<compile_context>
chip_gen: v7x
topology: tpu7x:2x2x1
jax: 0.10.0
libtpu: 0.0.40
codegen_flags: <defaults>
</compile_context>

<pallas_src>
import functools

import jax
import jax.numpy as jnp
from jax.experimental import pallas as pl
from jax.experimental.pallas import tpu as pltpu


HIDDEN = 128          # hidden_dim of the module
IN_DIM = 3            # embedding_dim_pos * 6 + 3 == 3  (no positional encoding)
DIR_DIM = 3           # embedding_dim_direction * 6 + 3 == 3
HALF = HIDDEN // 2    # 64
OD_DIM = 8            # cat(o, d) padded from 6 to 8 lanes
PROJ_DIM = 3 * HIDDEN  # 384: [w1 out | w5x out | w9d out (64) + 64 zero lanes]


def _nerf_kernel(od_ref,
                 w_od, wh, bh, w8, b8, w9h, b9, w10, b10,
                 out_ref):
    bf16 = jnp.bfloat16

    def relu_bf(x):
        # f32 accumulate + bias + ReLU already done; cast once for the next dot.
        return jnp.maximum(x, 0.0).astype(bf16)

    def dot_bf(a_bf16, w_bf16):
        # MXU in bf16, accumulate in f32.
        return jnp.dot(a_bf16, w_bf16, preferred_element_type=jnp.float32)

    od = od_ref[...]                                   # (TM, 8) f32

    # ---- fused K=8 f32 projection of cat(o, d): (TM, 384) ----
    #   cols   0..127 : o @ w1   (block1 layer 1)
    #   cols 128..255 : o @ w5x  (block2 layer 1, the cat(..., x) part)
    #   cols 256..319 : d @ w9d  (block3, the cat(..., d) part)
    proj = jnp.dot(od, w_od[...], preferred_element_type=jnp.float32)
    o1 = proj[:, :HIDDEN]
    o5 = proj[:, HIDDEN:2 * HIDDEN]
    d9 = proj[:, 2 * HIDDEN:2 * HIDDEN + HALF]         # (TM, 64)

    b = bh[...]                                        # (7, 128) f32, rows = b1..b7
    b1, b2, b3 = b[0:1, :], b[1:2, :], b[2:3, :]
    b4, b5 = b[3:4, :], b[4:5, :]
    b6, b7 = b[5:6, :], b[6:7, :]

    # ---- block1: 4x (Linear + ReLU), bf16 activations between layers ----
    h = relu_bf(o1 + b1)                               # (TM, 128) bf16
    h = relu_bf(dot_bf(h, wh[0]) + b2)
    h = relu_bf(dot_bf(h, wh[1]) + b3)
    h = relu_bf(dot_bf(h, wh[2]) + b4)

    # ---- block2 on cat((h, o), dim=1) realized as split matmul ----
    h2 = relu_bf(dot_bf(h, wh[3]) + o5 + b5)
    h2 = relu_bf(dot_bf(h2, wh[4]) + b6)
    h2 = relu_bf(dot_bf(h2, wh[5]) + b7)

    # last Linear of block2 (hidden_dim + 1 outputs), zero-padded to 256 lanes
    t8 = dot_bf(h2, w8[...]) + b8[...]                 # (TM, 256) f32
    h_out = t8[:, :HIDDEN].astype(bf16)                # tmp[:, :-1]   (TM, 128)
    sigma = jnp.maximum(t8[:, HIDDEN:HIDDEN + 1], 0.0)  # relu(tmp[:, -1])  (TM, 1)

    # ---- block3 on cat((h_out, d), dim=1) -> split matmul (d part precomputed) ----
    h3 = relu_bf(dot_bf(h_out, w9h[...]) + d9 + b9[...])   # (TM, 64) bf16

    # ---- block4: Linear + Sigmoid ----
    c = jax.nn.sigmoid(dot_bf(h3, w10[...]) + b10[...])    # (TM, 3) f32

    # single fused output: lanes 0..2 = c, lane 3 = sigma
    out_ref[...] = jnp.concatenate([c, sigma], axis=1).astype(out_ref.dtype)


def _full_spec(shape):
    # Weight / bias: same full block at every grid step (stays resident).
    return pl.BlockSpec(shape, lambda i, n=len(shape): (0,) * n)


@functools.partial(jax.jit, static_argnames=("tm",))
def nerf_forward(o, d, params, tm=1024):
    N = o.shape[0]
    n_blocks = pl.cdiv(N, tm)
    n_pad = n_blocks * tm

    # one lane-packed input stream: [o | d | 0 0]  -> (N, 8)
    od = jnp.concatenate(
        [o, d, jnp.zeros((N, OD_DIM - IN_DIM - DIR_DIM), o.dtype)], axis=1)
    if n_pad != N:                      # pad rows; padded rows are discarded
        od = jnp.pad(od, ((0, n_pad - N), (0, 0)))

    weight_specs = [_full_spec(p.shape) for p in params]
    in_specs = [pl.BlockSpec((tm, OD_DIM), lambda i: (i, 0))] + weight_specs
    out_specs = pl.BlockSpec((tm, 4), lambda i: (i, 0))   # c lanes 0..2, sigma lane 3

    out = pl.pallas_call(
        _nerf_kernel,
        out_shape=jax.ShapeDtypeStruct((n_pad, 4), jnp.float32),
        grid_spec=pltpu.PrefetchScalarGridSpec(
            num_scalar_prefetch=0,
            grid=(n_blocks,),
            in_specs=in_specs,
            out_specs=out_specs,
        ),
        compiler_params=pltpu.CompilerParams(
            dimension_semantics=("parallel",),
            vmem_limit_bytes=32 * 1024 * 1024,
        ),
    )(od, *params)

    c = out[:N, :3]
    sigma = out[:N, 3]                  # shape (N,), matching tmp[:, -1]
    return c, sigma


def init_params(key):
    """Deterministic synthetic per-layer parameters. Weights stored as (in, out)."""
    ks = iter(jax.random.split(key, 32))

    def lin(in_dim, out_dim, scale=0.1):
        w = jax.random.normal(next(ks), (in_dim, out_dim), jnp.float32) * scale
        b = jax.random.normal(next(ks), (1, out_dim), jnp.float32) * scale
        return w, b

    w1, b1 = lin(IN_DIM, HIDDEN)
    w2, b2 = lin(HIDDEN, HIDDEN)
    w3, b3 = lin(HIDDEN, HIDDEN)
    w4, b4 = lin(HIDDEN, HIDDEN)
    w5, b5 = lin(HIDDEN + IN_DIM, HIDDEN)      # block2 layer 1 (input = cat(h, x))
    w6, b6 = lin(HIDDEN, HIDDEN)
    w7, b7 = lin(HIDDEN, HIDDEN)
    w8, b8 = lin(HIDDEN, HIDDEN + 1)           # block2 last layer (hidden + sigma)
    w9, b9 = lin(HIDDEN + DIR_DIM, HALF)       # block3 (input = cat(h, d))
    w10, b10 = lin(HALF, 3)
    return (w1, b1, w2, b2, w3, b3, w4, b4, w5, b5,
            w6, b6, w7, b7, w8, b8, w9, b9, w10, b10)


def pack_params(raw):
    """Pack per-layer params into the kernel's fused / stacked layout."""
    (w1, b1, w2, b2, w3, b3, w4, b4, w5, b5,
     w6, b6, w7, b7, w8, b8, w9, b9, w10, b10) = raw
    bf16 = jnp.bfloat16

    w5h, w5x = w5[:HIDDEN], w5[HIDDEN:]        # (128,128), (3,128)
    w9h, w9d = w9[:HIDDEN], w9[HIDDEN:]        # (128,64),  (3,64)

    # fused (8, 384) f32 first-layer weight applied to cat(o, d, 0, 0):
    #   rows 0..2 : [w1 | w5x | 0]        (o part)
    #   rows 3..5 : [0  | 0   | w9d | 0]  (d part)
    #   rows 6..7 : 0                     (lane padding of the input)
    w_od = jnp.zeros((OD_DIM, PROJ_DIM), jnp.float32)
    w_od = w_od.at[0:IN_DIM, 0:HIDDEN].set(w1)
    w_od = w_od.at[0:IN_DIM, HIDDEN:2 * HIDDEN].set(w5x)
    w_od = w_od.at[IN_DIM:IN_DIM + DIR_DIM,
                   2 * HIDDEN:2 * HIDDEN + HALF].set(w9d)

    wh = jnp.stack([w2, w3, w4, w5h, w6, w7]).astype(bf16)         # (6, 128, 128)
    bh = jnp.concatenate([b1, b2, b3, b4, b5, b6, b7], axis=0)     # (7, 128) f32

    pad = 2 * HIDDEN - (HIDDEN + 1)                                # 127 zero lanes
    w8m = jnp.pad(w8, ((0, 0), (0, pad))).astype(bf16)             # (128, 256)
    b8m = jnp.pad(b8, ((0, 0), (0, pad)))                          # (1, 256) f32

    return (w_od, wh, bh, w8m, b8m,
            w9h.astype(bf16), b9,
            w10.astype(bf16), b10)


def _reference(o, d, raw):
    """Pure-JAX f32 reference matching the PyTorch forward exactly."""
    (w1, b1, w2, b2, w3, b3, w4, b4, w5, b5,
     w6, b6, w7, b7, w8, b8, w9, b9, w10, b10) = raw
    relu = lambda x: jnp.maximum(x, 0.0)
    h = relu(o @ w1 + b1)
    h = relu(h @ w2 + b2)
    h = relu(h @ w3 + b3)
    h = relu(h @ w4 + b4)
    t = relu(jnp.concatenate([h, o], axis=1) @ w5 + b5)
    t = relu(t @ w6 + b6)
    t = relu(t @ w7 + b7)
    tmp = t @ w8 + b8
    h_out, sigma = tmp[:, :-1], relu(tmp[:, -1])
    h3 = relu(jnp.concatenate([h_out, d], axis=1) @ w9 + b9)
    c = jax.nn.sigmoid(h3 @ w10 + b10)
    return c, sigma


if __name__ == "__main__":
    key = jax.random.PRNGKey(0)
    k_o, k_d, k_p = jax.random.split(key, 3)

    # N deliberately NOT a multiple of TM to exercise the padding path.
    # Small TM here keeps the test cheap while giving a 2-step grid (both v7x
    # TensorCores used); for throughput runs use the default tm=1024 or 2048.
    N = 1000
    o = jax.random.normal(k_o, (N, IN_DIM), jnp.float32)
    d = jax.random.normal(k_d, (N, DIR_DIM), jnp.float32)

    raw_params = init_params(k_p)
    params = pack_params(raw_params)

    c, sigma = nerf_forward(o, d, params, tm=512)
    jax.block_until_ready((c, sigma))

    c_ref, sigma_ref = _reference(o, d, raw_params)
    assert c.shape == (N, 3) and sigma.shape == (N,)
    # bf16 MXU operands for the hidden layers -> relaxed tolerance vs f32 ref.
    err_c = float(jnp.max(jnp.abs(c - c_ref)))
    err_s = float(jnp.max(jnp.abs(sigma - sigma_ref)))
    assert jnp.allclose(c, c_ref, atol=3e-2, rtol=3e-2), err_c
    assert jnp.allclose(sigma, sigma_ref, atol=3e-2, rtol=3e-2), err_s

    print("KERNEL_OK")
</pallas_src>

<mosaic_0001>
module attributes {stable_mosaic.version = 11 : i64} {
  func.func @_nerf_kernel(%arg0: i32, %arg1: memref<512x8xf32, #tpu.memory_space<vmem>>, %arg2: memref<8x384xf32, #tpu.memory_space<vmem>>, %arg3: memref<6x128x128xbf16, #tpu.memory_space<vmem>>, %arg4: memref<7x128xf32, #tpu.memory_space<vmem>>, %arg5: memref<128x256xbf16, #tpu.memory_space<vmem>>, %arg6: memref<1x256xf32, #tpu.memory_space<vmem>>, %arg7: memref<128x64xbf16, #tpu.memory_space<vmem>>, %arg8: memref<1x64xf32, #tpu.memory_space<vmem>>, %arg9: memref<64x3xbf16, #tpu.memory_space<vmem>>, %arg10: memref<1x3xf32, #tpu.memory_space<vmem>>, %arg11: memref<512x4xf32, #tpu.memory_space<vmem>>) attributes {dimension_semantics = [#tpu.dimension_semantics<parallel>], iteration_bounds = array<i64: 2>, scalar_prefetch = 0 : i64, scratch_operands = 0 : i64, tpu.core_type = #tpu.core_type<tc>, window_params = [{transform_indices = @transform_0, window_bounds = array<i64: 512, 8>}, {pipeline_mode = #tpu.pipeline_mode<synchronous>, transform_indices = @transform_1, window_bounds = array<i64: 8, 384>}, {pipeline_mode = #tpu.pipeline_mode<synchronous>, transform_indices = @transform_2, window_bounds = array<i64: 6, 128, 128>}, {pipeline_mode = #tpu.pipeline_mode<synchronous>, transform_indices = @transform_3, window_bounds = array<i64: 7, 128>}, {pipeline_mode = #tpu.pipeline_mode<synchronous>, transform_indices = @transform_4, window_bounds = array<i64: 128, 256>}, {pipeline_mode = #tpu.pipeline_mode<synchronous>, transform_indices = @transform_5, window_bounds = array<i64: 1, 256>}, {pipeline_mode = #tpu.pipeline_mode<synchronous>, transform_indices = @transform_6, window_bounds = array<i64: 128, 64>}, {pipeline_mode = #tpu.pipeline_mode<synchronous>, transform_indices = @transform_7, window_bounds = array<i64: 1, 64>}, {pipeline_mode = #tpu.pipeline_mode<synchronous>, transform_indices = @transform_8, window_bounds = array<i64: 64, 3>}, {pipeline_mode = #tpu.pipeline_mode<synchronous>, transform_indices = @transform_9, window_bounds = array<i64: 1, 3>}, {transform_indices = @transform_10, window_bounds = array<i64: 512, 4>}]} {
    %c0 = arith.constant 0 : index
    %c0_0 = arith.constant 0 : index
    %0 = vector.load %arg1[%c0, %c0_0] : memref<512x8xf32, #tpu.memory_space<vmem>>, vector<512x8xf32>
    %c0_1 = arith.constant 0 : index
    %c0_2 = arith.constant 0 : index
    %1 = vector.load %arg2[%c0_1, %c0_2] : memref<8x384xf32, #tpu.memory_space<vmem>>, vector<8x384xf32>
    %cst = arith.constant dense<0.000000e+00> : vector<512x384xf32>
    %2 = tpu.matmul %0, %1, %cst {dimension_numbers = #tpu.dot_dimension_numbers<[1], [0], [0], [1], [0, 0, 1, 1], [], []>} : vector<512x8xf32>, vector<8x384xf32>, vector<512x384xf32> -> vector<512x384xf32>
    %3 = vector.extract_strided_slice %2 {offsets = [0, 0], sizes = [512, 128], strides = [1, 1]} : vector<512x384xf32> to vector<512x128xf32>
    %4 = vector.extract_strided_slice %2 {offsets = [0, 128], sizes = [512, 128], strides = [1, 1]} : vector<512x384xf32> to vector<512x128xf32>
    %5 = vector.extract_strided_slice %2 {offsets = [0, 256], sizes = [512, 64], strides = [1, 1]} : vector<512x384xf32> to vector<512x64xf32>
    %c0_3 = arith.constant 0 : index
    %c0_4 = arith.constant 0 : index
    %6 = vector.load %arg4[%c0_3, %c0_4] : memref<7x128xf32, #tpu.memory_space<vmem>>, vector<7x128xf32>
    %7 = vector.extract_strided_slice %6 {offsets = [0, 0], sizes = [1, 128], strides = [1, 1]} : vector<7x128xf32> to vector<1x128xf32>
    %8 = vector.extract_strided_slice %6 {offsets = [1, 0], sizes = [1, 128], strides = [1, 1]} : vector<7x128xf32> to vector<1x128xf32>
    %9 = vector.extract_strided_slice %6 {offsets = [2, 0], sizes = [1, 128], strides = [1, 1]} : vector<7x128xf32> to vector<1x128xf32>
    %10 = vector.extract_strided_slice %6 {offsets = [3, 0], sizes = [1, 128], strides = [1, 1]} : vector<7x128xf32> to vector<1x128xf32>
    %11 = vector.extract_strided_slice %6 {offsets = [4, 0], sizes = [1, 128], strides = [1, 1]} : vector<7x128xf32> to vector<1x128xf32>
    %12 = vector.extract_strided_slice %6 {offsets = [5, 0], sizes = [1, 128], strides = [1, 1]} : vector<7x128xf32> to vector<1x128xf32>
    %13 = vector.extract_strided_slice %6 {offsets = [6, 0], sizes = [1, 128], strides = [1, 1]} : vector<7x128xf32> to vector<1x128xf32>
    %14 = vector.broadcast %7 : vector<1x128xf32> to vector<512x128xf32>
    %15 = arith.addf %3, %14 : vector<512x128xf32>
    %cst_5 = arith.constant 0.000000e+00 : f32
    %16 = vector.broadcast %cst_5 : f32 to vector<512x128xf32>
    %17 = arith.maximumf %15, %16 : vector<512x128xf32>
    %18 = arith.truncf %17 : vector<512x128xf32> to vector<512x128xbf16>
    %c0_6 = arith.constant 0 : index
    %c0_7 = arith.constant 0 : index
    %c0_8 = arith.constant 0 : index
    %19 = vector.load %arg3[%c0_6, %c0_7, %c0_8] : memref<6x128x128xbf16, #tpu.memory_space<vmem>>, vector<1x128x128xbf16>
    %20 = vector.shape_cast %19 : vector<1x128x128xbf16> to vector<128x128xbf16>
    %cst_9 = arith.constant dense<0.000000e+00> : vector<512x128xf32>
    %21 = tpu.matmul %18, %20, %cst_9 {dimension_numbers = #tpu.dot_dimension_numbers<[1], [0], [0], [1], [0, 0, 1, 1], [], []>} : vector<512x128xbf16>, vector<128x128xbf16>, vector<512x128xf32> -> vector<512x128xf32>
    %22 = vector.broadcast %8 : vector<1x128xf32> to vector<512x128xf32>
    %23 = arith.addf %21, %22 : vector<512x128xf32>
    %cst_10 = arith.constant 0.000000e+00 : f32
    %24 = vector.broadcast %cst_10 : f32 to vector<512x128xf32>
    %25 = arith.maximumf %23, %24 : vector<512x128xf32>
    %26 = arith.truncf %25 : vector<512x128xf32> to vector<512x128xbf16>
    %c1 = arith.constant 1 : index
    %c0_11 = arith.constant 0 : index
    %c0_12 = arith.constant 0 : index
    %27 = vector.load %arg3[%c1, %c0_11, %c0_12] : memref<6x128x128xbf16, #tpu.memory_space<vmem>>, vector<1x128x128xbf16>
    %28 = vector.shape_cast %27 : vector<1x128x128xbf16> to vector<128x128xbf16>
    %cst_13 = arith.constant dense<0.000000e+00> : vector<512x128xf32>
    %29 = tpu.matmul %26, %28, %cst_13 {dimension_numbers = #tpu.dot_dimension_numbers<[1], [0], [0], [1], [0, 0, 1, 1], [], []>} : vector<512x128xbf16>, vector<128x128xbf16>, vector<512x128xf32> -> vector<512x128xf32>
    %30 = vector.broadcast %9 : vector<1x128xf32> to vector<512x128xf32>
    %31 = arith.addf %29, %30 : vector<512x128xf32>
    %cst_14 = arith.constant 0.000000e+00 : f32
    %32 = vector.broadcast %cst_14 : f32 to vector<512x128xf32>
    %33 = arith.maximumf %31, %32 : vector<512x128xf32>
    %34 = arith.truncf %33 : vector<512x128xf32> to vector<512x128xbf16>
    %c2 = arith.constant 2 : index
    %c0_15 = arith.constant 0 : index
    %c0_16 = arith.constant 0 : index
    %35 = vector.load %arg3[%c2, %c0_15, %c0_16] : memref<6x128x128xbf16, #tpu.memory_space<vmem>>, vector<1x128x128xbf16>
    %36 = vector.shape_cast %35 : vector<1x128x128xbf16> to vector<128x128xbf16>
    %cst_17 = arith.constant dense<0.000000e+00> : vector<512x128xf32>
    %37 = tpu.matmul %34, %36, %cst_17 {dimension_numbers = #tpu.dot_dimension_numbers<[1], [0], [0], [1], [0, 0, 1, 1], [], []>} : vector<512x128xbf16>, vector<128x128xbf16>, vector<512x128xf32> -> vector<512x128xf32>
    %38 = vector.broadcast %10 : vector<1x128xf32> to vector<512x128xf32>
    %39 = arith.addf %37, %38 : vector<512x128xf32>
    %cst_18 = arith.constant 0.000000e+00 : f32
    %40 = vector.broadcast %cst_18 : f32 to vector<512x128xf32>
    %41 = arith.maximumf %39, %40 : vector<512x128xf32>
    %42 = arith.truncf %41 : vector<512x128xf32> to vector<512x128xbf16>
    %c3 = arith.constant 3 : index
    %c0_19 = arith.constant 0 : index
    %c0_20 = arith.constant 0 : index
    %43 = vector.load %arg3[%c3, %c0_19, %c0_20] : memref<6x128x128xbf16, #tpu.memory_space<vmem>>, vector<1x128x128xbf16>
    %44 = vector.shape_cast %43 : vector<1x128x128xbf16> to vector<128x128xbf16>
    %cst_21 = arith.constant dense<0.000000e+00> : vector<512x128xf32>
    %45 = tpu.matmul %42, %44, %cst_21 {dimension_numbers = #tpu.dot_dimension_numbers<[1], [0], [0], [1], [0, 0, 1, 1], [], []>} : vector<512x128xbf16>, vector<128x128xbf16>, vector<512x128xf32> -> vector<512x128xf32>
    %46 = arith.addf %45, %4 : vector<512x128xf32>
    %47 = vector.broadcast %11 : vector<1x128xf32> to vector<512x128xf32>
    %48 = arith.addf %46, %47 : vector<512x128xf32>
    %cst_22 = arith.constant 0.000000e+00 : f32
    %49 = vector.broadcast %cst_22 : f32 to vector<512x128xf32>
    %50 = arith.maximumf %48, %49 : vector<512x128xf32>
    %51 = arith.truncf %50 : vector<512x128xf32> to vector<512x128xbf16>
    %c4 = arith.constant 4 : index
    %c0_23 = arith.constant 0 : index
    %c0_24 = arith.constant 0 : index
    %52 = vector.load %arg3[%c4, %c0_23, %c0_24] : memref<6x128x128xbf16, #tpu.memory_space<vmem>>, vector<1x128x128xbf16>
    %53 = vector.shape_cast %52 : vector<1x128x128xbf16> to vector<128x128xbf16>
    %cst_25 = arith.constant dense<0.000000e+00> : vector<512x128xf32>
    %54 = tpu.matmul %51, %53, %cst_25 {dimension_numbers = #tpu.dot_dimension_numbers<[1], [0], [0], [1], [0, 0, 1, 1], [], []>} : vector<512x128xbf16>, vector<128x128xbf16>, vector<512x128xf32> -> vector<512x128xf32>
    %55 = vector.broadcast %12 : vector<1x128xf32> to vector<512x128xf32>
    %56 = arith.addf %54, %55 : vector<512x128xf32>
    %cst_26 = arith.constant 0.000000e+00 : f32
    %57 = vector.broadcast %cst_26 : f32 to vector<512x128xf32>
    %58 = arith.maximumf %56, %57 : vector<512x128xf32>
    %59 = arith.truncf %58 : vector<512x128xf32> to vector<512x128xbf16>
    %c5 = arith.constant 5 : index
    %c0_27 = arith.constant 0 : index
    %c0_28 = arith.constant 0 : index
    %60 = vector.load %arg3[%c5, %c0_27, %c0_28] : memref<6x128x128xbf16, #tpu.memory_space<vmem>>, vector<1x128x128xbf16>
    %61 = vector.shape_cast %60 : vector<1x128x128xbf16> to vector<128x128xbf16>
    %cst_29 = arith.constant dense<0.000000e+00> : vector<512x128xf32>
    %62 = tpu.matmul %59, %61, %cst_29 {dimension_numbers = #tpu.dot_dimension_numbers<[1], [0], [0], [1], [0, 0, 1, 1], [], []>} : vector<512x128xbf16>, vector<128x128xbf16>, vector<512x128xf32> -> vector<512x128xf32>
    %63 = vector.broadcast %13 : vector<1x128xf32> to vector<512x128xf32>
    %64 = arith.addf %62, %63 : vector<512x128xf32>
    %cst_30 = arith.constant 0.000000e+00 : f32
    %65 = vector.broadcast %cst_30 : f32 to vector<512x128xf32>
    %66 = arith.maximumf %64, %65 : vector<512x128xf32>
    %67 = arith.truncf %66 : vector<512x128xf32> to vector<512x128xbf16>
    %c0_31 = arith.constant 0 : index
    %c0_32 = arith.constant 0 : index
    %68 = vector.load %arg5[%c0_31, %c0_32] : memref<128x256xbf16, #tpu.memory_space<vmem>>, vector<128x256xbf16>
    %cst_33 = arith.constant dense<0.000000e+00> : vector<512x256xf32>
    %69 = tpu.matmul %67, %68, %cst_33 {dimension_numbers = #tpu.dot_dimension_numbers<[1], [0], [0], [1], [0, 0, 1, 1], [], []>} : vector<512x128xbf16>, vector<128x256xbf16>, vector<512x256xf32> -> vector<512x256xf32>
    %c0_34 = arith.constant 0 : index
    %c0_35 = arith.constant 0 : index
    %70 = vector.load %arg6[%c0_34, %c0_35] : memref<1x256xf32, #tpu.memory_space<vmem>>, vector<1x256xf32>
    %71 = vector.broadcast %70 : vector<1x256xf32> to vector<512x256xf32>
    %72 = arith.addf %69, %71 : vector<512x256xf32>
    %73 = vector.extract_strided_slice %72 {offsets = [0, 0], sizes = [512, 128], strides = [1, 1]} : vector<512x256xf32> to vector<512x128xf32>
    %74 = arith.truncf %73 : vector<512x128xf32> to vector<512x128xbf16>
    %75 = vector.extract_strided_slice %72 {offsets = [0, 128], sizes = [512, 1], strides = [1, 1]} : vector<512x256xf32> to vector<512x1xf32>
    %cst_36 = arith.constant 0.000000e+00 : f32
    %76 = vector.broadcast %cst_36 : f32 to vector<512x1xf32>
    %77 = arith.maximumf %75, %76 : vector<512x1xf32>
    %c0_37 = arith.constant 0 : index
    %c0_38 = arith.constant 0 : index
    %78 = vector.load %arg7[%c0_37, %c0_38] : memref<128x64xbf16, #tpu.memory_space<vmem>>, vector<128x64xbf16>
    %cst_39 = arith.constant dense<0.000000e+00> : vector<512x64xf32>
    %79 = tpu.matmul %74, %78, %cst_39 {dimension_numbers = #tpu.dot_dimension_numbers<[1], [0], [0], [1], [0, 0, 1, 1], [], []>} : vector<512x128xbf16>, vector<128x64xbf16>, vector<512x64xf32> -> vector<512x64xf32>
    %80 = arith.addf %79, %5 : vector<512x64xf32>
    %c0_40 = arith.constant 0 : index
    %c0_41 = arith.constant 0 : index
    %81 = vector.load %arg8[%c0_40, %c0_41] : memref<1x64xf32, #tpu.memory_space<vmem>>, vector<1x64xf32>
    %82 = vector.broadcast %81 : vector<1x64xf32> to vector<512x64xf32>
    %83 = arith.addf %80, %82 : vector<512x64xf32>
    %cst_42 = arith.constant 0.000000e+00 : f32
    %84 = vector.broadcast %cst_42 : f32 to vector<512x64xf32>
    %85 = arith.maximumf %83, %84 : vector<512x64xf32>
    %86 = arith.truncf %85 : vector<512x64xf32> to vector<512x64xbf16>
    %c0_43 = arith.constant 0 : index
    %c0_44 = arith.constant 0 : index
    %87 = vector.load %arg9[%c0_43, %c0_44] : memref<64x3xbf16, #tpu.memory_space<vmem>>, vector<64x3xbf16>
    %cst_45 = arith.constant dense<0.000000e+00> : vector<512x3xf32>
    %88 = tpu.matmul %86, %87, %cst_45 {dimension_numbers = #tpu.dot_dimension_numbers<[1], [0], [0], [1], [0, 0, 1, 1], [], []>} : vector<512x64xbf16>, vector<64x3xbf16>, vector<512x3xf32> -> vector<512x3xf32>
    %c0_46 = arith.constant 0 : index
    %c0_47 = arith.constant 0 : index
    %89 = vector.load %arg10[%c0_46, %c0_47] : memref<1x3xf32, #tpu.memory_space<vmem>>, vector<1x3xf32>
    %90 = vector.broadcast %89 : vector<1x3xf32> to vector<512x3xf32>
    %91 = arith.addf %88, %90 : vector<512x3xf32>
    %92 = arith.negf %91 : vector<512x3xf32>
    %93 = math.exp %92 : vector<512x3xf32>
    %cst_48 = arith.constant 1.000000e+00 : f32
    %94 = vector.broadcast %cst_48 : f32 to vector<512x3xf32>
    %95 = arith.addf %94, %93 : vector<512x3xf32>
    %96 = arith.divf %94, %95 : vector<512x3xf32>
    %97 = tpu.concatenate %96, %77 in 1 : vector<512x3xf32>, vector<512x1xf32> -> vector<512x4xf32>
    %c0_49 = arith.constant 0 : index
    %c0_50 = arith.constant 0 : index
    %98 = vector.load %arg11[%c0_49, %c0_50] : memref<512x4xf32, #tpu.memory_space<vmem>>, vector<512x4xf32>
    tpu.vector_store %arg11[%c0_49, %c0_50], %97 {strides = array<i32>} : memref<512x4xf32, #tpu.memory_space<vmem>>, vector<512x4xf32>,
    return
  }
  func.func @transform_0(%arg0: i32) -> (i32, i32) {
    %c0_i32 = arith.constant 0 : i32
    %c0_i32_0 = arith.constant 0 : i32
    return %arg0, %c0_i32 : i32, i32
  }
  func.func @transform_1(%arg0: i32) -> (i32, i32) {
    %c0_i32 = arith.constant 0 : i32
    %c0_i32_0 = arith.constant 0 : i32
    %c0_i32_1 = arith.constant 0 : i32
    return %c0_i32, %c0_i32_0 : i32, i32
  }
  func.func @transform_2(%arg0: i32) -> (i32, i32, i32) {
    %c0_i32 = arith.constant 0 : i32
    %c0_i32_0 = arith.constant 0 : i32
    %c0_i32_1 = arith.constant 0 : i32
    %c0_i32_2 = arith.constant 0 : i32
    return %c0_i32, %c0_i32_0, %c0_i32_1 : i32, i32, i32
  }
  func.func @transform_3(%arg0: i32) -> (i32, i32) {
    %c0_i32 = arith.constant 0 : i32
    %c0_i32_0 = arith.constant 0 : i32
    %c0_i32_1 = arith.constant 0 : i32
    return %c0_i32, %c0_i32_0 : i32, i32
  }
  func.func @transform_4(%arg0: i32) -> (i32, i32) {
    %c0_i32 = arith.constant 0 : i32
    %c0_i32_0 = arith.constant 0 : i32
    %c0_i32_1 = arith.constant 0 : i32
    return %c0_i32, %c0_i32_0 : i32, i32
  }
  func.func @transform_5(%arg0: i32) -> (i32, i32) {
    %c0_i32 = arith.constant 0 : i32
    %c0_i32_0 = arith.constant 0 : i32
    %c0_i32_1 = arith.constant 0 : i32
    return %c0_i32, %c0_i32_0 : i32, i32
  }
  func.func @transform_6(%arg0: i32) -> (i32, i32) {
    %c0_i32 = arith.constant 0 : i32
    %c0_i32_0 = arith.constant 0 : i32
    %c0_i32_1 = arith.constant 0 : i32
    return %c0_i32, %c0_i32_0 : i32, i32
  }
  func.func @transform_7(%arg0: i32) -> (i32, i32) {
    %c0_i32 = arith.constant 0 : i32
    %c0_i32_0 = arith.constant 0 : i32
    %c0_i32_1 = arith.constant 0 : i32
    return %c0_i32, %c0_i32_0 : i32, i32
  }
  func.func @transform_8(%arg0: i32) -> (i32, i32) {
    %c0_i32 = arith.constant 0 : i32
    %c0_i32_0 = arith.constant 0 : i32
    %c0_i32_1 = arith.constant 0 : i32
    return %c0_i32, %c0_i32_0 : i32, i32
  }
  func.func @transform_9(%arg0: i32) -> (i32, i32) {
    %c0_i32 = arith.constant 0 : i32
    %c0_i32_0 = arith.constant 0 : i32
    %c0_i32_1 = arith.constant 0 : i32
    return %c0_i32, %c0_i32_0 : i32, i32
  }
  func.func @transform_10(%arg0: i32) -> (i32, i32) {
    %c0_i32 = arith.constant 0 : i32
    %c0_i32_0 = arith.constant 0 : i32
    return %arg0, %c0_i32 : i32, i32
  }
}

</mosaic_0001>

<llo_original>
// kernel: nerf_forward.1
$region0: #{nerf_forward.1}
  #allocation0 [shape = 'u32[]', space=smem, size = 0x4, offset = 0x4, fixed_abs, tag = 'smem constant byte address 0x4 - core index']
  #allocation1 [shape = 'u32[144,128]{1,0:T(1,128)}', space=vmem, size = 0x12000, scoped, tag = 'internal scratch']
  %s0 = inlined_call_operand.vmem [shape: f32[1024,8], index: 0, kind: input, shape index: {}]
  %s1 = inlined_call_operand.vmem [shape: f32[8,384], index: 1, kind: input, shape index: {}]
  %s2 = inlined_call_operand.vmem [shape: bf16[6,128,128], index: 2, kind: input, shape index: {}]
  %s3 = inlined_call_operand.vmem [shape: f32[7,128], index: 3, kind: input, shape index: {}]
  %s4 = inlined_call_operand.vmem [shape: bf16[128,256], index: 4, kind: input, shape index: {}]
  %s5 = inlined_call_operand.vmem [shape: f32[1,256], index: 5, kind: input, shape index: {}]
  %s6 = inlined_call_operand.vmem [shape: bf16[128,64], index: 6, kind: input, shape index: {}]
  %s7 = inlined_call_operand.vmem [shape: f32[1,64], index: 7, kind: input, shape index: {}]
  %s8 = inlined_call_operand.vmem [shape: bf16[64,3], index: 8, kind: input, shape index: {}]
  %s9 = inlined_call_operand.vmem [shape: f32[1,3], index: 9, kind: input, shape index: {}]
  %s10 = inlined_call_operand.vmem [shape: f32[1024,4], index: 10, kind: output, shape index: {}]
  %s11 = sld [smem:[#allocation0]]
  $region73: #{nerf_forward.1} parent=0
    _
  %s13 = ssub.s32 1, %s11
  %s14 = scalar_select 0, %s13, %s11
  loop: start=0, step=1, limit=4
  $region2: #{nerf_forward.1} parent=0 // loop_pre_header
    _
  $region3: #{nerf_forward.1} parent=0 // loop_header
    %s16 = sphi 0, %s20
    %p17 = scmp.ge.s32.totalorder %s16, 4
    %s26 = sphi 0, %s28
    %s29 = sphi 0, %s26
    %s30 = sphi 0, %s29
    %s46 = sphi 0, %s30
    %s50 = sphi 0, %s50
    %s52 = sphi 0, %s50
    %s53 = sphi 0, %s52
    %s67 = sphi 0, %s53
    %s71 = sphi 0, %s71
    %s73 = sphi 0, %s71
    %s74 = sphi 0, %s73
    %s88 = sphi 0, %s74
    %s92 = sphi 0, %s92
    %s94 = sphi 0, %s92
    %s95 = sphi 0, %s94
    %s109 = sphi 0, %s95
    %s113 = sphi 0, %s113
    %s115 = sphi 0, %s113
    %s116 = sphi 0, %s115
    %s130 = sphi 0, %s116
    %s134 = sphi 0, %s134
    %s136 = sphi 0, %s134
    %s137 = sphi 0, %s136
    %s151 = sphi 0, %s137
    %s155 = sphi 0, %s155
    %s157 = sphi 0, %s155
    %s158 = sphi 0, %s157
    %s172 = sphi 0, %s158
    %s176 = sphi 0, %s176
    %s178 = sphi 0, %s176
    %s179 = sphi 0, %s178
    %s193 = sphi 0, %s179
    %s197 = sphi 0, %s197
    %s199 = sphi 0, %s197
    %s200 = sphi 0, %s199
    %s214 = sphi 0, %s200
    %s218 = sphi 0, %s218
    %s220 = sphi 0, %s218
    %s221 = sphi 0, %s220
    %s235 = sphi 0, %s221
    %s241 = sphi 0, %s243
    %s244 = sphi 0, %s241
    %s245 = sphi 0, %s244
    %s261 = sphi 0, %s245
  $region4: #{nerf_forward.1} parent=0 // loop_header_branch
    %19 = sbr.rel (%p17) target = $region8
  $region5: #{nerf_forward.1} parent=0 // loop_body
    %s21 = ssub.s32 %s16, 1
    %s22 = ssub.s32 %s16, 2
    %s23 = sadd.s32 %s16, 1
    %s24 = ssub.s32 %s16, %s23
    %p25 = scmp.eq.s32.totalorder %s24, 0
    %s27 = sadd.s32 %s26, 1
    %s28 = scalar_select %p25, %s26, %s27
    %p31 = pneg %p25
    %p32 = scmp.eq.s32.totalorder %s16, 1
    %p33 = por %p31, %p32
    %p34 = scmp.ne.s32.totalorder %s26, %s29
    %p35 = scmp.eq.s32.totalorder %s16, 0
    %p36 = por %p34, %p35
    %p37 = scmp.ne.s32.totalorder %s26, %s29
    %p38 = scmp.eq.s32.totalorder %s21, 1
    %p39 = por %p37, %p38
    %p40 = scmp.ne.s32.totalorder %s29, %s30
    %p41 = scmp.eq.s32.totalorder %s21, 0
    %p42 = por %p40, %p41
    %p43 = scmp.ne.s32.totalorder %s29, %s30
    %p44 = scmp.eq.s32.totalorder %s22, 1
    %p45 = por %p43, %p44
    %p47 = scmp.ne.s32.totalorder %s30, %s46
    %p48 = scmp.eq.s32.totalorder %s22, 0
    %p49 = por %p47, %p48
    %s51 = sadd.s32 %s50, 1
    %p54 = scmp.eq.s32.totalorder %s16, 1
    %p55 = scmp.ne.s32.totalorder %s50, %s52
    %p56 = scmp.eq.s32.totalorder %s16, 0
    %p57 = por %p55, %p56
    %p58 = scmp.ne.s32.totalorder %s50, %s52
    %p59 = scmp.eq.s32.totalorder %s21, 1
    %p60 = por %p58, %p59
    %p61 = scmp.ne.s32.totalorder %s52, %s53
    %p62 = scmp.eq.s32.totalorder %s21, 0
    %p63 = por %p61, %p62
    %p64 = scmp.ne.s32.totalorder %s52, %s53
    %p65 = scmp.eq.s32.totalorder %s22, 1
    %p66 = por %p64, %p65
    %p68 = scmp.ne.s32.totalorder %s53, %s67
    %p69 = scmp.eq.s32.totalorder %s22, 0
    %p70 = por %p68, %p69
    %s72 = sadd.s32 %s71, 1
    %p75 = scmp.eq.s32.totalorder %s16, 1
    %p76 = scmp.ne.s32.totalorder %s71, %s73
    %p77 = scmp.eq.s32.totalorder %s16, 0
    %p78 = por %p76, %p77
    %p79 = scmp.ne.s32.totalorder %s71, %s73
    %p80 = scmp.eq.s32.totalorder %s21, 1
    %p81 = por %p79, %p80
    %p82 = scmp.ne.s32.totalorder %s73, %s74
    %p83 = scmp.eq.s32.totalorder %s21, 0
    %p84 = por %p82, %p83
    %p85 = scmp.ne.s32.totalorder %s73, %s74
    %p86 = scmp.eq.s32.totalorder %s22, 1
    %p87 = por %p85, %p86
    %p89 = scmp.ne.s32.totalorder %s74, %s88
    %p90 = scmp.eq.s32.totalorder %s22, 0
    %p91 = por %p89, %p90
    %s93 = sadd.s32 %s92, 1
    %p96 = scmp.eq.s32.totalorder %s16, 1
    %p97 = scmp.ne.s32.totalorder %s92, %s94
    %p98 = scmp.eq.s32.totalorder %s16, 0
    %p99 = por %p97, %p98
    %p100 = scmp.ne.s32.totalorder %s92, %s94
    %p101 = scmp.eq.s32.totalorder %s21, 1
    %p102 = por %p100, %p101
    %p103 = scmp.ne.s32.totalorder %s94, %s95
    %p104 = scmp.eq.s32.totalorder %s21, 0
    %p105 = por %p103, %p104
    %p106 = scmp.ne.s32.totalorder %s94, %s95
    %p107 = scmp.eq.s32.totalorder %s22, 1
    %p108 = por %p106, %p107
    %p110 = scmp.ne.s32.totalorder %s95, %s109
    %p111 = scmp.eq.s32.totalorder %s22, 0
    %p112 = por %p110, %p111
    %s114 = sadd.s32 %s113, 1
    %p117 = scmp.eq.s32.totalorder %s16, 1
    %p118 = scmp.ne.s32.totalorder %s113, %s115
    %p119 = scmp.eq.s32.totalorder %s16, 0
    %p120 = por %p118, %p119
    %p121 = scmp.ne.s32.totalorder %s113, %s115
    %p122 = scmp.eq.s32.totalorder %s21, 1
    %p123 = por %p121, %p122
    %p124 = scmp.ne.s32.totalorder %s115, %s116
    %p125 = scmp.eq.s32.totalorder %s21, 0
    %p126 = por %p124, %p125
    %p127 = scmp.ne.s32.totalorder %s115, %s116
    %p128 = scmp.eq.s32.totalorder %s22, 1
    %p129 = por %p127, %p128
    %p131 = scmp.ne.s32.totalorder %s116, %s130
    %p132 = scmp.eq.s32.totalorder %s22, 0
    %p133 = por %p131, %p132
    %s135 = sadd.s32 %s134, 1
    %p138 = scmp.eq.s32.totalorder %s16, 1
    %p139 = scmp.ne.s32.totalorder %s134, %s136
    %p140 = scmp.eq.s32.totalorder %s16, 0
    %p141 = por %p139, %p140
    %p142 = scmp.ne.s32.totalorder %s134, %s136
    %p143 = scmp.eq.s32.totalorder %s21, 1
    %p144 = por %p142, %p143
    %p145 = scmp.ne.s32.totalorder %s136, %s137
    %p146 = scmp.eq.s32.totalorder %s21, 0
    %p147 = por %p145, %p146
    %p148 = scmp.ne.s32.totalorder %s136, %s137
    %p149 = scmp.eq.s32.totalorder %s22, 1
    %p150 = por %p148, %p149
    %p152 = scmp.ne.s32.totalorder %s137, %s151
    %p153 = scmp.eq.s32.totalorder %s22, 0
    %p154 = por %p152, %p153
    %s156 = sadd.s32 %s155, 1
    %p159 = scmp.eq.s32.totalorder %s16, 1
    %p160 = scmp.ne.s32.totalorder %s155, %s157
    %p161 = scmp.eq.s32.totalorder %s16, 0
    %p162 = por %p160, %p161
    %p163 = scmp.ne.s32.totalorder %s155, %s157
    %p164 = scmp.eq.s32.totalorder %s21, 1
    %p165 = por %p163, %p164
    %p166 = scmp.ne.s32.totalorder %s157, %s158
    %p167 = scmp.eq.s32.totalorder %s21, 0
    %p168 = por %p166, %p167
    %p169 = scmp.ne.s32.totalorder %s157, %s158
    %p170 = scmp.eq.s32.totalorder %s22, 1
    %p171 = por %p169, %p170
    %p173 = scmp.ne.s32.totalorder %s158, %s172
    %p174 = scmp.eq.s32.totalorder %s22, 0
    %p175 = por %p173, %p174
    %s177 = sadd.s32 %s176, 1
    %p180 = scmp.eq.s32.totalorder %s16, 1
    %p181 = scmp.ne.s32.totalorder %s176, %s178
    %p182 = scmp.eq.s32.totalorder %s16, 0
    %p183 = por %p181, %p182
    %p184 = scmp.ne.s32.totalorder %s176, %s178
    %p185 = scmp.eq.s32.totalorder %s21, 1
    %p186 = por %p184, %p185
    %p187 = scmp.ne.s32.totalorder %s178, %s179
    %p188 = scmp.eq.s32.totalorder %s21, 0
    %p189 = por %p187, %p188
    %p190 = scmp.ne.s32.totalorder %s178, %s179
    %p191 = scmp.eq.s32.totalorder %s22, 1
    %p192 = por %p190, %p191
    %p194 = scmp.ne.s32.totalorder %s179, %s193
    %p195 = scmp.eq.s32.totalorder %s22, 0
    %p196 = por %p194, %p195
    %s198 = sadd.s32 %s197, 1
    %p201 = scmp.eq.s32.totalorder %s16, 1
    %p202 = scmp.ne.s32.totalorder %s197, %s199
    %p203 = scmp.eq.s32.totalorder %s16, 0
    %p204 = por %p202, %p203
    %p205 = scmp.ne.s32.totalorder %s197, %s199
    %p206 = scmp.eq.s32.totalorder %s21, 1
    %p207 = por %p205, %p206
    %p208 = scmp.ne.s32.totalorder %s199, %s200
    %p209 = scmp.eq.s32.totalorder %s21, 0
    %p210 = por %p208, %p209
    %p211 = scmp.ne.s32.totalorder %s199, %s200
    %p212 = scmp.eq.s32.totalorder %s22, 1
    %p213 = por %p211, %p212
    %p215 = scmp.ne.s32.totalorder %s200, %s214
    %p216 = scmp.eq.s32.totalorder %s22, 0
    %p217 = por %p215, %p216
    %s219 = sadd.s32 %s218, 1
    %p222 = scmp.eq.s32.totalorder %s16, 1
    %p223 = scmp.ne.s32.totalorder %s218, %s220
    %p224 = scmp.eq.s32.totalorder %s16, 0
    %p225 = por %p223, %p224
    %p226 = scmp.ne.s32.totalorder %s218, %s220
    %p227 = scmp.eq.s32.totalorder %s21, 1
    %p228 = por %p226, %p227
    %p229 = scmp.ne.s32.totalorder %s220, %s221
    %p230 = scmp.eq.s32.totalorder %s21, 0
    %p231 = por %p229, %p230
    %p232 = scmp.ne.s32.totalorder %s220, %s221
    %p233 = scmp.eq.s32.totalorder %s22, 1
    %p234 = por %p232, %p233
    %p236 = scmp.ne.s32.totalorder %s221, %s235
    %p237 = scmp.eq.s32.totalorder %s22, 0
    %p238 = por %p236, %p237
    %s239 = ssub.s32 %s16, %s23
    %p240 = scmp.eq.s32.totalorder %s239, 0
    %s242 = sadd.s32 %s241, 1
    %s243 = scalar_select %p240, %s241, %s242
    %p246 = pneg %p240
    %p247 = scmp.eq.s32.totalorder %s16, 1
    %p248 = por %p246, %p247
    %p249 = scmp.ne.s32.totalorder %s241, %s244
    %p250 = scmp.eq.s32.totalorder %s16, 0
    %p251 = por %p249, %p250
    %p252 = scmp.ne.s32.totalorder %s241, %s244
    %p253 = scmp.eq.s32.totalorder %s21, 1
    %p254 = por %p252, %p253
    %p255 = scmp.ne.s32.totalorder %s244, %s245
    %p256 = scmp.eq.s32.totalorder %s21, 0
    %p257 = por %p255, %p256
    %p258 = scmp.ne.s32.totalorder %s244, %s245
    %p259 = scmp.eq.s32.totalorder %s22, 1
    %p260 = por %p258, %p259
    %p262 = scmp.ne.s32.totalorder %s245, %s261
    %p263 = scmp.eq.s32.totalorder %s22, 0
    %p264 = por %p262, %p263
    %p265 = scmp.le.s32.totalorder 1, %s16
    %p266 = scmp.lt.s32.totalorder %s16, 3
    %p267 = pnand %p265, %p266
    %p268 = pneg %p267
    // Predicated region
    $region9: #{nerf_forward.1} parent=5 // pred_check
      _
    $region10: #{nerf_forward.1} parent=5 // pred_check_branch
      %270 = sbr.rel (%p267) target = $region12
    $region11: #{nerf_forward.1} parent=5 // pred_region
      %s271 = ssub.s32 %s16, 1
      // Predicated region
      $region13: #{nerf_forward.1} parent=11 // pred_check
        %p272 = pneg %p63
      $region14: #{nerf_forward.1} parent=11 // pred_check_branch
        %274 = sbr.rel (%p272) target = $region16
      $region15: #{nerf_forward.1} parent=11 // pred_region
        _
      $region16: #{nerf_forward.1} parent=11 // pred_fallthru
        _
      // Predicated region
      $region17: #{nerf_forward.1} parent=11 // pred_check
        %p275 = pneg %p84
      $region18: #{nerf_forward.1} parent=11 // pred_check_branch
        %277 = sbr.rel (%p275) target = $region20
      $region19: #{nerf_forward.1} parent=11 // pred_region
        _
      $region20: #{nerf_forward.1} parent=11 // pred_fallthru
        _
      // Predicated region
      $region21: #{nerf_forward.1} parent=11 // pred_check
        %p278 = pneg %p105
      $region22: #{nerf_forward.1} parent=11 // pred_check_branch
        %280 = sbr.rel (%p278) target = $region24
      $region23: #{nerf_forward.1} parent=11 // pred_region
        _
      $region24: #{nerf_forward.1} parent=11 // pred_fallthru
        _
      // Predicated region
      $region25: #{nerf_forward.1} parent=11 // pred_check
        %p281 = pneg %p126
      $region26: #{nerf_forward.1} parent=11 // pred_check_branch
        %283 = sbr.rel (%p281) target = $region28
      $region27: #{nerf_forward.1} parent=11 // pred_region
        _
      $region28: #{nerf_forward.1} parent=11 // pred_fallthru
        _
      // Predicated region
      $region29: #{nerf_forward.1} parent=11 // pred_check
        %p284 = pneg %p147
      $region30: #{nerf_forward.1} parent=11 // pred_check_branch
        %286 = sbr.rel (%p284) target = $region32
      $region31: #{nerf_forward.1} parent=11 // pred_region
        _
      $region32: #{nerf_forward.1} parent=11 // pred_fallthru
        _
      // Predicated region
      $region33: #{nerf_forward.1} parent=11 // pred_check
        %p287 = pneg %p168
      $region34: #{nerf_forward.1} parent=11 // pred_check_branch
        %289 = sbr.rel (%p287) target = $region36
      $region35: #{nerf_forward.1} parent=11 // pred_region
        _
      $region36: #{nerf_forward.1} parent=11 // pred_fallthru
        _
      // Predicated region
      $region37: #{nerf_forward.1} parent=11 // pred_check
        %p290 = pneg %p189
      $region38: #{nerf_forward.1} parent=11 // pred_check_branch
        %292 = sbr.rel (%p290) target = $region40
      $region39: #{nerf_forward.1} parent=11 // pred_region
        _
      $region40: #{nerf_forward.1} parent=11 // pred_fallthru
        _
      // Predicated region
      $region41: #{nerf_forward.1} parent=11 // pred_check
        %p293 = pneg %p210
      $region42: #{nerf_forward.1} parent=11 // pred_check_branch
        %295 = sbr.rel (%p293) target = $region44
      $region43: #{nerf_forward.1} parent=11 // pred_region
        _
      $region44: #{nerf_forward.1} parent=11 // pred_fallthru
        _
      // Predicated region
      $region45: #{nerf_forward.1} parent=11 // pred_check
        %p296 = pneg %p231
      $region46: #{nerf_forward.1} parent=11 // pred_check_branch
        %298 = sbr.rel (%p296) target = $region48
      $region47: #{nerf_forward.1} parent=11 // pred_region
        _
      $region48: #{nerf_forward.1} parent=11 // pred_fallthru
        _
    $region12: #{nerf_forward.1} parent=5 // pred_fallthru
      _
    %p299 = scmp.lt.s32.totalorder %s16, 2
    // Predicated region
    $region49: #{nerf_forward.1} parent=5 // pred_check
      %p300 = pneg %p299
    $region50: #{nerf_forward.1} parent=5 // pred_check_branch
      %302 = sbr.rel (%p300) target = $region52
    $region51: #{nerf_forward.1} parent=5 // pred_region
      // Predicated region
      $region53: #{nerf_forward.1} parent=51 // pred_check
        %p303 = pneg %p36
      $region54: #{nerf_forward.1} parent=51 // pred_check_branch
        %305 = sbr.rel (%p303) target = $region56
      $region55: #{nerf_forward.1} parent=51 // pred_region
        %s306 = smul.u32 64, %s16
        %p307 = scmp.lt.s32.totalorder %s306, 127
        %s308 = scalar_select %p307, %s306, 127
        %s309 = smul.addr %s308, 8
        %s310 = scalar_lea.vmem %s0, %s309
        %s311 = smul.u32 64, %s16
      $region56: #{nerf_forward.1} parent=51 // pred_fallthru
        _
    $region52: #{nerf_forward.1} parent=5 // pred_fallthru
      _
    %p312 = scmp.le.s32.totalorder 1, %s16
    %p313 = scmp.lt.s32.totalorder %s16, 3
    %p314 = pnand %p312, %p313
    %p315 = pneg %p314
    // Predicated region
    $region57: #{nerf_forward.1} parent=5 // pred_check
      _
    $region58: #{nerf_forward.1} parent=5 // pred_check_branch
      %317 = sbr.rel (%p314) target = $region60
    $region59: #{nerf_forward.1} parent=5 // pred_region
      %s318 = ssub.s32 %s16, 1
      %s319 = smul.u32 64, %s21
      %p320 = scmp.lt.s32.totalorder %s319, 127
      %s321 = scalar_select %p320, %s319, 127
      %s322 = smul.addr %s321, 8
      %s323 = scalar_lea.vmem %s0, %s322
      %p324 = pneg %p42
      %p325 = pneg %p39
      %p326 = pneg %p63
      %p327 = pneg %p60
      %p328 = pneg %p84
      %p329 = pneg %p81
      %p330 = pneg %p105
      %p331 = pneg %p102
      %p332 = pneg %p126
      %p333 = pneg %p123
      %p334 = pneg %p147
      %p335 = pneg %p144
      %p336 = pneg %p168
      %p337 = pneg %p165
      %p338 = pneg %p189
      %p339 = pneg %p186
      %p340 = pneg %p210
      %p341 = pneg %p207
      %p342 = pneg %p231
      %p343 = pneg %p228
      %p344 = pneg %p257
      %p345 = pneg %p254
      %s346 = smul.u32 64, %s21
      %p347 = scmp.lt.s32.totalorder %s346, 127
      %s348 = scalar_select %p347, %s346, 127
      %s349 = smul.addr %s348, 8
      %s350 = scalar_lea.vmem %s10, %s349
      %s351 = smul.u32 64, %s21
      %p352 = scmp.lt.s32.totalorder %s351, 127
      %s353 = scalar_select %p352, %s351, 127
      %s354 = smul.addr %s353, 8
      %s355 = scalar_lea.vmem %s0, %s354
      %s356 = smul.u32 64, %s21
      %s357 = smul.u32 64, %s21
      %p358 = scmp.lt.s32.totalorder %s357, 127
      %s359 = scalar_select %p358, %s357, 127
      %s360 = smul.addr %s359, 8
      %s361 = scalar_lea.vmem %s10, %s360
      %s362 = smul.u32 64, %s21
      %v364 = vld [vmem:[%s355] sm:$0xff]
      %v365 = vld [vmem:[%s355 + $0x8] sm:$0xff]
      %v366 = vld [vmem:[%s355 + $0x10] sm:$0xff]
      %v367 = vld [vmem:[%s355 + $0x18] sm:$0xff]
      %v368 = vld [vmem:[%s355 + $0x20] sm:$0xff]
      %v369 = vld [vmem:[%s355 + $0x28] sm:$0xff]
      %v370 = vld [vmem:[%s355 + $0x30] sm:$0xff]
      %v371 = vld [vmem:[%s355 + $0x38] sm:$0xff]
      %v372 = vld [vmem:[%s355 + $0x40] sm:$0xff]
      %v373 = vld [vmem:[%s355 + $0x48] sm:$0xff]
      %v374 = vld [vmem:[%s355 + $0x50] sm:$0xff]
      %v375 = vld [vmem:[%s355 + $0x58] sm:$0xff]
      %v376 = vld [vmem:[%s355 + $0x60] sm:$0xff]
      %v377 = vld [vmem:[%s355 + $0x68] sm:$0xff]
      %v378 = vld [vmem:[%s355 + $0x70] sm:$0xff]
      %v379 = vld [vmem:[%s355 + $0x78] sm:$0xff]
      %v380 = vld [vmem:[%s355 + $0x80] sm:$0xff]
      %v381 = vld [vmem:[%s355 + $0x88] sm:$0xff]
      %v382 = vld [vmem:[%s355 + $0x90] sm:$0xff]
      %v383 = vld [vmem:[%s355 + $0x98] sm:$0xff]
      %v384 = vld [vmem:[%s355 + $0xa0] sm:$0xff]
      %v385 = vld [vmem:[%s355 + $0xa8] sm:$0xff]
      %v386 = vld [vmem:[%s355 + $0xb0] sm:$0xff]
      %v387 = vld [vmem:[%s355 + $0xb8] sm:$0xff]
      %v388 = vld [vmem:[%s355 + $0xc0] sm:$0xff]
      %v389 = vld [vmem:[%s355 + $0xc8] sm:$0xff]
      %v390 = vld [vmem:[%s355 + $0xd0] sm:$0xff]
      %v391 = vld [vmem:[%s355 + $0xd8] sm:$0xff]
      %v392 = vld [vmem:[%s355 + $0xe0] sm:$0xff]
      %v393 = vld [vmem:[%s355 + $0xe8] sm:$0xff]
      %v394 = vld [vmem:[%s355 + $0xf0] sm:$0xff]
      %v395 = vld [vmem:[%s355 + $0xf8] sm:$0xff]
      %v396 = vld [vmem:[%s355 + $0x100] sm:$0xff]
      %v397 = vld [vmem:[%s355 + $0x108] sm:$0xff]
      %v398 = vld [vmem:[%s355 + $0x110] sm:$0xff]
      %v399 = vld [vmem:[%s355 + $0x118] sm:$0xff]
      %v400 = vld [vmem:[%s355 + $0x120] sm:$0xff]
      %v401 = vld [vmem:[%s355 + $0x128] sm:$0xff]
      %v402 = vld [vmem:[%s355 + $0x130] sm:$0xff]
      %v403 = vld [vmem:[%s355 + $0x138] sm:$0xff]
      %v404 = vld [vmem:[%s355 + $0x140] sm:$0xff]
      %v405 = vld [vmem:[%s355 + $0x148] sm:$0xff]
      %v406 = vld [vmem:[%s355 + $0x150] sm:$0xff]
      %v407 = vld [vmem:[%s355 + $0x158] sm:$0xff]
      %v408 = vld [vmem:[%s355 + $0x160] sm:$0xff]
      %v409 = vld [vmem:[%s355 + $0x168] sm:$0xff]
      %v410 = vld [vmem:[%s355 + $0x170] sm:$0xff]
      %v411 = vld [vmem:[%s355 + $0x178] sm:$0xff]
      %v412 = vld [vmem:[%s355 + $0x180] sm:$0xff]
      %v413 = vld [vmem:[%s355 + $0x188] sm:$0xff]
      %v414 = vld [vmem:[%s355 + $0x190] sm:$0xff]
      %v415 = vld [vmem:[%s355 + $0x198] sm:$0xff]
      %v416 = vld [vmem:[%s355 + $0x1a0] sm:$0xff]
      %v417 = vld [vmem:[%s355 + $0x1a8] sm:$0xff]
      %v418 = vld [vmem:[%s355 + $0x1b0] sm:$0xff]
      %v419 = vld [vmem:[%s355 + $0x1b8] sm:$0xff]
      %v420 = vld [vmem:[%s355 + $0x1c0] sm:$0xff]
      %v421 = vld [vmem:[%s355 + $0x1c8] sm:$0xff]
      %v422 = vld [vmem:[%s355 + $0x1d0] sm:$0xff]
      %v423 = vld [vmem:[%s355 + $0x1d8] sm:$0xff]
      %v424 = vld [vmem:[%s355 + $0x1e0] sm:$0xff]
      %v425 = vld [vmem:[%s355 + $0x1e8] sm:$0xff]
      %v426 = vld [vmem:[%s355 + $0x1f0] sm:$0xff]
      %v427 = vld [vmem:[%s355 + $0x1f8] sm:$0xff]
      %v428 = vld [vmem:[%s1] sm:$0xff]
      %v429 = vld [vmem:[%s1 + $0x8] sm:$0xff]
      %v430 = vld [vmem:[%s1 + $0x10] sm:$0xff]
      %vm431 = vcmask 64512
      %v433 = vsel %vm431, %v364, 0
      %v436 = vsel %vm431, %v365, 0
      %v439 = vsel %vm431, %v366, 0
      %v442 = vsel %vm431, %v367, 0
      %v445 = vsel %vm431, %v368, 0
      %v448 = vsel %vm431, %v369, 0
      %v451 = vsel %vm431, %v370, 0
      %v454 = vsel %vm431, %v371, 0
      %v457 = vsel %vm431, %v372, 0
      %v460 = vsel %vm431, %v373, 0
      %v463 = vsel %vm431, %v374, 0
      %v466 = vsel %vm431, %v375, 0
      %v469 = vsel %vm431, %v376, 0
      %v472 = vsel %vm431, %v377, 0
      %v475 = vsel %vm431, %v378, 0
      %v478 = vsel %vm431, %v379, 0
      %v481 = vsel %vm431, %v380, 0
      %v484 = vsel %vm431, %v381, 0
      %v487 = vsel %vm431, %v382, 0
      %v490 = vsel %vm431, %v383, 0
      %v493 = vsel %vm431, %v384, 0
      %v496 = vsel %vm431, %v385, 0
      %v499 = vsel %vm431, %v386, 0
      %v502 = vsel %vm431, %v387, 0
      %v505 = vsel %vm431, %v388, 0
      %v508 = vsel %vm431, %v389, 0
      %v511 = vsel %vm431, %v390, 0
      %v514 = vsel %vm431, %v391, 0
      %v517 = vsel %vm431, %v392, 0
      %v520 = vsel %vm431, %v393, 0
      %v523 = vsel %vm431, %v394, 0
      %v526 = vsel %vm431, %v395, 0
      %v529 = vsel %vm431, %v396, 0
      %v532 = vsel %vm431, %v397, 0
      %v535 = vsel %vm431, %v398, 0
      %v538 = vsel %vm431, %v399, 0
      %v541 = vsel %vm431, %v400, 0
      %v544 = vsel %vm431, %v401, 0
      %v547 = vsel %vm431, %v402, 0
      %v550 = vsel %vm431, %v403, 0
      %v553 = vsel %vm431, %v404, 0
      %v556 = vsel %vm431, %v405, 0
      %v559 = vsel %vm431, %v406, 0
      %v562 = vsel %vm431, %v407, 0
      %v565 = vsel %vm431, %v408, 0
      %v568 = vsel %vm431, %v409, 0
      %v571 = vsel %vm431, %v410, 0
      %v574 = vsel %vm431, %v411, 0
      %v577 = vsel %vm431, %v412, 0
      %v580 = vsel %vm431, %v413, 0
      %v583 = vsel %vm431, %v414, 0
      %v586 = vsel %vm431, %v415, 0
      %v589 = vsel %vm431, %v416, 0
      %v592 = vsel %vm431, %v417, 0
      %v595 = vsel %vm431, %v418, 0
      %v598 = vsel %vm431, %v419, 0
      %v601 = vsel %vm431, %v420, 0
      %v604 = vsel %vm431, %v421, 0
      %v607 = vsel %vm431, %v422, 0
      %v610 = vsel %vm431, %v423, 0
      %v613 = vsel %vm431, %v424, 0
      %v616 = vsel %vm431, %v425, 0
      %v619 = vsel %vm431, %v426, 0
      %v622 = vsel %vm431, %v427, 0
      %624 = vmatprep.subr.mxu0 %v429
      %625 = vmatpush1.msra.mxu0 %v428
      %626 = vmatprep.subr.mxu0 0.0
      %627 = vmatpush1.msra.mxu0 0.0
      %628 = vmatprep.subr.mxu0 0.0
      %629 = vmatpush1.msra.mxu0 0.0
      %630 = vmatprep.subr.mxu0 0.0
      %631 = vmatpush1.msra.mxu0 0.0
      %632 = vmatprep.subr.mxu0 0.0
      %633 = vmatpush1.msra.mxu0 0.0
      %634 = vmatprep.subr.mxu0 0.0
      %635 = vmatpush1.msra.mxu0 0.0
      %636 = vmatprep.subr.mxu0 0.0
      %637 = vmatpush1.msra.mxu0 0.0
      %638 = vmatprep.subr.mxu0 0.0
      %639 = vmatpush1.msra.mxu0 0.0
      %640 = vmatprep.subr.mxu0 0.0
      %641 = vmatpush1.msra.mxu0 0.0
      %642 = vmatprep.subr.mxu0 0.0
      %643 = vmatpush1.msra.mxu0 0.0
      %644 = vmatprep.subr.mxu0 0.0
      %645 = vmatpush1.msra.mxu0 0.0
      %646 = vmatprep.subr.mxu0 0.0
      %647 = vmatpush1.msra.mxu0 0.0
      %648 = vmatprep.subr.mxu0 0.0
      %649 = vmatpush1.msra.mxu0 0.0
      %650 = vmatprep.subr.mxu0 0.0
      %651 = vmatpush1.msra.mxu0 0.0
      %652 = vmatprep.subr.mxu0 0.0
      %653 = vmatpush1.msra.mxu0 0.0
      %654 = vmatprep.subr.mxu0 0.0
      %655 = vmatpush1.msra.mxu0 0.0
      %656 = vmatprep.subr.mxu0 0.0
      %657 = vmatpush1.msra.mxu0 0.0
      %658 = vmatprep.subr.mxu0 0.0
      %659 = vmatpush1.msra.mxu0 0.0
      %660 = vmatprep.subr.mxu0 0.0
      %661 = vmatpush1.msra.mxu0 0.0
      %662 = vmatprep.subr.mxu0 0.0
      %663 = vmatpush1.msra.mxu0 0.0
      %664 = vmatprep.subr.mxu0 0.0
      %665 = vmatpush1.msra.mxu0 0.0
      %666 = vmatprep.subr.mxu0 0.0
      %667 = vmatpush1.msra.mxu0 0.0
      %668 = vmatprep.subr.mxu0 0.0
      %669 = vmatpush1.msra.mxu0 0.0
      %670 = vmatprep.subr.mxu0 0.0
      %671 = vmatpush1.msra.mxu0 0.0
      %672 = vmatprep.subr.mxu0 0.0
      %673 = vmatpush1.msra.mxu0 0.0
      %674 = vmatprep.subr.mxu0 0.0
      %675 = vmatpush1.msra.mxu0 0.0
      %676 = vmatprep.subr.mxu0 0.0
      %677 = vmatpush1.msra.mxu0 0.0
      %678 = vmatprep.subr.mxu0 0.0
      %679 = vmatpush1.msra.mxu0 0.0
      %680 = vmatprep.subr.mxu0 0.0
      %681 = vmatpush1.msra.mxu0 0.0
      %682 = vmatprep.subr.mxu0 0.0
      %683 = vmatpush1.msra.mxu0 0.0
      %684 = vmatprep.subr.mxu0 0.0
      %685 = vmatpush1.msra.mxu0 0.0
      %686 = vmatprep.subr.mxu0 0.0
      %687 = vmatpush1.msra.mxu0 0.0
      %688 = vmatprep.mubr.f32.mxu0 0.0
      %689 = vmatmul.mubr.f32.gmra.mrb[0].mxu0 %v433
      %v690 = vpop.f32.mrb[0].mxu0
      %v691 = vadd.f32 0.0, %v690
      %v692 = vpop.f32.mrb[0].mxu0
      %v693 = vadd.f32 0.0, %v692
      %694 = vmatprep.mubr.f32.mxu0 0.0
      %695 = vmatmul.mubr.f32.gmra.mrb[0].mxu0 %v436
      %v696 = vpop.f32.mrb[0].mxu0
      %v697 = vadd.f32 0.0, %v696
      %v698 = vpop.f32.mrb[0].mxu0
      %v699 = vadd.f32 0.0, %v698
      %700 = vmatprep.mubr.f32.mxu0 0.0
      %701 = vmatmul.mubr.f32.gmra.mrb[0].mxu0 %v439
      %v702 = vpop.f32.mrb[0].mxu0
      %v703 = vadd.f32 0.0, %v702
      %v704 = vpop.f32.mrb[0].mxu0
      %v705 = vadd.f32 0.0, %v704
      %706 = vmatprep.mubr.f32.mxu0 0.0
      %707 = vmatmul.mubr.f32.gmra.mrb[0].mxu0 %v442
      %v708 = vpop.f32.mrb[0].mxu0
      %v709 = vadd.f32 0.0, %v708
      %v710 = vpop.f32.mrb[0].mxu0
      %v711 = vadd.f32 0.0, %v710
      %712 = vmatprep.mubr.f32.mxu0 0.0
      %713 = vmatmul.mubr.f32.gmra.mrb[0].mxu0 %v445
      %v714 = vpop.f32.mrb[0].mxu0
      %v715 = vadd.f32 0.0, %v714
      %v716 = vpop.f32.mrb[0].mxu0
      %v717 = vadd.f32 0.0, %v716
      %718 = vmatprep.mubr.f32.mxu0 0.0
      %719 = vmatmul.mubr.f32.gmra.mrb[0].mxu0 %v448
      %v720 = vpop.f32.mrb[0].mxu0
      %v721 = vadd.f32 0.0, %v720
      %v722 = vpop.f32.mrb[0].mxu0
      %v723 = vadd.f32 0.0, %v722
      %724 = vmatprep.mubr.f32.mxu0 0.0
      %725 = vmatmul.mubr.f32.gmra.mrb[0].mxu0 %v451
      %v726 = vpop.f32.mrb[0].mxu0
      %v727 = vadd.f32 0.0, %v726
      %v728 = vpop.f32.mrb[0].mxu0
      %v729 = vadd.f32 0.0, %v728
      %730 = vmatprep.mubr.f32.mxu0 0.0
      %731 = vmatmul.mubr.f32.gmra.mrb[0].mxu0 %v454
      %v732 = vpop.f32.mrb[0].mxu0
      %v733 = vadd.f32 0.0, %v732
      %v734 = vpop.f32.mrb[0].mxu0
      %v735 = vadd.f32 0.0, %v734
      %736 = vmatprep.mubr.f32.mxu0 0.0
      %737 = vmatmul.mubr.f32.gmra.mrb[0].mxu0 %v457
      %v738 = vpop.f32.mrb[0].mxu0
      %v739 = vadd.f32 0.0, %v738
      %v740 = vpop.f32.mrb[0].mxu0
      %v741 = vadd.f32 0.0, %v740
      %742 = vmatprep.mubr.f32.mxu0 0.0
      %743 = vmatmul.mubr.f32.gmra.mrb[0].mxu0 %v460
      %v744 = vpop.f32.mrb[0].mxu0
      %v745 = vadd.f32 0.0, %v744
      %v746 = vpop.f32.mrb[0].mxu0
      %v747 = vadd.f32 0.0, %v746
      %748 = vmatprep.mubr.f32.mxu0 0.0
      %749 = vmatmul.mubr.f32.gmra.mrb[0].mxu0 %v463
      %v750 = vpop.f32.mrb[0].mxu0
      %v751 = vadd.f32 0.0, %v750
      %v752 = vpop.f32.mrb[0].mxu0
      %v753 = vadd.f32 0.0, %v752
      %754 = vmatprep.mubr.f32.mxu0 0.0
      %755 = vmatmul.mubr.f32.gmra.mrb[0].mxu0 %v466
      %v756 = vpop.f32.mrb[0].mxu0
      %v757 = vadd.f32 0.0, %v756
      %v758 = vpop.f32.mrb[0].mxu0
      %v759 = vadd.f32 0.0, %v758
      %760 = vmatprep.mubr.f32.mxu0 0.0
      %761 = vmatmul.mubr.f32.gmra.mrb[0].mxu0 %v469
      %v762 = vpop.f32.mrb[0].mxu0
      %v763 = vadd.f32 0.0, %v762
      %v764 = vpop.f32.mrb[0].mxu0
      %v765 = vadd.f32 0.0, %v764
      %766 = vmatprep.mubr.f32.mxu0 0.0
      %767 = vmatmul.mubr.f32.gmra.mrb[0].mxu0 %v472
      %v768 = vpop.f32.mrb[0].mxu0
      %v769 = vadd.f32 0.0, %v768
      %v770 = vpop.f32.mrb[0].mxu0
      %v771 = vadd.f32 0.0, %v770
      %772 = vmatprep.mubr.f32.mxu0 0.0
      %773 = vmatmul.mubr.f32.gmra.mrb[0].mxu0 %v475
      %v774 = vpop.f32.mrb[0].mxu0
      %v775 = vadd.f32 0.0, %v774
      %v776 = vpop.f32.mrb[0].mxu0
      %v777 = vadd.f32 0.0, %v776
      %778 = vmatprep.mubr.f32.mxu0 0.0
      %779 = vmatmul.mubr.f32.gmra.mrb[0].mxu0 %v478
      %v780 = vpop.f32.mrb[0].mxu0
      %v781 = vadd.f32 0.0, %v780
      %v782 = vpop.f32.mrb[0].mxu0
      %v783 = vadd.f32 0.0, %v782
      %784 = vmatprep.mubr.f32.mxu0 0.0
      %785 = vmatmul.mubr.f32.gmra.mrb[0].mxu0 %v481
      %v786 = vpop.f32.mrb[0].mxu0
      %v787 = vadd.f32 0.0, %v786
      %v788 = vpop.f32.mrb[0].mxu0
      %v789 = vadd.f32 0.0, %v788
      %790 = vmatprep.mubr.f32.mxu0 0.0
      %791 = vmatmul.mubr.f32.gmra.mrb[0].mxu0 %v484
      %v792 = vpop.f32.mrb[0].mxu0
      %v793 = vadd.f32 0.0, %v792
      %v794 = vpop.f32.mrb[0].mxu0
      %v795 = vadd.f32 0.0, %v794
      %796 = vmatprep.mubr.f32.mxu0 0.0
      %797 = vmatmul.mubr.f32.gmra.mrb[0].mxu0 %v487
      %v798 = vpop.f32.mrb[0].mxu0
      %v799 = vadd.f32 0.0, %v798
      %v800 = vpop.f32.mrb[0].mxu0
      %v801 = vadd.f32 0.0, %v800
      %802 = vmatprep.mubr.f32.mxu0 0.0
      %803 = vmatmul.mubr.f32.gmra.mrb[0].mxu0 %v490
      %v804 = vpop.f32.mrb[0].mxu0
      %v805 = vadd.f32 0.0, %v804
      %v806 = vpop.f32.mrb[0].mxu0
      %v807 = vadd.f32 0.0, %v806
      %808 = vmatprep.mubr.f32.mxu0 0.0
      %809 = vmatmul.mubr.f32.gmra.mrb[0].mxu0 %v493
      %v810 = vpop.f32.mrb[0].mxu0
      %v811 = vadd.f32 0.0, %v810
      %v812 = vpop.f32.mrb[0].mxu0
      %v813 = vadd.f32 0.0, %v812
      %814 = vmatprep.mubr.f32.mxu0 0.0
      %815 = vmatmul.mubr.f32.gmra.mrb[0].mxu0 %v496
      %v816 = vpop.f32.mrb[0].mxu0
      %v817 = vadd.f32 0.0, %v816
      %v818 = vpop.f32.mrb[0].mxu0
      %v819 = vadd.f32 0.0, %v818
      %820 = vmatprep.mubr.f32.mxu0 0.0
      %821 = vmatmul.mubr.f32.gmra.mrb[0].mxu0 %v499
      %v822 = vpop.f32.mrb[0].mxu0
      %v823 = vadd.f32 0.0, %v822
      %v824 = vpop.f32.mrb[0].mxu0
      %v825 = vadd.f32 0.0, %v824
      %826 = vmatprep.mubr.f32.mxu0 0.0
      %827 = vmatmul.mubr.f32.gmra.mrb[0].mxu0 %v502
      %v828 = vpop.f32.mrb[0].mxu0
      %v829 = vadd.f32 0.0, %v828
      %v830 = vpop.f32.mrb[0].mxu0
      %v831 = vadd.f32 0.0, %v830
      %832 = vmatprep.mubr.f32.mxu0 0.0
      %833 = vmatmul.mubr.f32.gmra.mrb[0].mxu0 %v505
      %v834 = vpop.f32.mrb[0].mxu0
      %v835 = vadd.f32 0.0, %v834
      %v836 = vpop.f32.mrb[0].mxu0
      %v837 = vadd.f32 0.0, %v836
      %838 = vmatprep.mubr.f32.mxu0 0.0
      %839 = vmatmul.mubr.f32.gmra.mrb[0].mxu0 %v508
      %v840 = vpop.f32.mrb[0].mxu0
      %v841 = vadd.f32 0.0, %v840
      %v842 = vpop.f32.mrb[0].mxu0
      %v843 = vadd.f32 0.0, %v842
      %844 = vmatprep.mubr.f32.mxu0 0.0
      %845 = vmatmul.mubr.f32.gmra.mrb[0].mxu0 %v511
      %v846 = vpop.f32.mrb[0].mxu0
      %v847 = vadd.f32 0.0, %v846
      %v848 = vpop.f32.mrb[0].mxu0
      %v849 = vadd.f32 0.0, %v848
      %850 = vmatprep.mubr.f32.mxu0 0.0
      %851 = vmatmul.mubr.f32.gmra.mrb[0].mxu0 %v514
      %v852 = vpop.f32.mrb[0].mxu0
      %v853 = vadd.f32 0.0, %v852
      %v854 = vpop.f32.mrb[0].mxu0
      %v855 = vadd.f32 0.0, %v854
      %856 = vmatprep.mubr.f32.mxu0 0.0
      %857 = vmatmul.mubr.f32.gmra.mrb[0].mxu0 %v517
      %v858 = vpop.f32.mrb[0].mxu0
      %v859 = vadd.f32 0.0, %v858
      %v860 = vpop.f32.mrb[0].mxu0
      %v861 = vadd.f32 0.0, %v860
      %862 = vmatprep.mubr.f32.mxu0 0.0
      %863 = vmatmul.mubr.f32.gmra.mrb[0].mxu0 %v520
      %v864 = vpop.f32.mrb[0].mxu0
      %v865 = vadd.f32 0.0, %v864
      %v866 = vpop.f32.mrb[0].mxu0
      %v867 = vadd.f32 0.0, %v866
      %868 = vmatprep.mubr.f32.mxu0 0.0
      %869 = vmatmul.mubr.f32.gmra.mrb[0].mxu0 %v523
      %v870 = vpop.f32.mrb[0].mxu0
      %v871 = vadd.f32 0.0, %v870
      %v872 = vpop.f32.mrb[0].mxu0
      %v873 = vadd.f32 0.0, %v872
      %874 = vmatprep.mubr.f32.mxu0 0.0
      %875 = vmatmul.mubr.f32.gmra.mrb[0].mxu0 %v526
      %v876 = vpop.f32.mrb[0].mxu0
      %v877 = vadd.f32 0.0, %v876
      %v878 = vpop.f32.mrb[0].mxu0
      %v879 = vadd.f32 0.0, %v878
      %880 = vmatprep.mubr.f32.mxu0 0.0
      %881 = vmatmul.mubr.f32.gmra.mrb[0].mxu0 %v529
      %v882 = vpop.f32.mrb[0].mxu0
      %v883 = vadd.f32 0.0, %v882
      %v884 = vpop.f32.mrb[0].mxu0
      %v885 = vadd.f32 0.0, %v884
      %886 = vmatprep.mubr.f32.mxu0 0.0
      %887 = vmatmul.mubr.f32.gmra.mrb[0].mxu0 %v532
      %v888 = vpop.f32.mrb[0].mxu0
      %v889 = vadd.f32 0.0, %v888
      %v890 = vpop.f32.mrb[0].mxu0
      %v891 = vadd.f32 0.0, %v890
      %892 = vmatprep.mubr.f32.mxu0 0.0
      %893 = vmatmul.mubr.f32.gmra.mrb[0].mxu0 %v535
      %v894 = vpop.f32.mrb[0].mxu0
      %v895 = vadd.f32 0.0, %v894
      %v896 = vpop.f32.mrb[0].mxu0
      %v897 = vadd.f32 0.0, %v896
      %898 = vmatprep.mubr.f32.mxu0 0.0
      %899 = vmatmul.mubr.f32.gmra.mrb[0].mxu0 %v538
      %v900 = vpop.f32.mrb[0].mxu0
      %v901 = vadd.f32 0.0, %v900
      %v902 = vpop.f32.mrb[0].mxu0
      %v903 = vadd.f32 0.0, %v902
      %904 = vmatprep.mubr.f32.mxu0 0.0
      %905 = vmatmul.mubr.f32.gmra.mrb[0].mxu0 %v541
      %v906 = vpop.f32.mrb[0].mxu0
      %v907 = vadd.f32 0.0, %v906
      %v908 = vpop.f32.mrb[0].mxu0
      %v909 = vadd.f32 0.0, %v908
      %910 = vmatprep.mubr.f32.mxu0 0.0
      %911 = vmatmul.mubr.f32.gmra.mrb[0].mxu0 %v544
      %v912 = vpop.f32.mrb[0].mxu0
      %v913 = vadd.f32 0.0, %v912
      %v914 = vpop.f32.mrb[0].mxu0
      %v915 = vadd.f32 0.0, %v914
      %916 = vmatprep.mubr.f32.mxu0 0.0
      %917 = vmatmul.mubr.f32.gmra.mrb[0].mxu0 %v547
      %v918 = vpop.f32.mrb[0].mxu0
      %v919 = vadd.f32 0.0, %v918
      %v920 = vpop.f32.mrb[0].mxu0
      %v921 = vadd.f32 0.0, %v920
      %922 = vmatprep.mubr.f32.mxu0 0.0
      %923 = vmatmul.mubr.f32.gmra.mrb[0].mxu0 %v550
      %v924 = vpop.f32.mrb[0].mxu0
      %v925 = vadd.f32 0.0, %v924
      %v926 = vpop.f32.mrb[0].mxu0
      %v927 = vadd.f32 0.0, %v926
      %928 = vmatprep.mubr.f32.mxu0 0.0
      %929 = vmatmul.mubr.f32.gmra.mrb[0].mxu0 %v553
      %v930 = vpop.f32.mrb[0].mxu0
      %v931 = vadd.f32 0.0, %v930
      %v932 = vpop.f32.mrb[0].mxu0
      %v933 = vadd.f32 0.0, %v932
      %934 = vmatprep.mubr.f32.mxu0 0.0
      %935 = vmatmul.mubr.f32.gmra.mrb[0].mxu0 %v556
      %v936 = vpop.f32.mrb[0].mxu0
      %v937 = vadd.f32 0.0, %v936
      %v938 = vpop.f32.mrb[0].mxu0
      %v939 = vadd.f32 0.0, %v938
      %940 = vmatprep.mubr.f32.mxu0 0.0
      %941 = vmatmul.mubr.f32.gmra.mrb[0].mxu0 %v559
      %v942 = vpop.f32.mrb[0].mxu0
      %v943 = vadd.f32 0.0, %v942
      %v944 = vpop.f32.mrb[0].mxu0
      %v945 = vadd.f32 0.0, %v944
      %946 = vmatprep.mubr.f32.mxu0 0.0
      %947 = vmatmul.mubr.f32.gmra.mrb[0].mxu0 %v562
      %v948 = vpop.f32.mrb[0].mxu0
      %v949 = vadd.f32 0.0, %v948
      %v950 = vpop.f32.mrb[0].mxu0
      %v951 = vadd.f32 0.0, %v950
      %952 = vmatprep.mubr.f32.mxu0 0.0
      %953 = vmatmul.mubr.f32.gmra.mrb[0].mxu0 %v565
      %v954 = vpop.f32.mrb[0].mxu0
      %v955 = vadd.f32 0.0, %v954
      %v956 = vpop.f32.mrb[0].mxu0
      %v957 = vadd.f32 0.0, %v956
      %958 = vmatprep.mubr.f32.mxu0 0.0
      %959 = vmatmul.mubr.f32.gmra.mrb[0].mxu0 %v568
      %v960 = vpop.f32.mrb[0].mxu0
      %v961 = vadd.f32 0.0, %v960
      %v962 = vpop.f32.mrb[0].mxu0
      %v963 = vadd.f32 0.0, %v962
      %964 = vmatprep.mubr.f32.mxu0 0.0
      %965 = vmatmul.mubr.f32.gmra.mrb[0].mxu0 %v571
      %v966 = vpop.f32.mrb[0].mxu0
      %v967 = vadd.f32 0.0, %v966
      %v968 = vpop.f32.mrb[0].mxu0
      %v969 = vadd.f32 0.0, %v968
      %970 = vmatprep.mubr.f32.mxu0 0.0
      %971 = vmatmul.mubr.f32.gmra.mrb[0].mxu0 %v574
      %v972 = vpop.f32.mrb[0].mxu0
      %v973 = vadd.f32 0.0, %v972
      %v974 = vpop.f32.mrb[0].mxu0
      %v975 = vadd.f32 0.0, %v974
      %976 = vmatprep.mubr.f32.mxu0 0.0
      %977 = vmatmul.mubr.f32.gmra.mrb[0].mxu0 %v577
      %v978 = vpop.f32.mrb[0].mxu0
      %v979 = vadd.f32 0.0, %v978
      %v980 = vpop.f32.mrb[0].mxu0
      %v981 = vadd.f32 0.0, %v980
      %982 = vmatprep.mubr.f32.mxu0 0.0
      %983 = vmatmul.mubr.f32.gmra.mrb[0].mxu0 %v580
      %v984 = vpop.f32.mrb[0].mxu0
      %v985 = vadd.f32 0.0, %v984
      %v986 = vpop.f32.mrb[0].mxu0
      %v987 = vadd.f32 0.0, %v986
      %988 = vmatprep.mubr.f32.mxu0 0.0
      %989 = vmatmul.mubr.f32.gmra.mrb[0].mxu0 %v583
      %v990 = vpop.f32.mrb[0].mxu0
      %v991 = vadd.f32 0.0, %v990
      %v992 = vpop.f32.mrb[0].mxu0
      %v993 = vadd.f32 0.0, %v992
      %994 = vmatprep.mubr.f32.mxu0 0.0
      %995 = vmatmul.mubr.f32.gmra.mrb[0].mxu0 %v586
      %v996 = vpop.f32.mrb[0].mxu0
      %v997 = vadd.f32 0.0, %v996
      %v998 = vpop.f32.mrb[0].mxu0
      %v999 = vadd.f32 0.0, %v998
      %1000 = vmatprep.mubr.f32.mxu0 0.0
      %1001 = vmatmul.mubr.f32.gmra.mrb[0].mxu0 %v589
      %v1002 = vpop.f32.mrb[0].mxu0
      %v1003 = vadd.f32 0.0, %v1002
      %v1004 = vpop.f32.mrb[0].mxu0
      %v1005 = vadd.f32 0.0, %v1004
      %1006 = vmatprep.mubr.f32.mxu0 0.0
      %1007 = vmatmul.mubr.f32.gmra.mrb[0].mxu0 %v592
      %v1008 = vpop.f32.mrb[0].mxu0
      %v1009 = vadd.f32 0.0, %v1008
      %v1010 = vpop.f32.mrb[0].mxu0
      %v1011 = vadd.f32 0.0, %v1010
      %1012 = vmatprep.mubr.f32.mxu0 0.0
      %1013 = vmatmul.mubr.f32.gmra.mrb[0].mxu0 %v595
      %v1014 = vpop.f32.mrb[0].mxu0
      %v1015 = vadd.f32 0.0, %v1014
      %v1016 = vpop.f32.mrb[0].mxu0
      %v1017 = vadd.f32 0.0, %v1016
      %1018 = vmatprep.mubr.f32.mxu0 0.0
      %1019 = vmatmul.mubr.f32.gmra.mrb[0].mxu0 %v598
      %v1020 = vpop.f32.mrb[0].mxu0
      %v1021 = vadd.f32 0.0, %v1020
      %v1022 = vpop.f32.mrb[0].mxu0
      %v1023 = vadd.f32 0.0, %v1022
      %1024 = vmatprep.mubr.f32.mxu0 0.0
      %1025 = vmatmul.mubr.f32.gmra.mrb[0].mxu0 %v601
      %v1026 = vpop.f32.mrb[0].mxu0
      %v1027 = vadd.f32 0.0, %v1026
      %v1028 = vpop.f32.mrb[0].mxu0
      %v1029 = vadd.f32 0.0, %v1028
      %1030 = vmatprep.mubr.f32.mxu0 0.0
      %1031 = vmatmul.mubr.f32.gmra.mrb[0].mxu0 %v604
      %v1032 = vpop.f32.mrb[0].mxu0
      %v1033 = vadd.f32 0.0, %v1032
      %v1034 = vpop.f32.mrb[0].mxu0
      %v1035 = vadd.f32 0.0, %v1034
      %1036 = vmatprep.mubr.f32.mxu0 0.0
      %1037 = vmatmul.mubr.f32.gmra.mrb[0].mxu0 %v607
      %v1038 = vpop.f32.mrb[0].mxu0
      %v1039 = vadd.f32 0.0, %v1038
      %v1040 = vpop.f32.mrb[0].mxu0
      %v1041 = vadd.f32 0.0, %v1040
      %1042 = vmatprep.mubr.f32.mxu0 0.0
      %1043 = vmatmul.mubr.f32.gmra.mrb[0].mxu0 %v610
      %v1044 = vpop.f32.mrb[0].mxu0
      %v1045 = vadd.f32 0.0, %v1044
      %v1046 = vpop.f32.mrb[0].mxu0
      %v1047 = vadd.f32 0.0, %v1046
      %1048 = vmatprep.mubr.f32.mxu0 0.0
      %1049 = vmatmul.mubr.f32.gmra.mrb[0].mxu0 %v613
      %v1050 = vpop.f32.mrb[0].mxu0
      %v1051 = vadd.f32 0.0, %v1050
      %v1052 = vpop.f32.mrb[0].mxu0
      %v1053 = vadd.f32 0.0, %v1052
      %1054 = vmatprep.mubr.f32.mxu0 0.0
      %1055 = vmatmul.mubr.f32.gmra.mrb[0].mxu0 %v616
      %v1056 = vpop.f32.mrb[0].mxu0
      %v1057 = vadd.f32 0.0, %v1056
      %v1058 = vpop.f32.mrb[0].mxu0
      %v1059 = vadd.f32 0.0, %v1058
      %1060 = vmatprep.mubr.f32.mxu0 0.0
      %1061 = vmatmul.mubr.f32.gmra.mrb[0].mxu0 %v619
      %v1062 = vpop.f32.mrb[0].mxu0
      %v1063 = vadd.f32 0.0, %v1062
      %v1064 = vpop.f32.mrb[0].mxu0
      %v1065 = vadd.f32 0.0, %v1064
      %1066 = vmatprep.mubr.f32.mxu0 0.0
      %1067 = vmatmul.mubr.f32.gmra.mrb[0].mxu0 %v622
      %v1068 = vpop.f32.mrb[0].mxu0
      %v1069 = vadd.f32 0.0, %v1068
      %v1070 = vpop.f32.mrb[0].mxu0
      %v1071 = vadd.f32 0.0, %v1070
      %1072 = vdwg.mxu0
      %1073 = vmatprep.subr.mxu0 0.0
      %1074 = vmatpush1.msra.mxu0 %v430
      %1075 = vmatprep.subr.mxu0 0.0
      %1076 = vmatpush1.msra.mxu0 0.0
      %1077 = vmatprep.subr.mxu0 0.0
      %1078 = vmatpush1.msra.mxu0 0.0
      %1079 = vmatprep.subr.mxu0 0.0
      %1080 = vmatpush1.msra.mxu0 0.0
      %1081 = vmatprep.subr.mxu0 0.0
      %1082 = vmatpush1.msra.mxu0 0.0
      %1083 = vmatprep.subr.mxu0 0.0
      %1084 = vmatpush1.msra.mxu0 0.0
      %1085 = vmatprep.subr.mxu0 0.0
      %1086 = vmatpush1.msra.mxu0 0.0
      %1087 = vmatprep.subr.mxu0 0.0
      %1088 = vmatpush1.msra.mxu0 0.0
      %1089 = vmatprep.subr.mxu0 0.0
      %1090 = vmatpush1.msra.mxu0 0.0
      %1091 = vmatprep.subr.mxu0 0.0
      %1092 = vmatpush1.msra.mxu0 0.0
      %1093 = vmatprep.subr.mxu0 0.0
      %1094 = vmatpush1.msra.mxu0 0.0
      %1095 = vmatprep.subr.mxu0 0.0
      %1096 = vmatpush1.msra.mxu0 0.0
      %1097 = vmatprep.subr.mxu0 0.0
      %1098 = vmatpush1.msra.mxu0 0.0
      %1099 = vmatprep.subr.mxu0 0.0
      %1100 = vmatpush1.msra.mxu0 0.0
      %1101 = vmatprep.subr.mxu0 0.0
      %1102 = vmatpush1.msra.mxu0 0.0
      %1103 = vmatprep.subr.mxu0 0.0
      %1104 = vmatpush1.msra.mxu0 0.0
      %1105 = vmatprep.subr.mxu0 0.0
      %1106 = vmatpush1.msra.mxu0 0.0
      %1107 = vmatprep.subr.mxu0 0.0
      %1108 = vmatpush1.msra.mxu0 0.0
      %1109 = vmatprep.subr.mxu0 0.0
      %1110 = vmatpush1.msra.mxu0 0.0
      %1111 = vmatprep.subr.mxu0 0.0
      %1112 = vmatpush1.msra.mxu0 0.0
      %1113 = vmatprep.subr.mxu0 0.0
      %1114 = vmatpush1.msra.mxu0 0.0
      %1115 = vmatprep.subr.mxu0 0.0
      %1116 = vmatpush1.msra.mxu0 0.0
      %1117 = vmatprep.subr.mxu0 0.0
      %1118 = vmatpush1.msra.mxu0 0.0
      %1119 = vmatprep.subr.mxu0 0.0
      %1120 = vmatpush1.msra.mxu0 0.0
      %1121 = vmatprep.subr.mxu0 0.0
      %1122 = vmatpush1.msra.mxu0 0.0
      %1123 = vmatprep.subr.mxu0 0.0
      %1124 = vmatpush1.msra.mxu0 0.0
      %1125 = vmatprep.subr.mxu0 0.0
      %1126 = vmatpush1.msra.mxu0 0.0
      %1127 = vmatprep.subr.mxu0 0.0
      %1128 = vmatpush1.msra.mxu0 0.0
      %1129 = vmatprep.subr.mxu0 0.0
      %1130 = vmatpush1.msra.mxu0 0.0
      %1131 = vmatprep.subr.mxu0 0.0
      %1132 = vmatpush1.msra.mxu0 0.0
      %1133 = vmatprep.subr.mxu0 0.0
      %1134 = vmatpush1.msra.mxu0 0.0
      %1135 = vmatprep.subr.mxu0 0.0
      %1136 = vmatpush1.msra.mxu0 0.0
      %1137 = vmatprep.mubr.f32.mxu0 0.0
      %1138 = vmatmul.mubr.f32.gmra.mrb[0].mxu0 %v433
      %v1139 = vpop.f32.mrb[0].mxu0
      %v1140 = vadd.f32 0.0, %v1139
      %v1141 = vpop.f32.mrb[0].mxu0
      %1142 = vmatprep.mubr.f32.mxu0 0.0
      %1143 = vmatmul.mubr.f32.gmra.mrb[0].mxu0 %v436
      %v1144 = vpop.f32.mrb[0].mxu0
      %v1145 = vadd.f32 0.0, %v1144
      %v1146 = vpop.f32.mrb[0].mxu0
      %1147 = vmatprep.mubr.f32.mxu0 0.0
      %1148 = vmatmul.mubr.f32.gmra.mrb[0].mxu0 %v439
      %v1149 = vpop.f32.mrb[0].mxu0
      %v1150 = vadd.f32 0.0, %v1149
      %v1151 = vpop.f32.mrb[0].mxu0
      %1152 = vmatprep.mubr.f32.mxu0 0.0
      %1153 = vmatmul.mubr.f32.gmra.mrb[0].mxu0 %v442
      %v1154 = vpop.f32.mrb[0].mxu0
      %v1155 = vadd.f32 0.0, %v1154
      %v1156 = vpop.f32.mrb[0].mxu0
      %1157 = vmatprep.mubr.f32.mxu0 0.0
      %1158 = vmatmul.mubr.f32.gmra.mrb[0].mxu0 %v445
      %v1159 = vpop.f32.mrb[0].mxu0
      %v1160 = vadd.f32 0.0, %v1159
      %v1161 = vpop.f32.mrb[0].mxu0
      %1162 = vmatprep.mubr.f32.mxu0 0.0
      %1163 = vmatmul.mubr.f32.gmra.mrb[0].mxu0 %v448
      %v1164 = vpop.f32.mrb[0].mxu0
      %v1165 = vadd.f32 0.0, %v1164
      %v1166 = vpop.f32.mrb[0].mxu0
      %1167 = vmatprep.mubr.f32.mxu0 0.0
      %1168 = vmatmul.mubr.f32.gmra.mrb[0].mxu0 %v451
      %v1169 = vpop.f32.mrb[0].mxu0
      %v1170 = vadd.f32 0.0, %v1169
      %v1171 = vpop.f32.mrb[0].mxu0
      %1172 = vmatprep.mubr.f32.mxu0 0.0
      %1173 = vmatmul.mubr.f32.gmra.mrb[0].mxu0 %v454
      %v1174 = vpop.f32.mrb[0].mxu0
      %v1175 = vadd.f32 0.0, %v1174
      %v1176 = vpop.f32.mrb[0].mxu0
      %1177 = vmatprep.mubr.f32.mxu0 0.0
      %1178 = vmatmul.mubr.f32.gmra.mrb[0].mxu0 %v457
      %v1179 = vpop.f32.mrb[0].mxu0
      %v1180 = vadd.f32 0.0, %v1179
      %v1181 = vpop.f32.mrb[0].mxu0
      %1182 = vmatprep.mubr.f32.mxu0 0.0
      %1183 = vmatmul.mubr.f32.gmra.mrb[0].mxu0 %v460
      %v1184 = vpop.f32.mrb[0].mxu0
      %v1185 = vadd.f32 0.0, %v1184
      %v1186 = vpop.f32.mrb[0].mxu0
      %1187 = vmatprep.mubr.f32.mxu0 0.0
      %1188 = vmatmul.mubr.f32.gmra.mrb[0].mxu0 %v463
      %v1189 = vpop.f32.mrb[0].mxu0
      %v1190 = vadd.f32 0.0, %v1189
      %v1191 = vpop.f32.mrb[0].mxu0
      %1192 = vmatprep.mubr.f32.mxu0 0.0
      %1193 = vmatmul.mubr.f32.gmra.mrb[0].mxu0 %v466
      %v1194 = vpop.f32.mrb[0].mxu0
      %v1195 = vadd.f32 0.0, %v1194
      %v1196 = vpop.f32.mrb[0].mxu0
      %1197 = vmatprep.mubr.f32.mxu0 0.0
      %1198 = vmatmul.mubr.f32.gmra.mrb[0].mxu0 %v469
      %v1199 = vpop.f32.mrb[0].mxu0
      %v1200 = vadd.f32 0.0, %v1199
      %v1201 = vpop.f32.mrb[0].mxu0
      %1202 = vmatprep.mubr.f32.mxu0 0.0
      %1203 = vmatmul.mubr.f32.gmra.mrb[0].mxu0 %v472
      %v1204 = vpop.f32.mrb[0].mxu0
      %v1205 = vadd.f32 0.0, %v1204
      %v1206 = vpop.f32.mrb[0].mxu0
      %1207 = vmatprep.mubr.f32.mxu0 0.0
      %1208 = vmatmul.mubr.f32.gmra.mrb[0].mxu0 %v475
      %v1209 = vpop.f32.mrb[0].mxu0
      %v1210 = vadd.f32 0.0, %v1209
      %v1211 = vpop.f32.mrb[0].mxu0
      %1212 = vmatprep.mubr.f32.mxu0 0.0
      %1213 = vmatmul.mubr.f32.gmra.mrb[0].mxu0 %v478
      %v1214 = vpop.f32.mrb[0].mxu0
      %v1215 = vadd.f32 0.0, %v1214
      %v1216 = vpop.f32.mrb[0].mxu0
      %1217 = vmatprep.mubr.f32.mxu0 0.0
      %1218 = vmatmul.mubr.f32.gmra.mrb[0].mxu0 %v481
      %v1219 = vpop.f32.mrb[0].mxu0
      %v1220 = vadd.f32 0.0, %v1219
      %v1221 = vpop.f32.mrb[0].mxu0
      %1222 = vmatprep.mubr.f32.mxu0 0.0
      %1223 = vmatmul.mubr.f32.gmra.mrb[0].mxu0 %v484
      %v1224 = vpop.f32.mrb[0].mxu0
      %v1225 = vadd.f32 0.0, %v1224
      %v1226 = vpop.f32.mrb[0].mxu0
      %1227 = vmatprep.mubr.f32.mxu0 0.0
      %1228 = vmatmul.mubr.f32.gmra.mrb[0].mxu0 %v487
      %v1229 = vpop.f32.mrb[0].mxu0
      %v1230 = vadd.f32 0.0, %v1229
      %v1231 = vpop.f32.mrb[0].mxu0
      %1232 = vmatprep.mubr.f32.mxu0 0.0
      %1233 = vmatmul.mubr.f32.gmra.mrb[0].mxu0 %v490
      %v1234 = vpop.f32.mrb[0].mxu0
      %v1235 = vadd.f32 0.0, %v1234
      %v1236 = vpop.f32.mrb[0].mxu0
      %1237 = vmatprep.mubr.f32.mxu0 0.0
      %1238 = vmatmul.mubr.f32.gmra.mrb[0].mxu0 %v493
      %v1239 = vpop.f32.mrb[0].mxu0
      %v1240 = vadd.f32 0.0, %v1239
      %v1241 = vpop.f32.mrb[0].mxu0
      %1242 = vmatprep.mubr.f32.mxu0 0.0
      %1243 = vmatmul.mubr.f32.gmra.mrb[0].mxu0 %v496
      %v1244 = vpop.f32.mrb[0].mxu0
      %v1245 = vadd.f32 0.0, %v1244
      %v1246 = vpop.f32.mrb[0].mxu0
      %1247 = vmatprep.mubr.f32.mxu0 0.0
      %1248 = vmatmul.mubr.f32.gmra.mrb[0].mxu0 %v499
      %v1249 = vpop.f32.mrb[0].mxu0
      %v1250 = vadd.f32 0.0, %v1249
      %v1251 = vpop.f32.mrb[0].mxu0
      %1252 = vmatprep.mubr.f32.mxu0 0.0
      %1253 = vmatmul.mubr.f32.gmra.mrb[0].mxu0 %v502
      %v1254 = vpop.f32.mrb[0].mxu0
      %v1255 = vadd.f32 0.0, %v1254
      %v1256 = vpop.f32.mrb[0].mxu0
      %1257 = vmatprep.mubr.f32.mxu0 0.0
      %1258 = vmatmul.mubr.f32.gmra.mrb[0].mxu0 %v505
      %v1259 = vpop.f32.mrb[0].mxu0
      %v1260 = vadd.f32 0.0, %v1259
      %v1261 = vpop.f32.mrb[0].mxu0
      %1262 = vmatprep.mubr.f32.mxu0 0.0
      %1263 = vmatmul.mubr.f32.gmra.mrb[0].mxu0 %v508
      %v1264 = vpop.f32.mrb[0].mxu0
      %v1265 = vadd.f32 0.0, %v1264
      %v1266 = vpop.f32.mrb[0].mxu0
      %1267 = vmatprep.mubr.f32.mxu0 0.0
      %1268 = vmatmul.mubr.f32.gmra.mrb[0].mxu0 %v511
      %v1269 = vpop.f32.mrb[0].mxu0
      %v1270 = vadd.f32 0.0, %v1269
      %v1271 = vpop.f32.mrb[0].mxu0
      %1272 = vmatprep.mubr.f32.mxu0 0.0
      %1273 = vmatmul.mubr.f32.gmra.mrb[0].mxu0 %v514
      %v1274 = vpop.f32.mrb[0].mxu0
      %v1275 = vadd.f32 0.0, %v1274
      %v1276 = vpop.f32.mrb[0].mxu0
      %1277 = vmatprep.mubr.f32.mxu0 0.0
      %1278 = vmatmul.mubr.f32.gmra.mrb[0].mxu0 %v517
      %v1279 = vpop.f32.mrb[0].mxu0
      %v1280 = vadd.f32 0.0, %v1279
      %v1281 = vpop.f32.mrb[0].mxu0
      %1282 = vmatprep.mubr.f32.mxu0 0.0
      %1283 = vmatmul.mubr.f32.gmra.mrb[0].mxu0 %v520
      %v1284 = vpop.f32.mrb[0].mxu0
      %v1285 = vadd.f32 0.0, %v1284
      %v1286 = vpop.f32.mrb[0].mxu0
      %1287 = vmatprep.mubr.f32.mxu0 0.0
      %1288 = vmatmul.mubr.f32.gmra.mrb[0].mxu0 %v523
      %v1289 = vpop.f32.mrb[0].mxu0
      %v1290 = vadd.f32 0.0, %v1289
      %v1291 = vpop.f32.mrb[0].mxu0
      %1292 = vmatprep.mubr.f32.mxu0 0.0
      %1293 = vmatmul.mubr.f32.gmra.mrb[0].mxu0 %v526
      %v1294 = vpop.f32.mrb[0].mxu0
      %v1295 = vadd.f32 0.0, %v1294
      %v1296 = vpop.f32.mrb[0].mxu0
      %1297 = vmatprep.mubr.f32.mxu0 0.0
      %1298 = vmatmul.mubr.f32.gmra.mrb[0].mxu0 %v529
      %v1299 = vpop.f32.mrb[0].mxu0
      %v1300 = vadd.f32 0.0, %v1299
      %v1301 = vpop.f32.mrb[0].mxu0
      %1302 = vmatprep.mubr.f32.mxu0 0.0
      %1303 = vmatmul.mubr.f32.gmra.mrb[0].mxu0 %v532
      %v1304 = vpop.f32.mrb[0].mxu0
      %v1305 = vadd.f32 0.0, %v1304
      %v1306 = vpop.f32.mrb[0].mxu0
      %1307 = vmatprep.mubr.f32.mxu0 0.0
      %1308 = vmatmul.mubr.f32.gmra.mrb[0].mxu0 %v535
      %v1309 = vpop.f32.mrb[0].mxu0
      %v1310 = vadd.f32 0.0, %v1309
      %v1311 = vpop.f32.mrb[0].mxu0
      %1312 = vmatprep.mubr.f32.mxu0 0.0
      %1313 = vmatmul.mubr.f32.gmra.mrb[0].mxu0 %v538
      %v1314 = vpop.f32.mrb[0].mxu0
      %v1315 = vadd.f32 0.0, %v1314
      %v1316 = vpop.f32.mrb[0].mxu0
      %1317 = vmatprep.mubr.f32.mxu0 0.0
      %1318 = vmatmul.mubr.f32.gmra.mrb[0].mxu0 %v541
      %v1319 = vpop.f32.mrb[0].mxu0
      %v1320 = vadd.f32 0.0, %v1319
      %v1321 = vpop.f32.mrb[0].mxu0
      %1322 = vmatprep.mubr.f32.mxu0 0.0
      %1323 = vmatmul.mubr.f32.gmra.mrb[0].mxu0 %v544
      %v1324 = vpop.f32.mrb[0].mxu0
      %v1325 = vadd.f32 0.0, %v1324
      %v1326 = vpop.f32.mrb[0].mxu0
      %1327 = vmatprep.mubr.f32.mxu0 0.0
      %1328 = vmatmul.mubr.f32.gmra.mrb[0].mxu0 %v547
      %v1329 = vpop.f32.mrb[0].mxu0
      %v1330 = vadd.f32 0.0, %v1329
      %v1331 = vpop.f32.mrb[0].mxu0
      %1332 = vmatprep.mubr.f32.mxu0 0.0
      %1333 = vmatmul.mubr.f32.gmra.mrb[0].mxu0 %v550
      %v1334 = vpop.f32.mrb[0].mxu0
      %v1335 = vadd.f32 0.0, %v1334
      %v1336 = vpop.f32.mrb[0].mxu0
      %1337 = vmatprep.mubr.f32.mxu0 0.0
      %1338 = vmatmul.mubr.f32.gmra.mrb[0].mxu0 %v553
      %v1339 = vpop.f32.mrb[0].mxu0
      %v1340 = vadd.f32 0.0, %v1339
      %v1341 = vpop.f32.mrb[0].mxu0
      %1342 = vmatprep.mubr.f32.mxu0 0.0
      %1343 = vmatmul.mubr.f32.gmra.mrb[0].mxu0 %v556
      %v1344 = vpop.f32.mrb[0].mxu0
      %v1345 = vadd.f32 0.0, %v1344
      %v1346 = vpop.f32.mrb[0].mxu0
      %1347 = vmatprep.mubr.f32.mxu0 0.0
      %1348 = vmatmul.mubr.f32.gmra.mrb[0].mxu0 %v559
      %v1349 = vpop.f32.mrb[0].mxu0
      %v1350 = vadd.f32 0.0, %v1349
      %v1351 = vpop.f32.mrb[0].mxu0
      %1352 = vmatprep.mubr.f32.mxu0 0.0
      %1353 = vmatmul.mubr.f32.gmra.mrb[0].mxu0 %v562
      %v1354 = vpop.f32.mrb[0].mxu0
      %v1355 = vadd.f32 0.0, %v1354
      %v1356 = vpop.f32.mrb[0].mxu0
      %1357 = vmatprep.mubr.f32.mxu0 0.0
      %1358 = vmatmul.mubr.f32.gmra.mrb[0].mxu0 %v565
      %v1359 = vpop.f32.mrb[0].mxu0
      %v1360 = vadd.f32 0.0, %v1359
      %v1361 = vpop.f32.mrb[0].mxu0
      %1362 = vmatprep.mubr.f32.mxu0 0.0
      %1363 = vmatmul.mubr.f32.gmra.mrb[0].mxu0 %v568
      %v1364 = vpop.f32.mrb[0].mxu0
      %v1365 = vadd.f32 0.0, %v1364
      %v1366 = vpop.f32.mrb[0].mxu0
      %1367 = vmatprep.mubr.f32.mxu0 0.0
      %1368 = vmatmul.mubr.f32.gmra.mrb[0].mxu0 %v571
      %v1369 = vpop.f32.mrb[0].mxu0
      %v1370 = vadd.f32 0.0, %v1369
      %v1371 = vpop.f32.mrb[0].mxu0
      %1372 = vmatprep.mubr.f32.mxu0 0.0
      %1373 = vmatmul.mubr.f32.gmra.mrb[0].mxu0 %v574
      %v1374 = vpop.f32.mrb[0].mxu0
      %v1375 = vadd.f32 0.0, %v1374
      %v1376 = vpop.f32.mrb[0].mxu0
      %1377 = vmatprep.mubr.f32.mxu0 0.0
      %1378 = vmatmul.mubr.f32.gmra.mrb[0].mxu0 %v577
      %v1379 = vpop.f32.mrb[0].mxu0
      %v1380 = vadd.f32 0.0, %v1379
      %v1381 = vpop.f32.mrb[0].mxu0
      %1382 = vmatprep.mubr.f32.mxu0 0.0
      %1383 = vmatmul.mubr.f32.gmra.mrb[0].mxu0 %v580
      %v1384 = vpop.f32.mrb[0].mxu0
      %v1385 = vadd.f32 0.0, %v1384
      %v1386 = vpop.f32.mrb[0].mxu0
      %1387 = vmatprep.mubr.f32.mxu0 0.0
      %1388 = vmatmul.mubr.f32.gmra.mrb[0].mxu0 %v583
      %v1389 = vpop.f32.mrb[0].mxu0
      %v1390 = vadd.f32 0.0, %v1389
      %v1391 = vpop.f32.mrb[0].mxu0
      %1392 = vmatprep.mubr.f32.mxu0 0.0
      %1393 = vmatmul.mubr.f32.gmra.mrb[0].mxu0 %v586
      %v1394 = vpop.f32.mrb[0].mxu0
      %v1395 = vadd.f32 0.0, %v1394
      %v1396 = vpop.f32.mrb[0].mxu0
      %1397 = vmatprep.mubr.f32.mxu0 0.0
      %1398 = vmatmul.mubr.f32.gmra.mrb[0].mxu0 %v589
      %v1399 = vpop.f32.mrb[0].mxu0
      %v1400 = vadd.f32 0.0, %v1399
      %v1401 = vpop.f32.mrb[0].mxu0
      %1402 = vmatprep.mubr.f32.mxu0 0.0
      %1403 = vmatmul.mubr.f32.gmra.mrb[0].mxu0 %v592
      %v1404 = vpop.f32.mrb[0].mxu0
      %v1405 = vadd.f32 0.0, %v1404
      %v1406 = vpop.f32.mrb[0].mxu0
      %1407 = vmatprep.mubr.f32.mxu0 0.0
      %1408 = vmatmul.mubr.f32.gmra.mrb[0].mxu0 %v595
      %v1409 = vpop.f32.mrb[0].mxu0
      %v1410 = vadd.f32 0.0, %v1409
      %v1411 = vpop.f32.mrb[0].mxu0
      %1412 = vmatprep.mubr.f32.mxu0 0.0
      %1413 = vmatmul.mubr.f32.gmra.mrb[0].mxu0 %v598
      %v1414 = vpop.f32.mrb[0].mxu0
      %v1415 = vadd.f32 0.0, %v1414
      %v1416 = vpop.f32.mrb[0].mxu0
      %1417 = vmatprep.mubr.f32.mxu0 0.0
      %1418 = vmatmul.mubr.f32.gmra.mrb[0].mxu0 %v601
      %v1419 = vpop.f32.mrb[0].mxu0
      %v1420 = vadd.f32 0.0, %v1419
      %v1421 = vpop.f32.mrb[0].mxu0
      %1422 = vmatprep.mubr.f32.mxu0 0.0
      %1423 = vmatmul.mubr.f32.gmra.mrb[0].mxu0 %v604
      %v1424 = vpop.f32.mrb[0].mxu0
      %v1425 = vadd.f32 0.0, %v1424
      %v1426 = vpop.f32.mrb[0].mxu0
      %1427 = vmatprep.mubr.f32.mxu0 0.0
      %1428 = vmatmul.mubr.f32.gmra.mrb[0].mxu0 %v607
      %v1429 = vpop.f32.mrb[0].mxu0
      %v1430 = vadd.f32 0.0, %v1429
      %v1431 = vpop.f32.mrb[0].mxu0
      %1432 = vmatprep.mubr.f32.mxu0 0.0
      %1433 = vmatmul.mubr.f32.gmra.mrb[0].mxu0 %v610
      %v1434 = vpop.f32.mrb[0].mxu0
      %v1435 = vadd.f32 0.0, %v1434
      %v1436 = vpop.f32.mrb[0].mxu0
      %1437 = vmatprep.mubr.f32.mxu0 0.0
      %1438 = vmatmul.mubr.f32.gmra.mrb[0].mxu0 %v613
      %v1439 = vpop.f32.mrb[0].mxu0
      %v1440 = vadd.f32 0.0, %v1439
      %v1441 = vpop.f32.mrb[0].mxu0
      %1442 = vmatprep.mubr.f32.mxu0 0.0
      %1443 = vmatmul.mubr.f32.gmra.mrb[0].mxu0 %v616
      %v1444 = vpop.f32.mrb[0].mxu0
      %v1445 = vadd.f32 0.0, %v1444
      %v1446 = vpop.f32.mrb[0].mxu0
      %1447 = vmatprep.mubr.f32.mxu0 0.0
      %1448 = vmatmul.mubr.f32.gmra.mrb[0].mxu0 %v619
      %v1449 = vpop.f32.mrb[0].mxu0
      %v1450 = vadd.f32 0.0, %v1449
      %v1451 = vpop.f32.mrb[0].mxu0
      %1452 = vmatprep.mubr.f32.mxu0 0.0
      %1453 = vmatmul.mubr.f32.gmra.mrb[0].mxu0 %v622
      %v1454 = vpop.f32.mrb[0].mxu0
      %v1455 = vadd.f32 0.0, %v1454
      %v1456 = vpop.f32.mrb[0].mxu0
      %1457 = vdwg.mxu0
      %v1458 = vld [vmem:[%s3] sm:$0x7f]
      %v1459 = vlaneseq
      %v1460 = vshrl.u32 %v1459, 7
      %v1461 = vsub.s32 0, %v1460
      %v1462 = vrot.slane %v1458, %v1461
      %v1463 = vadd.f32 %v691, %v1462
      %v1464 = vadd.f32 %v697, %v1462
      %v1465 = vadd.f32 %v703, %v1462
      %v1466 = vadd.f32 %v709, %v1462
      %v1467 = vadd.f32 %v715, %v1462
      %v1468 = vadd.f32 %v721, %v1462
      %v1469 = vadd.f32 %v727, %v1462
      %v1470 = vadd.f32 %v733, %v1462
      %v1471 = vadd.f32 %v739, %v1462
      %v1472 = vadd.f32 %v745, %v1462
      %v1473 = vadd.f32 %v751, %v1462
      %v1474 = vadd.f32 %v757, %v1462
      %v1475 = vadd.f32 %v763, %v1462
      %v1476 = vadd.f32 %v769, %v1462
      %v1477 = vadd.f32 %v775, %v1462
      %v1478 = vadd.f32 %v781, %v1462
      %v1479 = vadd.f32 %v787, %v1462
      %v1480 = vadd.f32 %v793, %v1462
      %v1481 = vadd.f32 %v799, %v1462
      %v1482 = vadd.f32 %v805, %v1462
      %v1483 = vadd.f32 %v811, %v1462
      %v1484 = vadd.f32 %v817, %v1462
      %v1485 = vadd.f32 %v823, %v1462
      %v1486 = vadd.f32 %v829, %v1462
      %v1487 = vadd.f32 %v835, %v1462
      %v1488 = vadd.f32 %v841, %v1462
      %v1489 = vadd.f32 %v847, %v1462
      %v1490 = vadd.f32 %v853, %v1462
      %v1491 = vadd.f32 %v859, %v1462
      %v1492 = vadd.f32 %v865, %v1462
      %v1493 = vadd.f32 %v871, %v1462
      %v1494 = vadd.f32 %v877, %v1462
      %v1495 = vadd.f32 %v883, %v1462
      %v1496 = vadd.f32 %v889, %v1462
      %v1497 = vadd.f32 %v895, %v1462
      %v1498 = vadd.f32 %v901, %v1462
      %v1499 = vadd.f32 %v907, %v1462
      %v1500 = vadd.f32 %v913, %v1462
      %v1501 = vadd.f32 %v919, %v1462
      %v1502 = vadd.f32 %v925, %v1462
      %v1503 = vadd.f32 %v931, %v1462
      %v1504 = vadd.f32 %v937, %v1462
      %v1505 = vadd.f32 %v943, %v1462
      %v1506 = vadd.f32 %v949, %v1462
      %v1507 = vadd.f32 %v955, %v1462
      %v1508 = vadd.f32 %v961, %v1462
      %v1509 = vadd.f32 %v967, %v1462
      %v1510 = vadd.f32 %v973, %v1462
      %v1511 = vadd.f32 %v979, %v1462
      %v1512 = vadd.f32 %v985, %v1462
      %v1513 = vadd.f32 %v991, %v1462
      %v1514 = vadd.f32 %v997, %v1462
      %v1515 = vadd.f32 %v1003, %v1462
      %v1516 = vadd.f32 %v1009, %v1462
      %v1517 = vadd.f32 %v1015, %v1462
      %v1518 = vadd.f32 %v1021, %v1462
      %v1519 = vadd.f32 %v1027, %v1462
      %v1520 = vadd.f32 %v1033, %v1462
      %v1521 = vadd.f32 %v1039, %v1462
      %v1522 = vadd.f32 %v1045, %v1462
      %v1523 = vadd.f32 %v1051, %v1462
      %v1524 = vadd.f32 %v1057, %v1462
      %v1525 = vadd.f32 %v1063, %v1462
      %v1526 = vadd.f32 %v1069, %v1462
      %v1527 = vmax.f32 %v1463, 0.0
      %v1528 = vmax.f32 %v1464, 0.0
      %v1529 = vmax.f32 %v1465, 0.0
      %v1530 = vmax.f32 %v1466, 0.0
      %v1531 = vmax.f32 %v1467, 0.0
      %v1532 = vmax.f32 %v1468, 0.0
      %v1533 = vmax.f32 %v1469, 0.0
      %v1534 = vmax.f32 %v1470, 0.0
      %v1535 = vmax.f32 %v1471, 0.0
      %v1536 = vmax.f32 %v1472, 0.0
      %v1537 = vmax.f32 %v1473, 0.0
      %v1538 = vmax.f32 %v1474, 0.0
      %v1539 = vmax.f32 %v1475, 0.0
      %v1540 = vmax.f32 %v1476, 0.0
      %v1541 = vmax.f32 %v1477, 0.0
      %v1542 = vmax.f32 %v1478, 0.0
      %v1543 = vmax.f32 %v1479, 0.0
      %v1544 = vmax.f32 %v1480, 0.0
      %v1545 = vmax.f32 %v1481, 0.0
      %v1546 = vmax.f32 %v1482, 0.0
      %v1547 = vmax.f32 %v1483, 0.0
      %v1548 = vmax.f32 %v1484, 0.0
      %v1549 = vmax.f32 %v1485, 0.0
      %v1550 = vmax.f32 %v1486, 0.0
      %v1551 = vmax.f32 %v1487, 0.0
      %v1552 = vmax.f32 %v1488, 0.0
      %v1553 = vmax.f32 %v1489, 0.0
      %v1554 = vmax.f32 %v1490, 0.0
      %v1555 = vmax.f32 %v1491, 0.0
      %v1556 = vmax.f32 %v1492, 0.0
      %v1557 = vmax.f32 %v1493, 0.0
      %v1558 = vmax.f32 %v1494, 0.0
      %v1559 = vmax.f32 %v1495, 0.0
      %v1560 = vmax.f32 %v1496, 0.0
      %v1561 = vmax.f32 %v1497, 0.0
      %v1562 = vmax.f32 %v1498, 0.0
      %v1563 = vmax.f32 %v1499, 0.0
      %v1564 = vmax.f32 %v1500, 0.0
      %v1565 = vmax.f32 %v1501, 0.0
      %v1566 = vmax.f32 %v1502, 0.0
      %v1567 = vmax.f32 %v1503, 0.0
      %v1568 = vmax.f32 %v1504, 0.0
      %v1569 = vmax.f32 %v1505, 0.0
      %v1570 = vmax.f32 %v1506, 0.0
      %v1571 = vmax.f32 %v1507, 0.0
      %v1572 = vmax.f32 %v1508, 0.0
      %v1573 = vmax.f32 %v1509, 0.0
      %v1574 = vmax.f32 %v1510, 0.0
      %v1575 = vmax.f32 %v1511, 0.0
      %v1576 = vmax.f32 %v1512, 0.0
      %v1577 = vmax.f32 %v1513, 0.0
      %v1578 = vmax.f32 %v1514, 0.0
      %v1579 = vmax.f32 %v1515, 0.0
      %v1580 = vmax.f32 %v1516, 0.0
      %v1581 = vmax.f32 %v1517, 0.0
      %v1582 = vmax.f32 %v1518, 0.0
      %v1583 = vmax.f32 %v1519, 0.0
      %v1584 = vmax.f32 %v1520, 0.0
      %v1585 = vmax.f32 %v1521, 0.0
      %v1586 = vmax.f32 %v1522, 0.0
      %v1587 = vmax.f32 %v1523, 0.0
      %v1588 = vmax.f32 %v1524, 0.0
      %v1589 = vmax.f32 %v1525, 0.0
      %v1590 = vmax.f32 %v1526, 0.0
      %v1591 = vpack.c.bf16 %v1528, %v1527
      %v1592 = vpack.c.bf16 %v1530, %v1529
      %v1593 = vpack.c.bf16 %v1532, %v1531
      %v1594 = vpack.c.bf16 %v1534, %v1533
      %v1595 = vpack.c.bf16 %v1536, %v1535
      %v1596 = vpack.c.bf16 %v1538, %v1537
      %v1597 = vpack.c.bf16 %v1540, %v1539
      %v1598 = vpack.c.bf16 %v1542, %v1541
      %v1599 = vpack.c.bf16 %v1544, %v1543
      %v1600 = vpack.c.bf16 %v1546, %v1545
      %v1601 = vpack.c.bf16 %v1548, %v1547
      %v1602 = vpack.c.bf16 %v1550, %v1549
      %v1603 = vpack.c.bf16 %v1552, %v1551
      %v1604 = vpack.c.bf16 %v1554, %v1553
      %v1605 = vpack.c.bf16 %v1556, %v1555
      %v1606 = vpack.c.bf16 %v1558, %v1557
      %v1607 = vpack.c.bf16 %v1560, %v1559
      %v1608 = vpack.c.bf16 %v1562, %v1561
      %v1609 = vpack.c.bf16 %v1564, %v1563
      %v1610 = vpack.c.bf16 %v1566, %v1565
      %v1611 = vpack.c.bf16 %v1568, %v1567
      %v1612 = vpack.c.bf16 %v1570, %v1569
      %v1613 = vpack.c.bf16 %v1572, %v1571
      %v1614 = vpack.c.bf16 %v1574, %v1573
      %v1615 = vpack.c.bf16 %v1576, %v1575
      %v1616 = vpack.c.bf16 %v1578, %v1577
      %v1617 = vpack.c.bf16 %v1580, %v1579
      %v1618 = vpack.c.bf16 %v1582, %v1581
      %v1619 = vpack.c.bf16 %v1584, %v1583
      %v1620 = vpack.c.bf16 %v1586, %v1585
      %v1621 = vpack.c.bf16 %v1588, %v1587
      %v1622 = vpack.c.bf16 %v1590, %v1589
      %v1623 = vld [vmem:[%s2] sm:$0xf]
      %v1624 = vld [vmem:[%s2 + $0x4] sm:$0xf]
      %v1625 = vld [vmem:[%s2 + $0x8] sm:$0xf]
      %v1626 = vld [vmem:[%s2 + $0xc] sm:$0xf]
      %v1627 = vld [vmem:[%s2 + $0x10] sm:$0xf]
      %v1628 = vld [vmem:[%s2 + $0x14] sm:$0xf]
      %v1629 = vld [vmem:[%s2 + $0x18] sm:$0xf]
      %v1630 = vld [vmem:[%s2 + $0x1c] sm:$0xf]
      %v1631 = vld [vmem:[%s2 + $0x20] sm:$0xf]
      %v1632 = vld [vmem:[%s2 + $0x24] sm:$0xf]
      %v1633 = vld [vmem:[%s2 + $0x28] sm:$0xf]
      %v1634 = vld [vmem:[%s2 + $0x2c] sm:$0xf]
      %v1635 = vld [vmem:[%s2 + $0x30] sm:$0xf]
      %v1636 = vld [vmem:[%s2 + $0x34] sm:$0xf]
      %v1637 = vld [vmem:[%s2 + $0x38] sm:$0xf]
      %v1638 = vld [vmem:[%s2 + $0x3c] sm:$0xf]
      %v1639 = vlaneseq
      %v1640 = vshrl.u32 %v1639, 7
      %v1641 = vsub.s32 1, %v1640
      %v1642 = vrot.slane %v1458, %v1641
      %v1659 = vunpack.c.l.b16 %v1623
      %v1660 = vunpack.c.l.b16 %v1624
      %v1661 = vunpack.c.l.b16 %v1625
      %v1662 = vunpack.c.l.b16 %v1626
      %v1663 = vunpack.c.l.b16 %v1627
      %v1664 = vunpack.c.l.b16 %v1628
      %v1665 = vunpack.c.l.b16 %v1629
      %v1666 = vunpack.c.l.b16 %v1630
      %v1667 = vunpack.c.l.b16 %v1631
      %v1668 = vunpack.c.l.b16 %v1632
      %v1669 = vunpack.c.l.b16 %v1633
      %v1670 = vunpack.c.l.b16 %v1634
      %v1671 = vunpack.c.l.b16 %v1635
      %v1672 = vunpack.c.l.b16 %v1636
      %v1673 = vunpack.c.l.b16 %v1637
      %v1674 = vunpack.c.l.b16 %v1638
      %v1675 = vpack.c.b16 %v1660, %v1659
      %v1676 = vpack.c.b16 %v1662, %v1661
      %v1677 = vpack.c.b16 %v1664, %v1663
      %v1678 = vpack.c.b16 %v1666, %v1665
      %v1679 = vpack.c.b16 %v1668, %v1667
      %v1680 = vpack.c.b16 %v1670, %v1669
      %v1681 = vpack.c.b16 %v1672, %v1671
      %v1682 = vpack.c.b16 %v1674, %v1673
      %1691 = vmatprep.subr.bf16.mxu0 0
      %1692 = vmatpush1.bf16.msra.mxu0 %v1675
      %1693 = vmatprep.subr.bf16.mxu0 0
      %1694 = vmatpush1.bf16.msra.mxu0 %v1676
      %1695 = vmatprep.subr.bf16.mxu0 0
      %1696 = vmatpush1.bf16.msra.mxu0 %v1677
      %1697 = vmatprep.subr.bf16.mxu0 0
      %1698 = vmatpush1.bf16.msra.mxu0 %v1678
      %1699 = vmatprep.subr.bf16.mxu0 0
      %1700 = vmatpush1.bf16.msra.mxu0 %v1679
      %1701 = vmatprep.subr.bf16.mxu0 0
      %1702 = vmatpush1.bf16.msra.mxu0 %v1680
      %1703 = vmatprep.subr.bf16.mxu0 0
      %1704 = vmatpush1.bf16.msra.mxu0 %v1681
      %1705 = vmatprep.subr.bf16.mxu0 0
      %1706 = vmatpush1.bf16.msra.mxu0 %v1682
      %1707 = vmatprep.subr.bf16.mxu0 0
      %1708 = vmatpush1.bf16.msra.mxu0 0
      %1709 = vmatprep.subr.bf16.mxu0 0
      %1710 = vmatpush1.bf16.msra.mxu0 0
      %1711 = vmatprep.subr.bf16.mxu0 0
      %1712 = vmatpush1.bf16.msra.mxu0 0
      %1713 = vmatprep.subr.bf16.mxu0 0
      %1714 = vmatpush1.bf16.msra.mxu0 0
      %1715 = vmatprep.subr.bf16.mxu0 0
      %1716 = vmatpush1.bf16.msra.mxu0 0
      %1717 = vmatprep.subr.bf16.mxu0 0
      %1718 = vmatpush1.bf16.msra.mxu0 0
      %1719 = vmatprep.subr.bf16.mxu0 0
      %1720 = vmatpush1.bf16.msra.mxu0 0
      %1721 = vmatprep.subr.bf16.mxu0 0
      %1722 = vmatpush1.bf16.msra.mxu0 0
      %1723 = vmatprep.mubr.bf16.mxu0 0
      %1724 = vmatmul.mubr.bf16.gmra.mrb[0].mxu0 %v1591
      %v1725 = vpop.f32.mrb[0].mxu0
      %v1726 = vadd.f32 %v1642, %v1725
      %v1727 = vpop.f32.mrb[0].mxu0
      %v1728 = vpop.f32.mrb[0].mxu0
      %v1729 = vadd.f32 %v1642, %v1728
      %v1730 = vpop.f32.mrb[0].mxu0
      %1731 = vmatprep.mubr.bf16.mxu0 0
      %1732 = vmatmul.mubr.bf16.gmra.mrb[0].mxu0 %v1592
      %v1733 = vpop.f32.mrb[0].mxu0
      %v1734 = vadd.f32 %v1642, %v1733
      %v1735 = vpop.f32.mrb[0].mxu0
      %v1736 = vpop.f32.mrb[0].mxu0
      %v1737 = vadd.f32 %v1642, %v1736
      %v1738 = vpop.f32.mrb[0].mxu0
      %1739 = vmatprep.mubr.bf16.mxu0 0
      %1740 = vmatmul.mubr.bf16.gmra.mrb[0].mxu0 %v1593
      %v1741 = vpop.f32.mrb[0].mxu0
      %v1742 = vadd.f32 %v1642, %v1741
      %v1743 = vpop.f32.mrb[0].mxu0
      %v1744 = vpop.f32.mrb[0].mxu0
      %v1745 = vadd.f32 %v1642, %v1744
      %v1746 = vpop.f32.mrb[0].mxu0
      %1747 = vmatprep.mubr.bf16.mxu0 0
      %1748 = vmatmul.mubr.bf16.gmra.mrb[0].mxu0 %v1594
      %v1749 = vpop.f32.mrb[0].mxu0
      %v1750 = vadd.f32 %v1642, %v1749
      %v1751 = vpop.f32.mrb[0].mxu0
      %v1752 = vpop.f32.mrb[0].mxu0
      %v1753 = vadd.f32 %v1642, %v1752
      %v1754 = vpop.f32.mrb[0].mxu0
      %1755 = vmatprep.mubr.bf16.mxu0 0
      %1756 = vmatmul.mubr.bf16.gmra.mrb[0].mxu0 %v1595
      %v1757 = vpop.f32.mrb[0].mxu0
      %v1758 = vadd.f32 %v1642, %v1757
      %v1759 = vpop.f32.mrb[0].mxu0
      %v1760 = vpop.f32.mrb[0].mxu0
      %v1761 = vadd.f32 %v1642, %v1760
      %v1762 = vpop.f32.mrb[0].mxu0
      %1763 = vmatprep.mubr.bf16.mxu0 0
      %1764 = vmatmul.mubr.bf16.gmra.mrb[0].mxu0 %v1596
      %v1765 = vpop.f32.mrb[0].mxu0
      %v1766 = vadd.f32 %v1642, %v1765
      %v1767 = vpop.f32.mrb[0].mxu0
      %v1768 = vpop.f32.mrb[0].mxu0
      %v1769 = vadd.f32 %v1642, %v1768
      %v1770 = vpop.f32.mrb[0].mxu0
      %1771 = vmatprep.mubr.bf16.mxu0 0
      %1772 = vmatmul.mubr.bf16.gmra.mrb[0].mxu0 %v1597
      %v1773 = vpop.f32.mrb[0].mxu0
      %v1774 = vadd.f32 %v1642, %v1773
      %v1775 = vpop.f32.mrb[0].mxu0
      %v1776 = vpop.f32.mrb[0].mxu0
      %v1777 = vadd.f32 %v1642, %v1776
      %v1778 = vpop.f32.mrb[0].mxu0
      %1779 = vmatprep.mubr.bf16.mxu0 0
      %1780 = vmatmul.mubr.bf16.gmra.mrb[0].mxu0 %v1598
      %v1781 = vpop.f32.mrb[0].mxu0
      %v1782 = vadd.f32 %v1642, %v1781
      %v1783 = vpop.f32.mrb[0].mxu0
      %v1784 = vpop.f32.mrb[0].mxu0
      %v1785 = vadd.f32 %v1642, %v1784
      %v1786 = vpop.f32.mrb[0].mxu0
      %1787 = vmatprep.mubr.bf16.mxu0 0
      %1788 = vmatmul.mubr.bf16.gmra.mrb[0].mxu0 %v1599
      %v1789 = vpop.f32.mrb[0].mxu0
      %v1790 = vadd.f32 %v1642, %v1789
      %v1791 = vpop.f32.mrb[0].mxu0
      %v1792 = vpop.f32.mrb[0].mxu0
      %v1793 = vadd.f32 %v1642, %v1792
      %v1794 = vpop.f32.mrb[0].mxu0
      %1795 = vmatprep.mubr.bf16.mxu0 0
      %1796 = vmatmul.mubr.bf16.gmra.mrb[0].mxu0 %v1600
      %v1797 = vpop.f32.mrb[0].mxu0
      %v1798 = vadd.f32 %v1642, %v1797
      %v1799 = vpop.f32.mrb[0].mxu0
      %v1800 = vpop.f32.mrb[0].mxu0
      %v1801 = vadd.f32 %v1642, %v1800
      %v1802 = vpop.f32.mrb[0].mxu0
      %1803 = vmatprep.mubr.bf16.mxu0 0
      %1804 = vmatmul.mubr.bf16.gmra.mrb[0].mxu0 %v1601
      %v1805 = vpop.f32.mrb[0].mxu0
      %v1806 = vadd.f32 %v1642, %v1805
      %v1807 = vpop.f32.mrb[0].mxu0
      %v1808 = vpop.f32.mrb[0].mxu0
      %v1809 = vadd.f32 %v1642, %v1808
      %v1810 = vpop.f32.mrb[0].mxu0
      %1811 = vmatprep.mubr.bf16.mxu0 0
      %1812 = vmatmul.mubr.bf16.gmra.mrb[0].mxu0 %v1602
      %v1813 = vpop.f32.mrb[0].mxu0
      %v1814 = vadd.f32 %v1642, %v1813
      %v1815 = vpop.f32.mrb[0].mxu0
      %v1816 = vpop.f32.mrb[0].mxu0
      %v1817 = vadd.f32 %v1642, %v1816
      %v1818 = vpop.f32.mrb[0].mxu0
      %1819 = vmatprep.mubr.bf16.mxu0 0
      %1820 = vmatmul.mubr.bf16.gmra.mrb[0].mxu0 %v1603
      %v1821 = vpop.f32.mrb[0].mxu0
      %v1822 = vadd.f32 %v1642, %v1821
      %v1823 = vpop.f32.mrb[0].mxu0
      %v1824 = vpop.f32.mrb[0].mxu0
      %v1825 = vadd.f32 %v1642, %v1824
      %v1826 = vpop.f32.mrb[0].mxu0
      %1827 = vmatprep.mubr.bf16.mxu0 0
      %1828 = vmatmul.mubr.bf16.gmra.mrb[0].mxu0 %v1604
      %v1829 = vpop.f32.mrb[0].mxu0
      %v1830 = vadd.f32 %v1642, %v1829
      %v1831 = vpop.f32.mrb[0].mxu0
      %v1832 = vpop.f32.mrb[0].mxu0
      %v1833 = vadd.f32 %v1642, %v1832
      %v1834 = vpop.f32.mrb[0].mxu0
      %1835 = vmatprep.mubr.bf16.mxu0 0
      %1836 = vmatmul.mubr.bf16.gmra.mrb[0].mxu0 %v1605
      %v1837 = vpop.f32.mrb[0].mxu0
      %v1838 = vadd.f32 %v1642, %v1837
      %v1839 = vpop.f32.mrb[0].mxu0
      %v1840 = vpop.f32.mrb[0].mxu0
      %v1841 = vadd.f32 %v1642, %v1840
      %v1842 = vpop.f32.mrb[0].mxu0
      %1843 = vmatprep.mubr.bf16.mxu0 0
      %1844 = vmatmul.mubr.bf16.gmra.mrb[0].mxu0 %v1606
      %v1845 = vpop.f32.mrb[0].mxu0
      %v1846 = vadd.f32 %v1642, %v1845
      %v1847 = vpop.f32.mrb[0].mxu0
      %v1848 = vpop.f32.mrb[0].mxu0
      %v1849 = vadd.f32 %v1642, %v1848
      %v1850 = vpop.f32.mrb[0].mxu0
      %1851 = vmatprep.mubr.bf16.mxu0 0
      %1852 = vmatmul.mubr.bf16.gmra.mrb[0].mxu0 %v1607
      %v1853 = vpop.f32.mrb[0].mxu0
      %v1854 = vadd.f32 %v1642, %v1853
      %v1855 = vpop.f32.mrb[0].mxu0
      %v1856 = vpop.f32.mrb[0].mxu0
      %v1857 = vadd.f32 %v1642, %v1856
      %v1858 = vpop.f32.mrb[0].mxu0
      %1859 = vmatprep.mubr.bf16.mxu0 0
      %1860 = vmatmul.mubr.bf16.gmra.mrb[0].mxu0 %v1608
      %v1861 = vpop.f32.mrb[0].mxu0
      %v1862 = vadd.f32 %v1642, %v1861
      %v1863 = vpop.f32.mrb[0].mxu0
      %v1864 = vpop.f32.mrb[0].mxu0
      %v1865 = vadd.f32 %v1642, %v1864
      %v1866 = vpop.f32.mrb[0].mxu0
      %1867 = vmatprep.mubr.bf16.mxu0 0
      %1868 = vmatmul.mubr.bf16.gmra.mrb[0].mxu0 %v1609
      %v1869 = vpop.f32.mrb[0].mxu0
      %v1870 = vadd.f32 %v1642, %v1869
      %v1871 = vpop.f32.mrb[0].mxu0
      %v1872 = vpop.f32.mrb[0].mxu0
      %v1873 = vadd.f32 %v1642, %v1872
      %v1874 = vpop.f32.mrb[0].mxu0
      %1875 = vmatprep.mubr.bf16.mxu0 0
      %1876 = vmatmul.mubr.bf16.gmra.mrb[0].mxu0 %v1610
      %v1877 = vpop.f32.mrb[0].mxu0
      %v1878 = vadd.f32 %v1642, %v1877
      %v1879 = vpop.f32.mrb[0].mxu0
      %v1880 = vpop.f32.mrb[0].mxu0
      %v1881 = vadd.f32 %v1642, %v1880
      %v1882 = vpop.f32.mrb[0].mxu0
      %1883 = vmatprep.mubr.bf16.mxu0 0
      %1884 = vmatmul.mubr.bf16.gmra.mrb[0].mxu0 %v1611
      %v1885 = vpop.f32.mrb[0].mxu0
      %v1886 = vadd.f32 %v1642, %v1885
      %v1887 = vpop.f32.mrb[0].mxu0
      %v1888 = vpop.f32.mrb[0].mxu0
      %v1889 = vadd.f32 %v1642, %v1888
      %v1890 = vpop.f32.mrb[0].mxu0
      %1891 = vmatprep.mubr.bf16.mxu0 0
      %1892 = vmatmul.mubr.bf16.gmra.mrb[0].mxu0 %v1612
      %v1893 = vpop.f32.mrb[0].mxu0
      %v1894 = vadd.f32 %v1642, %v1893
      %v1895 = vpop.f32.mrb[0].mxu0
      %v1896 = vpop.f32.mrb[0].mxu0
      %v1897 = vadd.f32 %v1642, %v1896
      %v1898 = vpop.f32.mrb[0].mxu0
      %1899 = vmatprep.mubr.bf16.mxu0 0
      %1900 = vmatmul.mubr.bf16.gmra.mrb[0].mxu0 %v1613
      %v1901 = vpop.f32.mrb[0].mxu0
      %v1902 = vadd.f32 %v1642, %v1901
      %v1903 = vpop.f32.mrb[0].mxu0
      %v1904 = vpop.f32.mrb[0].mxu0
      %v1905 = vadd.f32 %v1642, %v1904
      %v1906 = vpop.f32.mrb[0].mxu0
      %1907 = vmatprep.mubr.bf16.mxu0 0
      %1908 = vmatmul.mubr.bf16.gmra.mrb[0].mxu0 %v1614
      %v1909 = vpop.f32.mrb[0].mxu0
      %v1910 = vadd.f32 %v1642, %v1909
      %v1911 = vpop.f32.mrb[0].mxu0
      %v1912 = vpop.f32.mrb[0].mxu0
      %v1913 = vadd.f32 %v1642, %v1912
      %v1914 = vpop.f32.mrb[0].mxu0
      %1915 = vmatprep.mubr.bf16.mxu0 0
      %1916 = vmatmul.mubr.bf16.gmra.mrb[0].mxu0 %v1615
      %v1917 = vpop.f32.mrb[0].mxu0
      %v1918 = vadd.f32 %v1642, %v1917
      %v1919 = vpop.f32.mrb[0].mxu0
      %v1920 = vpop.f32.mrb[0].mxu0
      %v1921 = vadd.f32 %v1642, %v1920
      %v1922 = vpop.f32.mrb[0].mxu0
      %1923 = vmatprep.mubr.bf16.mxu0 0
      %1924 = vmatmul.mubr.bf16.gmra.mrb[0].mxu0 %v1616
      %v1925 = vpop.f32.mrb[0].mxu0
      %v1926 = vadd.f32 %v1642, %v1925
      %v1927 = vpop.f32.mrb[0].mxu0
      %v1928 = vpop.f32.mrb[0].mxu0
      %v1929 = vadd.f32 %v1642, %v1928
      %v1930 = vpop.f32.mrb[0].mxu0
      %1931 = vmatprep.mubr.bf16.mxu0 0
      %1932 = vmatmul.mubr.bf16.gmra.mrb[0].mxu0 %v1617
      %v1933 = vpop.f32.mrb[0].mxu0
      %v1934 = vadd.f32 %v1642, %v1933
      %v1935 = vpop.f32.mrb[0].mxu0
      %v1936 = vpop.f32.mrb[0].mxu0
      %v1937 = vadd.f32 %v1642, %v1936
      %v1938 = vpop.f32.mrb[0].mxu0
      %1939 = vmatprep.mubr.bf16.mxu0 0
      %1940 = vmatmul.mubr.bf16.gmra.mrb[0].mxu0 %v1618
      %v1941 = vpop.f32.mrb[0].mxu0
      %v1942 = vadd.f32 %v1642, %v1941
      %v1943 = vpop.f32.mrb[0].mxu0
      %v1944 = vpop.f32.mrb[0].mxu0
      %v1945 = vadd.f32 %v1642, %v1944
      %v1946 = vpop.f32.mrb[0].mxu0
      %1947 = vmatprep.mubr.bf16.mxu0 0
      %1948 = vmatmul.mubr.bf16.gmra.mrb[0].mxu0 %v1619
      %v1949 = vpop.f32.mrb[0].mxu0
      %v1950 = vadd.f32 %v1642, %v1949
      %v1951 = vpop.f32.mrb[0].mxu0
      %v1952 = vpop.f32.mrb[0].mxu0
      %v1953 = vadd.f32 %v1642, %v1952
      %v1954 = vpop.f32.mrb[0].mxu0
      %1955 = vmatprep.mubr.bf16.mxu0 0
      %1956 = vmatmul.mubr.bf16.gmra.mrb[0].mxu0 %v1620
      %v1957 = vpop.f32.mrb[0].mxu0
      %v1958 = vadd.f32 %v1642, %v1957
      %v1959 = vpop.f32.mrb[0].mxu0
      %v1960 = vpop.f32.mrb[0].mxu0
      %v1961 = vadd.f32 %v1642, %v1960
      %v1962 = vpop.f32.mrb[0].mxu0
      %1963 = vmatprep.mubr.bf16.mxu0 0
      %1964 = vmatmul.mubr.bf16.gmra.mrb[0].mxu0 %v1621
      %v1965 = vpop.f32.mrb[0].mxu0
      %v1966 = vadd.f32 %v1642, %v1965
      %v1967 = vpop.f32.mrb[0].mxu0
      %v1968 = vpop.f32.mrb[0].mxu0
      %v1969 = vadd.f32 %v1642, %v1968
      %v1970 = vpop.f32.mrb[0].mxu0
      %1971 = vmatprep.mubr.bf16.mxu0 0
      %1972 = vmatmul.mubr.bf16.gmra.mrb[0].mxu0 %v1622
      %v1973 = vpop.f32.mrb[0].mxu0
      %v1974 = vadd.f32 %v1642, %v1973
      %v1975 = vpop.f32.mrb[0].mxu0
      %v1976 = vpop.f32.mrb[0].mxu0
      %v1977 = vadd.f32 %v1642, %v1976
      %v1978 = vpop.f32.mrb[0].mxu0
      %1979 = vdwg.mxu0
      %v1980 = vmax.f32 %v1726, 0.0
      %v1981 = vmax.f32 %v1729, 0.0
      %v1982 = vmax.f32 %v1734, 0.0
      %v1983 = vmax.f32 %v1737, 0.0
      %v1984 = vmax.f32 %v1742, 0.0
      %v1985 = vmax.f32 %v1745, 0.0
      %v1986 = vmax.f32 %v1750, 0.0
      %v1987 = vmax.f32 %v1753, 0.0
      %v1988 = vmax.f32 %v1758, 0.0
      %v1989 = vmax.f32 %v1761, 0.0
      %v1990 = vmax.f32 %v1766, 0.0
      %v1991 = vmax.f32 %v1769, 0.0
      %v1992 = vmax.f32 %v1774, 0.0
      %v1993 = vmax.f32 %v1777, 0.0
      %v1994 = vmax.f32 %v1782, 0.0
      %v1995 = vmax.f32 %v1785, 0.0
      %v1996 = vmax.f32 %v1790, 0.0
      %v1997 = vmax.f32 %v1793, 0.0
      %v1998 = vmax.f32 %v1798, 0.0
      %v1999 = vmax.f32 %v1801, 0.0
      %v2000 = vmax.f32 %v1806, 0.0
      %v2001 = vmax.f32 %v1809, 0.0
      %v2002 = vmax.f32 %v1814, 0.0
      %v2003 = vmax.f32 %v1817, 0.0
      %v2004 = vmax.f32 %v1822, 0.0
      %v2005 = vmax.f32 %v1825, 0.0
      %v2006 = vmax.f32 %v1830, 0.0
      %v2007 = vmax.f32 %v1833, 0.0
      %v2008 = vmax.f32 %v1838, 0.0
      %v2009 = vmax.f32 %v1841, 0.0
      %v2010 = vmax.f32 %v1846, 0.0
      %v2011 = vmax.f32 %v1849, 0.0
      %v2012 = vmax.f32 %v1854, 0.0
      %v2013 = vmax.f32 %v1857, 0.0
      %v2014 = vmax.f32 %v1862, 0.0
      %v2015 = vmax.f32 %v1865, 0.0
      %v2016 = vmax.f32 %v1870, 0.0
      %v2017 = vmax.f32 %v1873, 0.0
      %v2018 = vmax.f32 %v1878, 0.0
      %v2019 = vmax.f32 %v1881, 0.0
      %v2020 = vmax.f32 %v1886, 0.0
      %v2021 = vmax.f32 %v1889, 0.0
      %v2022 = vmax.f32 %v1894, 0.0
      %v2023 = vmax.f32 %v1897, 0.0
      %v2024 = vmax.f32 %v1902, 0.0
      %v2025 = vmax.f32 %v1905, 0.0
      %v2026 = vmax.f32 %v1910, 0.0
      %v2027 = vmax.f32 %v1913, 0.0
      %v2028 = vmax.f32 %v1918, 0.0
      %v2029 = vmax.f32 %v1921, 0.0
      %v2030 = vmax.f32 %v1926, 0.0
      %v2031 = vmax.f32 %v1929, 0.0
      %v2032 = vmax.f32 %v1934, 0.0
      %v2033 = vmax.f32 %v1937, 0.0
      %v2034 = vmax.f32 %v1942, 0.0
      %v2035 = vmax.f32 %v1945, 0.0
      %v2036 = vmax.f32 %v1950, 0.0
      %v2037 = vmax.f32 %v1953, 0.0
      %v2038 = vmax.f32 %v1958, 0.0
      %v2039 = vmax.f32 %v1961, 0.0
      %v2040 = vmax.f32 %v1966, 0.0
      %v2041 = vmax.f32 %v1969, 0.0
      %v2042 = vmax.f32 %v1974, 0.0
      %v2043 = vmax.f32 %v1977, 0.0
      %v2044 = vpack.c.bf16 %v1981, %v1980
      %v2045 = vpack.c.bf16 %v1983, %v1982
      %v2046 = vpack.c.bf16 %v1985, %v1984
      %v2047 = vpack.c.bf16 %v1987, %v1986
      %v2048 = vpack.c.bf16 %v1989, %v1988
      %v2049 = vpack.c.bf16 %v1991, %v1990
      %v2050 = vpack.c.bf16 %v1993, %v1992
      %v2051 = vpack.c.bf16 %v1995, %v1994
      %v2052 = vpack.c.bf16 %v1997, %v1996
      %v2053 = vpack.c.bf16 %v1999, %v1998
      %v2054 = vpack.c.bf16 %v2001, %v2000
      %v2055 = vpack.c.bf16 %v2003, %v2002
      %v2056 = vpack.c.bf16 %v2005, %v2004
      %v2057 = vpack.c.bf16 %v2007, %v2006
      %v2058 = vpack.c.bf16 %v2009, %v2008
      %v2059 = vpack.c.bf16 %v2011, %v2010
      %v2060 = vpack.c.bf16 %v2013, %v2012
      %v2061 = vpack.c.bf16 %v2015, %v2014
      %v2062 = vpack.c.bf16 %v2017, %v2016
      %v2063 = vpack.c.bf16 %v2019, %v2018
      %v2064 = vpack.c.bf16 %v2021, %v2020
      %v2065 = vpack.c.bf16 %v2023, %v2022
      %v2066 = vpack.c.bf16 %v2025, %v2024
      %v2067 = vpack.c.bf16 %v2027, %v2026
      %v2068 = vpack.c.bf16 %v2029, %v2028
      %v2069 = vpack.c.bf16 %v2031, %v2030
      %v2070 = vpack.c.bf16 %v2033, %v2032
      %v2071 = vpack.c.bf16 %v2035, %v2034
      %v2072 = vpack.c.bf16 %v2037, %v2036
      %v2073 = vpack.c.bf16 %v2039, %v2038
      %v2074 = vpack.c.bf16 %v2041, %v2040
      %v2075 = vpack.c.bf16 %v2043, %v2042
      %s2076 = scalar_lea.vmem %s2, 64
      %v2077 = vld [vmem:[%s2076] sm:$0xf]
      %v2078 = vld [vmem:[%s2076 + $0x4] sm:$0xf]
      %v2079 = vld [vmem:[%s2076 + $0x8] sm:$0xf]
      %v2080 = vld [vmem:[%s2076 + $0xc] sm:$0xf]
      %v2081 = vld [vmem:[%s2076 + $0x10] sm:$0xf]
      %v2082 = vld [vmem:[%s2076 + $0x14] sm:$0xf]
      %v2083 = vld [vmem:[%s2076 + $0x18] sm:$0xf]
      %v2084 = vld [vmem:[%s2076 + $0x1c] sm:$0xf]
      %v2085 = vld [vmem:[%s2076 + $0x20] sm:$0xf]
      %v2086 = vld [vmem:[%s2076 + $0x24] sm:$0xf]
      %v2087 = vld [vmem:[%s2076 + $0x28] sm:$0xf]
      %v2088 = vld [vmem:[%s2076 + $0x2c] sm:$0xf]
      %v2089 = vld [vmem:[%s2076 + $0x30] sm:$0xf]
      %v2090 = vld [vmem:[%s2076 + $0x34] sm:$0xf]
      %v2091 = vld [vmem:[%s2076 + $0x38] sm:$0xf]
      %v2092 = vld [vmem:[%s2076 + $0x3c] sm:$0xf]
      %v2093 = vlaneseq
      %v2094 = vshrl.u32 %v2093, 7
      %v2095 = vsub.s32 2, %v2094
      %v2096 = vrot.slane %v1458, %v2095
      %v2113 = vunpack.c.l.b16 %v2077
      %v2114 = vunpack.c.l.b16 %v2078
      %v2115 = vunpack.c.l.b16 %v2079
      %v2116 = vunpack.c.l.b16 %v2080
      %v2117 = vunpack.c.l.b16 %v2081
      %v2118 = vunpack.c.l.b16 %v2082
      %v2119 = vunpack.c.l.b16 %v2083
      %v2120 = vunpack.c.l.b16 %v2084
      %v2121 = vunpack.c.l.b16 %v2085
      %v2122 = vunpack.c.l.b16 %v2086
      %v2123 = vunpack.c.l.b16 %v2087
      %v2124 = vunpack.c.l.b16 %v2088
      %v2125 = vunpack.c.l.b16 %v2089
      %v2126 = vunpack.c.l.b16 %v2090
      %v2127 = vunpack.c.l.b16 %v2091
      %v2128 = vunpack.c.l.b16 %v2092
      %v2129 = vpack.c.b16 %v2114, %v2113
      %v2130 = vpack.c.b16 %v2116, %v2115
      %v2131 = vpack.c.b16 %v2118, %v2117
      %v2132 = vpack.c.b16 %v2120, %v2119
      %v2133 = vpack.c.b16 %v2122, %v2121
      %v2134 = vpack.c.b16 %v2124, %v2123
      %v2135 = vpack.c.b16 %v2126, %v2125
      %v2136 = vpack.c.b16 %v2128, %v2127
      %2145 = vmatprep.subr.bf16.mxu0 0
      %2146 = vmatpush1.bf16.msra.mxu0 %v2129
      %2147 = vmatprep.subr.bf16.mxu0 0
      %2148 = vmatpush1.bf16.msra.mxu0 %v2130
      %2149 = vmatprep.subr.bf16.mxu0 0
      %2150 = vmatpush1.bf16.msra.mxu0 %v2131
      %2151 = vmatprep.subr.bf16.mxu0 0
      %2152 = vmatpush1.bf16.msra.mxu0 %v2132
      %2153 = vmatprep.subr.bf16.mxu0 0
      %2154 = vmatpush1.bf16.msra.mxu0 %v2133
      %2155 = vmatprep.subr.bf16.mxu0 0
      %2156 = vmatpush1.bf16.msra.mxu0 %v2134
      %2157 = vmatprep.subr.bf16.mxu0 0
      %2158 = vmatpush1.bf16.msra.mxu0 %v2135
      %2159 = vmatprep.subr.bf16.mxu0 0
      %2160 = vmatpush1.bf16.msra.mxu0 %v2136
      %2161 = vmatprep.subr.bf16.mxu0 0
      %2162 = vmatpush1.bf16.msra.mxu0 0
      %2163 = vmatprep.subr.bf16.mxu0 0
      %2164 = vmatpush1.bf16.msra.mxu0 0
      %2165 = vmatprep.subr.bf16.mxu0 0
      %2166 = vmatpush1.bf16.msra.mxu0 0
      %2167 = vmatprep.subr.bf16.mxu0 0
      %2168 = vmatpush1.bf16.msra.mxu0 0
      %2169 = vmatprep.subr.bf16.mxu0 0
      %2170 = vmatpush1.bf16.msra.mxu0 0
      %2171 = vmatprep.subr.bf16.mxu0 0
      %2172 = vmatpush1.bf16.msra.mxu0 0
      %2173 = vmatprep.subr.bf16.mxu0 0
      %2174 = vmatpush1.bf16.msra.mxu0 0
      %2175 = vmatprep.subr.bf16.mxu0 0
      %2176 = vmatpush1.bf16.msra.mxu0 0
      %2177 = vmatprep.mubr.bf16.mxu0 0
      %2178 = vmatmul.mubr.bf16.gmra.mrb[0].mxu0 %v2044
      %v2179 = vpop.f32.mrb[0].mxu0
      %v2180 = vadd.f32 %v2096, %v2179
      %v2181 = vpop.f32.mrb[0].mxu0
      %v2182 = vpop.f32.mrb[0].mxu0
      %v2183 = vadd.f32 %v2096, %v2182
      %v2184 = vpop.f32.mrb[0].mxu0
      %2185 = vmatprep.mubr.bf16.mxu0 0
      %2186 = vmatmul.mubr.bf16.gmra.mrb[0].mxu0 %v2045
      %v2187 = vpop.f32.mrb[0].mxu0
      %v2188 = vadd.f32 %v2096, %v2187
      %v2189 = vpop.f32.mrb[0].mxu0
      %v2190 = vpop.f32.mrb[0].mxu0
      %v2191 = vadd.f32 %v2096, %v2190
      %v2192 = vpop.f32.mrb[0].mxu0
      %2193 = vmatprep.mubr.bf16.mxu0 0
      %2194 = vmatmul.mubr.bf16.gmra.mrb[0].mxu0 %v2046
      %v2195 = vpop.f32.mrb[0].mxu0
      %v2196 = vadd.f32 %v2096, %v2195
      %v2197 = vpop.f32.mrb[0].mxu0
      %v2198 = vpop.f32.mrb[0].mxu0
      %v2199 = vadd.f32 %v2096, %v2198
      %v2200 = vpop.f32.mrb[0].mxu0
      %2201 = vmatprep.mubr.bf16.mxu0 0
      %2202 = vmatmul.mubr.bf16.gmra.mrb[0].mxu0 %v2047
      %v2203 = vpop.f32.mrb[0].mxu0
      %v2204 = vadd.f32 %v2096, %v2203
      %v2205 = vpop.f32.mrb[0].mxu0
      %v2206 = vpop.f32.mrb[0].mxu0
      %v2207 = vadd.f32 %v2096, %v2206
      %v2208 = vpop.f32.mrb[0].mxu0
      %2209 = vmatprep.mubr.bf16.mxu0 0
      %2210 = vmatmul.mubr.bf16.gmra.mrb[0].mxu0 %v2048
      %v2211 = vpop.f32.mrb[0].mxu0
      %v2212 = vadd.f32 %v2096, %v2211
      %v2213 = vpop.f32.mrb[0].mxu0
      %v2214 = vpop.f32.mrb[0].mxu0
      %v2215 = vadd.f32 %v2096, %v2214
      %v2216 = vpop.f32.mrb[0].mxu0
      %2217 = vmatprep.mubr.bf16.mxu0 0
      %2218 = vmatmul.mubr.bf16.gmra.mrb[0].mxu0 %v2049
      %v2219 = vpop.f32.mrb[0].mxu0
      %v2220 = vadd.f32 %v2096, %v2219
      %v2221 = vpop.f32.mrb[0].mxu0
      %v2222 = vpop.f32.mrb[0].mxu0
      %v2223 = vadd.f32 %v2096, %v2222
      %v2224 = vpop.f32.mrb[0].mxu0
      %2225 = vmatprep.mubr.bf16.mxu0 0
      %2226 = vmatmul.mubr.bf16.gmra.mrb[0].mxu0 %v2050
      %v2227 = vpop.f32.mrb[0].mxu0
      %v2228 = vadd.f32 %v2096, %v2227
      %v2229 = vpop.f32.mrb[0].mxu0
      %v2230 = vpop.f32.mrb[0].mxu0
      %v2231 = vadd.f32 %v2096, %v2230
      %v2232 = vpop.f32.mrb[0].mxu0
      %2233 = vmatprep.mubr.bf16.mxu0 0
      %2234 = vmatmul.mubr.bf16.gmra.mrb[0].mxu0 %v2051
      %v2235 = vpop.f32.mrb[0].mxu0
      %v2236 = vadd.f32 %v2096, %v2235
      %v2237 = vpop.f32.mrb[0].mxu0
      %v2238 = vpop.f32.mrb[0].mxu0
      %v2239 = vadd.f32 %v2096, %v2238
      %v2240 = vpop.f32.mrb[0].mxu0
      %2241 = vmatprep.mubr.bf16.mxu0 0
      %2242 = vmatmul.mubr.bf16.gmra.mrb[0].mxu0 %v2052
      %v2243 = vpop.f32.mrb[0].mxu0
      %v2244 = vadd.f32 %v2096, %v2243
      %v2245 = vpop.f32.mrb[0].mxu0
      %v2246 = vpop.f32.mrb[0].mxu0
      %v2247 = vadd.f32 %v2096, %v2246
      %v2248 = vpop.f32.mrb[0].mxu0
      %2249 = vmatprep.mubr.bf16.mxu0 0
      %2250 = vmatmul.mubr.bf16.gmra.mrb[0].mxu0 %v2053
      %v2251 = vpop.f32.mrb[0].mxu0
      %v2252 = vadd.f32 %v2096, %v2251
      %v2253 = vpop.f32.mrb[0].mxu0
      %v2254 = vpop.f32.mrb[0].mxu0
      %v2255 = vadd.f32 %v2096, %v2254
      %v2256 = vpop.f32.mrb[0].mxu0
      %2257 = vmatprep.mubr.bf16.mxu0 0
      %2258 = vmatmul.mubr.bf16.gmra.mrb[0].mxu0 %v2054
      %v2259 = vpop.f32.mrb[0].mxu0
      %v2260 = vadd.f32 %v2096, %v2259
      %v2261 = vpop.f32.mrb[0].mxu0
      %v2262 = vpop.f32.mrb[0].mxu0
      %v2263 = vadd.f32 %v2096, %v2262
      %v2264 = vpop.f32.mrb[0].mxu0
      %2265 = vmatprep.mubr.bf16.mxu0 0
      %2266 = vmatmul.mubr.bf16.gmra.mrb[0].mxu0 %v2055
      %v2267 = vpop.f32.mrb[0].mxu0
      %v2268 = vadd.f32 %v2096, %v2267
      %v2269 = vpop.f32.mrb[0].mxu0
      %v2270 = vpop.f32.mrb[0].mxu0
      %v2271 = vadd.f32 %v2096, %v2270
      %v2272 = vpop.f32.mrb[0].mxu0
      %2273 = vmatprep.mubr.bf16.mxu0 0
      %2274 = vmatmul.mubr.bf16.gmra.mrb[0].mxu0 %v2056
      %v2275 = vpop.f32.mrb[0].mxu0
      %v2276 = vadd.f32 %v2096, %v2275
      %v2277 = vpop.f32.mrb[0].mxu0
      %v2278 = vpop.f32.mrb[0].mxu0
      %v2279 = vadd.f32 %v2096, %v2278
      %v2280 = vpop.f32.mrb[0].mxu0
      %2281 = vmatprep.mubr.bf16.mxu0 0
      %2282 = vmatmul.mubr.bf16.gmra.mrb[0].mxu0 %v2057
      %v2283 = vpop.f32.mrb[0].mxu0
      %v2284 = vadd.f32 %v2096, %v2283
      %v2285 = vpop.f32.mrb[0].mxu0
      %v2286 = vpop.f32.mrb[0].mxu0
      %v2287 = vadd.f32 %v2096, %v2286
      %v2288 = vpop.f32.mrb[0].mxu0
      %2289 = vmatprep.mubr.bf16.mxu0 0
      %2290 = vmatmul.mubr.bf16.gmra.mrb[0].mxu0 %v2058
      %v2291 = vpop.f32.mrb[0].mxu0
      %v2292 = vadd.f32 %v2096, %v2291
      %v2293 = vpop.f32.mrb[0].mxu0
      %v2294 = vpop.f32.mrb[0].mxu0
      %v2295 = vadd.f32 %v2096, %v2294
      %v2296 = vpop.f32.mrb[0].mxu0
      %2297 = vmatprep.mubr.bf16.mxu0 0
      %2298 = vmatmul.mubr.bf16.gmra.mrb[0].mxu0 %v2059
      %v2299 = vpop.f32.mrb[0].mxu0
      %v2300 = vadd.f32 %v2096, %v2299
      %v2301 = vpop.f32.mrb[0].mxu0
      %v2302 = vpop.f32.mrb[0].mxu0
      %v2303 = vadd.f32 %v2096, %v2302
      %v2304 = vpop.f32.mrb[0].mxu0
      %2305 = vmatprep.mubr.bf16.mxu0 0
      %2306 = vmatmul.mubr.bf16.gmra.mrb[0].mxu0 %v2060
      %v2307 = vpop.f32.mrb[0].mxu0
      %v2308 = vadd.f32 %v2096, %v2307
      %v2309 = vpop.f32.mrb[0].mxu0
      %v2310 = vpop.f32.mrb[0].mxu0
      %v2311 = vadd.f32 %v2096, %v2310
      %v2312 = vpop.f32.mrb[0].mxu0
      %2313 = vmatprep.mubr.bf16.mxu0 0
      %2314 = vmatmul.mubr.bf16.gmra.mrb[0].mxu0 %v2061
      %v2315 = vpop.f32.mrb[0].mxu0
      %v2316 = vadd.f32 %v2096, %v2315
      %v2317 = vpop.f32.mrb[0].mxu0
      %v2318 = vpop.f32.mrb[0].mxu0
      %v2319 = vadd.f32 %v2096, %v2318
      %v2320 = vpop.f32.mrb[0].mxu0
      %2321 = vmatprep.mubr.bf16.mxu0 0
      %2322 = vmatmul.mubr.bf16.gmra.mrb[0].mxu0 %v2062
      %v2323 = vpop.f32.mrb[0].mxu0
      %v2324 = vadd.f32 %v2096, %v2323
      %v2325 = vpop.f32.mrb[0].mxu0
      %v2326 = vpop.f32.mrb[0].mxu0
      %v2327 = vadd.f32 %v2096, %v2326
      %v2328 = vpop.f32.mrb[0].mxu0
      %2329 = vmatprep.mubr.bf16.mxu0 0
      %2330 = vmatmul.mubr.bf16.gmra.mrb[0].mxu0 %v2063
      %v2331 = vpop.f32.mrb[0].mxu0
      %v2332 = vadd.f32 %v2096, %v2331
      %v2333 = vpop.f32.mrb[0].mxu0
      %v2334 = vpop.f32.mrb[0].mxu0
      %v2335 = vadd.f32 %v2096, %v2334
      %v2336 = vpop.f32.mrb[0].mxu0
      %2337 = vmatprep.mubr.bf16.mxu0 0
      %2338 = vmatmul.mubr.bf16.gmra.mrb[0].mxu0 %v2064
      %v2339 = vpop.f32.mrb[0].mxu0
      %v2340 = vadd.f32 %v2096, %v2339
      %v2341 = vpop.f32.mrb[0].mxu0
      %v2342 = vpop.f32.mrb[0].mxu0
      %v2343 = vadd.f32 %v2096, %v2342
      %v2344 = vpop.f32.mrb[0].mxu0
      %2345 = vmatprep.mubr.bf16.mxu0 0
      %2346 = vmatmul.mubr.bf16.gmra.mrb[0].mxu0 %v2065
      %v2347 = vpop.f32.mrb[0].mxu0
      %v2348 = vadd.f32 %v2096, %v2347
      %v2349 = vpop.f32.mrb[0].mxu0
      %v2350 = vpop.f32.mrb[0].mxu0
      %v2351 = vadd.f32 %v2096, %v2350
      %v2352 = vpop.f32.mrb[0].mxu0
      %2353 = vmatprep.mubr.bf16.mxu0 0
      %2354 = vmatmul.mubr.bf16.gmra.mrb[0].mxu0 %v2066
      %v2355 = vpop.f32.mrb[0].mxu0
      %v2356 = vadd.f32 %v2096, %v2355
      %v2357 = vpop.f32.mrb[0].mxu0
      %v2358 = vpop.f32.mrb[0].mxu0
      %v2359 = vadd.f32 %v2096, %v2358
      %v2360 = vpop.f32.mrb[0].mxu0
      %2361 = vmatprep.mubr.bf16.mxu0 0
      %2362 = vmatmul.mubr.bf16.gmra.mrb[0].mxu0 %v2067
      %v2363 = vpop.f32.mrb[0].mxu0
      %v2364 = vadd.f32 %v2096, %v2363
      %v2365 = vpop.f32.mrb[0].mxu0
      %v2366 = vpop.f32.mrb[0].mxu0
      %v2367 = vadd.f32 %v2096, %v2366
      %v2368 = vpop.f32.mrb[0].mxu0
      %2369 = vmatprep.mubr.bf16.mxu0 0
      %2370 = vmatmul.mubr.bf16.gmra.mrb[0].mxu0 %v2068
      %v2371 = vpop.f32.mrb[0].mxu0
      %v2372 = vadd.f32 %v2096, %v2371
      %v2373 = vpop.f32.mrb[0].mxu0
      %v2374 = vpop.f32.mrb[0].mxu0
      %v2375 = vadd.f32 %v2096, %v2374
      %v2376 = vpop.f32.mrb[0].mxu0
      %2377 = vmatprep.mubr.bf16.mxu0 0
      %2378 = vmatmul.mubr.bf16.gmra.mrb[0].mxu0 %v2069
      %v2379 = vpop.f32.mrb[0].mxu0
      %v2380 = vadd.f32 %v2096, %v2379
      %v2381 = vpop.f32.mrb[0].mxu0
      %v2382 = vpop.f32.mrb[0].mxu0
      %v2383 = vadd.f32 %v2096, %v2382
      %v2384 = vpop.f32.mrb[0].mxu0
      %2385 = vmatprep.mubr.bf16.mxu0 0
      %2386 = vmatmul.mubr.bf16.gmra.mrb[0].mxu0 %v2070
      %v2387 = vpop.f32.mrb[0].mxu0
      %v2388 = vadd.f32 %v2096, %v2387
      %v2389 = vpop.f32.mrb[0].mxu0
      %v2390 = vpop.f32.mrb[0].mxu0
      %v2391 = vadd.f32 %v2096, %v2390
      %v2392 = vpop.f32.mrb[0].mxu0
      %2393 = vmatprep.mubr.bf16.mxu0 0
      %2394 = vmatmul.mubr.bf16.gmra.mrb[0].mxu0 %v2071
      %v2395 = vpop.f32.mrb[0].mxu0
      %v2396 = vadd.f32 %v2096, %v2395
      %v2397 = vpop.f32.mrb[0].mxu0
      %v2398 = vpop.f32.mrb[0].mxu0
      %v2399 = vadd.f32 %v2096, %v2398
      %v2400 = vpop.f32.mrb[0].mxu0
      %2401 = vmatprep.mubr.bf16.mxu0 0
      %2402 = vmatmul.mubr.bf16.gmra.mrb[0].mxu0 %v2072
      %v2403 = vpop.f32.mrb[0].mxu0
      %v2404 = vadd.f32 %v2096, %v2403
      %v2405 = vpop.f32.mrb[0].mxu0
      %v2406 = vpop.f32.mrb[0].mxu0
      %v2407 = vadd.f32 %v2096, %v2406
      %v2408 = vpop.f32.mrb[0].mxu0
      %2409 = vmatprep.mubr.bf16.mxu0 0
      %2410 = vmatmul.mubr.bf16.gmra.mrb[0].mxu0 %v2073
      %v2411 = vpop.f32.mrb[0].mxu0
      %v2412 = vadd.f32 %v2096, %v2411
      %v2413 = vpop.f32.mrb[0].mxu0
      %v2414 = vpop.f32.mrb[0].mxu0
      %v2415 = vadd.f32 %v2096, %v2414
      %v2416 = vpop.f32.mrb[0].mxu0
      %2417 = vmatprep.mubr.bf16.mxu0 0
      %2418 = vmatmul.mubr.bf16.gmra.mrb[0].mxu0 %v2074
      %v2419 = vpop.f32.mrb[0].mxu0
      %v2420 = vadd.f32 %v2096, %v2419
      %v2421 = vpop.f32.mrb[0].mxu0
      %v2422 = vpop.f32.mrb[0].mxu0
      %v2423 = vadd.f32 %v2096, %v2422
      %v2424 = vpop.f32.mrb[0].mxu0
      %2425 = vmatprep.mubr.bf16.mxu0 0
      %2426 = vmatmul.mubr.bf16.gmra.mrb[0].mxu0 %v2075
      %v2427 = vpop.f32.mrb[0].mxu0
      %v2428 = vadd.f32 %v2096, %v2427
      %v2429 = vpop.f32.mrb[0].mxu0
      %v2430 = vpop.f32.mrb[0].mxu0
      %v2431 = vadd.f32 %v2096, %v2430
      %v2432 = vpop.f32.mrb[0].mxu0
      %2433 = vdwg.mxu0
      %v2434 = vmax.f32 %v2180, 0.0
      %v2435 = vmax.f32 %v2183, 0.0
      %v2436 = vmax.f32 %v2188, 0.0
      %v2437 = vmax.f32 %v2191, 0.0
      %v2438 = vmax.f32 %v2196, 0.0
      %v2439 = vmax.f32 %v2199, 0.0
      %v2440 = vmax.f32 %v2204, 0.0
      %v2441 = vmax.f32 %v2207, 0.0
      %v2442 = vmax.f32 %v2212, 0.0
      %v2443 = vmax.f32 %v2215, 0.0
      %v2444 = vmax.f32 %v2220, 0.0
      %v2445 = vmax.f32 %v2223, 0.0
      %v2446 = vmax.f32 %v2228, 0.0
      %v2447 = vmax.f32 %v2231, 0.0
      %v2448 = vmax.f32 %v2236, 0.0
      %v2449 = vmax.f32 %v2239, 0.0
      %v2450 = vmax.f32 %v2244, 0.0
      %v2451 = vmax.f32 %v2247, 0.0
      %v2452 = vmax.f32 %v2252, 0.0
      %v2453 = vmax.f32 %v2255, 0.0
      %v2454 = vmax.f32 %v2260, 0.0
      %v2455 = vmax.f32 %v2263, 0.0
      %v2456 = vmax.f32 %v2268, 0.0
      %v2457 = vmax.f32 %v2271, 0.0
      %v2458 = vmax.f32 %v2276, 0.0
      %v2459 = vmax.f32 %v2279, 0.0
      %v2460 = vmax.f32 %v2284, 0.0
      %v2461 = vmax.f32 %v2287, 0.0
      %v2462 = vmax.f32 %v2292, 0.0
      %v2463 = vmax.f32 %v2295, 0.0
      %v2464 = vmax.f32 %v2300, 0.0
      %v2465 = vmax.f32 %v2303, 0.0
      %v2466 = vmax.f32 %v2308, 0.0
      %v2467 = vmax.f32 %v2311, 0.0
      %v2468 = vmax.f32 %v2316, 0.0
      %v2469 = vmax.f32 %v2319, 0.0
      %v2470 = vmax.f32 %v2324, 0.0
      %v2471 = vmax.f32 %v2327, 0.0
      %v2472 = vmax.f32 %v2332, 0.0
      %v2473 = vmax.f32 %v2335, 0.0
      %v2474 = vmax.f32 %v2340, 0.0
      %v2475 = vmax.f32 %v2343, 0.0
      %v2476 = vmax.f32 %v2348, 0.0
      %v2477 = vmax.f32 %v2351, 0.0
      %v2478 = vmax.f32 %v2356, 0.0
      %v2479 = vmax.f32 %v2359, 0.0
      %v2480 = vmax.f32 %v2364, 0.0
      %v2481 = vmax.f32 %v2367, 0.0
      %v2482 = vmax.f32 %v2372, 0.0
      %v2483 = vmax.f32 %v2375, 0.0
      %v2484 = vmax.f32 %v2380, 0.0
      %v2485 = vmax.f32 %v2383, 0.0
      %v2486 = vmax.f32 %v2388, 0.0
      %v2487 = vmax.f32 %v2391, 0.0
      %v2488 = vmax.f32 %v2396, 0.0
      %v2489 = vmax.f32 %v2399, 0.0
      %v2490 = vmax.f32 %v2404, 0.0
      %v2491 = vmax.f32 %v2407, 0.0
      %v2492 = vmax.f32 %v2412, 0.0
      %v2493 = vmax.f32 %v2415, 0.0
      %v2494 = vmax.f32 %v2420, 0.0
      %v2495 = vmax.f32 %v2423, 0.0
      %v2496 = vmax.f32 %v2428, 0.0
      %v2497 = vmax.f32 %v2431, 0.0
      %v2498 = vpack.c.bf16 %v2435, %v2434
      %v2499 = vpack.c.bf16 %v2437, %v2436
      %v2500 = vpack.c.bf16 %v2439, %v2438
      %v2501 = vpack.c.bf16 %v2441, %v2440
      %v2502 = vpack.c.bf16 %v2443, %v2442
      %v2503 = vpack.c.bf16 %v2445, %v2444
      %v2504 = vpack.c.bf16 %v2447, %v2446
      %v2505 = vpack.c.bf16 %v2449, %v2448
      %v2506 = vpack.c.bf16 %v2451, %v2450
      %v2507 = vpack.c.bf16 %v2453, %v2452
      %v2508 = vpack.c.bf16 %v2455, %v2454
      %v2509 = vpack.c.bf16 %v2457, %v2456
      %v2510 = vpack.c.bf16 %v2459, %v2458
      %v2511 = vpack.c.bf16 %v2461, %v2460
      %v2512 = vpack.c.bf16 %v2463, %v2462
      %v2513 = vpack.c.bf16 %v2465, %v2464
      %v2514 = vpack.c.bf16 %v2467, %v2466
      %v2515 = vpack.c.bf16 %v2469, %v2468
      %v2516 = vpack.c.bf16 %v2471, %v2470
      %v2517 = vpack.c.bf16 %v2473, %v2472
      %v2518 = vpack.c.bf16 %v2475, %v2474
      %v2519 = vpack.c.bf16 %v2477, %v2476
      %v2520 = vpack.c.bf16 %v2479, %v2478
      %v2521 = vpack.c.bf16 %v2481, %v2480
      %v2522 = vpack.c.bf16 %v2483, %v2482
      %v2523 = vpack.c.bf16 %v2485, %v2484
      %v2524 = vpack.c.bf16 %v2487, %v2486
      %v2525 = vpack.c.bf16 %v2489, %v2488
      %v2526 = vpack.c.bf16 %v2491, %v2490
      %v2527 = vpack.c.bf16 %v2493, %v2492
      %v2528 = vpack.c.bf16 %v2495, %v2494
      %v2529 = vpack.c.bf16 %v2497, %v2496
      %s2530 = scalar_lea.vmem %s2, 128
      %v2531 = vld [vmem:[%s2530] sm:$0xf]
      %v2532 = vld [vmem:[%s2530 + $0x4] sm:$0xf]
      %v2533 = vld [vmem:[%s2530 + $0x8] sm:$0xf]
      %v2534 = vld [vmem:[%s2530 + $0xc] sm:$0xf]
      %v2535 = vld [vmem:[%s2530 + $0x10] sm:$0xf]
      %v2536 = vld [vmem:[%s2530 + $0x14] sm:$0xf]
      %v2537 = vld [vmem:[%s2530 + $0x18] sm:$0xf]
      %v2538 = vld [vmem:[%s2530 + $0x1c] sm:$0xf]
      %v2539 = vld [vmem:[%s2530 + $0x20] sm:$0xf]
      %v2540 = vld [vmem:[%s2530 + $0x24] sm:$0xf]
      %v2541 = vld [vmem:[%s2530 + $0x28] sm:$0xf]
      %v2542 = vld [vmem:[%s2530 + $0x2c] sm:$0xf]
      %v2543 = vld [vmem:[%s2530 + $0x30] sm:$0xf]
      %v2544 = vld [vmem:[%s2530 + $0x34] sm:$0xf]
      %v2545 = vld [vmem:[%s2530 + $0x38] sm:$0xf]
      %v2546 = vld [vmem:[%s2530 + $0x3c] sm:$0xf]
      %v2547 = vlaneseq
      %v2548 = vshrl.u32 %v2547, 7
      %v2549 = vsub.s32 3, %v2548
      %v2550 = vrot.slane %v1458, %v2549
      %v2567 = vunpack.c.l.b16 %v2531
      %v2568 = vunpack.c.l.b16 %v2532
      %v2569 = vunpack.c.l.b16 %v2533
      %v2570 = vunpack.c.l.b16 %v2534
      %v2571 = vunpack.c.l.b16 %v2535
      %v2572 = vunpack.c.l.b16 %v2536
      %v2573 = vunpack.c.l.b16 %v2537
      %v2574 = vunpack.c.l.b16 %v2538
      %v2575 = vunpack.c.l.b16 %v2539
      %v2576 = vunpack.c.l.b16 %v2540
      %v2577 = vunpack.c.l.b16 %v2541
      %v2578 = vunpack.c.l.b16 %v2542
      %v2579 = vunpack.c.l.b16 %v2543
      %v2580 = vunpack.c.l.b16 %v2544
      %v2581 = vunpack.c.l.b16 %v2545
      %v2582 = vunpack.c.l.b16 %v2546
      %v2583 = vpack.c.b16 %v2568, %v2567
      %v2584 = vpack.c.b16 %v2570, %v2569
      %v2585 = vpack.c.b16 %v2572, %v2571
      %v2586 = vpack.c.b16 %v2574, %v2573
      %v2587 = vpack.c.b16 %v2576, %v2575
      %v2588 = vpack.c.b16 %v2578, %v2577
      %v2589 = vpack.c.b16 %v2580, %v2579
      %v2590 = vpack.c.b16 %v2582, %v2581
      %2599 = vmatprep.subr.bf16.mxu0 0
      %2600 = vmatpush1.bf16.msra.mxu0 %v2583
      %2601 = vmatprep.subr.bf16.mxu0 0
      %2602 = vmatpush1.bf16.msra.mxu0 %v2584
      %2603 = vmatprep.subr.bf16.mxu0 0
      %2604 = vmatpush1.bf16.msra.mxu0 %v2585
      %2605 = vmatprep.subr.bf16.mxu0 0
      %2606 = vmatpush1.bf16.msra.mxu0 %v2586
      %2607 = vmatprep.subr.bf16.mxu0 0
      %2608 = vmatpush1.bf16.msra.mxu0 %v2587
      %2609 = vmatprep.subr.bf16.mxu0 0
      %2610 = vmatpush1.bf16.msra.mxu0 %v2588
      %2611 = vmatprep.subr.bf16.mxu0 0
      %2612 = vmatpush1.bf16.msra.mxu0 %v2589
      %2613 = vmatprep.subr.bf16.mxu0 0
      %2614 = vmatpush1.bf16.msra.mxu0 %v2590
      %2615 = vmatprep.subr.bf16.mxu0 0
      %2616 = vmatpush1.bf16.msra.mxu0 0
      %2617 = vmatprep.subr.bf16.mxu0 0
      %2618 = vmatpush1.bf16.msra.mxu0 0
      %2619 = vmatprep.subr.bf16.mxu0 0
      %2620 = vmatpush1.bf16.msra.mxu0 0
      %2621 = vmatprep.subr.bf16.mxu0 0
      %2622 = vmatpush1.bf16.msra.mxu0 0
      %2623 = vmatprep.subr.bf16.mxu0 0
      %2624 = vmatpush1.bf16.msra.mxu0 0
      %2625 = vmatprep.subr.bf16.mxu0 0
      %2626 = vmatpush1.bf16.msra.mxu0 0
      %2627 = vmatprep.subr.bf16.mxu0 0
      %2628 = vmatpush1.bf16.msra.mxu0 0
      %2629 = vmatprep.subr.bf16.mxu0 0
      %2630 = vmatpush1.bf16.msra.mxu0 0
      %2631 = vmatprep.mubr.bf16.mxu0 0
      %2632 = vmatmul.mubr.bf16.gmra.mrb[0].mxu0 %v2498
      %v2633 = vpop.f32.mrb[0].mxu0
      %v2634 = vadd.f32 %v2550, %v2633
      %v2635 = vpop.f32.mrb[0].mxu0
      %v2636 = vpop.f32.mrb[0].mxu0
      %v2637 = vadd.f32 %v2550, %v2636
      %v2638 = vpop.f32.mrb[0].mxu0
      %2639 = vmatprep.mubr.bf16.mxu0 0
      %2640 = vmatmul.mubr.bf16.gmra.mrb[0].mxu0 %v2499
      %v2641 = vpop.f32.mrb[0].mxu0
      %v2642 = vadd.f32 %v2550, %v2641
      %v2643 = vpop.f32.mrb[0].mxu0
      %v2644 = vpop.f32.mrb[0].mxu0
      %v2645 = vadd.f32 %v2550, %v2644
      %v2646 = vpop.f32.mrb[0].mxu0
      %2647 = vmatprep.mubr.bf16.mxu0 0
      %2648 = vmatmul.mubr.bf16.gmra.mrb[0].mxu0 %v2500
      %v2649 = vpop.f32.mrb[0].mxu0
      %v2650 = vadd.f32 %v2550, %v2649
      %v2651 = vpop.f32.mrb[0].mxu0
      %v2652 = vpop.f32.mrb[0].mxu0
      %v2653 = vadd.f32 %v2550, %v2652
      %v2654 = vpop.f32.mrb[0].mxu0
      %2655 = vmatprep.mubr.bf16.mxu0 0
      %2656 = vmatmul.mubr.bf16.gmra.mrb[0].mxu0 %v2501
      %v2657 = vpop.f32.mrb[0].mxu0
      %v2658 = vadd.f32 %v2550, %v2657
      %v2659 = vpop.f32.mrb[0].mxu0
      %v2660 = vpop.f32.mrb[0].mxu0
      %v2661 = vadd.f32 %v2550, %v2660
      %v2662 = vpop.f32.mrb[0].mxu0
      %2663 = vmatprep.mubr.bf16.mxu0 0
      %2664 = vmatmul.mubr.bf16.gmra.mrb[0].mxu0 %v2502
      %v2665 = vpop.f32.mrb[0].mxu0
      %v2666 = vadd.f32 %v2550, %v2665
      %v2667 = vpop.f32.mrb[0].mxu0
      %v2668 = vpop.f32.mrb[0].mxu0
      %v2669 = vadd.f32 %v2550, %v2668
      %v2670 = vpop.f32.mrb[0].mxu0
      %2671 = vmatprep.mubr.bf16.mxu0 0
      %2672 = vmatmul.mubr.bf16.gmra.mrb[0].mxu0 %v2503
      %v2673 = vpop.f32.mrb[0].mxu0
      %v2674 = vadd.f32 %v2550, %v2673
      %v2675 = vpop.f32.mrb[0].mxu0
      %v2676 = vpop.f32.mrb[0].mxu0
      %v2677 = vadd.f32 %v2550, %v2676
      %v2678 = vpop.f32.mrb[0].mxu0
      %2679 = vmatprep.mubr.bf16.mxu0 0
      %2680 = vmatmul.mubr.bf16.gmra.mrb[0].mxu0 %v2504
      %v2681 = vpop.f32.mrb[0].mxu0
      %v2682 = vadd.f32 %v2550, %v2681
      %v2683 = vpop.f32.mrb[0].mxu0
      %v2684 = vpop.f32.mrb[0].mxu0
      %v2685 = vadd.f32 %v2550, %v2684
      %v2686 = vpop.f32.mrb[0].mxu0
      %2687 = vmatprep.mubr.bf16.mxu0 0
      %2688 = vmatmul.mubr.bf16.gmra.mrb[0].mxu0 %v2505
      %v2689 = vpop.f32.mrb[0].mxu0
      %v2690 = vadd.f32 %v2550, %v2689
      %v2691 = vpop.f32.mrb[0].mxu0
      %v2692 = vpop.f32.mrb[0].mxu0
      %v2693 = vadd.f32 %v2550, %v2692
      %v2694 = vpop.f32.mrb[0].mxu0
      %2695 = vmatprep.mubr.bf16.mxu0 0
      %2696 = vmatmul.mubr.bf16.gmra.mrb[0].mxu0 %v2506
      %v2697 = vpop.f32.mrb[0].mxu0
      %v2698 = vadd.f32 %v2550, %v2697
      %v2699 = vpop.f32.mrb[0].mxu0
      %v2700 = vpop.f32.mrb[0].mxu0
      %v2701 = vadd.f32 %v2550, %v2700
      %v2702 = vpop.f32.mrb[0].mxu0
      %2703 = vmatprep.mubr.bf16.mxu0 0
      %2704 = vmatmul.mubr.bf16.gmra.mrb[0].mxu0 %v2507
      %v2705 = vpop.f32.mrb[0].mxu0
      %v2706 = vadd.f32 %v2550, %v2705
      %v2707 = vpop.f32.mrb[0].mxu0
      %v2708 = vpop.f32.mrb[0].mxu0
      %v2709 = vadd.f32 %v2550, %v2708
      %v2710 = vpop.f32.mrb[0].mxu0
      %2711 = vmatprep.mubr.bf16.mxu0 0
      %2712 = vmatmul.mubr.bf16.gmra.mrb[0].mxu0 %v2508
      %v2713 = vpop.f32.mrb[0].mxu0
      %v2714 = vadd.f32 %v2550, %v2713
      %v2715 = vpop.f32.mrb[0].mxu0
      %v2716 = vpop.f32.mrb[0].mxu0
      %v2717 = vadd.f32 %v2550, %v2716
      %v2718 = vpop.f32.mrb[0].mxu0
      %2719 = vmatprep.mubr.bf16.mxu0 0
      %2720 = vmatmul.mubr.bf16.gmra.mrb[0].mxu0 %v2509
      %v2721 = vpop.f32.mrb[0].mxu0
      %v2722 = vadd.f32 %v2550, %v2721
      %v2723 = vpop.f32.mrb[0].mxu0
      %v2724 = vpop.f32.mrb[0].mxu0
      %v2725 = vadd.f32 %v2550, %v2724
      %v2726 = vpop.f32.mrb[0].mxu0
      %2727 = vmatprep.mubr.bf16.mxu0 0
      %2728 = vmatmul.mubr.bf16.gmra.mrb[0].mxu0 %v2510
      %v2729 = vpop.f32.mrb[0].mxu0
      %v2730 = vadd.f32 %v2550, %v2729
      %v2731 = vpop.f32.mrb[0].mxu0
      %v2732 = vpop.f32.mrb[0].mxu0
      %v2733 = vadd.f32 %v2550, %v2732
      %v2734 = vpop.f32.mrb[0].mxu0
      %2735 = vmatprep.mubr.bf16.mxu0 0
      %2736 = vmatmul.mubr.bf16.gmra.mrb[0].mxu0 %v2511
      %v2737 = vpop.f32.mrb[0].mxu0
      %v2738 = vadd.f32 %v2550, %v2737
      %v2739 = vpop.f32.mrb[0].mxu0
      %v2740 = vpop.f32.mrb[0].mxu0
      %v2741 = vadd.f32 %v2550, %v2740
      %v2742 = vpop.f32.mrb[0].mxu0
      %2743 = vmatprep.mubr.bf16.mxu0 0
      %2744 = vmatmul.mubr.bf16.gmra.mrb[0].mxu0 %v2512
      %v2745 = vpop.f32.mrb[0].mxu0
      %v2746 = vadd.f32 %v2550, %v2745
      %v2747 = vpop.f32.mrb[0].mxu0
      %v2748 = vpop.f32.mrb[0].mxu0
      %v2749 = vadd.f32 %v2550, %v2748
      %v2750 = vpop.f32.mrb[0].mxu0
      %2751 = vmatprep.mubr.bf16.mxu0 0
      %2752 = vmatmul.mubr.bf16.gmra.mrb[0].mxu0 %v2513
      %v2753 = vpop.f32.mrb[0].mxu0
      %v2754 = vadd.f32 %v2550, %v2753
      %v2755 = vpop.f32.mrb[0].mxu0
      %v2756 = vpop.f32.mrb[0].mxu0
      %v2757 = vadd.f32 %v2550, %v2756
      %v2758 = vpop.f32.mrb[0].mxu0
      %2759 = vmatprep.mubr.bf16.mxu0 0
      %2760 = vmatmul.mubr.bf16.gmra.mrb[0].mxu0 %v2514
      %v2761 = vpop.f32.mrb[0].mxu0
      %v2762 = vadd.f32 %v2550, %v2761
      %v2763 = vpop.f32.mrb[0].mxu0
      %v2764 = vpop.f32.mrb[0].mxu0
      %v2765 = vadd.f32 %v2550, %v2764
      %v2766 = vpop.f32.mrb[0].mxu0
      %2767 = vmatprep.mubr.bf16.mxu0 0
      %2768 = vmatmul.mubr.bf16.gmra.mrb[0].mxu0 %v2515
      %v2769 = vpop.f32.mrb[0].mxu0
      %v2770 = vadd.f32 %v2550, %v2769
      %v2771 = vpop.f32.mrb[0].mxu0
      %v2772 = vpop.f32.mrb[0].mxu0
      %v2773 = vadd.f32 %v2550, %v2772
      %v2774 = vpop.f32.mrb[0].mxu0
      %2775 = vmatprep.mubr.bf16.mxu0 0
      %2776 = vmatmul.mubr.bf16.gmra.mrb[0].mxu0 %v2516
      %v2777 = vpop.f32.mrb[0].mxu0
      %v2778 = vadd.f32 %v2550, %v2777
      %v2779 = vpop.f32.mrb[0].mxu0
      %v2780 = vpop.f32.mrb[0].mxu0
      %v2781 = vadd.f32 %v2550, %v2780
      %v2782 = vpop.f32.mrb[0].mxu0
      %2783 = vmatprep.mubr.bf16.mxu0 0
      %2784 = vmatmul.mubr.bf16.gmra.mrb[0].mxu0 %v2517
      %v2785 = vpop.f32.mrb[0].mxu0
      %v2786 = vadd.f32 %v2550, %v2785
      %v2787 = vpop.f32.mrb[0].mxu0
      %v2788 = vpop.f32.mrb[0].mxu0
      %v2789 = vadd.f32 %v2550, %v2788
      %v2790 = vpop.f32.mrb[0].mxu0
      %2791 = vmatprep.mubr.bf16.mxu0 0
      %2792 = vmatmul.mubr.bf16.gmra.mrb[0].mxu0 %v2518
      %v2793 = vpop.f32.mrb[0].mxu0
      %v2794 = vadd.f32 %v2550, %v2793
      %v2795 = vpop.f32.mrb[0].mxu0
      %v2796 = vpop.f32.mrb[0].mxu0
      %v2797 = vadd.f32 %v2550, %v2796
      %v2798 = vpop.f32.mrb[0].mxu0
      %2799 = vmatprep.mubr.bf16.mxu0 0
      %2800 = vmatmul.mubr.bf16.gmra.mrb[0].mxu0 %v2519
      %v2801 = vpop.f32.mrb[0].mxu0
      %v2802 = vadd.f32 %v2550, %v2801
      %v2803 = vpop.f32.mrb[0].mxu0
      %v2804 = vpop.f32.mrb[0].mxu0
      %v2805 = vadd.f32 %v2550, %v2804
      %v2806 = vpop.f32.mrb[0].mxu0
      %2807 = vmatprep.mubr.bf16.mxu0 0
      %2808 = vmatmul.mubr.bf16.gmra.mrb[0].mxu0 %v2520
      %v2809 = vpop.f32.mrb[0].mxu0
      %v2810 = vadd.f32 %v2550, %v2809
      %v2811 = vpop.f32.mrb[0].mxu0
      %v2812 = vpop.f32.mrb[0].mxu0
      %v2813 = vadd.f32 %v2550, %v2812
      %v2814 = vpop.f32.mrb[0].mxu0
      %2815 = vmatprep.mubr.bf16.mxu0 0
      %2816 = vmatmul.mubr.bf16.gmra.mrb[0].mxu0 %v2521
      %v2817 = vpop.f32.mrb[0].mxu0
      %v2818 = vadd.f32 %v2550, %v2817
      %v2819 = vpop.f32.mrb[0].mxu0
      %v2820 = vpop.f32.mrb[0].mxu0
      %v2821 = vadd.f32 %v2550, %v2820
      %v2822 = vpop.f32.mrb[0].mxu0
      %2823 = vmatprep.mubr.bf16.mxu0 0
      %2824 = vmatmul.mubr.bf16.gmra.mrb[0].mxu0 %v2522
      %v2825 = vpop.f32.mrb[0].mxu0
      %v2826 = vadd.f32 %v2550, %v2825
      %v2827 = vpop.f32.mrb[0].mxu0
      %v2828 = vpop.f32.mrb[0].mxu0
      %v2829 = vadd.f32 %v2550, %v2828
      %v2830 = vpop.f32.mrb[0].mxu0
      %2831 = vmatprep.mubr.bf16.mxu0 0
      %2832 = vmatmul.mubr.bf16.gmra.mrb[0].mxu0 %v2523
      %v2833 = vpop.f32.mrb[0].mxu0
      %v2834 = vadd.f32 %v2550, %v2833
      %v2835 = vpop.f32.mrb[0].mxu0
      %v2836 = vpop.f32.mrb[0].mxu0
      %v2837 = vadd.f32 %v2550, %v2836
      %v2838 = vpop.f32.mrb[0].mxu0
      %2839 = vmatprep.mubr.bf16.mxu0 0
      %2840 = vmatmul.mubr.bf16.gmra.mrb[0].mxu0 %v2524
      %v2841 = vpop.f32.mrb[0].mxu0
      %v2842 = vadd.f32 %v2550, %v2841
      %v2843 = vpop.f32.mrb[0].mxu0
      %v2844 = vpop.f32.mrb[0].mxu0
      %v2845 = vadd.f32 %v2550, %v2844
      %v2846 = vpop.f32.mrb[0].mxu0
      %2847 = vmatprep.mubr.bf16.mxu0 0
      %2848 = vmatmul.mubr.bf16.gmra.mrb[0].mxu0 %v2525
      %v2849 = vpop.f32.mrb[0].mxu0
      %v2850 = vadd.f32 %v2550, %v2849
      %v2851 = vpop.f32.mrb[0].mxu0
      %v2852 = vpop.f32.mrb[0].mxu0
      %v2853 = vadd.f32 %v2550, %v2852
      %v2854 = vpop.f32.mrb[0].mxu0
      %2855 = vmatprep.mubr.bf16.mxu0 0
      %2856 = vmatmul.mubr.bf16.gmra.mrb[0].mxu0 %v2526
      %v2857 = vpop.f32.mrb[0].mxu0
      %v2858 = vadd.f32 %v2550, %v2857
      %v2859 = vpop.f32.mrb[0].mxu0
      %v2860 = vpop.f32.mrb[0].mxu0
      %v2861 = vadd.f32 %v2550, %v2860
      %v2862 = vpop.f32.mrb[0].mxu0
      %2863 = vmatprep.mubr.bf16.mxu0 0
      %2864 = vmatmul.mubr.bf16.gmra.mrb[0].mxu0 %v2527
      %v2865 = vpop.f32.mrb[0].mxu0
      %v2866 = vadd.f32 %v2550, %v2865
      %v2867 = vpop.f32.mrb[0].mxu0
      %v2868 = vpop.f32.mrb[0].mxu0
      %v2869 = vadd.f32 %v2550, %v2868
      %v2870 = vpop.f32.mrb[0].mxu0
      %2871 = vmatprep.mubr.bf16.mxu0 0
      %2872 = vmatmul.mubr.bf16.gmra.mrb[0].mxu0 %v2528
      %v2873 = vpop.f32.mrb[0].mxu0
      %v2874 = vadd.f32 %v2550, %v2873
      %v2875 = vpop.f32.mrb[0].mxu0
      %v2876 = vpop.f32.mrb[0].mxu0
      %v2877 = vadd.f32 %v2550, %v2876
      %v2878 = vpop.f32.mrb[0].mxu0
      %2879 = vmatprep.mubr.bf16.mxu0 0
      %2880 = vmatmul.mubr.bf16.gmra.mrb[0].mxu0 %v2529
      %v2881 = vpop.f32.mrb[0].mxu0
      %v2882 = vadd.f32 %v2550, %v2881
      %v2883 = vpop.f32.mrb[0].mxu0
      %v2884 = vpop.f32.mrb[0].mxu0
      %v2885 = vadd.f32 %v2550, %v2884
      %v2886 = vpop.f32.mrb[0].mxu0
      %2887 = vdwg.mxu0
      %v2888 = vmax.f32 %v2634, 0.0
      %v2889 = vmax.f32 %v2637, 0.0
      %v2890 = vmax.f32 %v2642, 0.0
      %v2891 = vmax.f32 %v2645, 0.0
      %v2892 = vmax.f32 %v2650, 0.0
      %v2893 = vmax.f32 %v2653, 0.0
      %v2894 = vmax.f32 %v2658, 0.0
      %v2895 = vmax.f32 %v2661, 0.0
      %v2896 = vmax.f32 %v2666, 0.0
      %v2897 = vmax.f32 %v2669, 0.0
      %v2898 = vmax.f32 %v2674, 0.0
      %v2899 = vmax.f32 %v2677, 0.0
      %v2900 = vmax.f32 %v2682, 0.0
      %v2901 = vmax.f32 %v2685, 0.0
      %v2902 = vmax.f32 %v2690, 0.0
      %v2903 = vmax.f32 %v2693, 0.0
      %v2904 = vmax.f32 %v2698, 0.0
      %v2905 = vmax.f32 %v2701, 0.0
      %v2906 = vmax.f32 %v2706, 0.0
      %v2907 = vmax.f32 %v2709, 0.0
      %v2908 = vmax.f32 %v2714, 0.0
      %v2909 = vmax.f32 %v2717, 0.0
      %v2910 = vmax.f32 %v2722, 0.0
      %v2911 = vmax.f32 %v2725, 0.0
      %v2912 = vmax.f32 %v2730, 0.0
      %v2913 = vmax.f32 %v2733, 0.0
      %v2914 = vmax.f32 %v2738, 0.0
      %v2915 = vmax.f32 %v2741, 0.0
      %v2916 = vmax.f32 %v2746, 0.0
      %v2917 = vmax.f32 %v2749, 0.0
      %v2918 = vmax.f32 %v2754, 0.0
      %v2919 = vmax.f32 %v2757, 0.0
      %v2920 = vmax.f32 %v2762, 0.0
      %v2921 = vmax.f32 %v2765, 0.0
      %v2922 = vmax.f32 %v2770, 0.0
      %v2923 = vmax.f32 %v2773, 0.0
      %v2924 = vmax.f32 %v2778, 0.0
      %v2925 = vmax.f32 %v2781, 0.0
      %v2926 = vmax.f32 %v2786, 0.0
      %v2927 = vmax.f32 %v2789, 0.0
      %v2928 = vmax.f32 %v2794, 0.0
      %v2929 = vmax.f32 %v2797, 0.0
      %v2930 = vmax.f32 %v2802, 0.0
      %v2931 = vmax.f32 %v2805, 0.0
      %v2932 = vmax.f32 %v2810, 0.0
      %v2933 = vmax.f32 %v2813, 0.0
      %v2934 = vmax.f32 %v2818, 0.0
      %v2935 = vmax.f32 %v2821, 0.0
      %v2936 = vmax.f32 %v2826, 0.0
      %v2937 = vmax.f32 %v2829, 0.0
      %v2938 = vmax.f32 %v2834, 0.0
      %v2939 = vmax.f32 %v2837, 0.0
      %v2940 = vmax.f32 %v2842, 0.0
      %v2941 = vmax.f32 %v2845, 0.0
      %v2942 = vmax.f32 %v2850, 0.0
      %v2943 = vmax.f32 %v2853, 0.0
      %v2944 = vmax.f32 %v2858, 0.0
      %v2945 = vmax.f32 %v2861, 0.0
      %v2946 = vmax.f32 %v2866, 0.0
      %v2947 = vmax.f32 %v2869, 0.0
      %v2948 = vmax.f32 %v2874, 0.0
      %v2949 = vmax.f32 %v2877, 0.0
      %v2950 = vmax.f32 %v2882, 0.0
      %v2951 = vmax.f32 %v2885, 0.0
      %v2952 = vpack.c.bf16 %v2889, %v2888
      %v2953 = vpack.c.bf16 %v2891, %v2890
      %v2954 = vpack.c.bf16 %v2893, %v2892
      %v2955 = vpack.c.bf16 %v2895, %v2894
      %v2956 = vpack.c.bf16 %v2897, %v2896
      %v2957 = vpack.c.bf16 %v2899, %v2898
      %v2958 = vpack.c.bf16 %v2901, %v2900
      %v2959 = vpack.c.bf16 %v2903, %v2902
      %v2960 = vpack.c.bf16 %v2905, %v2904
      %v2961 = vpack.c.bf16 %v2907, %v2906
      %v2962 = vpack.c.bf16 %v2909, %v2908
      %v2963 = vpack.c.bf16 %v2911, %v2910
      %v2964 = vpack.c.bf16 %v2913, %v2912
      %v2965 = vpack.c.bf16 %v2915, %v2914
      %v2966 = vpack.c.bf16 %v2917, %v2916
      %v2967 = vpack.c.bf16 %v2919, %v2918
      %v2968 = vpack.c.bf16 %v2921, %v2920
      %v2969 = vpack.c.bf16 %v2923, %v2922
      %v2970 = vpack.c.bf16 %v2925, %v2924
      %v2971 = vpack.c.bf16 %v2927, %v2926
      %v2972 = vpack.c.bf16 %v2929, %v2928
      %v2973 = vpack.c.bf16 %v2931, %v2930
      %v2974 = vpack.c.bf16 %v2933, %v2932
      %v2975 = vpack.c.bf16 %v2935, %v2934
      %v2976 = vpack.c.bf16 %v2937, %v2936
      %v2977 = vpack.c.bf16 %v2939, %v2938
      %v2978 = vpack.c.bf16 %v2941, %v2940
      %v2979 = vpack.c.bf16 %v2943, %v2942
      %v2980 = vpack.c.bf16 %v2945, %v2944
      %v2981 = vpack.c.bf16 %v2947, %v2946
      %v2982 = vpack.c.bf16 %v2949, %v2948
      %v2983 = vpack.c.bf16 %v2951, %v2950
      %s2984 = scalar_lea.vmem %s2, 192
      %v2985 = vld [vmem:[%s2984] sm:$0xf]
      %v2986 = vld [vmem:[%s2984 + $0x4] sm:$0xf]
      %v2987 = vld [vmem:[%s2984 + $0x8] sm:$0xf]
      %v2988 = vld [vmem:[%s2984 + $0xc] sm:$0xf]
      %v2989 = vld [vmem:[%s2984 + $0x10] sm:$0xf]
      %v2990 = vld [vmem:[%s2984 + $0x14] sm:$0xf]
      %v2991 = vld [vmem:[%s2984 + $0x18] sm:$0xf]
      %v2992 = vld [vmem:[%s2984 + $0x1c] sm:$0xf]
      %v2993 = vld [vmem:[%s2984 + $0x20] sm:$0xf]
      %v2994 = vld [vmem:[%s2984 + $0x24] sm:$0xf]
      %v2995 = vld [vmem:[%s2984 + $0x28] sm:$0xf]
      %v2996 = vld [vmem:[%s2984 + $0x2c] sm:$0xf]
      %v2997 = vld [vmem:[%s2984 + $0x30] sm:$0xf]
      %v2998 = vld [vmem:[%s2984 + $0x34] sm:$0xf]
      %v2999 = vld [vmem:[%s2984 + $0x38] sm:$0xf]
      %v3000 = vld [vmem:[%s2984 + $0x3c] sm:$0xf]
      %v3017 = vunpack.c.l.b16 %v2985
      %v3018 = vunpack.c.l.b16 %v2986
      %v3019 = vunpack.c.l.b16 %v2987
      %v3020 = vunpack.c.l.b16 %v2988
      %v3021 = vunpack.c.l.b16 %v2989
      %v3022 = vunpack.c.l.b16 %v2990
      %v3023 = vunpack.c.l.b16 %v2991
      %v3024 = vunpack.c.l.b16 %v2992
      %v3025 = vunpack.c.l.b16 %v2993
      %v3026 = vunpack.c.l.b16 %v2994
      %v3027 = vunpack.c.l.b16 %v2995
      %v3028 = vunpack.c.l.b16 %v2996
      %v3029 = vunpack.c.l.b16 %v2997
      %v3030 = vunpack.c.l.b16 %v2998
      %v3031 = vunpack.c.l.b16 %v2999
      %v3032 = vunpack.c.l.b16 %v3000
      %v3033 = vpack.c.b16 %v3018, %v3017
      %v3034 = vpack.c.b16 %v3020, %v3019
      %v3035 = vpack.c.b16 %v3022, %v3021
      %v3036 = vpack.c.b16 %v3024, %v3023
      %v3037 = vpack.c.b16 %v3026, %v3025
      %v3038 = vpack.c.b16 %v3028, %v3027
      %v3039 = vpack.c.b16 %v3030, %v3029
      %v3040 = vpack.c.b16 %v3032, %v3031
      %3049 = vmatprep.subr.bf16.mxu0 0
      %3050 = vmatpush1.bf16.msra.mxu0 %v3033
      %3051 = vmatprep.subr.bf16.mxu0 0
      %3052 = vmatpush1.bf16.msra.mxu0 %v3034
      %3053 = vmatprep.subr.bf16.mxu0 0
      %3054 = vmatpush1.bf16.msra.mxu0 %v3035
      %3055 = vmatprep.subr.bf16.mxu0 0
      %3056 = vmatpush1.bf16.msra.mxu0 %v3036
      %3057 = vmatprep.subr.bf16.mxu0 0
      %3058 = vmatpush1.bf16.msra.mxu0 %v3037
      %3059 = vmatprep.subr.bf16.mxu0 0
      %3060 = vmatpush1.bf16.msra.mxu0 %v3038
      %3061 = vmatprep.subr.bf16.mxu0 0
      %3062 = vmatpush1.bf16.msra.mxu0 %v3039
      %3063 = vmatprep.subr.bf16.mxu0 0
      %3064 = vmatpush1.bf16.msra.mxu0 %v3040
      %3065 = vmatprep.subr.bf16.mxu0 0
      %3066 = vmatpush1.bf16.msra.mxu0 0
      %3067 = vmatprep.subr.bf16.mxu0 0
      %3068 = vmatpush1.bf16.msra.mxu0 0
      %3069 = vmatprep.subr.bf16.mxu0 0
      %3070 = vmatpush1.bf16.msra.mxu0 0
      %3071 = vmatprep.subr.bf16.mxu0 0
      %3072 = vmatpush1.bf16.msra.mxu0 0
      %3073 = vmatprep.subr.bf16.mxu0 0
      %3074 = vmatpush1.bf16.msra.mxu0 0
      %3075 = vmatprep.subr.bf16.mxu0 0
      %3076 = vmatpush1.bf16.msra.mxu0 0
      %3077 = vmatprep.subr.bf16.mxu0 0
      %3078 = vmatpush1.bf16.msra.mxu0 0
      %3079 = vmatprep.subr.bf16.mxu0 0
      %3080 = vmatpush1.bf16.msra.mxu0 0
      %3081 = vmatprep.mubr.bf16.mxu0 0
      %3082 = vmatmul.mubr.bf16.gmra.mrb[0].mxu0 %v2952
      %v3083 = vpop.f32.mrb[0].mxu0
      %v3084 = vadd.f32 %v693, %v3083
      %v3085 = vpop.f32.mrb[0].mxu0
      %v3086 = vpop.f32.mrb[0].mxu0
      %v3087 = vadd.f32 %v699, %v3086
      %v3088 = vpop.f32.mrb[0].mxu0
      %3089 = vmatprep.mubr.bf16.mxu0 0
      %3090 = vmatmul.mubr.bf16.gmra.mrb[0].mxu0 %v2953
      %v3091 = vpop.f32.mrb[0].mxu0
      %v3092 = vadd.f32 %v705, %v3091
      %v3093 = vpop.f32.mrb[0].mxu0
      %v3094 = vpop.f32.mrb[0].mxu0
      %v3095 = vadd.f32 %v711, %v3094
      %v3096 = vpop.f32.mrb[0].mxu0
      %3097 = vmatprep.mubr.bf16.mxu0 0
      %3098 = vmatmul.mubr.bf16.gmra.mrb[0].mxu0 %v2954
      %v3099 = vpop.f32.mrb[0].mxu0
      %v3100 = vadd.f32 %v717, %v3099
      %v3101 = vpop.f32.mrb[0].mxu0
      %v3102 = vpop.f32.mrb[0].mxu0
      %v3103 = vadd.f32 %v723, %v3102
      %v3104 = vpop.f32.mrb[0].mxu0
      %3105 = vmatprep.mubr.bf16.mxu0 0
      %3106 = vmatmul.mubr.bf16.gmra.mrb[0].mxu0 %v2955
      %v3107 = vpop.f32.mrb[0].mxu0
      %v3108 = vadd.f32 %v729, %v3107
      %v3109 = vpop.f32.mrb[0].mxu0
      %v3110 = vpop.f32.mrb[0].mxu0
      %v3111 = vadd.f32 %v735, %v3110
      %v3112 = vpop.f32.mrb[0].mxu0
      %3113 = vmatprep.mubr.bf16.mxu0 0
      %3114 = vmatmul.mubr.bf16.gmra.mrb[0].mxu0 %v2956
      %v3115 = vpop.f32.mrb[0].mxu0
      %v3116 = vadd.f32 %v741, %v3115
      %v3117 = vpop.f32.mrb[0].mxu0
      %v3118 = vpop.f32.mrb[0].mxu0
      %v3119 = vadd.f32 %v747, %v3118
      %v3120 = vpop.f32.mrb[0].mxu0
      %3121 = vmatprep.mubr.bf16.mxu0 0
      %3122 = vmatmul.mubr.bf16.gmra.mrb[0].mxu0 %v2957
      %v3123 = vpop.f32.mrb[0].mxu0
      %v3124 = vadd.f32 %v753, %v3123
      %v3125 = vpop.f32.mrb[0].mxu0
      %v3126 = vpop.f32.mrb[0].mxu0
      %v3127 = vadd.f32 %v759, %v3126
      %v3128 = vpop.f32.mrb[0].mxu0
      %3129 = vmatprep.mubr.bf16.mxu0 0
      %3130 = vmatmul.mubr.bf16.gmra.mrb[0].mxu0 %v2958
      %v3131 = vpop.f32.mrb[0].mxu0
      %v3132 = vadd.f32 %v765, %v3131
      %v3133 = vpop.f32.mrb[0].mxu0
      %v3134 = vpop.f32.mrb[0].mxu0
      %v3135 = vadd.f32 %v771, %v3134
      %v3136 = vpop.f32.mrb[0].mxu0
      %3137 = vmatprep.mubr.bf16.mxu0 0
      %3138 = vmatmul.mubr.bf16.gmra.mrb[0].mxu0 %v2959
      %v3139 = vpop.f32.mrb[0].mxu0
      %v3140 = vadd.f32 %v777, %v3139
      %v3141 = vpop.f32.mrb[0].mxu0
      %v3142 = vpop.f32.mrb[0].mxu0
      %v3143 = vadd.f32 %v783, %v3142
      %v3144 = vpop.f32.mrb[0].mxu0
      %3145 = vmatprep.mubr.bf16.mxu0 0
      %3146 = vmatmul.mubr.bf16.gmra.mrb[0].mxu0 %v2960
      %v3147 = vpop.f32.mrb[0].mxu0
      %v3148 = vadd.f32 %v789, %v3147
      %v3149 = vpop.f32.mrb[0].mxu0
      %v3150 = vpop.f32.mrb[0].mxu0
      %v3151 = vadd.f32 %v795, %v3150
      %v3152 = vpop.f32.mrb[0].mxu0
      %3153 = vmatprep.mubr.bf16.mxu0 0
      %3154 = vmatmul.mubr.bf16.gmra.mrb[0].mxu0 %v2961
      %v3155 = vpop.f32.mrb[0].mxu0
      %v3156 = vadd.f32 %v801, %v3155
      %v3157 = vpop.f32.mrb[0].mxu0
      %v3158 = vpop.f32.mrb[0].mxu0
      %v3159 = vadd.f32 %v807, %v3158
      %v3160 = vpop.f32.mrb[0].mxu0
      %3161 = vmatprep.mubr.bf16.mxu0 0
      %3162 = vmatmul.mubr.bf16.gmra.mrb[0].mxu0 %v2962
      %v3163 = vpop.f32.mrb[0].mxu0
      %v3164 = vadd.f32 %v813, %v3163
      %v3165 = vpop.f32.mrb[0].mxu0
      %v3166 = vpop.f32.mrb[0].mxu0
      %v3167 = vadd.f32 %v819, %v3166
      %v3168 = vpop.f32.mrb[0].mxu0
      %3169 = vmatprep.mubr.bf16.mxu0 0
      %3170 = vmatmul.mubr.bf16.gmra.mrb[0].mxu0 %v2963
      %v3171 = vpop.f32.mrb[0].mxu0
      %v3172 = vadd.f32 %v825, %v3171
      %v3173 = vpop.f32.mrb[0].mxu0
      %v3174 = vpop.f32.mrb[0].mxu0
      %v3175 = vadd.f32 %v831, %v3174
      %v3176 = vpop.f32.mrb[0].mxu0
      %3177 = vmatprep.mubr.bf16.mxu0 0
      %3178 = vmatmul.mubr.bf16.gmra.mrb[0].mxu0 %v2964
      %v3179 = vpop.f32.mrb[0].mxu0
      %v3180 = vadd.f32 %v837, %v3179
      %v3181 = vpop.f32.mrb[0].mxu0
      %v3182 = vpop.f32.mrb[0].mxu0
      %v3183 = vadd.f32 %v843, %v3182
      %v3184 = vpop.f32.mrb[0].mxu0
      %3185 = vmatprep.mubr.bf16.mxu0 0
      %3186 = vmatmul.mubr.bf16.gmra.mrb[0].mxu0 %v2965
      %v3187 = vpop.f32.mrb[0].mxu0
      %v3188 = vadd.f32 %v849, %v3187
      %v3189 = vpop.f32.mrb[0].mxu0
      %v3190 = vpop.f32.mrb[0].mxu0
      %v3191 = vadd.f32 %v855, %v3190
      %v3192 = vpop.f32.mrb[0].mxu0
      %3193 = vmatprep.mubr.bf16.mxu0 0
      %3194 = vmatmul.mubr.bf16.gmra.mrb[0].mxu0 %v2966
      %v3195 = vpop.f32.mrb[0].mxu0
      %v3196 = vadd.f32 %v861, %v3195
      %v3197 = vpop.f32.mrb[0].mxu0
      %v3198 = vpop.f32.mrb[0].mxu0
      %v3199 = vadd.f32 %v867, %v3198
      %v3200 = vpop.f32.mrb[0].mxu0
      %3201 = vmatprep.mubr.bf16.mxu0 0
      %3202 = vmatmul.mubr.bf16.gmra.mrb[0].mxu0 %v2967
      %v3203 = vpop.f32.mrb[0].mxu0
      %v3204 = vadd.f32 %v873, %v3203
      %v3205 = vpop.f32.mrb[0].mxu0
      %v3206 = vpop.f32.mrb[0].mxu0
      %v3207 = vadd.f32 %v879, %v3206
      %v3208 = vpop.f32.mrb[0].mxu0
      %3209 = vmatprep.mubr.bf16.mxu0 0
      %3210 = vmatmul.mubr.bf16.gmra.mrb[0].mxu0 %v2968
      %v3211 = vpop.f32.mrb[0].mxu0
      %v3212 = vadd.f32 %v885, %v3211
      %v3213 = vpop.f32.mrb[0].mxu0
      %v3214 = vpop.f32.mrb[0].mxu0
      %v3215 = vadd.f32 %v891, %v3214
      %v3216 = vpop.f32.mrb[0].mxu0
      %3217 = vmatprep.mubr.bf16.mxu0 0
      %3218 = vmatmul.mubr.bf16.gmra.mrb[0].mxu0 %v2969
      %v3219 = vpop.f32.mrb[0].mxu0
      %v3220 = vadd.f32 %v897, %v3219
      %v3221 = vpop.f32.mrb[0].mxu0
      %v3222 = vpop.f32.mrb[0].mxu0
      %v3223 = vadd.f32 %v903, %v3222
      %v3224 = vpop.f32.mrb[0].mxu0
      %3225 = vmatprep.mubr.bf16.mxu0 0
      %3226 = vmatmul.mubr.bf16.gmra.mrb[0].mxu0 %v2970
      %v3227 = vpop.f32.mrb[0].mxu0
      %v3228 = vadd.f32 %v909, %v3227
      %v3229 = vpop.f32.mrb[0].mxu0
      %v3230 = vpop.f32.mrb[0].mxu0
      %v3231 = vadd.f32 %v915, %v3230
      %v3232 = vpop.f32.mrb[0].mxu0
      %3233 = vmatprep.mubr.bf16.mxu0 0
      %3234 = vmatmul.mubr.bf16.gmra.mrb[0].mxu0 %v2971
      %v3235 = vpop.f32.mrb[0].mxu0
      %v3236 = vadd.f32 %v921, %v3235
      %v3237 = vpop.f32.mrb[0].mxu0
      %v3238 = vpop.f32.mrb[0].mxu0
      %v3239 = vadd.f32 %v927, %v3238
      %v3240 = vpop.f32.mrb[0].mxu0
      %3241 = vmatprep.mubr.bf16.mxu0 0
      %3242 = vmatmul.mubr.bf16.gmra.mrb[0].mxu0 %v2972
      %v3243 = vpop.f32.mrb[0].mxu0
      %v3244 = vadd.f32 %v933, %v3243
      %v3245 = vpop.f32.mrb[0].mxu0
      %v3246 = vpop.f32.mrb[0].mxu0
      %v3247 = vadd.f32 %v939, %v3246
      %v3248 = vpop.f32.mrb[0].mxu0
      %3249 = vmatprep.mubr.bf16.mxu0 0
      %3250 = vmatmul.mubr.bf16.gmra.mrb[0].mxu0 %v2973
      %v3251 = vpop.f32.mrb[0].mxu0
      %v3252 = vadd.f32 %v945, %v3251
      %v3253 = vpop.f32.mrb[0].mxu0
      %v3254 = vpop.f32.mrb[0].mxu0
      %v3255 = vadd.f32 %v951, %v3254
      %v3256 = vpop.f32.mrb[0].mxu0
      %3257 = vmatprep.mubr.bf16.mxu0 0
      %3258 = vmatmul.mubr.bf16.gmra.mrb[0].mxu0 %v2974
      %v3259 = vpop.f32.mrb[0].mxu0
      %v3260 = vadd.f32 %v957, %v3259
      %v3261 = vpop.f32.mrb[0].mxu0
      %v3262 = vpop.f32.mrb[0].mxu0
      %v3263 = vadd.f32 %v963, %v3262
      %v3264 = vpop.f32.mrb[0].mxu0
      %3265 = vmatprep.mubr.bf16.mxu0 0
      %3266 = vmatmul.mubr.bf16.gmra.mrb[0].mxu0 %v2975
      %v3267 = vpop.f32.mrb[0].mxu0
      %v3268 = vadd.f32 %v969, %v3267
      %v3269 = vpop.f32.mrb[0].mxu0
      %v3270 = vpop.f32.mrb[0].mxu0
      %v3271 = vadd.f32 %v975, %v3270
      %v3272 = vpop.f32.mrb[0].mxu0
      %3273 = vmatprep.mubr.bf16.mxu0 0
      %3274 = vmatmul.mubr.bf16.gmra.mrb[0].mxu0 %v2976
      %v3275 = vpop.f32.mrb[0].mxu0
      %v3276 = vadd.f32 %v981, %v3275
      %v3277 = vpop.f32.mrb[0].mxu0
      %v3278 = vpop.f32.mrb[0].mxu0
      %v3279 = vadd.f32 %v987, %v3278
      %v3280 = vpop.f32.mrb[0].mxu0
      %3281 = vmatprep.mubr.bf16.mxu0 0
      %3282 = vmatmul.mubr.bf16.gmra.mrb[0].mxu0 %v2977
      %v3283 = vpop.f32.mrb[0].mxu0
      %v3284 = vadd.f32 %v993, %v3283
      %v3285 = vpop.f32.mrb[0].mxu0
      %v3286 = vpop.f32.mrb[0].mxu0
      %v3287 = vadd.f32 %v999, %v3286
      %v3288 = vpop.f32.mrb[0].mxu0
      %3289 = vmatprep.mubr.bf16.mxu0 0
      %3290 = vmatmul.mubr.bf16.gmra.mrb[0].mxu0 %v2978
      %v3291 = vpop.f32.mrb[0].mxu0
      %v3292 = vadd.f32 %v1005, %v3291
      %v3293 = vpop.f32.mrb[0].mxu0
      %v3294 = vpop.f32.mrb[0].mxu0
      %v3295 = vadd.f32 %v1011, %v3294
      %v3296 = vpop.f32.mrb[0].mxu0
      %3297 = vmatprep.mubr.bf16.mxu0 0
      %3298 = vmatmul.mubr.bf16.gmra.mrb[0].mxu0 %v2979
      %v3299 = vpop.f32.mrb[0].mxu0
      %v3300 = vadd.f32 %v1017, %v3299
      %v3301 = vpop.f32.mrb[0].mxu0
      %v3302 = vpop.f32.mrb[0].mxu0
      %v3303 = vadd.f32 %v1023, %v3302
      %v3304 = vpop.f32.mrb[0].mxu0
      %3305 = vmatprep.mubr.bf16.mxu0 0
      %3306 = vmatmul.mubr.bf16.gmra.mrb[0].mxu0 %v2980
      %v3307 = vpop.f32.mrb[0].mxu0
      %v3308 = vadd.f32 %v1029, %v3307
      %v3309 = vpop.f32.mrb[0].mxu0
      %v3310 = vpop.f32.mrb[0].mxu0
      %v3311 = vadd.f32 %v1035, %v3310
      %v3312 = vpop.f32.mrb[0].mxu0
      %3313 = vmatprep.mubr.bf16.mxu0 0
      %3314 = vmatmul.mubr.bf16.gmra.mrb[0].mxu0 %v2981
      %v3315 = vpop.f32.mrb[0].mxu0
      %v3316 = vadd.f32 %v1041, %v3315
      %v3317 = vpop.f32.mrb[0].mxu0
      %v3318 = vpop.f32.mrb[0].mxu0
      %v3319 = vadd.f32 %v1047, %v3318
      %v3320 = vpop.f32.mrb[0].mxu0
      %3321 = vmatprep.mubr.bf16.mxu0 0
      %3322 = vmatmul.mubr.bf16.gmra.mrb[0].mxu0 %v2982
      %v3323 = vpop.f32.mrb[0].mxu0
      %v3324 = vadd.f32 %v1053, %v3323
      %v3325 = vpop.f32.mrb[0].mxu0
      %v3326 = vpop.f32.mrb[0].mxu0
      %v3327 = vadd.f32 %v1059, %v3326
      %v3328 = vpop.f32.mrb[0].mxu0
      %3329 = vmatprep.mubr.bf16.mxu0 0
      %3330 = vmatmul.mubr.bf16.gmra.mrb[0].mxu0 %v2983
      %v3331 = vpop.f32.mrb[0].mxu0
      %v3332 = vadd.f32 %v1065, %v3331
      %v3333 = vpop.f32.mrb[0].mxu0
      %v3334 = vpop.f32.mrb[0].mxu0
      %v3335 = vadd.f32 %v1071, %v3334
      %v3336 = vpop.f32.mrb[0].mxu0
      %3337 = vdwg.mxu0
      %v3338 = vlaneseq
      %v3339 = vshrl.u32 %v3338, 7
      %v3340 = vsub.s32 4, %v3339
      %v3341 = vrot.slane %v1458, %v3340
      %v3342 = vadd.f32 %v3084, %v3341
      %v3343 = vadd.f32 %v3087, %v3341
      %v3344 = vadd.f32 %v3092, %v3341
      %v3345 = vadd.f32 %v3095, %v3341
      %v3346 = vadd.f32 %v3100, %v3341
      %v3347 = vadd.f32 %v3103, %v3341
      %v3348 = vadd.f32 %v3108, %v3341
      %v3349 = vadd.f32 %v3111, %v3341
      %v3350 = vadd.f32 %v3116, %v3341
      %v3351 = vadd.f32 %v3119, %v3341
      %v3352 = vadd.f32 %v3124, %v3341
      %v3353 = vadd.f32 %v3127, %v3341
      %v3354 = vadd.f32 %v3132, %v3341
      %v3355 = vadd.f32 %v3135, %v3341
      %v3356 = vadd.f32 %v3140, %v3341
      %v3357 = vadd.f32 %v3143, %v3341
      %v3358 = vadd.f32 %v3148, %v3341
      %v3359 = vadd.f32 %v3151, %v3341
      %v3360 = vadd.f32 %v3156, %v3341
      %v3361 = vadd.f32 %v3159, %v3341
      %v3362 = vadd.f32 %v3164, %v3341
      %v3363 = vadd.f32 %v3167, %v3341
      %v3364 = vadd.f32 %v3172, %v3341
      %v3365 = vadd.f32 %v3175, %v3341
      %v3366 = vadd.f32 %v3180, %v3341
      %v3367 = vadd.f32 %v3183, %v3341
      %v3368 = vadd.f32 %v3188, %v3341
      %v3369 = vadd.f32 %v3191, %v3341
      %v3370 = vadd.f32 %v3196, %v3341
      %v3371 = vadd.f32 %v3199, %v3341
      %v3372 = vadd.f32 %v3204, %v3341
      %v3373 = vadd.f32 %v3207, %v3341
      %v3374 = vadd.f32 %v3212, %v3341
      %v3375 = vadd.f32 %v3215, %v3341
      %v3376 = vadd.f32 %v3220, %v3341
      %v3377 = vadd.f32 %v3223, %v3341
      %v3378 = vadd.f32 %v3228, %v3341
      %v3379 = vadd.f32 %v3231, %v3341
      %v3380 = vadd.f32 %v3236, %v3341
      %v3381 = vadd.f32 %v3239, %v3341
      %v3382 = vadd.f32 %v3244, %v3341
      %v3383 = vadd.f32 %v3247, %v3341
      %v3384 = vadd.f32 %v3252, %v3341
      %v3385 = vadd.f32 %v3255, %v3341
      %v3386 = vadd.f32 %v3260, %v3341
      %v3387 = vadd.f32 %v3263, %v3341
      %v3388 = vadd.f32 %v3268, %v3341
      %v3389 = vadd.f32 %v3271, %v3341
      %v3390 = vadd.f32 %v3276, %v3341
      %v3391 = vadd.f32 %v3279, %v3341
      %v3392 = vadd.f32 %v3284, %v3341
      %v3393 = vadd.f32 %v3287, %v3341
      %v3394 = vadd.f32 %v3292, %v3341
      %v3395 = vadd.f32 %v3295, %v3341
      %v3396 = vadd.f32 %v3300, %v3341
      %v3397 = vadd.f32 %v3303, %v3341
      %v3398 = vadd.f32 %v3308, %v3341
      %v3399 = vadd.f32 %v3311, %v3341
      %v3400 = vadd.f32 %v3316, %v3341
      %v3401 = vadd.f32 %v3319, %v3341
      %v3402 = vadd.f32 %v3324, %v3341
      %v3403 = vadd.f32 %v3327, %v3341
      %v3404 = vadd.f32 %v3332, %v3341
      %v3405 = vadd.f32 %v3335, %v3341
      %v3406 = vmax.f32 %v3342, 0.0
      %v3407 = vmax.f32 %v3343, 0.0
      %v3408 = vmax.f32 %v3344, 0.0
      %v3409 = vmax.f32 %v3345, 0.0
      %v3410 = vmax.f32 %v3346, 0.0
      %v3411 = vmax.f32 %v3347, 0.0
      %v3412 = vmax.f32 %v3348, 0.0
      %v3413 = vmax.f32 %v3349, 0.0
      %v3414 = vmax.f32 %v3350, 0.0
      %v3415 = vmax.f32 %v3351, 0.0
      %v3416 = vmax.f32 %v3352, 0.0
      %v3417 = vmax.f32 %v3353, 0.0
      %v3418 = vmax.f32 %v3354, 0.0
      %v3419 = vmax.f32 %v3355, 0.0
      %v3420 = vmax.f32 %v3356, 0.0
      %v3421 = vmax.f32 %v3357, 0.0
      %v3422 = vmax.f32 %v3358, 0.0
      %v3423 = vmax.f32 %v3359, 0.0
      %v3424 = vmax.f32 %v3360, 0.0
      %v3425 = vmax.f32 %v3361, 0.0
      %v3426 = vmax.f32 %v3362, 0.0
      %v3427 = vmax.f32 %v3363, 0.0
      %v3428 = vmax.f32 %v3364, 0.0
      %v3429 = vmax.f32 %v3365, 0.0
      %v3430 = vmax.f32 %v3366, 0.0
      %v3431 = vmax.f32 %v3367, 0.0
      %v3432 = vmax.f32 %v3368, 0.0
      %v3433 = vmax.f32 %v3369, 0.0
      %v3434 = vmax.f32 %v3370, 0.0
      %v3435 = vmax.f32 %v3371, 0.0
      %v3436 = vmax.f32 %v3372, 0.0
      %v3437 = vmax.f32 %v3373, 0.0
      %v3438 = vmax.f32 %v3374, 0.0
      %v3439 = vmax.f32 %v3375, 0.0
      %v3440 = vmax.f32 %v3376, 0.0
      %v3441 = vmax.f32 %v3377, 0.0
      %v3442 = vmax.f32 %v3378, 0.0
      %v3443 = vmax.f32 %v3379, 0.0
      %v3444 = vmax.f32 %v3380, 0.0
      %v3445 = vmax.f32 %v3381, 0.0
      %v3446 = vmax.f32 %v3382, 0.0
      %v3447 = vmax.f32 %v3383, 0.0
      %v3448 = vmax.f32 %v3384, 0.0
      %v3449 = vmax.f32 %v3385, 0.0
      %v3450 = vmax.f32 %v3386, 0.0
      %v3451 = vmax.f32 %v3387, 0.0
      %v3452 = vmax.f32 %v3388, 0.0
      %v3453 = vmax.f32 %v3389, 0.0
      %v3454 = vmax.f32 %v3390, 0.0
      %v3455 = vmax.f32 %v3391, 0.0
      %v3456 = vmax.f32 %v3392, 0.0
      %v3457 = vmax.f32 %v3393, 0.0
      %v3458 = vmax.f32 %v3394, 0.0
      %v3459 = vmax.f32 %v3395, 0.0
      %v3460 = vmax.f32 %v3396, 0.0
      %v3461 = vmax.f32 %v3397, 0.0
      %v3462 = vmax.f32 %v3398, 0.0
      %v3463 = vmax.f32 %v3399, 0.0
      %v3464 = vmax.f32 %v3400, 0.0
      %v3465 = vmax.f32 %v3401, 0.0
      %v3466 = vmax.f32 %v3402, 0.0
      %v3467 = vmax.f32 %v3403, 0.0
      %v3468 = vmax.f32 %v3404, 0.0
      %v3469 = vmax.f32 %v3405, 0.0
      %v3470 = vpack.c.bf16 %v3407, %v3406
      %v3471 = vpack.c.bf16 %v3409, %v3408
      %v3472 = vpack.c.bf16 %v3411, %v3410
      %v3473 = vpack.c.bf16 %v3413, %v3412
      %v3474 = vpack.c.bf16 %v3415, %v3414
      %v3475 = vpack.c.bf16 %v3417, %v3416
      %v3476 = vpack.c.bf16 %v3419, %v3418
      %v3477 = vpack.c.bf16 %v3421, %v3420
      %v3478 = vpack.c.bf16 %v3423, %v3422
      %v3479 = vpack.c.bf16 %v3425, %v3424
      %v3480 = vpack.c.bf16 %v3427, %v3426
      %v3481 = vpack.c.bf16 %v3429, %v3428
      %v3482 = vpack.c.bf16 %v3431, %v3430
      %v3483 = vpack.c.bf16 %v3433, %v3432
      %v3484 = vpack.c.bf16 %v3435, %v3434
      %v3485 = vpack.c.bf16 %v3437, %v3436
      %v3486 = vpack.c.bf16 %v3439, %v3438
      %v3487 = vpack.c.bf16 %v3441, %v3440
      %v3488 = vpack.c.bf16 %v3443, %v3442
      %v3489 = vpack.c.bf16 %v3445, %v3444
      %v3490 = vpack.c.bf16 %v3447, %v3446
      %v3491 = vpack.c.bf16 %v3449, %v3448
      %v3492 = vpack.c.bf16 %v3451, %v3450
      %v3493 = vpack.c.bf16 %v3453, %v3452
      %v3494 = vpack.c.bf16 %v3455, %v3454
      %v3495 = vpack.c.bf16 %v3457, %v3456
      %v3496 = vpack.c.bf16 %v3459, %v3458
      %v3497 = vpack.c.bf16 %v3461, %v3460
      %v3498 = vpack.c.bf16 %v3463, %v3462
      %v3499 = vpack.c.bf16 %v3465, %v3464
      %v3500 = vpack.c.bf16 %v3467, %v3466
      %v3501 = vpack.c.bf16 %v3469, %v3468
      %s3502 = scalar_lea.vmem %s2, 256
      %v3503 = vld [vmem:[%s3502] sm:$0xf]
      %v3504 = vld [vmem:[%s3502 + $0x4] sm:$0xf]
      %v3505 = vld [vmem:[%s3502 + $0x8] sm:$0xf]
      %v3506 = vld [vmem:[%s3502 + $0xc] sm:$0xf]
      %v3507 = vld [vmem:[%s3502 + $0x10] sm:$0xf]
      %v3508 = vld [vmem:[%s3502 + $0x14] sm:$0xf]
      %v3509 = vld [vmem:[%s3502 + $0x18] sm:$0xf]
      %v3510 = vld [vmem:[%s3502 + $0x1c] sm:$0xf]
      %v3511 = vld [vmem:[%s3502 + $0x20] sm:$0xf]
      %v3512 = vld [vmem:[%s3502 + $0x24] sm:$0xf]
      %v3513 = vld [vmem:[%s3502 + $0x28] sm:$0xf]
      %v3514 = vld [vmem:[%s3502 + $0x2c] sm:$0xf]
      %v3515 = vld [vmem:[%s3502 + $0x30] sm:$0xf]
      %v3516 = vld [vmem:[%s3502 + $0x34] sm:$0xf]
      %v3517 = vld [vmem:[%s3502 + $0x38] sm:$0xf]
      %v3518 = vld [vmem:[%s3502 + $0x3c] sm:$0xf]
      %v3519 = vlaneseq
      %v3520 = vshrl.u32 %v3519, 7
      %v3521 = vsub.s32 5, %v3520
      %v3522 = vrot.slane %v1458, %v3521
      %v3539 = vunpack.c.l.b16 %v3503
      %v3540 = vunpack.c.l.b16 %v3504
      %v3541 = vunpack.c.l.b16 %v3505
      %v3542 = vunpack.c.l.b16 %v3506
      %v3543 = vunpack.c.l.b16 %v3507
      %v3544 = vunpack.c.l.b16 %v3508
      %v3545 = vunpack.c.l.b16 %v3509
      %v3546 = vunpack.c.l.b16 %v3510
      %v3547 = vunpack.c.l.b16 %v3511
      %v3548 = vunpack.c.l.b16 %v3512
      %v3549 = vunpack.c.l.b16 %v3513
      %v3550 = vunpack.c.l.b16 %v3514
      %v3551 = vunpack.c.l.b16 %v3515
      %v3552 = vunpack.c.l.b16 %v3516
      %v3553 = vunpack.c.l.b16 %v3517
      %v3554 = vunpack.c.l.b16 %v3518
      %v3555 = vpack.c.b16 %v3540, %v3539
      %v3556 = vpack.c.b16 %v3542, %v3541
      %v3557 = vpack.c.b16 %v3544, %v3543
      %v3558 = vpack.c.b16 %v3546, %v3545
      %v3559 = vpack.c.b16 %v3548, %v3547
      %v3560 = vpack.c.b16 %v3550, %v3549
      %v3561 = vpack.c.b16 %v3552, %v3551
      %v3562 = vpack.c.b16 %v3554, %v3553
      %3571 = vmatprep.subr.bf16.mxu0 0
      %3572 = vmatpush1.bf16.msra.mxu0 %v3555
      %3573 = vmatprep.subr.bf16.mxu0 0
      %3574 = vmatpush1.bf16.msra.mxu0 %v3556
      %3575 = vmatprep.subr.bf16.mxu0 0
      %3576 = vmatpush1.bf16.msra.mxu0 %v3557
      %3577 = vmatprep.subr.bf16.mxu0 0
      %3578 = vmatpush1.bf16.msra.mxu0 %v3558
      %3579 = vmatprep.subr.bf16.mxu0 0
      %3580 = vmatpush1.bf16.msra.mxu0 %v3559
      %3581 = vmatprep.subr.bf16.mxu0 0
      %3582 = vmatpush1.bf16.msra.mxu0 %v3560
      %3583 = vmatprep.subr.bf16.mxu0 0
      %3584 = vmatpush1.bf16.msra.mxu0 %v3561
      %3585 = vmatprep.subr.bf16.mxu0 0
      %3586 = vmatpush1.bf16.msra.mxu0 %v3562
      %3587 = vmatprep.subr.bf16.mxu0 0
      %3588 = vmatpush1.bf16.msra.mxu0 0
      %3589 = vmatprep.subr.bf16.mxu0 0
      %3590 = vmatpush1.bf16.msra.mxu0 0
      %3591 = vmatprep.subr.bf16.mxu0 0
      %3592 = vmatpush1.bf16.msra.mxu0 0
      %3593 = vmatprep.subr.bf16.mxu0 0
      %3594 = vmatpush1.bf16.msra.mxu0 0
      %3595 = vmatprep.subr.bf16.mxu0 0
      %3596 = vmatpush1.bf16.msra.mxu0 0
      %3597 = vmatprep.subr.bf16.mxu0 0
      %3598 = vmatpush1.bf16.msra.mxu0 0
      %3599 = vmatprep.subr.bf16.mxu0 0
      %3600 = vmatpush1.bf16.msra.mxu0 0
      %3601 = vmatprep.subr.bf16.mxu0 0
      %3602 = vmatpush1.bf16.msra.mxu0 0
      %3603 = vmatprep.mubr.bf16.mxu0 0
      %3604 = vmatmul.mubr.bf16.gmra.mrb[0].mxu0 %v3470
      %v3605 = vpop.f32.mrb[0].mxu0
      %v3606 = vadd.f32 %v3522, %v3605
      %v3607 = vpop.f32.mrb[0].mxu0
      %v3608 = vpop.f32.mrb[0].mxu0
      %v3609 = vadd.f32 %v3522, %v3608
      %v3610 = vpop.f32.mrb[0].mxu0
      %3611 = vmatprep.mubr.bf16.mxu0 0
      %3612 = vmatmul.mubr.bf16.gmra.mrb[0].mxu0 %v3471
      %v3613 = vpop.f32.mrb[0].mxu0
      %v3614 = vadd.f32 %v3522, %v3613
      %v3615 = vpop.f32.mrb[0].mxu0
      %v3616 = vpop.f32.mrb[0].mxu0
      %v3617 = vadd.f32 %v3522, %v3616
      %v3618 = vpop.f32.mrb[0].mxu0
      %3619 = vmatprep.mubr.bf16.mxu0 0
      %3620 = vmatmul.mubr.bf16.gmra.mrb[0].mxu0 %v3472
      %v3621 = vpop.f32.mrb[0].mxu0
      %v3622 = vadd.f32 %v3522, %v3621
      %v3623 = vpop.f32.mrb[0].mxu0
      %v3624 = vpop.f32.mrb[0].mxu0
      %v3625 = vadd.f32 %v3522, %v3624
      %v3626 = vpop.f32.mrb[0].mxu0
      %3627 = vmatprep.mubr.bf16.mxu0 0
      %3628 = vmatmul.mubr.bf16.gmra.mrb[0].mxu0 %v3473
      %v3629 = vpop.f32.mrb[0].mxu0
      %v3630 = vadd.f32 %v3522, %v3629
      %v3631 = vpop.f32.mrb[0].mxu0
      %v3632 = vpop.f32.mrb[0].mxu0
      %v3633 = vadd.f32 %v3522, %v3632
      %v3634 = vpop.f32.mrb[0].mxu0
      %3635 = vmatprep.mubr.bf16.mxu0 0
      %3636 = vmatmul.mubr.bf16.gmra.mrb[0].mxu0 %v3474
      %v3637 = vpop.f32.mrb[0].mxu0
      %v3638 = vadd.f32 %v3522, %v3637
      %v3639 = vpop.f32.mrb[0].mxu0
      %v3640 = vpop.f32.mrb[0].mxu0
      %v3641 = vadd.f32 %v3522, %v3640
      %v3642 = vpop.f32.mrb[0].mxu0
      %3643 = vmatprep.mubr.bf16.mxu0 0
      %3644 = vmatmul.mubr.bf16.gmra.mrb[0].mxu0 %v3475
      %v3645 = vpop.f32.mrb[0].mxu0
      %v3646 = vadd.f32 %v3522, %v3645
      %v3647 = vpop.f32.mrb[0].mxu0
      %v3648 = vpop.f32.mrb[0].mxu0
      %v3649 = vadd.f32 %v3522, %v3648
      %v3650 = vpop.f32.mrb[0].mxu0
      %3651 = vmatprep.mubr.bf16.mxu0 0
      %3652 = vmatmul.mubr.bf16.gmra.mrb[0].mxu0 %v3476
      %v3653 = vpop.f32.mrb[0].mxu0
      %v3654 = vadd.f32 %v3522, %v3653
      %v3655 = vpop.f32.mrb[0].mxu0
      %v3656 = vpop.f32.mrb[0].mxu0
      %v3657 = vadd.f32 %v3522, %v3656
      %v3658 = vpop.f32.mrb[0].mxu0
      %3659 = vmatprep.mubr.bf16.mxu0 0
      %3660 = vmatmul.mubr.bf16.gmra.mrb[0].mxu0 %v3477
      %v3661 = vpop.f32.mrb[0].mxu0
      %v3662 = vadd.f32 %v3522, %v3661
      %v3663 = vpop.f32.mrb[0].mxu0
      %v3664 = vpop.f32.mrb[0].mxu0
      %v3665 = vadd.f32 %v3522, %v3664
      %v3666 = vpop.f32.mrb[0].mxu0
      %3667 = vmatprep.mubr.bf16.mxu0 0
      %3668 = vmatmul.mubr.bf16.gmra.mrb[0].mxu0 %v3478
      %v3669 = vpop.f32.mrb[0].mxu0
      %v3670 = vadd.f32 %v3522, %v3669
      %v3671 = vpop.f32.mrb[0].mxu0
      %v3672 = vpop.f32.mrb[0].mxu0
      %v3673 = vadd.f32 %v3522, %v3672
      %v3674 = vpop.f32.mrb[0].mxu0
      %3675 = vmatprep.mubr.bf16.mxu0 0
      %3676 = vmatmul.mubr.bf16.gmra.mrb[0].mxu0 %v3479
      %v3677 = vpop.f32.mrb[0].mxu0
      %v3678 = vadd.f32 %v3522, %v3677
      %v3679 = vpop.f32.mrb[0].mxu0
      %v3680 = vpop.f32.mrb[0].mxu0
      %v3681 = vadd.f32 %v3522, %v3680
      %v3682 = vpop.f32.mrb[0].mxu0
      %3683 = vmatprep.mubr.bf16.mxu0 0
      %3684 = vmatmul.mubr.bf16.gmra.mrb[0].mxu0 %v3480
      %v3685 = vpop.f32.mrb[0].mxu0
      %v3686 = vadd.f32 %v3522, %v3685
      %v3687 = vpop.f32.mrb[0].mxu0
      %v3688 = vpop.f32.mrb[0].mxu0
      %v3689 = vadd.f32 %v3522, %v3688
      %v3690 = vpop.f32.mrb[0].mxu0
      %3691 = vmatprep.mubr.bf16.mxu0 0
      %3692 = vmatmul.mubr.bf16.gmra.mrb[0].mxu0 %v3481
      %v3693 = vpop.f32.mrb[0].mxu0
      %v3694 = vadd.f32 %v3522, %v3693
      %v3695 = vpop.f32.mrb[0].mxu0
      %v3696 = vpop.f32.mrb[0].mxu0
      %v3697 = vadd.f32 %v3522, %v3696
      %v3698 = vpop.f32.mrb[0].mxu0
      %3699 = vmatprep.mubr.bf16.mxu0 0
      %3700 = vmatmul.mubr.bf16.gmra.mrb[0].mxu0 %v3482
      %v3701 = vpop.f32.mrb[0].mxu0
      %v3702 = vadd.f32 %v3522, %v3701
      %v3703 = vpop.f32.mrb[0].mxu0
      %v3704 = vpop.f32.mrb[0].mxu0
      %v3705 = vadd.f32 %v3522, %v3704
      %v3706 = vpop.f32.mrb[0].mxu0
      %3707 = vmatprep.mubr.bf16.mxu0 0
      %3708 = vmatmul.mubr.bf16.gmra.mrb[0].mxu0 %v3483
      %v3709 = vpop.f32.mrb[0].mxu0
      %v3710 = vadd.f32 %v3522, %v3709
      %v3711 = vpop.f32.mrb[0].mxu0
      %v3712 = vpop.f32.mrb[0].mxu0
      %v3713 = vadd.f32 %v3522, %v3712
      %v3714 = vpop.f32.mrb[0].mxu0
      %3715 = vmatprep.mubr.bf16.mxu0 0
      %3716 = vmatmul.mubr.bf16.gmra.mrb[0].mxu0 %v3484
      %v3717 = vpop.f32.mrb[0].mxu0
      %v3718 = vadd.f32 %v3522, %v3717
      %v3719 = vpop.f32.mrb[0].mxu0
      %v3720 = vpop.f32.mrb[0].mxu0
      %v3721 = vadd.f32 %v3522, %v3720
      %v3722 = vpop.f32.mrb[0].mxu0
      %3723 = vmatprep.mubr.bf16.mxu0 0
      %3724 = vmatmul.mubr.bf16.gmra.mrb[0].mxu0 %v3485
      %v3725 = vpop.f32.mrb[0].mxu0
      %v3726 = vadd.f32 %v3522, %v3725
      %v3727 = vpop.f32.mrb[0].mxu0
      %v3728 = vpop.f32.mrb[0].mxu0
      %v3729 = vadd.f32 %v3522, %v3728
      %v3730 = vpop.f32.mrb[0].mxu0
      %3731 = vmatprep.mubr.bf16.mxu0 0
      %3732 = vmatmul.mubr.bf16.gmra.mrb[0].mxu0 %v3486
      %v3733 = vpop.f32.mrb[0].mxu0
      %v3734 = vadd.f32 %v3522, %v3733
      %v3735 = vpop.f32.mrb[0].mxu0
      %v3736 = vpop.f32.mrb[0].mxu0
      %v3737 = vadd.f32 %v3522, %v3736
      %v3738 = vpop.f32.mrb[0].mxu0
      %3739 = vmatprep.mubr.bf16.mxu0 0
      %3740 = vmatmul.mubr.bf16.gmra.mrb[0].mxu0 %v3487
      %v3741 = vpop.f32.mrb[0].mxu0
      %v3742 = vadd.f32 %v3522, %v3741
      %v3743 = vpop.f32.mrb[0].mxu0
      %v3744 = vpop.f32.mrb[0].mxu0
      %v3745 = vadd.f32 %v3522, %v3744
      %v3746 = vpop.f32.mrb[0].mxu0
      %3747 = vmatprep.mubr.bf16.mxu0 0
      %3748 = vmatmul.mubr.bf16.gmra.mrb[0].mxu0 %v3488
      %v3749 = vpop.f32.mrb[0].mxu0
      %v3750 = vadd.f32 %v3522, %v3749
      %v3751 = vpop.f32.mrb[0].mxu0
      %v3752 = vpop.f32.mrb[0].mxu0
      %v3753 = vadd.f32 %v3522, %v3752
      %v3754 = vpop.f32.mrb[0].mxu0
      %3755 = vmatprep.mubr.bf16.mxu0 0
      %3756 = vmatmul.mubr.bf16.gmra.mrb[0].mxu0 %v3489
      %v3757 = vpop.f32.mrb[0].mxu0
      %v3758 = vadd.f32 %v3522, %v3757
      %v3759 = vpop.f32.mrb[0].mxu0
      %v3760 = vpop.f32.mrb[0].mxu0
      %v3761 = vadd.f32 %v3522, %v3760
      %v3762 = vpop.f32.mrb[0].mxu0
      %3763 = vmatprep.mubr.bf16.mxu0 0
      %3764 = vmatmul.mubr.bf16.gmra.mrb[0].mxu0 %v3490
      %v3765 = vpop.f32.mrb[0].mxu0
      %v3766 = vadd.f32 %v3522, %v3765
      %v3767 = vpop.f32.mrb[0].mxu0
      %v3768 = vpop.f32.mrb[0].mxu0
      %v3769 = vadd.f32 %v3522, %v3768
      %v3770 = vpop.f32.mrb[0].mxu0
      %3771 = vmatprep.mubr.bf16.mxu0 0
      %3772 = vmatmul.mubr.bf16.gmra.mrb[0].mxu0 %v3491
      %v3773 = vpop.f32.mrb[0].mxu0
      %v3774 = vadd.f32 %v3522, %v3773
      %v3775 = vpop.f32.mrb[0].mxu0
      %v3776 = vpop.f32.mrb[0].mxu0
      %v3777 = vadd.f32 %v3522, %v3776
      %v3778 = vpop.f32.mrb[0].mxu0
      %3779 = vmatprep.mubr.bf16.mxu0 0
      %3780 = vmatmul.mubr.bf16.gmra.mrb[0].mxu0 %v3492
      %v3781 = vpop.f32.mrb[0].mxu0
      %v3782 = vadd.f32 %v3522, %v3781
      %v3783 = vpop.f32.mrb[0].mxu0
      %v3784 = vpop.f32.mrb[0].mxu0
      %v3785 = vadd.f32 %v3522, %v3784
      %v3786 = vpop.f32.mrb[0].mxu0
      %3787 = vmatprep.mubr.bf16.mxu0 0
      %3788 = vmatmul.mubr.bf16.gmra.mrb[0].mxu0 %v3493
      %v3789 = vpop.f32.mrb[0].mxu0
      %v3790 = vadd.f32 %v3522, %v3789
      %v3791 = vpop.f32.mrb[0].mxu0
      %v3792 = vpop.f32.mrb[0].mxu0
      %v3793 = vadd.f32 %v3522, %v3792
      %v3794 = vpop.f32.mrb[0].mxu0
      %3795 = vmatprep.mubr.bf16.mxu0 0
      %3796 = vmatmul.mubr.bf16.gmra.mrb[0].mxu0 %v3494
      %v3797 = vpop.f32.mrb[0].mxu0
      %v3798 = vadd.f32 %v3522, %v3797
      %v3799 = vpop.f32.mrb[0].mxu0
      %v3800 = vpop.f32.mrb[0].mxu0
      %v3801 = vadd.f32 %v3522, %v3800
      %v3802 = vpop.f32.mrb[0].mxu0
      %3803 = vmatprep.mubr.bf16.mxu0 0
      %3804 = vmatmul.mubr.bf16.gmra.mrb[0].mxu0 %v3495
      %v3805 = vpop.f32.mrb[0].mxu0
      %v3806 = vadd.f32 %v3522, %v3805
      %v3807 = vpop.f32.mrb[0].mxu0
      %v3808 = vpop.f32.mrb[0].mxu0
      %v3809 = vadd.f32 %v3522, %v3808
      %v3810 = vpop.f32.mrb[0].mxu0
      %3811 = vmatprep.mubr.bf16.mxu0 0
      %3812 = vmatmul.mubr.bf16.gmra.mrb[0].mxu0 %v3496
      %v3813 = vpop.f32.mrb[0].mxu0
      %v3814 = vadd.f32 %v3522, %v3813
      %v3815 = vpop.f32.mrb[0].mxu0
      %v3816 = vpop.f32.mrb[0].mxu0
      %v3817 = vadd.f32 %v3522, %v3816
      %v3818 = vpop.f32.mrb[0].mxu0
      %3819 = vmatprep.mubr.bf16.mxu0 0
      %3820 = vmatmul.mubr.bf16.gmra.mrb[0].mxu0 %v3497
      %v3821 = vpop.f32.mrb[0].mxu0
      %v3822 = vadd.f32 %v3522, %v3821
      %v3823 = vpop.f32.mrb[0].mxu0
      %v3824 = vpop.f32.mrb[0].mxu0
      %v3825 = vadd.f32 %v3522, %v3824
      %v3826 = vpop.f32.mrb[0].mxu0
      %3827 = vmatprep.mubr.bf16.mxu0 0
      %3828 = vmatmul.mubr.bf16.gmra.mrb[0].mxu0 %v3498
      %v3829 = vpop.f32.mrb[0].mxu0
      %v3830 = vadd.f32 %v3522, %v3829
      %v3831 = vpop.f32.mrb[0].mxu0
      %v3832 = vpop.f32.mrb[0].mxu0
      %v3833 = vadd.f32 %v3522, %v3832
      %v3834 = vpop.f32.mrb[0].mxu0
      %3835 = vmatprep.mubr.bf16.mxu0 0
      %3836 = vmatmul.mubr.bf16.gmra.mrb[0].mxu0 %v3499
      %v3837 = vpop.f32.mrb[0].mxu0
      %v3838 = vadd.f32 %v3522, %v3837
      %v3839 = vpop.f32.mrb[0].mxu0
      %v3840 = vpop.f32.mrb[0].mxu0
      %v3841 = vadd.f32 %v3522, %v3840
      %v3842 = vpop.f32.mrb[0].mxu0
      %3843 = vmatprep.mubr.bf16.mxu0 0
      %3844 = vmatmul.mubr.bf16.gmra.mrb[0].mxu0 %v3500
      %v3845 = vpop.f32.mrb[0].mxu0
      %v3846 = vadd.f32 %v3522, %v3845
      %v3847 = vpop.f32.mrb[0].mxu0
      %v3848 = vpop.f32.mrb[0].mxu0
      %v3849 = vadd.f32 %v3522, %v3848
      %v3850 = vpop.f32.mrb[0].mxu0
      %3851 = vmatprep.mubr.bf16.mxu0 0
      %3852 = vmatmul.mubr.bf16.gmra.mrb[0].mxu0 %v3501
      %v3853 = vpop.f32.mrb[0].mxu0
      %v3854 = vadd.f32 %v3522, %v3853
      %v3855 = vpop.f32.mrb[0].mxu0
      %v3856 = vpop.f32.mrb[0].mxu0
      %v3857 = vadd.f32 %v3522, %v3856
      %v3858 = vpop.f32.mrb[0].mxu0
      %3859 = vdwg.mxu0
      %v3860 = vmax.f32 %v3606, 0.0
      %v3861 = vmax.f32 %v3609, 0.0
      %v3862 = vmax.f32 %v3614, 0.0
      %v3863 = vmax.f32 %v3617, 0.0
      %v3864 = vmax.f32 %v3622, 0.0
      %v3865 = vmax.f32 %v3625, 0.0
      %v3866 = vmax.f32 %v3630, 0.0
      %v3867 = vmax.f32 %v3633, 0.0
      %v3868 = vmax.f32 %v3638, 0.0
      %v3869 = vmax.f32 %v3641, 0.0
      %v3870 = vmax.f32 %v3646, 0.0
      %v3871 = vmax.f32 %v3649, 0.0
      %v3872 = vmax.f32 %v3654, 0.0
      %v3873 = vmax.f32 %v3657, 0.0
      %v3874 = vmax.f32 %v3662, 0.0
      %v3875 = vmax.f32 %v3665, 0.0
      %v3876 = vmax.f32 %v3670, 0.0
      %v3877 = vmax.f32 %v3673, 0.0
      %v3878 = vmax.f32 %v3678, 0.0
      %v3879 = vmax.f32 %v3681, 0.0
      %v3880 = vmax.f32 %v3686, 0.0
      %v3881 = vmax.f32 %v3689, 0.0
      %v3882 = vmax.f32 %v3694, 0.0
      %v3883 = vmax.f32 %v3697, 0.0
      %v3884 = vmax.f32 %v3702, 0.0
      %v3885 = vmax.f32 %v3705, 0.0
      %v3886 = vmax.f32 %v3710, 0.0
      %v3887 = vmax.f32 %v3713, 0.0
      %v3888 = vmax.f32 %v3718, 0.0
      %v3889 = vmax.f32 %v3721, 0.0
      %v3890 = vmax.f32 %v3726, 0.0
      %v3891 = vmax.f32 %v3729, 0.0
      %v3892 = vmax.f32 %v3734, 0.0
      %v3893 = vmax.f32 %v3737, 0.0
      %v3894 = vmax.f32 %v3742, 0.0
      %v3895 = vmax.f32 %v3745, 0.0
      %v3896 = vmax.f32 %v3750, 0.0
      %v3897 = vmax.f32 %v3753, 0.0
      %v3898 = vmax.f32 %v3758, 0.0
      %v3899 = vmax.f32 %v3761, 0.0
      %v3900 = vmax.f32 %v3766, 0.0
      %v3901 = vmax.f32 %v3769, 0.0
      %v3902 = vmax.f32 %v3774, 0.0
      %v3903 = vmax.f32 %v3777, 0.0
      %v3904 = vmax.f32 %v3782, 0.0
      %v3905 = vmax.f32 %v3785, 0.0
      %v3906 = vmax.f32 %v3790, 0.0
      %v3907 = vmax.f32 %v3793, 0.0
      %v3908 = vmax.f32 %v3798, 0.0
      %v3909 = vmax.f32 %v3801, 0.0
      %v3910 = vmax.f32 %v3806, 0.0
      %v3911 = vmax.f32 %v3809, 0.0
      %v3912 = vmax.f32 %v3814, 0.0
      %v3913 = vmax.f32 %v3817, 0.0
      %v3914 = vmax.f32 %v3822, 0.0
      %v3915 = vmax.f32 %v3825, 0.0
      %v3916 = vmax.f32 %v3830, 0.0
      %v3917 = vmax.f32 %v3833, 0.0
      %v3918 = vmax.f32 %v3838, 0.0
      %v3919 = vmax.f32 %v3841, 0.0
      %v3920 = vmax.f32 %v3846, 0.0
      %v3921 = vmax.f32 %v3849, 0.0
      %v3922 = vmax.f32 %v3854, 0.0
      %v3923 = vmax.f32 %v3857, 0.0
      %v3924 = vpack.c.bf16 %v3861, %v3860
      %v3925 = vpack.c.bf16 %v3863, %v3862
      %v3926 = vpack.c.bf16 %v3865, %v3864
      %v3927 = vpack.c.bf16 %v3867, %v3866
      %v3928 = vpack.c.bf16 %v3869, %v3868
      %v3929 = vpack.c.bf16 %v3871, %v3870
      %v3930 = vpack.c.bf16 %v3873, %v3872
      %v3931 = vpack.c.bf16 %v3875, %v3874
      %v3932 = vpack.c.bf16 %v3877, %v3876
      %v3933 = vpack.c.bf16 %v3879, %v3878
      %v3934 = vpack.c.bf16 %v3881, %v3880
      %v3935 = vpack.c.bf16 %v3883, %v3882
      %v3936 = vpack.c.bf16 %v3885, %v3884
      %v3937 = vpack.c.bf16 %v3887, %v3886
      %v3938 = vpack.c.bf16 %v3889, %v3888
      %v3939 = vpack.c.bf16 %v3891, %v3890
      %v3940 = vpack.c.bf16 %v3893, %v3892
      %v3941 = vpack.c.bf16 %v3895, %v3894
      %v3942 = vpack.c.bf16 %v3897, %v3896
      %v3943 = vpack.c.bf16 %v3899, %v3898
      %v3944 = vpack.c.bf16 %v3901, %v3900
      %v3945 = vpack.c.bf16 %v3903, %v3902
      %v3946 = vpack.c.bf16 %v3905, %v3904
      %v3947 = vpack.c.bf16 %v3907, %v3906
      %v3948 = vpack.c.bf16 %v3909, %v3908
      %v3949 = vpack.c.bf16 %v3911, %v3910
      %v3950 = vpack.c.bf16 %v3913, %v3912
      %v3951 = vpack.c.bf16 %v3915, %v3914
      %v3952 = vpack.c.bf16 %v3917, %v3916
      %v3953 = vpack.c.bf16 %v3919, %v3918
      %v3954 = vpack.c.bf16 %v3921, %v3920
      %v3955 = vpack.c.bf16 %v3923, %v3922
      %s3956 = scalar_lea.vmem %s2, 320
      %v3957 = vld [vmem:[%s3956] sm:$0xf]
      %v3958 = vld [vmem:[%s3956 + $0x4] sm:$0xf]
      %v3959 = vld [vmem:[%s3956 + $0x8] sm:$0xf]
      %v3960 = vld [vmem:[%s3956 + $0xc] sm:$0xf]
      %v3961 = vld [vmem:[%s3956 + $0x10] sm:$0xf]
      %v3962 = vld [vmem:[%s3956 + $0x14] sm:$0xf]
      %v3963 = vld [vmem:[%s3956 + $0x18] sm:$0xf]
      %v3964 = vld [vmem:[%s3956 + $0x1c] sm:$0xf]
      %v3965 = vld [vmem:[%s3956 + $0x20] sm:$0xf]
      %v3966 = vld [vmem:[%s3956 + $0x24] sm:$0xf]
      %v3967 = vld [vmem:[%s3956 + $0x28] sm:$0xf]
      %v3968 = vld [vmem:[%s3956 + $0x2c] sm:$0xf]
      %v3969 = vld [vmem:[%s3956 + $0x30] sm:$0xf]
      %v3970 = vld [vmem:[%s3956 + $0x34] sm:$0xf]
      %v3971 = vld [vmem:[%s3956 + $0x38] sm:$0xf]
      %v3972 = vld [vmem:[%s3956 + $0x3c] sm:$0xf]
      %v3973 = vlaneseq
      %v3974 = vshrl.u32 %v3973, 7
      %v3975 = vsub.s32 6, %v3974
      %v3976 = vrot.slane %v1458, %v3975
      %v3993 = vunpack.c.l.b16 %v3957
      %v3994 = vunpack.c.l.b16 %v3958
      %v3995 = vunpack.c.l.b16 %v3959
      %v3996 = vunpack.c.l.b16 %v3960
      %v3997 = vunpack.c.l.b16 %v3961
      %v3998 = vunpack.c.l.b16 %v3962
      %v3999 = vunpack.c.l.b16 %v3963
      %v4000 = vunpack.c.l.b16 %v3964
      %v4001 = vunpack.c.l.b16 %v3965
      %v4002 = vunpack.c.l.b16 %v3966
      %v4003 = vunpack.c.l.b16 %v3967
      %v4004 = vunpack.c.l.b16 %v3968
      %v4005 = vunpack.c.l.b16 %v3969
      %v4006 = vunpack.c.l.b16 %v3970
      %v4007 = vunpack.c.l.b16 %v3971
      %v4008 = vunpack.c.l.b16 %v3972
      %v4009 = vpack.c.b16 %v3994, %v3993
      %v4010 = vpack.c.b16 %v3996, %v3995
      %v4011 = vpack.c.b16 %v3998, %v3997
      %v4012 = vpack.c.b16 %v4000, %v3999
      %v4013 = vpack.c.b16 %v4002, %v4001
      %v4014 = vpack.c.b16 %v4004, %v4003
      %v4015 = vpack.c.b16 %v4006, %v4005
      %v4016 = vpack.c.b16 %v4008, %v4007
      %4025 = vmatprep.subr.bf16.mxu0 0
      %4026 = vmatpush1.bf16.msra.mxu0 %v4009
      %4027 = vmatprep.subr.bf16.mxu0 0
      %4028 = vmatpush1.bf16.msra.mxu0 %v4010
      %4029 = vmatprep.subr.bf16.mxu0 0
      %4030 = vmatpush1.bf16.msra.mxu0 %v4011
      %4031 = vmatprep.subr.bf16.mxu0 0
      %4032 = vmatpush1.bf16.msra.mxu0 %v4012
      %4033 = vmatprep.subr.bf16.mxu0 0
      %4034 = vmatpush1.bf16.msra.mxu0 %v4013
      %4035 = vmatprep.subr.bf16.mxu0 0
      %4036 = vmatpush1.bf16.msra.mxu0 %v4014
      %4037 = vmatprep.subr.bf16.mxu0 0
      %4038 = vmatpush1.bf16.msra.mxu0 %v4015
      %4039 = vmatprep.subr.bf16.mxu0 0
      %4040 = vmatpush1.bf16.msra.mxu0 %v4016
      %4041 = vmatprep.subr.bf16.mxu0 0
      %4042 = vmatpush1.bf16.msra.mxu0 0
      %4043 = vmatprep.subr.bf16.mxu0 0
      %4044 = vmatpush1.bf16.msra.mxu0 0
      %4045 = vmatprep.subr.bf16.mxu0 0
      %4046 = vmatpush1.bf16.msra.mxu0 0
      %4047 = vmatprep.subr.bf16.mxu0 0
      %4048 = vmatpush1.bf16.msra.mxu0 0
      %4049 = vmatprep.subr.bf16.mxu0 0
      %4050 = vmatpush1.bf16.msra.mxu0 0
      %4051 = vmatprep.subr.bf16.mxu0 0
      %4052 = vmatpush1.bf16.msra.mxu0 0
      %4053 = vmatprep.subr.bf16.mxu0 0
      %4054 = vmatpush1.bf16.msra.mxu0 0
      %4055 = vmatprep.subr.bf16.mxu0 0
      %4056 = vmatpush1.bf16.msra.mxu0 0
      %4057 = vmatprep.mubr.bf16.mxu0 0
      %4058 = vmatmul.mubr.bf16.gmra.mrb[0].mxu0 %v3924
      %v4059 = vpop.f32.mrb[0].mxu0
      %v4060 = vadd.f32 %v3976, %v4059
      %v4061 = vpop.f32.mrb[0].mxu0
      %v4062 = vpop.f32.mrb[0].mxu0
      %v4063 = vadd.f32 %v3976, %v4062
      %v4064 = vpop.f32.mrb[0].mxu0
      %4065 = vmatprep.mubr.bf16.mxu0 0
      %4066 = vmatmul.mubr.bf16.gmra.mrb[0].mxu0 %v3925
      %v4067 = vpop.f32.mrb[0].mxu0
      %v4068 = vadd.f32 %v3976, %v4067
      %v4069 = vpop.f32.mrb[0].mxu0
      %v4070 = vpop.f32.mrb[0].mxu0
      %v4071 = vadd.f32 %v3976, %v4070
      %v4072 = vpop.f32.mrb[0].mxu0
      %4073 = vmatprep.mubr.bf16.mxu0 0
      %4074 = vmatmul.mubr.bf16.gmra.mrb[0].mxu0 %v3926
      %v4075 = vpop.f32.mrb[0].mxu0
      %v4076 = vadd.f32 %v3976, %v4075
      %v4077 = vpop.f32.mrb[0].mxu0
      %v4078 = vpop.f32.mrb[0].mxu0
      %v4079 = vadd.f32 %v3976, %v4078
      %v4080 = vpop.f32.mrb[0].mxu0
      %4081 = vmatprep.mubr.bf16.mxu0 0
      %4082 = vmatmul.mubr.bf16.gmra.mrb[0].mxu0 %v3927
      %v4083 = vpop.f32.mrb[0].mxu0
      %v4084 = vadd.f32 %v3976, %v4083
      %v4085 = vpop.f32.mrb[0].mxu0
      %v4086 = vpop.f32.mrb[0].mxu0
      %v4087 = vadd.f32 %v3976, %v4086
      %v4088 = vpop.f32.mrb[0].mxu0
      %4089 = vmatprep.mubr.bf16.mxu0 0
      %4090 = vmatmul.mubr.bf16.gmra.mrb[0].mxu0 %v3928
      %v4091 = vpop.f32.mrb[0].mxu0
      %v4092 = vadd.f32 %v3976, %v4091
      %v4093 = vpop.f32.mrb[0].mxu0
      %v4094 = vpop.f32.mrb[0].mxu0
      %v4095 = vadd.f32 %v3976, %v4094
      %v4096 = vpop.f32.mrb[0].mxu0
      %4097 = vmatprep.mubr.bf16.mxu0 0
      %4098 = vmatmul.mubr.bf16.gmra.mrb[0].mxu0 %v3929
      %v4099 = vpop.f32.mrb[0].mxu0
      %v4100 = vadd.f32 %v3976, %v4099
      %v4101 = vpop.f32.mrb[0].mxu0
      %v4102 = vpop.f32.mrb[0].mxu0
      %v4103 = vadd.f32 %v3976, %v4102
      %v4104 = vpop.f32.mrb[0].mxu0
      %4105 = vmatprep.mubr.bf16.mxu0 0
      %4106 = vmatmul.mubr.bf16.gmra.mrb[0].mxu0 %v3930
      %v4107 = vpop.f32.mrb[0].mxu0
      %v4108 = vadd.f32 %v3976, %v4107
      %v4109 = vpop.f32.mrb[0].mxu0
      %v4110 = vpop.f32.mrb[0].mxu0
      %v4111 = vadd.f32 %v3976, %v4110
      %v4112 = vpop.f32.mrb[0].mxu0
      %4113 = vmatprep.mubr.bf16.mxu0 0
      %4114 = vmatmul.mubr.bf16.gmra.mrb[0].mxu0 %v3931
      %v4115 = vpop.f32.mrb[0].mxu0
      %v4116 = vadd.f32 %v3976, %v4115
      %v4117 = vpop.f32.mrb[0].mxu0
      %v4118 = vpop.f32.mrb[0].mxu0
      %v4119 = vadd.f32 %v3976, %v4118
      %v4120 = vpop.f32.mrb[0].mxu0
      %4121 = vmatprep.mubr.bf16.mxu0 0
      %4122 = vmatmul.mubr.bf16.gmra.mrb[0].mxu0 %v3932
      %v4123 = vpop.f32.mrb[0].mxu0
      %v4124 = vadd.f32 %v3976, %v4123
      %v4125 = vpop.f32.mrb[0].mxu0
      %v4126 = vpop.f32.mrb[0].mxu0
      %v4127 = vadd.f32 %v3976, %v4126
      %v4128 = vpop.f32.mrb[0].mxu0
      %4129 = vmatprep.mubr.bf16.mxu0 0
      %4130 = vmatmul.mubr.bf16.gmra.mrb[0].mxu0 %v3933
      %v4131 = vpop.f32.mrb[0].mxu0
      %v4132 = vadd.f32 %v3976, %v4131
      %v4133 = vpop.f32.mrb[0].mxu0
      %v4134 = vpop.f32.mrb[0].mxu0
      %v4135 = vadd.f32 %v3976, %v4134
      %v4136 = vpop.f32.mrb[0].mxu0
      %4137 = vmatprep.mubr.bf16.mxu0 0
      %4138 = vmatmul.mubr.bf16.gmra.mrb[0].mxu0 %v3934
      %v4139 = vpop.f32.mrb[0].mxu0
      %v4140 = vadd.f32 %v3976, %v4139
      %v4141 = vpop.f32.mrb[0].mxu0
      %v4142 = vpop.f32.mrb[0].mxu0
      %v4143 = vadd.f32 %v3976, %v4142
      %v4144 = vpop.f32.mrb[0].mxu0
      %4145 = vmatprep.mubr.bf16.mxu0 0
      %4146 = vmatmul.mubr.bf16.gmra.mrb[0].mxu0 %v3935
      %v4147 = vpop.f32.mrb[0].mxu0
      %v4148 = vadd.f32 %v3976, %v4147
      %v4149 = vpop.f32.mrb[0].mxu0
      %v4150 = vpop.f32.mrb[0].mxu0
      %v4151 = vadd.f32 %v3976, %v4150
      %v4152 = vpop.f32.mrb[0].mxu0
      %4153 = vmatprep.mubr.bf16.mxu0 0
      %4154 = vmatmul.mubr.bf16.gmra.mrb[0].mxu0 %v3936
      %v4155 = vpop.f32.mrb[0].mxu0
      %v4156 = vadd.f32 %v3976, %v4155
      %v4157 = vpop.f32.mrb[0].mxu0
      %v4158 = vpop.f32.mrb[0].mxu0
      %v4159 = vadd.f32 %v3976, %v4158
      %v4160 = vpop.f32.mrb[0].mxu0
      %4161 = vmatprep.mubr.bf16.mxu0 0
      %4162 = vmatmul.mubr.bf16.gmra.mrb[0].mxu0 %v3937
      %v4163 = vpop.f32.mrb[0].mxu0
      %v4164 = vadd.f32 %v3976, %v4163
      %v4165 = vpop.f32.mrb[0].mxu0
      %v4166 = vpop.f32.mrb[0].mxu0
      %v4167 = vadd.f32 %v3976, %v4166
      %v4168 = vpop.f32.mrb[0].mxu0
      %4169 = vmatprep.mubr.bf16.mxu0 0
      %4170 = vmatmul.mubr.bf16.gmra.mrb[0].mxu0 %v3938
      %v4171 = vpop.f32.mrb[0].mxu0
      %v4172 = vadd.f32 %v3976, %v4171
      %v4173 = vpop.f32.mrb[0].mxu0
      %v4174 = vpop.f32.mrb[0].mxu0
      %v4175 = vadd.f32 %v3976, %v4174
      %v4176 = vpop.f32.mrb[0].mxu0
      %4177 = vmatprep.mubr.bf16.mxu0 0
      %4178 = vmatmul.mubr.bf16.gmra.mrb[0].mxu0 %v3939
      %v4179 = vpop.f32.mrb[0].mxu0
      %v4180 = vadd.f32 %v3976, %v4179
      %v4181 = vpop.f32.mrb[0].mxu0
      %v4182 = vpop.f32.mrb[0].mxu0
      %v4183 = vadd.f32 %v3976, %v4182
      %v4184 = vpop.f32.mrb[0].mxu0
      %4185 = vmatprep.mubr.bf16.mxu0 0
      %4186 = vmatmul.mubr.bf16.gmra.mrb[0].mxu0 %v3940
      %v4187 = vpop.f32.mrb[0].mxu0
      %v4188 = vadd.f32 %v3976, %v4187
      %v4189 = vpop.f32.mrb[0].mxu0
      %v4190 = vpop.f32.mrb[0].mxu0
      %v4191 = vadd.f32 %v3976, %v4190
      %v4192 = vpop.f32.mrb[0].mxu0
      %4193 = vmatprep.mubr.bf16.mxu0 0
      %4194 = vmatmul.mubr.bf16.gmra.mrb[0].mxu0 %v3941
      %v4195 = vpop.f32.mrb[0].mxu0
      %v4196 = vadd.f32 %v3976, %v4195
      %v4197 = vpop.f32.mrb[0].mxu0
      %v4198 = vpop.f32.mrb[0].mxu0
      %v4199 = vadd.f32 %v3976, %v4198
      %v4200 = vpop.f32.mrb[0].mxu0
      %4201 = vmatprep.mubr.bf16.mxu0 0
      %4202 = vmatmul.mubr.bf16.gmra.mrb[0].mxu0 %v3942
      %v4203 = vpop.f32.mrb[0].mxu0
      %v4204 = vadd.f32 %v3976, %v4203
      %v4205 = vpop.f32.mrb[0].mxu0
      %v4206 = vpop.f32.mrb[0].mxu0
      %v4207 = vadd.f32 %v3976, %v4206
      %v4208 = vpop.f32.mrb[0].mxu0
      %4209 = vmatprep.mubr.bf16.mxu0 0
      %4210 = vmatmul.mubr.bf16.gmra.mrb[0].mxu0 %v3943
      %v4211 = vpop.f32.mrb[0].mxu0
      %v4212 = vadd.f32 %v3976, %v4211
      %v4213 = vpop.f32.mrb[0].mxu0
      %v4214 = vpop.f32.mrb[0].mxu0
      %v4215 = vadd.f32 %v3976, %v4214
      %v4216 = vpop.f32.mrb[0].mxu0
      %4217 = vmatprep.mubr.bf16.mxu0 0
      %4218 = vmatmul.mubr.bf16.gmra.mrb[0].mxu0 %v3944
      %v4219 = vpop.f32.mrb[0].mxu0
      %v4220 = vadd.f32 %v3976, %v4219
      %v4221 = vpop.f32.mrb[0].mxu0
      %v4222 = vpop.f32.mrb[0].mxu0
      %v4223 = vadd.f32 %v3976, %v4222
      %v4224 = vpop.f32.mrb[0].mxu0
      %4225 = vmatprep.mubr.bf16.mxu0 0
      %4226 = vmatmul.mubr.bf16.gmra.mrb[0].mxu0 %v3945
      %v4227 = vpop.f32.mrb[0].mxu0
      %v4228 = vadd.f32 %v3976, %v4227
      %v4229 = vpop.f32.mrb[0].mxu0
      %v4230 = vpop.f32.mrb[0].mxu0
      %v4231 = vadd.f32 %v3976, %v4230
      %v4232 = vpop.f32.mrb[0].mxu0
      %4233 = vmatprep.mubr.bf16.mxu0 0
      %4234 = vmatmul.mubr.bf16.gmra.mrb[0].mxu0 %v3946
      %v4235 = vpop.f32.mrb[0].mxu0
      %v4236 = vadd.f32 %v3976, %v4235
      %v4237 = vpop.f32.mrb[0].mxu0
      %v4238 = vpop.f32.mrb[0].mxu0
      %v4239 = vadd.f32 %v3976, %v4238
      %v4240 = vpop.f32.mrb[0].mxu0
      %4241 = vmatprep.mubr.bf16.mxu0 0
      %4242 = vmatmul.mubr.bf16.gmra.mrb[0].mxu0 %v3947
      %v4243 = vpop.f32.mrb[0].mxu0
      %v4244 = vadd.f32 %v3976, %v4243
      %v4245 = vpop.f32.mrb[0].mxu0
      %v4246 = vpop.f32.mrb[0].mxu0
      %v4247 = vadd.f32 %v3976, %v4246
      %v4248 = vpop.f32.mrb[0].mxu0
      %4249 = vmatprep.mubr.bf16.mxu0 0
      %4250 = vmatmul.mubr.bf16.gmra.mrb[0].mxu0 %v3948
      %v4251 = vpop.f32.mrb[0].mxu0
      %v4252 = vadd.f32 %v3976, %v4251
      %v4253 = vpop.f32.mrb[0].mxu0
      %v4254 = vpop.f32.mrb[0].mxu0
      %v4255 = vadd.f32 %v3976, %v4254
      %v4256 = vpop.f32.mrb[0].mxu0
      %4257 = vmatprep.mubr.bf16.mxu0 0
      %4258 = vmatmul.mubr.bf16.gmra.mrb[0].mxu0 %v3949
      %v4259 = vpop.f32.mrb[0].mxu0
      %v4260 = vadd.f32 %v3976, %v4259
      %v4261 = vpop.f32.mrb[0].mxu0
      %v4262 = vpop.f32.mrb[0].mxu0
      %v4263 = vadd.f32 %v3976, %v4262
      %v4264 = vpop.f32.mrb[0].mxu0
      %4265 = vmatprep.mubr.bf16.mxu0 0
      %4266 = vmatmul.mubr.bf16.gmra.mrb[0].mxu0 %v3950
      %v4267 = vpop.f32.mrb[0].mxu0
      %v4268 = vadd.f32 %v3976, %v4267
      %v4269 = vpop.f32.mrb[0].mxu0
      %v4270 = vpop.f32.mrb[0].mxu0
      %v4271 = vadd.f32 %v3976, %v4270
      %v4272 = vpop.f32.mrb[0].mxu0
      %4273 = vmatprep.mubr.bf16.mxu0 0
      %4274 = vmatmul.mubr.bf16.gmra.mrb[0].mxu0 %v3951
      %v4275 = vpop.f32.mrb[0].mxu0
      %v4276 = vadd.f32 %v3976, %v4275
      %v4277 = vpop.f32.mrb[0].mxu0
      %v4278 = vpop.f32.mrb[0].mxu0
      %v4279 = vadd.f32 %v3976, %v4278
      %v4280 = vpop.f32.mrb[0].mxu0
      %4281 = vmatprep.mubr.bf16.mxu0 0
      %4282 = vmatmul.mubr.bf16.gmra.mrb[0].mxu0 %v3952
      %v4283 = vpop.f32.mrb[0].mxu0
      %v4284 = vadd.f32 %v3976, %v4283
      %v4285 = vpop.f32.mrb[0].mxu0
      %v4286 = vpop.f32.mrb[0].mxu0
      %v4287 = vadd.f32 %v3976, %v4286
      %v4288 = vpop.f32.mrb[0].mxu0
      %4289 = vmatprep.mubr.bf16.mxu0 0
      %4290 = vmatmul.mubr.bf16.gmra.mrb[0].mxu0 %v3953
      %v4291 = vpop.f32.mrb[0].mxu0
      %v4292 = vadd.f32 %v3976, %v4291
      %v4293 = vpop.f32.mrb[0].mxu0
      %v4294 = vpop.f32.mrb[0].mxu0
      %v4295 = vadd.f32 %v3976, %v4294
      %v4296 = vpop.f32.mrb[0].mxu0
      %4297 = vmatprep.mubr.bf16.mxu0 0
      %4298 = vmatmul.mubr.bf16.gmra.mrb[0].mxu0 %v3954
      %v4299 = vpop.f32.mrb[0].mxu0
      %v4300 = vadd.f32 %v3976, %v4299
      %v4301 = vpop.f32.mrb[0].mxu0
      %v4302 = vpop.f32.mrb[0].mxu0
      %v4303 = vadd.f32 %v3976, %v4302
      %v4304 = vpop.f32.mrb[0].mxu0
      %4305 = vmatprep.mubr.bf16.mxu0 0
      %4306 = vmatmul.mubr.bf16.gmra.mrb[0].mxu0 %v3955
      %v4307 = vpop.f32.mrb[0].mxu0
      %v4308 = vadd.f32 %v3976, %v4307
      %v4309 = vpop.f32.mrb[0].mxu0
      %v4310 = vpop.f32.mrb[0].mxu0
      %v4311 = vadd.f32 %v3976, %v4310
      %v4312 = vpop.f32.mrb[0].mxu0
      %4313 = vdwg.mxu0
      %v4314 = vmax.f32 %v4060, 0.0
      %v4315 = vmax.f32 %v4063, 0.0
      %v4316 = vmax.f32 %v4068, 0.0
      %v4317 = vmax.f32 %v4071, 0.0
      %v4318 = vmax.f32 %v4076, 0.0
      %v4319 = vmax.f32 %v4079, 0.0
      %v4320 = vmax.f32 %v4084, 0.0
      %v4321 = vmax.f32 %v4087, 0.0
      %v4322 = vmax.f32 %v4092, 0.0
      %v4323 = vmax.f32 %v4095, 0.0
      %v4324 = vmax.f32 %v4100, 0.0
      %v4325 = vmax.f32 %v4103, 0.0
      %v4326 = vmax.f32 %v4108, 0.0
      %v4327 = vmax.f32 %v4111, 0.0
      %v4328 = vmax.f32 %v4116, 0.0
      %v4329 = vmax.f32 %v4119, 0.0
      %v4330 = vmax.f32 %v4124, 0.0
      %v4331 = vmax.f32 %v4127, 0.0
      %v4332 = vmax.f32 %v4132, 0.0
      %v4333 = vmax.f32 %v4135, 0.0
      %v4334 = vmax.f32 %v4140, 0.0
      %v4335 = vmax.f32 %v4143, 0.0
      %v4336 = vmax.f32 %v4148, 0.0
      %v4337 = vmax.f32 %v4151, 0.0
      %v4338 = vmax.f32 %v4156, 0.0
      %v4339 = vmax.f32 %v4159, 0.0
      %v4340 = vmax.f32 %v4164, 0.0
      %v4341 = vmax.f32 %v4167, 0.0
      %v4342 = vmax.f32 %v4172, 0.0
      %v4343 = vmax.f32 %v4175, 0.0
      %v4344 = vmax.f32 %v4180, 0.0
      %v4345 = vmax.f32 %v4183, 0.0
      %v4346 = vmax.f32 %v4188, 0.0
      %v4347 = vmax.f32 %v4191, 0.0
      %v4348 = vmax.f32 %v4196, 0.0
      %v4349 = vmax.f32 %v4199, 0.0
      %v4350 = vmax.f32 %v4204, 0.0
      %v4351 = vmax.f32 %v4207, 0.0
      %v4352 = vmax.f32 %v4212, 0.0
      %v4353 = vmax.f32 %v4215, 0.0
      %v4354 = vmax.f32 %v4220, 0.0
      %v4355 = vmax.f32 %v4223, 0.0
      %v4356 = vmax.f32 %v4228, 0.0
      %v4357 = vmax.f32 %v4231, 0.0
      %v4358 = vmax.f32 %v4236, 0.0
      %v4359 = vmax.f32 %v4239, 0.0
      %v4360 = vmax.f32 %v4244, 0.0
      %v4361 = vmax.f32 %v4247, 0.0
      %v4362 = vmax.f32 %v4252, 0.0
      %v4363 = vmax.f32 %v4255, 0.0
      %v4364 = vmax.f32 %v4260, 0.0
      %v4365 = vmax.f32 %v4263, 0.0
      %v4366 = vmax.f32 %v4268, 0.0
      %v4367 = vmax.f32 %v4271, 0.0
      %v4368 = vmax.f32 %v4276, 0.0
      %v4369 = vmax.f32 %v4279, 0.0
      %v4370 = vmax.f32 %v4284, 0.0
      %v4371 = vmax.f32 %v4287, 0.0
      %v4372 = vmax.f32 %v4292, 0.0
      %v4373 = vmax.f32 %v4295, 0.0
      %v4374 = vmax.f32 %v4300, 0.0
      %v4375 = vmax.f32 %v4303, 0.0
      %v4376 = vmax.f32 %v4308, 0.0
      %v4377 = vmax.f32 %v4311, 0.0
      %v4378 = vpack.c.bf16 %v4315, %v4314
      %v4379 = vpack.c.bf16 %v4317, %v4316
      %v4380 = vpack.c.bf16 %v4319, %v4318
      %v4381 = vpack.c.bf16 %v4321, %v4320
      %v4382 = vpack.c.bf16 %v4323, %v4322
      %v4383 = vpack.c.bf16 %v4325, %v4324
      %v4384 = vpack.c.bf16 %v4327, %v4326
      %v4385 = vpack.c.bf16 %v4329, %v4328
      %v4386 = vpack.c.bf16 %v4331, %v4330
      %v4387 = vpack.c.bf16 %v4333, %v4332
      %v4388 = vpack.c.bf16 %v4335, %v4334
      %v4389 = vpack.c.bf16 %v4337, %v4336
      %v4390 = vpack.c.bf16 %v4339, %v4338
      %v4391 = vpack.c.bf16 %v4341, %v4340
      %v4392 = vpack.c.bf16 %v4343, %v4342
      %v4393 = vpack.c.bf16 %v4345, %v4344
      %v4394 = vpack.c.bf16 %v4347, %v4346
      %v4395 = vpack.c.bf16 %v4349, %v4348
      %v4396 = vpack.c.bf16 %v4351, %v4350
      %v4397 = vpack.c.bf16 %v4353, %v4352
      %v4398 = vpack.c.bf16 %v4355, %v4354
      %v4399 = vpack.c.bf16 %v4357, %v4356
      %v4400 = vpack.c.bf16 %v4359, %v4358
      %v4401 = vpack.c.bf16 %v4361, %v4360
      %v4402 = vpack.c.bf16 %v4363, %v4362
      %v4403 = vpack.c.bf16 %v4365, %v4364
      %v4404 = vpack.c.bf16 %v4367, %v4366
      %v4405 = vpack.c.bf16 %v4369, %v4368
      %v4406 = vpack.c.bf16 %v4371, %v4370
      %v4407 = vpack.c.bf16 %v4373, %v4372
      %v4408 = vpack.c.bf16 %v4375, %v4374
      %v4409 = vpack.c.bf16 %v4377, %v4376
      %v4410 = vld [vmem:[%s4] sm:$0xff]
      %v4411 = vld [vmem:[%s4 + $0x8] sm:$0xff]
      %v4412 = vld [vmem:[%s4 + $0x10] sm:$0xff]
      %v4413 = vld [vmem:[%s4 + $0x18] sm:$0xff]
      %v4414 = vld [vmem:[%s4 + $0x20] sm:$0xff]
      %v4415 = vld [vmem:[%s4 + $0x28] sm:$0xff]
      %v4416 = vld [vmem:[%s4 + $0x30] sm:$0xff]
      %v4417 = vld [vmem:[%s4 + $0x38] sm:$0xff]
      %v4418 = vld [vmem:[%s4 + $0x40] sm:$0xff]
      %v4419 = vld [vmem:[%s4 + $0x48] sm:$0xff]
      %v4420 = vld [vmem:[%s4 + $0x50] sm:$0xff]
      %v4421 = vld [vmem:[%s4 + $0x58] sm:$0xff]
      %v4422 = vld [vmem:[%s4 + $0x60] sm:$0xff]
      %v4423 = vld [vmem:[%s4 + $0x68] sm:$0xff]
      %v4424 = vld [vmem:[%s4 + $0x70] sm:$0xff]
      %v4425 = vld [vmem:[%s4 + $0x78] sm:$0xff]
      %v4426 = vld [vmem:[%s5] sm:$0x3]
      %v4428 = vlaneseq
      %v4429 = vshrl.u32 %v4428, 7
      %v4430 = vsub.s32 0, %v4429
      %v4431 = vrot.slane %v4426, %v4430
      %v4432 = vlaneseq
      %v4433 = vshrl.u32 %v4432, 7
      %v4434 = vsub.s32 1, %v4433
      %v4435 = vrot.slane %v4426, %v4434
      %v4454 = vunpack.c.l.b16 %v4410
      %v4455 = vunpack.c.h.b16 %v4410
      %v4456 = vunpack.c.l.b16 %v4411
      %v4457 = vunpack.c.h.b16 %v4411
      %v4458 = vunpack.c.l.b16 %v4412
      %v4459 = vunpack.c.h.b16 %v4412
      %v4460 = vunpack.c.l.b16 %v4413
      %v4461 = vunpack.c.h.b16 %v4413
      %v4462 = vunpack.c.l.b16 %v4414
      %v4463 = vunpack.c.h.b16 %v4414
      %v4464 = vunpack.c.l.b16 %v4415
      %v4465 = vunpack.c.h.b16 %v4415
      %v4466 = vunpack.c.l.b16 %v4416
      %v4467 = vunpack.c.h.b16 %v4416
      %v4468 = vunpack.c.l.b16 %v4417
      %v4469 = vunpack.c.h.b16 %v4417
      %v4470 = vunpack.c.l.b16 %v4418
      %v4471 = vunpack.c.h.b16 %v4418
      %v4472 = vunpack.c.l.b16 %v4419
      %v4473 = vunpack.c.h.b16 %v4419
      %v4474 = vunpack.c.l.b16 %v4420
      %v4475 = vunpack.c.h.b16 %v4420
      %v4476 = vunpack.c.l.b16 %v4421
      %v4477 = vunpack.c.h.b16 %v4421
      %v4478 = vunpack.c.l.b16 %v4422
      %v4479 = vunpack.c.h.b16 %v4422
      %v4480 = vunpack.c.l.b16 %v4423
      %v4481 = vunpack.c.h.b16 %v4423
      %v4482 = vunpack.c.l.b16 %v4424
      %v4483 = vunpack.c.h.b16 %v4424
      %v4484 = vunpack.c.l.b16 %v4425
      %v4485 = vunpack.c.h.b16 %v4425
      %v4486 = vpack.c.b16 %v4456, %v4454
      %v4487 = vpack.c.b16 %v4457, %v4455
      %v4488 = vpack.c.b16 %v4460, %v4458
      %v4489 = vpack.c.b16 %v4461, %v4459
      %v4490 = vpack.c.b16 %v4464, %v4462
      %v4491 = vpack.c.b16 %v4465, %v4463
      %v4492 = vpack.c.b16 %v4468, %v4466
      %v4493 = vpack.c.b16 %v4469, %v4467
      %v4494 = vpack.c.b16 %v4472, %v4470
      %v4495 = vpack.c.b16 %v4473, %v4471
      %v4496 = vpack.c.b16 %v4476, %v4474
      %v4497 = vpack.c.b16 %v4477, %v4475
      %v4498 = vpack.c.b16 %v4480, %v4478
      %v4499 = vpack.c.b16 %v4481, %v4479
      %v4500 = vpack.c.b16 %v4484, %v4482
      %v4501 = vpack.c.b16 %v4485, %v4483
      %4518 = vmatprep.subr.bf16.mxu0 %v4487
      %4519 = vmatpush1.bf16.msra.mxu0 %v4486
      %4520 = vmatprep.subr.bf16.mxu0 %v4489
      %4521 = vmatpush1.bf16.msra.mxu0 %v4488
      %4522 = vmatprep.subr.bf16.mxu0 %v4491
      %4523 = vmatpush1.bf16.msra.mxu0 %v4490
      %4524 = vmatprep.subr.bf16.mxu0 %v4493
      %4525 = vmatpush1.bf16.msra.mxu0 %v4492
      %4526 = vmatprep.subr.bf16.mxu0 %v4495
      %4527 = vmatpush1.bf16.msra.mxu0 %v4494
      %4528 = vmatprep.subr.bf16.mxu0 %v4497
      %4529 = vmatpush1.bf16.msra.mxu0 %v4496
      %4530 = vmatprep.subr.bf16.mxu0 %v4499
      %4531 = vmatpush1.bf16.msra.mxu0 %v4498
      %4532 = vmatprep.subr.bf16.mxu0 %v4501
      %4533 = vmatpush1.bf16.msra.mxu0 %v4500
      %4534 = vmatprep.subr.bf16.mxu0 0
      %4535 = vmatpush1.bf16.msra.mxu0 0
      %4536 = vmatprep.subr.bf16.mxu0 0
      %4537 = vmatpush1.bf16.msra.mxu0 0
      %4538 = vmatprep.subr.bf16.mxu0 0
      %4539 = vmatpush1.bf16.msra.mxu0 0
      %4540 = vmatprep.subr.bf16.mxu0 0
      %4541 = vmatpush1.bf16.msra.mxu0 0
      %4542 = vmatprep.subr.bf16.mxu0 0
      %4543 = vmatpush1.bf16.msra.mxu0 0
      %4544 = vmatprep.subr.bf16.mxu0 0
      %4545 = vmatpush1.bf16.msra.mxu0 0
      %4546 = vmatprep.subr.bf16.mxu0 0
      %4547 = vmatpush1.bf16.msra.mxu0 0
      %4548 = vmatprep.subr.bf16.mxu0 0
      %4549 = vmatpush1.bf16.msra.mxu0 0
      %4550 = vmatprep.mubr.bf16.mxu0 0
      %4551 = vmatmul.mubr.bf16.gmra.mrb[0].mxu0 %v4378
      %v4552 = vpop.f32.mrb[0].mxu0
      %v4553 = vadd.f32 %v4431, %v4552
      %v4554 = vpop.f32.mrb[0].mxu0
      %v4555 = vadd.f32 %v4435, %v4554
      %v4556 = vpop.f32.mrb[0].mxu0
      %v4557 = vadd.f32 %v4431, %v4556
      %v4558 = vpop.f32.mrb[0].mxu0
      %v4559 = vadd.f32 %v4435, %v4558
      %4560 = vmatprep.mubr.bf16.mxu0 0
      %4561 = vmatmul.mubr.bf16.gmra.mrb[0].mxu0 %v4379
      %v4562 = vpop.f32.mrb[0].mxu0
      %v4563 = vadd.f32 %v4431, %v4562
      %v4564 = vpop.f32.mrb[0].mxu0
      %v4565 = vadd.f32 %v4435, %v4564
      %v4566 = vpop.f32.mrb[0].mxu0
      %v4567 = vadd.f32 %v4431, %v4566
      %v4568 = vpop.f32.mrb[0].mxu0
      %v4569 = vadd.f32 %v4435, %v4568
      %4570 = vmatprep.mubr.bf16.mxu0 0
      %4571 = vmatmul.mubr.bf16.gmra.mrb[0].mxu0 %v4380
      %v4572 = vpop.f32.mrb[0].mxu0
      %v4573 = vadd.f32 %v4431, %v4572
      %v4574 = vpop.f32.mrb[0].mxu0
      %v4575 = vadd.f32 %v4435, %v4574
      %v4576 = vpop.f32.mrb[0].mxu0
      %v4577 = vadd.f32 %v4431, %v4576
      %v4578 = vpop.f32.mrb[0].mxu0
      %v4579 = vadd.f32 %v4435, %v4578
      %4580 = vmatprep.mubr.bf16.mxu0 0
      %4581 = vmatmul.mubr.bf16.gmra.mrb[0].mxu0 %v4381
      %v4582 = vpop.f32.mrb[0].mxu0
      %v4583 = vadd.f32 %v4431, %v4582
      %v4584 = vpop.f32.mrb[0].mxu0
      %v4585 = vadd.f32 %v4435, %v4584
      %v4586 = vpop.f32.mrb[0].mxu0
      %v4587 = vadd.f32 %v4431, %v4586
      %v4588 = vpop.f32.mrb[0].mxu0
      %v4589 = vadd.f32 %v4435, %v4588
      %4590 = vmatprep.mubr.bf16.mxu0 0
      %4591 = vmatmul.mubr.bf16.gmra.mrb[0].mxu0 %v4382
      %v4592 = vpop.f32.mrb[0].mxu0
      %v4593 = vadd.f32 %v4431, %v4592
      %v4594 = vpop.f32.mrb[0].mxu0
      %v4595 = vadd.f32 %v4435, %v4594
      %v4596 = vpop.f32.mrb[0].mxu0
      %v4597 = vadd.f32 %v4431, %v4596
      %v4598 = vpop.f32.mrb[0].mxu0
      %v4599 = vadd.f32 %v4435, %v4598
      %4600 = vmatprep.mubr.bf16.mxu0 0
      %4601 = vmatmul.mubr.bf16.gmra.mrb[0].mxu0 %v4383
      %v4602 = vpop.f32.mrb[0].mxu0
      %v4603 = vadd.f32 %v4431, %v4602
      %v4604 = vpop.f32.mrb[0].mxu0
      %v4605 = vadd.f32 %v4435, %v4604
      %v4606 = vpop.f32.mrb[0].mxu0
      %v4607 = vadd.f32 %v4431, %v4606
      %v4608 = vpop.f32.mrb[0].mxu0
      %v4609 = vadd.f32 %v4435, %v4608
      %4610 = vmatprep.mubr.bf16.mxu0 0
      %4611 = vmatmul.mubr.bf16.gmra.mrb[0].mxu0 %v4384
      %v4612 = vpop.f32.mrb[0].mxu0
      %v4613 = vadd.f32 %v4431, %v4612
      %v4614 = vpop.f32.mrb[0].mxu0
      %v4615 = vadd.f32 %v4435, %v4614
      %v4616 = vpop.f32.mrb[0].mxu0
      %v4617 = vadd.f32 %v4431, %v4616
      %v4618 = vpop.f32.mrb[0].mxu0
      %v4619 = vadd.f32 %v4435, %v4618
      %4620 = vmatprep.mubr.bf16.mxu0 0
      %4621 = vmatmul.mubr.bf16.gmra.mrb[0].mxu0 %v4385
      %v4622 = vpop.f32.mrb[0].mxu0
      %v4623 = vadd.f32 %v4431, %v4622
      %v4624 = vpop.f32.mrb[0].mxu0
      %v4625 = vadd.f32 %v4435, %v4624
      %v4626 = vpop.f32.mrb[0].mxu0
      %v4627 = vadd.f32 %v4431, %v4626
      %v4628 = vpop.f32.mrb[0].mxu0
      %v4629 = vadd.f32 %v4435, %v4628
      %4630 = vmatprep.mubr.bf16.mxu0 0
      %4631 = vmatmul.mubr.bf16.gmra.mrb[0].mxu0 %v4386
      %v4632 = vpop.f32.mrb[0].mxu0
      %v4633 = vadd.f32 %v4431, %v4632
      %v4634 = vpop.f32.mrb[0].mxu0
      %v4635 = vadd.f32 %v4435, %v4634
      %v4636 = vpop.f32.mrb[0].mxu0
      %v4637 = vadd.f32 %v4431, %v4636
      %v4638 = vpop.f32.mrb[0].mxu0
      %v4639 = vadd.f32 %v4435, %v4638
      %4640 = vmatprep.mubr.bf16.mxu0 0
      %4641 = vmatmul.mubr.bf16.gmra.mrb[0].mxu0 %v4387
      %v4642 = vpop.f32.mrb[0].mxu0
      %v4643 = vadd.f32 %v4431, %v4642
      %v4644 = vpop.f32.mrb[0].mxu0
      %v4645 = vadd.f32 %v4435, %v4644
      %v4646 = vpop.f32.mrb[0].mxu0
      %v4647 = vadd.f32 %v4431, %v4646
      %v4648 = vpop.f32.mrb[0].mxu0
      %v4649 = vadd.f32 %v4435, %v4648
      %4650 = vmatprep.mubr.bf16.mxu0 0
      %4651 = vmatmul.mubr.bf16.gmra.mrb[0].mxu0 %v4388
      %v4652 = vpop.f32.mrb[0].mxu0
      %v4653 = vadd.f32 %v4431, %v4652
      %v4654 = vpop.f32.mrb[0].mxu0
      %v4655 = vadd.f32 %v4435, %v4654
      %v4656 = vpop.f32.mrb[0].mxu0
      %v4657 = vadd.f32 %v4431, %v4656
      %v4658 = vpop.f32.mrb[0].mxu0
      %v4659 = vadd.f32 %v4435, %v4658
      %4660 = vmatprep.mubr.bf16.mxu0 0
      %4661 = vmatmul.mubr.bf16.gmra.mrb[0].mxu0 %v4389
      %v4662 = vpop.f32.mrb[0].mxu0
      %v4663 = vadd.f32 %v4431, %v4662
      %v4664 = vpop.f32.mrb[0].mxu0
      %v4665 = vadd.f32 %v4435, %v4664
      %v4666 = vpop.f32.mrb[0].mxu0
      %v4667 = vadd.f32 %v4431, %v4666
      %v4668 = vpop.f32.mrb[0].mxu0
      %v4669 = vadd.f32 %v4435, %v4668
      %4670 = vmatprep.mubr.bf16.mxu0 0
      %4671 = vmatmul.mubr.bf16.gmra.mrb[0].mxu0 %v4390
      %v4672 = vpop.f32.mrb[0].mxu0
      %v4673 = vadd.f32 %v4431, %v4672
      %v4674 = vpop.f32.mrb[0].mxu0
      %v4675 = vadd.f32 %v4435, %v4674
      %v4676 = vpop.f32.mrb[0].mxu0
      %v4677 = vadd.f32 %v4431, %v4676
      %v4678 = vpop.f32.mrb[0].mxu0
      %v4679 = vadd.f32 %v4435, %v4678
      %4680 = vmatprep.mubr.bf16.mxu0 0
      %4681 = vmatmul.mubr.bf16.gmra.mrb[0].mxu0 %v4391
      %v4682 = vpop.f32.mrb[0].mxu0
      %v4683 = vadd.f32 %v4431, %v4682
      %v4684 = vpop.f32.mrb[0].mxu0
      %v4685 = vadd.f32 %v4435, %v4684
      %v4686 = vpop.f32.mrb[0].mxu0
      %v4687 = vadd.f32 %v4431, %v4686
      %v4688 = vpop.f32.mrb[0].mxu0
      %v4689 = vadd.f32 %v4435, %v4688
      %4690 = vmatprep.mubr.bf16.mxu0 0
      %4691 = vmatmul.mubr.bf16.gmra.mrb[0].mxu0 %v4392
      %v4692 = vpop.f32.mrb[0].mxu0
      %v4693 = vadd.f32 %v4431, %v4692
      %v4694 = vpop.f32.mrb[0].mxu0
      %v4695 = vadd.f32 %v4435, %v4694
      %v4696 = vpop.f32.mrb[0].mxu0
      %v4697 = vadd.f32 %v4431, %v4696
      %v4698 = vpop.f32.mrb[0].mxu0
      %v4699 = vadd.f32 %v4435, %v4698
      %4700 = vmatprep.mubr.bf16.mxu0 0
      %4701 = vmatmul.mubr.bf16.gmra.mrb[0].mxu0 %v4393
      %v4702 = vpop.f32.mrb[0].mxu0
      %v4703 = vadd.f32 %v4431, %v4702
      %v4704 = vpop.f32.mrb[0].mxu0
      %v4705 = vadd.f32 %v4435, %v4704
      %v4706 = vpop.f32.mrb[0].mxu0
      %v4707 = vadd.f32 %v4431, %v4706
      %v4708 = vpop.f32.mrb[0].mxu0
      %v4709 = vadd.f32 %v4435, %v4708
      %4710 = vmatprep.mubr.bf16.mxu0 0
      %4711 = vmatmul.mubr.bf16.gmra.mrb[0].mxu0 %v4394
      %v4712 = vpop.f32.mrb[0].mxu0
      %v4713 = vadd.f32 %v4431, %v4712
      %v4714 = vpop.f32.mrb[0].mxu0
      %v4715 = vadd.f32 %v4435, %v4714
      %v4716 = vpop.f32.mrb[0].mxu0
      %v4717 = vadd.f32 %v4431, %v4716
      %v4718 = vpop.f32.mrb[0].mxu0
      %v4719 = vadd.f32 %v4435, %v4718
      %4720 = vmatprep.mubr.bf16.mxu0 0
      %4721 = vmatmul.mubr.bf16.gmra.mrb[0].mxu0 %v4395
      %v4722 = vpop.f32.mrb[0].mxu0
      %v4723 = vadd.f32 %v4431, %v4722
      %v4724 = vpop.f32.mrb[0].mxu0
      %v4725 = vadd.f32 %v4435, %v4724
      %v4726 = vpop.f32.mrb[0].mxu0
      %v4727 = vadd.f32 %v4431, %v4726
      %v4728 = vpop.f32.mrb[0].mxu0
      %v4729 = vadd.f32 %v4435, %v4728
      %4730 = vmatprep.mubr.bf16.mxu0 0
      %4731 = vmatmul.mubr.bf16.gmra.mrb[0].mxu0 %v4396
      %v4732 = vpop.f32.mrb[0].mxu0
      %v4733 = vadd.f32 %v4431, %v4732
      %v4734 = vpop.f32.mrb[0].mxu0
      %v4735 = vadd.f32 %v4435, %v4734
      %v4736 = vpop.f32.mrb[0].mxu0
      %v4737 = vadd.f32 %v4431, %v4736
      %v4738 = vpop.f32.mrb[0].mxu0
      %v4739 = vadd.f32 %v4435, %v4738
      %4740 = vmatprep.mubr.bf16.mxu0 0
      %4741 = vmatmul.mubr.bf16.gmra.mrb[0].mxu0 %v4397
      %v4742 = vpop.f32.mrb[0].mxu0
      %v4743 = vadd.f32 %v4431, %v4742
      %v4744 = vpop.f32.mrb[0].mxu0
      %v4745 = vadd.f32 %v4435, %v4744
      %v4746 = vpop.f32.mrb[0].mxu0
      %v4747 = vadd.f32 %v4431, %v4746
      %v4748 = vpop.f32.mrb[0].mxu0
      %v4749 = vadd.f32 %v4435, %v4748
      %4750 = vmatprep.mubr.bf16.mxu0 0
      %4751 = vmatmul.mubr.bf16.gmra.mrb[0].mxu0 %v4398
      %v4752 = vpop.f32.mrb[0].mxu0
      %v4753 = vadd.f32 %v4431, %v4752
      %v4754 = vpop.f32.mrb[0].mxu0
      %v4755 = vadd.f32 %v4435, %v4754
      %v4756 = vpop.f32.mrb[0].mxu0
      %v4757 = vadd.f32 %v4431, %v4756
      %v4758 = vpop.f32.mrb[0].mxu0
      %v4759 = vadd.f32 %v4435, %v4758
      %4760 = vmatprep.mubr.bf16.mxu0 0
      %4761 = vmatmul.mubr.bf16.gmra.mrb[0].mxu0 %v4399
      %v4762 = vpop.f32.mrb[0].mxu0
      %v4763 = vadd.f32 %v4431, %v4762
      %v4764 = vpop.f32.mrb[0].mxu0
      %v4765 = vadd.f32 %v4435, %v4764
      %v4766 = vpop.f32.mrb[0].mxu0
      %v4767 = vadd.f32 %v4431, %v4766
      %v4768 = vpop.f32.mrb[0].mxu0
      %v4769 = vadd.f32 %v4435, %v4768
      %4770 = vmatprep.mubr.bf16.mxu0 0
      %4771 = vmatmul.mubr.bf16.gmra.mrb[0].mxu0 %v4400
      %v4772 = vpop.f32.mrb[0].mxu0
      %v4773 = vadd.f32 %v4431, %v4772
      %v4774 = vpop.f32.mrb[0].mxu0
      %v4775 = vadd.f32 %v4435, %v4774
      %v4776 = vpop.f32.mrb[0].mxu0
      %v4777 = vadd.f32 %v4431, %v4776
      %v4778 = vpop.f32.mrb[0].mxu0
      %v4779 = vadd.f32 %v4435, %v4778
      %4780 = vmatprep.mubr.bf16.mxu0 0
      %4781 = vmatmul.mubr.bf16.gmra.mrb[0].mxu0 %v4401
      %v4782 = vpop.f32.mrb[0].mxu0
      %v4783 = vadd.f32 %v4431, %v4782
      %v4784 = vpop.f32.mrb[0].mxu0
      %v4785 = vadd.f32 %v4435, %v4784
      %v4786 = vpop.f32.mrb[0].mxu0
      %v4787 = vadd.f32 %v4431, %v4786
      %v4788 = vpop.f32.mrb[0].mxu0
      %v4789 = vadd.f32 %v4435, %v4788
      %4790 = vmatprep.mubr.bf16.mxu0 0
      %4791 = vmatmul.mubr.bf16.gmra.mrb[0].mxu0 %v4402
      %v4792 = vpop.f32.mrb[0].mxu0
      %v4793 = vadd.f32 %v4431, %v4792
      %v4794 = vpop.f32.mrb[0].mxu0
      %v4795 = vadd.f32 %v4435, %v4794
      %v4796 = vpop.f32.mrb[0].mxu0
      %v4797 = vadd.f32 %v4431, %v4796
      %v4798 = vpop.f32.mrb[0].mxu0
      %v4799 = vadd.f32 %v4435, %v4798
      %4800 = vmatprep.mubr.bf16.mxu0 0
      %4801 = vmatmul.mubr.bf16.gmra.mrb[0].mxu0 %v4403
      %v4802 = vpop.f32.mrb[0].mxu0
      %v4803 = vadd.f32 %v4431, %v4802
      %v4804 = vpop.f32.mrb[0].mxu0
      %v4805 = vadd.f32 %v4435, %v4804
      %v4806 = vpop.f32.mrb[0].mxu0
      %v4807 = vadd.f32 %v4431, %v4806
      %v4808 = vpop.f32.mrb[0].mxu0
      %v4809 = vadd.f32 %v4435, %v4808
      %4810 = vmatprep.mubr.bf16.mxu0 0
      %4811 = vmatmul.mubr.bf16.gmra.mrb[0].mxu0 %v4404
      %v4812 = vpop.f32.mrb[0].mxu0
      %v4813 = vadd.f32 %v4431, %v4812
      %v4814 = vpop.f32.mrb[0].mxu0
      %v4815 = vadd.f32 %v4435, %v4814
      %v4816 = vpop.f32.mrb[0].mxu0
      %v4817 = vadd.f32 %v4431, %v4816
      %v4818 = vpop.f32.mrb[0].mxu0
      %v4819 = vadd.f32 %v4435, %v4818
      %4820 = vmatprep.mubr.bf16.mxu0 0
      %4821 = vmatmul.mubr.bf16.gmra.mrb[0].mxu0 %v4405
      %v4822 = vpop.f32.mrb[0].mxu0
      %v4823 = vadd.f32 %v4431, %v4822
      %v4824 = vpop.f32.mrb[0].mxu0
      %v4825 = vadd.f32 %v4435, %v4824
      %v4826 = vpop.f32.mrb[0].mxu0
      %v4827 = vadd.f32 %v4431, %v4826
      %v4828 = vpop.f32.mrb[0].mxu0
      %v4829 = vadd.f32 %v4435, %v4828
      %4830 = vmatprep.mubr.bf16.mxu0 0
      %4831 = vmatmul.mubr.bf16.gmra.mrb[0].mxu0 %v4406
      %v4832 = vpop.f32.mrb[0].mxu0
      %v4833 = vadd.f32 %v4431, %v4832
      %v4834 = vpop.f32.mrb[0].mxu0
      %v4835 = vadd.f32 %v4435, %v4834
      %v4836 = vpop.f32.mrb[0].mxu0
      %v4837 = vadd.f32 %v4431, %v4836
      %v4838 = vpop.f32.mrb[0].mxu0
      %v4839 = vadd.f32 %v4435, %v4838
      %4840 = vmatprep.mubr.bf16.mxu0 0
      %4841 = vmatmul.mubr.bf16.gmra.mrb[0].mxu0 %v4407
      %v4842 = vpop.f32.mrb[0].mxu0
      %v4843 = vadd.f32 %v4431, %v4842
      %v4844 = vpop.f32.mrb[0].mxu0
      %v4845 = vadd.f32 %v4435, %v4844
      %v4846 = vpop.f32.mrb[0].mxu0
      %v4847 = vadd.f32 %v4431, %v4846
      %v4848 = vpop.f32.mrb[0].mxu0
      %v4849 = vadd.f32 %v4435, %v4848
      %4850 = vmatprep.mubr.bf16.mxu0 0
      %4851 = vmatmul.mubr.bf16.gmra.mrb[0].mxu0 %v4408
      %v4852 = vpop.f32.mrb[0].mxu0
      %v4853 = vadd.f32 %v4431, %v4852
      %v4854 = vpop.f32.mrb[0].mxu0
      %v4855 = vadd.f32 %v4435, %v4854
      %v4856 = vpop.f32.mrb[0].mxu0
      %v4857 = vadd.f32 %v4431, %v4856
      %v4858 = vpop.f32.mrb[0].mxu0
      %v4859 = vadd.f32 %v4435, %v4858
      %4860 = vmatprep.mubr.bf16.mxu0 0
      %4861 = vmatmul.mubr.bf16.gmra.mrb[0].mxu0 %v4409
      %v4862 = vpop.f32.mrb[0].mxu0
      %v4863 = vadd.f32 %v4431, %v4862
      %v4864 = vpop.f32.mrb[0].mxu0
      %v4865 = vadd.f32 %v4435, %v4864
      %v4866 = vpop.f32.mrb[0].mxu0
      %v4867 = vadd.f32 %v4431, %v4866
      %v4868 = vpop.f32.mrb[0].mxu0
      %v4869 = vadd.f32 %v4435, %v4868
      %4870 = vdwg.mxu0
      %v4871 = vpack.c.bf16 %v4557, %v4553
      %v4872 = vpack.c.bf16 %v4567, %v4563
      %v4873 = vpack.c.bf16 %v4577, %v4573
      %v4874 = vpack.c.bf16 %v4587, %v4583
      %v4875 = vpack.c.bf16 %v4597, %v4593
      %v4876 = vpack.c.bf16 %v4607, %v4603
      %v4877 = vpack.c.bf16 %v4617, %v4613
      %v4878 = vpack.c.bf16 %v4627, %v4623
      %v4879 = vpack.c.bf16 %v4637, %v4633
      %v4880 = vpack.c.bf16 %v4647, %v4643
      %v4881 = vpack.c.bf16 %v4657, %v4653
      %v4882 = vpack.c.bf16 %v4667, %v4663
      %v4883 = vpack.c.bf16 %v4677, %v4673
      %v4884 = vpack.c.bf16 %v4687, %v4683
      %v4885 = vpack.c.bf16 %v4697, %v4693
      %v4886 = vpack.c.bf16 %v4707, %v4703
      %v4887 = vpack.c.bf16 %v4717, %v4713
      %v4888 = vpack.c.bf16 %v4727, %v4723
      %v4889 = vpack.c.bf16 %v4737, %v4733
      %v4890 = vpack.c.bf16 %v4747, %v4743
      %v4891 = vpack.c.bf16 %v4757, %v4753
      %v4892 = vpack.c.bf16 %v4767, %v4763
      %v4893 = vpack.c.bf16 %v4777, %v4773
      %v4894 = vpack.c.bf16 %v4787, %v4783
      %v4895 = vpack.c.bf16 %v4797, %v4793
      %v4896 = vpack.c.bf16 %v4807, %v4803
      %v4897 = vpack.c.bf16 %v4817, %v4813
      %v4898 = vpack.c.bf16 %v4827, %v4823
      %v4899 = vpack.c.bf16 %v4837, %v4833
      %v4900 = vpack.c.bf16 %v4847, %v4843
      %v4901 = vpack.c.bf16 %v4857, %v4853
      %v4902 = vpack.c.bf16 %v4867, %v4863
      %v4903 = vmax.f32 %v4555, 0.0
      %v4904 = vmax.f32 %v4559, 0.0
      %v4905 = vmax.f32 %v4565, 0.0
      %v4906 = vmax.f32 %v4569, 0.0
      %v4907 = vmax.f32 %v4575, 0.0
      %v4908 = vmax.f32 %v4579, 0.0
      %v4909 = vmax.f32 %v4585, 0.0
      %v4910 = vmax.f32 %v4589, 0.0
      %v4911 = vmax.f32 %v4595, 0.0
      %v4912 = vmax.f32 %v4599, 0.0
      %v4913 = vmax.f32 %v4605, 0.0
      %v4914 = vmax.f32 %v4609, 0.0
      %v4915 = vmax.f32 %v4615, 0.0
      %v4916 = vmax.f32 %v4619, 0.0
      %v4917 = vmax.f32 %v4625, 0.0
      %v4918 = vmax.f32 %v4629, 0.0
      %v4919 = vmax.f32 %v4635, 0.0
      %v4920 = vmax.f32 %v4639, 0.0
      %v4921 = vmax.f32 %v4645, 0.0
      %v4922 = vmax.f32 %v4649, 0.0
      %v4923 = vmax.f32 %v4655, 0.0
      %v4924 = vmax.f32 %v4659, 0.0
      %v4925 = vmax.f32 %v4665, 0.0
      %v4926 = vmax.f32 %v4669, 0.0
      %v4927 = vmax.f32 %v4675, 0.0
      %v4928 = vmax.f32 %v4679, 0.0
      %v4929 = vmax.f32 %v4685, 0.0
      %v4930 = vmax.f32 %v4689, 0.0
      %v4931 = vmax.f32 %v4695, 0.0
      %v4932 = vmax.f32 %v4699, 0.0
      %v4933 = vmax.f32 %v4705, 0.0
      %v4934 = vmax.f32 %v4709, 0.0
      %v4935 = vmax.f32 %v4715, 0.0
      %v4936 = vmax.f32 %v4719, 0.0
      %v4937 = vmax.f32 %v4725, 0.0
      %v4938 = vmax.f32 %v4729, 0.0
      %v4939 = vmax.f32 %v4735, 0.0
      %v4940 = vmax.f32 %v4739, 0.0
      %v4941 = vmax.f32 %v4745, 0.0
      %v4942 = vmax.f32 %v4749, 0.0
      %v4943 = vmax.f32 %v4755, 0.0
      %v4944 = vmax.f32 %v4759, 0.0
      %v4945 = vmax.f32 %v4765, 0.0
      %v4946 = vmax.f32 %v4769, 0.0
      %v4947 = vmax.f32 %v4775, 0.0
      %v4948 = vmax.f32 %v4779, 0.0
      %v4949 = vmax.f32 %v4785, 0.0
      %v4950 = vmax.f32 %v4789, 0.0
      %v4951 = vmax.f32 %v4795, 0.0
      %v4952 = vmax.f32 %v4799, 0.0
      %v4953 = vmax.f32 %v4805, 0.0
      %v4954 = vmax.f32 %v4809, 0.0
      %v4955 = vmax.f32 %v4815, 0.0
      %v4956 = vmax.f32 %v4819, 0.0
      %v4957 = vmax.f32 %v4825, 0.0
      %v4958 = vmax.f32 %v4829, 0.0
      %v4959 = vmax.f32 %v4835, 0.0
      %v4960 = vmax.f32 %v4839, 0.0
      %v4961 = vmax.f32 %v4845, 0.0
      %v4962 = vmax.f32 %v4849, 0.0
      %v4963 = vmax.f32 %v4855, 0.0
      %v4964 = vmax.f32 %v4859, 0.0
      %v4965 = vmax.f32 %v4865, 0.0
      %v4966 = vmax.f32 %v4869, 0.0
      %v4967 = vld [vmem:[%s6] sm:$0xf]
      %v4968 = vld [vmem:[%s6 + $0x4] sm:$0xf]
      %v4969 = vld [vmem:[%s6 + $0x8] sm:$0xf]
      %v4970 = vld [vmem:[%s6 + $0xc] sm:$0xf]
      %v4971 = vld [vmem:[%s6 + $0x10] sm:$0xf]
      %v4972 = vld [vmem:[%s6 + $0x14] sm:$0xf]
      %v4973 = vld [vmem:[%s6 + $0x18] sm:$0xf]
      %v4974 = vld [vmem:[%s6 + $0x1c] sm:$0xf]
      %v4975 = vld [vmem:[%s6 + $0x20] sm:$0xf]
      %v4976 = vld [vmem:[%s6 + $0x24] sm:$0xf]
      %v4977 = vld [vmem:[%s6 + $0x28] sm:$0xf]
      %v4978 = vld [vmem:[%s6 + $0x2c] sm:$0xf]
      %v4979 = vld [vmem:[%s6 + $0x30] sm:$0xf]
      %v4980 = vld [vmem:[%s6 + $0x34] sm:$0xf]
      %v4981 = vld [vmem:[%s6 + $0x38] sm:$0xf]
      %v4982 = vld [vmem:[%s6 + $0x3c] sm:$0xf]
      %v4999 = vunpack.c.l.b16 %v4967
      %v5000 = vunpack.c.l.b16 %v4968
      %v5001 = vunpack.c.l.b16 %v4969
      %v5002 = vunpack.c.l.b16 %v4970
      %v5003 = vunpack.c.l.b16 %v4971
      %v5004 = vunpack.c.l.b16 %v4972
      %v5005 = vunpack.c.l.b16 %v4973
      %v5006 = vunpack.c.l.b16 %v4974
      %v5007 = vunpack.c.l.b16 %v4975
      %v5008 = vunpack.c.l.b16 %v4976
      %v5009 = vunpack.c.l.b16 %v4977
      %v5010 = vunpack.c.l.b16 %v4978
      %v5011 = vunpack.c.l.b16 %v4979
      %v5012 = vunpack.c.l.b16 %v4980
      %v5013 = vunpack.c.l.b16 %v4981
      %v5014 = vunpack.c.l.b16 %v4982
      %v5015 = vpack.c.b16 %v5000, %v4999
      %v5016 = vpack.c.b16 %v5002, %v5001
      %v5017 = vpack.c.b16 %v5004, %v5003
      %v5018 = vpack.c.b16 %v5006, %v5005
      %v5019 = vpack.c.b16 %v5008, %v5007
      %v5020 = vpack.c.b16 %v5010, %v5009
      %v5021 = vpack.c.b16 %v5012, %v5011
      %v5022 = vpack.c.b16 %v5014, %v5013
      %5031 = vmatprep.subr.bf16.mxu0 0
      %5032 = vmatpush1.bf16.msra.mxu0 %v5015
      %5033 = vmatprep.subr.bf16.mxu0 0
      %5034 = vmatpush1.bf16.msra.mxu0 %v5016
      %5035 = vmatprep.subr.bf16.mxu0 0
      %5036 = vmatpush1.bf16.msra.mxu0 %v5017
      %5037 = vmatprep.subr.bf16.mxu0 0
      %5038 = vmatpush1.bf16.msra.mxu0 %v5018
      %5039 = vmatprep.subr.bf16.mxu0 0
      %5040 = vmatpush1.bf16.msra.mxu0 %v5019
      %5041 = vmatprep.subr.bf16.mxu0 0
      %5042 = vmatpush1.bf16.msra.mxu0 %v5020
      %5043 = vmatprep.subr.bf16.mxu0 0
      %5044 = vmatpush1.bf16.msra.mxu0 %v5021
      %5045 = vmatprep.subr.bf16.mxu0 0
      %5046 = vmatpush1.bf16.msra.mxu0 %v5022
      %5047 = vmatprep.subr.bf16.mxu0 0
      %5048 = vmatpush1.bf16.msra.mxu0 0
      %5049 = vmatprep.subr.bf16.mxu0 0
      %5050 = vmatpush1.bf16.msra.mxu0 0
      %5051 = vmatprep.subr.bf16.mxu0 0
      %5052 = vmatpush1.bf16.msra.mxu0 0
      %5053 = vmatprep.subr.bf16.mxu0 0
      %5054 = vmatpush1.bf16.msra.mxu0 0
      %5055 = vmatprep.subr.bf16.mxu0 0
      %5056 = vmatpush1.bf16.msra.mxu0 0
      %5057 = vmatprep.subr.bf16.mxu0 0
      %5058 = vmatpush1.bf16.msra.mxu0 0
      %5059 = vmatprep.subr.bf16.mxu0 0
      %5060 = vmatpush1.bf16.msra.mxu0 0
      %5061 = vmatprep.subr.bf16.mxu0 0
      %5062 = vmatpush1.bf16.msra.mxu0 0
      %5063 = vmatprep.mubr.bf16.mxu0 0
      %5064 = vmatmul.mubr.bf16.gmra.mrb[0].mxu0 %v4871
      %v5065 = vpop.f32.mrb[0].mxu0
      %v5066 = vadd.f32 %v1140, %v5065
      %v5067 = vpop.f32.mrb[0].mxu0
      %v5068 = vpop.f32.mrb[0].mxu0
      %v5069 = vadd.f32 %v1145, %v5068
      %v5070 = vpop.f32.mrb[0].mxu0
      %5071 = vmatprep.mubr.bf16.mxu0 0
      %5072 = vmatmul.mubr.bf16.gmra.mrb[0].mxu0 %v4872
      %v5073 = vpop.f32.mrb[0].mxu0
      %v5074 = vadd.f32 %v1150, %v5073
      %v5075 = vpop.f32.mrb[0].mxu0
      %v5076 = vpop.f32.mrb[0].mxu0
      %v5077 = vadd.f32 %v1155, %v5076
      %v5078 = vpop.f32.mrb[0].mxu0
      %5079 = vmatprep.mubr.bf16.mxu0 0
      %5080 = vmatmul.mubr.bf16.gmra.mrb[0].mxu0 %v4873
      %v5081 = vpop.f32.mrb[0].mxu0
      %v5082 = vadd.f32 %v1160, %v5081
      %v5083 = vpop.f32.mrb[0].mxu0
      %v5084 = vpop.f32.mrb[0].mxu0
      %v5085 = vadd.f32 %v1165, %v5084
      %v5086 = vpop.f32.mrb[0].mxu0
      %5087 = vmatprep.mubr.bf16.mxu0 0
      %5088 = vmatmul.mubr.bf16.gmra.mrb[0].mxu0 %v4874
      %v5089 = vpop.f32.mrb[0].mxu0
      %v5090 = vadd.f32 %v1170, %v5089
      %v5091 = vpop.f32.mrb[0].mxu0
      %v5092 = vpop.f32.mrb[0].mxu0
      %v5093 = vadd.f32 %v1175, %v5092
      %v5094 = vpop.f32.mrb[0].mxu0
      %5095 = vmatprep.mubr.bf16.mxu0 0
      %5096 = vmatmul.mubr.bf16.gmra.mrb[0].mxu0 %v4875
      %v5097 = vpop.f32.mrb[0].mxu0
      %v5098 = vadd.f32 %v1180, %v5097
      %v5099 = vpop.f32.mrb[0].mxu0
      %v5100 = vpop.f32.mrb[0].mxu0
      %v5101 = vadd.f32 %v1185, %v5100
      %v5102 = vpop.f32.mrb[0].mxu0
      %5103 = vmatprep.mubr.bf16.mxu0 0
      %5104 = vmatmul.mubr.bf16.gmra.mrb[0].mxu0 %v4876
      %v5105 = vpop.f32.mrb[0].mxu0
      %v5106 = vadd.f32 %v1190, %v5105
      %v5107 = vpop.f32.mrb[0].mxu0
      %v5108 = vpop.f32.mrb[0].mxu0
      %v5109 = vadd.f32 %v1195, %v5108
      %v5110 = vpop.f32.mrb[0].mxu0
      %5111 = vmatprep.mubr.bf16.mxu0 0
      %5112 = vmatmul.mubr.bf16.gmra.mrb[0].mxu0 %v4877
      %v5113 = vpop.f32.mrb[0].mxu0
      %v5114 = vadd.f32 %v1200, %v5113
      %v5115 = vpop.f32.mrb[0].mxu0
      %v5116 = vpop.f32.mrb[0].mxu0
      %v5117 = vadd.f32 %v1205, %v5116
      %v5118 = vpop.f32.mrb[0].mxu0
      %5119 = vmatprep.mubr.bf16.mxu0 0
      %5120 = vmatmul.mubr.bf16.gmra.mrb[0].mxu0 %v4878
      %v5121 = vpop.f32.mrb[0].mxu0
      %v5122 = vadd.f32 %v1210, %v5121
      %v5123 = vpop.f32.mrb[0].mxu0
      %v5124 = vpop.f32.mrb[0].mxu0
      %v5125 = vadd.f32 %v1215, %v5124
      %v5126 = vpop.f32.mrb[0].mxu0
      %5127 = vmatprep.mubr.bf16.mxu0 0
      %5128 = vmatmul.mubr.bf16.gmra.mrb[0].mxu0 %v4879
      %v5129 = vpop.f32.mrb[0].mxu0
      %v5130 = vadd.f32 %v1220, %v5129
      %v5131 = vpop.f32.mrb[0].mxu0
      %v5132 = vpop.f32.mrb[0].mxu0
      %v5133 = vadd.f32 %v1225, %v5132
      %v5134 = vpop.f32.mrb[0].mxu0
      %5135 = vmatprep.mubr.bf16.mxu0 0
      %5136 = vmatmul.mubr.bf16.gmra.mrb[0].mxu0 %v4880
      %v5137 = vpop.f32.mrb[0].mxu0
      %v5138 = vadd.f32 %v1230, %v5137
      %v5139 = vpop.f32.mrb[0].mxu0
      %v5140 = vpop.f32.mrb[0].mxu0
      %v5141 = vadd.f32 %v1235, %v5140
      %v5142 = vpop.f32.mrb[0].mxu0
      %5143 = vmatprep.mubr.bf16.mxu0 0
      %5144 = vmatmul.mubr.bf16.gmra.mrb[0].mxu0 %v4881
      %v5145 = vpop.f32.mrb[0].mxu0
      %v5146 = vadd.f32 %v1240, %v5145
      %v5147 = vpop.f32.mrb[0].mxu0
      %v5148 = vpop.f32.mrb[0].mxu0
      %v5149 = vadd.f32 %v1245, %v5148
      %v5150 = vpop.f32.mrb[0].mxu0
      %5151 = vmatprep.mubr.bf16.mxu0 0
      %5152 = vmatmul.mubr.bf16.gmra.mrb[0].mxu0 %v4882
      %v5153 = vpop.f32.mrb[0].mxu0
      %v5154 = vadd.f32 %v1250, %v5153
      %v5155 = vpop.f32.mrb[0].mxu0
      %v5156 = vpop.f32.mrb[0].mxu0
      %v5157 = vadd.f32 %v1255, %v5156
      %v5158 = vpop.f32.mrb[0].mxu0
      %5159 = vmatprep.mubr.bf16.mxu0 0
      %5160 = vmatmul.mubr.bf16.gmra.mrb[0].mxu0 %v4883
      %v5161 = vpop.f32.mrb[0].mxu0
      %v5162 = vadd.f32 %v1260, %v5161
      %v5163 = vpop.f32.mrb[0].mxu0
      %v5164 = vpop.f32.mrb[0].mxu0
      %v5165 = vadd.f32 %v1265, %v5164
      %v5166 = vpop.f32.mrb[0].mxu0
      %5167 = vmatprep.mubr.bf16.mxu0 0
      %5168 = vmatmul.mubr.bf16.gmra.mrb[0].mxu0 %v4884
      %v5169 = vpop.f32.mrb[0].mxu0
      %v5170 = vadd.f32 %v1270, %v5169
      %v5171 = vpop.f32.mrb[0].mxu0
      %v5172 = vpop.f32.mrb[0].mxu0
      %v5173 = vadd.f32 %v1275, %v5172
      %v5174 = vpop.f32.mrb[0].mxu0
      %5175 = vmatprep.mubr.bf16.mxu0 0
      %5176 = vmatmul.mubr.bf16.gmra.mrb[0].mxu0 %v4885
      %v5177 = vpop.f32.mrb[0].mxu0
      %v5178 = vadd.f32 %v1280, %v5177
      %v5179 = vpop.f32.mrb[0].mxu0
      %v5180 = vpop.f32.mrb[0].mxu0
      %v5181 = vadd.f32 %v1285, %v5180
      %v5182 = vpop.f32.mrb[0].mxu0
      %5183 = vmatprep.mubr.bf16.mxu0 0
      %5184 = vmatmul.mubr.bf16.gmra.mrb[0].mxu0 %v4886
      %v5185 = vpop.f32.mrb[0].mxu0
      %v5186 = vadd.f32 %v1290, %v5185
      %v5187 = vpop.f32.mrb[0].mxu0
      %v5188 = vpop.f32.mrb[0].mxu0
      %v5189 = vadd.f32 %v1295, %v5188
      %v5190 = vpop.f32.mrb[0].mxu0
      %5191 = vmatprep.mubr.bf16.mxu0 0
      %5192 = vmatmul.mubr.bf16.gmra.mrb[0].mxu0 %v4887
      %v5193 = vpop.f32.mrb[0].mxu0
      %v5194 = vadd.f32 %v1300, %v5193
      %v5195 = vpop.f32.mrb[0].mxu0
      %v5196 = vpop.f32.mrb[0].mxu0
      %v5197 = vadd.f32 %v1305, %v5196
      %v5198 = vpop.f32.mrb[0].mxu0
      %5199 = vmatprep.mubr.bf16.mxu0 0
      %5200 = vmatmul.mubr.bf16.gmra.mrb[0].mxu0 %v4888
      %v5201 = vpop.f32.mrb[0].mxu0
      %v5202 = vadd.f32 %v1310, %v5201
      %v5203 = vpop.f32.mrb[0].mxu0
      %v5204 = vpop.f32.mrb[0].mxu0
      %v5205 = vadd.f32 %v1315, %v5204
      %v5206 = vpop.f32.mrb[0].mxu0
      %5207 = vmatprep.mubr.bf16.mxu0 0
      %5208 = vmatmul.mubr.bf16.gmra.mrb[0].mxu0 %v4889
      %v5209 = vpop.f32.mrb[0].mxu0
      %v5210 = vadd.f32 %v1320, %v5209
      %v5211 = vpop.f32.mrb[0].mxu0
      %v5212 = vpop.f32.mrb[0].mxu0
      %v5213 = vadd.f32 %v1325, %v5212
      %v5214 = vpop.f32.mrb[0].mxu0
      %5215 = vmatprep.mubr.bf16.mxu0 0
      %5216 = vmatmul.mubr.bf16.gmra.mrb[0].mxu0 %v4890
      %v5217 = vpop.f32.mrb[0].mxu0
      %v5218 = vadd.f32 %v1330, %v5217
      %v5219 = vpop.f32.mrb[0].mxu0
      %v5220 = vpop.f32.mrb[0].mxu0
      %v5221 = vadd.f32 %v1335, %v5220
      %v5222 = vpop.f32.mrb[0].mxu0
      %5223 = vmatprep.mubr.bf16.mxu0 0
      %5224 = vmatmul.mubr.bf16.gmra.mrb[0].mxu0 %v4891
      %v5225 = vpop.f32.mrb[0].mxu0
      %v5226 = vadd.f32 %v1340, %v5225
      %v5227 = vpop.f32.mrb[0].mxu0
      %v5228 = vpop.f32.mrb[0].mxu0
      %v5229 = vadd.f32 %v1345, %v5228
      %v5230 = vpop.f32.mrb[0].mxu0
      %5231 = vmatprep.mubr.bf16.mxu0 0
      %5232 = vmatmul.mubr.bf16.gmra.mrb[0].mxu0 %v4892
      %v5233 = vpop.f32.mrb[0].mxu0
      %v5234 = vadd.f32 %v1350, %v5233
      %v5235 = vpop.f32.mrb[0].mxu0
      %v5236 = vpop.f32.mrb[0].mxu0
      %v5237 = vadd.f32 %v1355, %v5236
      %v5238 = vpop.f32.mrb[0].mxu0
      %5239 = vmatprep.mubr.bf16.mxu0 0
      %5240 = vmatmul.mubr.bf16.gmra.mrb[0].mxu0 %v4893
      %v5241 = vpop.f32.mrb[0].mxu0
      %v5242 = vadd.f32 %v1360, %v5241
      %v5243 = vpop.f32.mrb[0].mxu0
      %v5244 = vpop.f32.mrb[0].mxu0
      %v5245 = vadd.f32 %v1365, %v5244
      %v5246 = vpop.f32.mrb[0].mxu0
      %5247 = vmatprep.mubr.bf16.mxu0 0
      %5248 = vmatmul.mubr.bf16.gmra.mrb[0].mxu0 %v4894
      %v5249 = vpop.f32.mrb[0].mxu0
      %v5250 = vadd.f32 %v1370, %v5249
      %v5251 = vpop.f32.mrb[0].mxu0
      %v5252 = vpop.f32.mrb[0].mxu0
      %v5253 = vadd.f32 %v1375, %v5252
      %v5254 = vpop.f32.mrb[0].mxu0
      %5255 = vmatprep.mubr.bf16.mxu0 0
      %5256 = vmatmul.mubr.bf16.gmra.mrb[0].mxu0 %v4895
      %v5257 = vpop.f32.mrb[0].mxu0
      %v5258 = vadd.f32 %v1380, %v5257
      %v5259 = vpop.f32.mrb[0].mxu0
      %v5260 = vpop.f32.mrb[0].mxu0
      %v5261 = vadd.f32 %v1385, %v5260
      %v5262 = vpop.f32.mrb[0].mxu0
      %5263 = vmatprep.mubr.bf16.mxu0 0
      %5264 = vmatmul.mubr.bf16.gmra.mrb[0].mxu0 %v4896
      %v5265 = vpop.f32.mrb[0].mxu0
      %v5266 = vadd.f32 %v1390, %v5265
      %v5267 = vpop.f32.mrb[0].mxu0
      %v5268 = vpop.f32.mrb[0].mxu0
      %v5269 = vadd.f32 %v1395, %v5268
      %v5270 = vpop.f32.mrb[0].mxu0
      %5271 = vmatprep.mubr.bf16.mxu0 0
      %5272 = vmatmul.mubr.bf16.gmra.mrb[0].mxu0 %v4897
      %v5273 = vpop.f32.mrb[0].mxu0
      %v5274 = vadd.f32 %v1400, %v5273
      %v5275 = vpop.f32.mrb[0].mxu0
      %v5276 = vpop.f32.mrb[0].mxu0
      %v5277 = vadd.f32 %v1405, %v5276
      %v5278 = vpop.f32.mrb[0].mxu0
      %5279 = vmatprep.mubr.bf16.mxu0 0
      %5280 = vmatmul.mubr.bf16.gmra.mrb[0].mxu0 %v4898
      %v5281 = vpop.f32.mrb[0].mxu0
      %v5282 = vadd.f32 %v1410, %v5281
      %v5283 = vpop.f32.mrb[0].mxu0
      %v5284 = vpop.f32.mrb[0].mxu0
      %v5285 = vadd.f32 %v1415, %v5284
      %v5286 = vpop.f32.mrb[0].mxu0
      %5287 = vmatprep.mubr.bf16.mxu0 0
      %5288 = vmatmul.mubr.bf16.gmra.mrb[0].mxu0 %v4899
      %v5289 = vpop.f32.mrb[0].mxu0
      %v5290 = vadd.f32 %v1420, %v5289
      %v5291 = vpop.f32.mrb[0].mxu0
      %v5292 = vpop.f32.mrb[0].mxu0
      %v5293 = vadd.f32 %v1425, %v5292
      %v5294 = vpop.f32.mrb[0].mxu0
      %5295 = vmatprep.mubr.bf16.mxu0 0
      %5296 = vmatmul.mubr.bf16.gmra.mrb[0].mxu0 %v4900
      %v5297 = vpop.f32.mrb[0].mxu0
      %v5298 = vadd.f32 %v1430, %v5297
      %v5299 = vpop.f32.mrb[0].mxu0
      %v5300 = vpop.f32.mrb[0].mxu0
      %v5301 = vadd.f32 %v1435, %v5300
      %v5302 = vpop.f32.mrb[0].mxu0
      %5303 = vmatprep.mubr.bf16.mxu0 0
      %5304 = vmatmul.mubr.bf16.gmra.mrb[0].mxu0 %v4901
      %v5305 = vpop.f32.mrb[0].mxu0
      %v5306 = vadd.f32 %v1440, %v5305
      %v5307 = vpop.f32.mrb[0].mxu0
      %v5308 = vpop.f32.mrb[0].mxu0
      %v5309 = vadd.f32 %v1445, %v5308
      %v5310 = vpop.f32.mrb[0].mxu0
      %5311 = vmatprep.mubr.bf16.mxu0 0
      %5312 = vmatmul.mubr.bf16.gmra.mrb[0].mxu0 %v4902
      %v5313 = vpop.f32.mrb[0].mxu0
      %v5314 = vadd.f32 %v1450, %v5313
      %v5315 = vpop.f32.mrb[0].mxu0
      %v5316 = vpop.f32.mrb[0].mxu0
      %v5317 = vadd.f32 %v1455, %v5316
      %v5318 = vpop.f32.mrb[0].mxu0
      %5319 = vdwg.mxu0
      %v5320 = vld [vmem:[%s7] sm:$0x1]
      %v5322 = vlaneseq
      %v5323 = vshrl.u32 %v5322, 7
      %v5324 = vsub.s32 0, %v5323
      %v5325 = vrot.slane %v5320, %v5324
      %v5327 = vadd.f32 %v5066, %v5325
      %v5328 = vadd.f32 %v5069, %v5325
      %v5329 = vadd.f32 %v5074, %v5325
      %v5330 = vadd.f32 %v5077, %v5325
      %v5331 = vadd.f32 %v5082, %v5325
      %v5332 = vadd.f32 %v5085, %v5325
      %v5333 = vadd.f32 %v5090, %v5325
      %v5334 = vadd.f32 %v5093, %v5325
      %v5335 = vadd.f32 %v5098, %v5325
      %v5336 = vadd.f32 %v5101, %v5325
      %v5337 = vadd.f32 %v5106, %v5325
      %v5338 = vadd.f32 %v5109, %v5325
      %v5339 = vadd.f32 %v5114, %v5325
      %v5340 = vadd.f32 %v5117, %v5325
      %v5341 = vadd.f32 %v5122, %v5325
      %v5342 = vadd.f32 %v5125, %v5325
      %v5343 = vadd.f32 %v5130, %v5325
      %v5344 = vadd.f32 %v5133, %v5325
      %v5345 = vadd.f32 %v5138, %v5325
      %v5346 = vadd.f32 %v5141, %v5325
      %v5347 = vadd.f32 %v5146, %v5325
      %v5348 = vadd.f32 %v5149, %v5325
      %v5349 = vadd.f32 %v5154, %v5325
      %v5350 = vadd.f32 %v5157, %v5325
      %v5351 = vadd.f32 %v5162, %v5325
      %v5352 = vadd.f32 %v5165, %v5325
      %v5353 = vadd.f32 %v5170, %v5325
      %v5354 = vadd.f32 %v5173, %v5325
      %v5355 = vadd.f32 %v5178, %v5325
      %v5356 = vadd.f32 %v5181, %v5325
      %v5357 = vadd.f32 %v5186, %v5325
      %v5358 = vadd.f32 %v5189, %v5325
      %v5359 = vadd.f32 %v5194, %v5325
      %v5360 = vadd.f32 %v5197, %v5325
      %v5361 = vadd.f32 %v5202, %v5325
      %v5362 = vadd.f32 %v5205, %v5325
      %v5363 = vadd.f32 %v5210, %v5325
      %v5364 = vadd.f32 %v5213, %v5325
      %v5365 = vadd.f32 %v5218, %v5325
      %v5366 = vadd.f32 %v5221, %v5325
      %v5367 = vadd.f32 %v5226, %v5325
      %v5368 = vadd.f32 %v5229, %v5325
      %v5369 = vadd.f32 %v5234, %v5325
      %v5370 = vadd.f32 %v5237, %v5325
      %v5371 = vadd.f32 %v5242, %v5325
      %v5372 = vadd.f32 %v5245, %v5325
      %v5373 = vadd.f32 %v5250, %v5325
      %v5374 = vadd.f32 %v5253, %v5325
      %v5375 = vadd.f32 %v5258, %v5325
      %v5376 = vadd.f32 %v5261, %v5325
      %v5377 = vadd.f32 %v5266, %v5325
      %v5378 = vadd.f32 %v5269, %v5325
      %v5379 = vadd.f32 %v5274, %v5325
      %v5380 = vadd.f32 %v5277, %v5325
      %v5381 = vadd.f32 %v5282, %v5325
      %v5382 = vadd.f32 %v5285, %v5325
      %v5383 = vadd.f32 %v5290, %v5325
      %v5384 = vadd.f32 %v5293, %v5325
      %v5385 = vadd.f32 %v5298, %v5325
      %v5386 = vadd.f32 %v5301, %v5325
      %v5387 = vadd.f32 %v5306, %v5325
      %v5388 = vadd.f32 %v5309, %v5325
      %v5389 = vadd.f32 %v5314, %v5325
      %v5390 = vadd.f32 %v5317, %v5325
      %v5391 = vmax.f32 %v5327, 0.0
      %v5392 = vmax.f32 %v5328, 0.0
      %v5393 = vmax.f32 %v5329, 0.0
      %v5394 = vmax.f32 %v5330, 0.0
      %v5395 = vmax.f32 %v5331, 0.0
      %v5396 = vmax.f32 %v5332, 0.0
      %v5397 = vmax.f32 %v5333, 0.0
      %v5398 = vmax.f32 %v5334, 0.0
      %v5399 = vmax.f32 %v5335, 0.0
      %v5400 = vmax.f32 %v5336, 0.0
      %v5401 = vmax.f32 %v5337, 0.0
      %v5402 = vmax.f32 %v5338, 0.0
      %v5403 = vmax.f32 %v5339, 0.0
      %v5404 = vmax.f32 %v5340, 0.0
      %v5405 = vmax.f32 %v5341, 0.0
      %v5406 = vmax.f32 %v5342, 0.0
      %v5407 = vmax.f32 %v5343, 0.0
      %v5408 = vmax.f32 %v5344, 0.0
      %v5409 = vmax.f32 %v5345, 0.0
      %v5410 = vmax.f32 %v5346, 0.0
      %v5411 = vmax.f32 %v5347, 0.0
      %v5412 = vmax.f32 %v5348, 0.0
      %v5413 = vmax.f32 %v5349, 0.0
      %v5414 = vmax.f32 %v5350, 0.0
      %v5415 = vmax.f32 %v5351, 0.0
      %v5416 = vmax.f32 %v5352, 0.0
      %v5417 = vmax.f32 %v5353, 0.0
      %v5418 = vmax.f32 %v5354, 0.0
      %v5419 = vmax.f32 %v5355, 0.0
      %v5420 = vmax.f32 %v5356, 0.0
      %v5421 = vmax.f32 %v5357, 0.0
      %v5422 = vmax.f32 %v5358, 0.0
      %v5423 = vmax.f32 %v5359, 0.0
      %v5424 = vmax.f32 %v5360, 0.0
      %v5425 = vmax.f32 %v5361, 0.0
      %v5426 = vmax.f32 %v5362, 0.0
      %v5427 = vmax.f32 %v5363, 0.0
      %v5428 = vmax.f32 %v5364, 0.0
      %v5429 = vmax.f32 %v5365, 0.0
      %v5430 = vmax.f32 %v5366, 0.0
      %v5431 = vmax.f32 %v5367, 0.0
      %v5432 = vmax.f32 %v5368, 0.0
      %v5433 = vmax.f32 %v5369, 0.0
      %v5434 = vmax.f32 %v5370, 0.0
      %v5435 = vmax.f32 %v5371, 0.0
      %v5436 = vmax.f32 %v5372, 0.0
      %v5437 = vmax.f32 %v5373, 0.0
      %v5438 = vmax.f32 %v5374, 0.0
      %v5439 = vmax.f32 %v5375, 0.0
      %v5440 = vmax.f32 %v5376, 0.0
      %v5441 = vmax.f32 %v5377, 0.0
      %v5442 = vmax.f32 %v5378, 0.0
      %v5443 = vmax.f32 %v5379, 0.0
      %v5444 = vmax.f32 %v5380, 0.0
      %v5445 = vmax.f32 %v5381, 0.0
      %v5446 = vmax.f32 %v5382, 0.0
      %v5447 = vmax.f32 %v5383, 0.0
      %v5448 = vmax.f32 %v5384, 0.0
      %v5449 = vmax.f32 %v5385, 0.0
      %v5450 = vmax.f32 %v5386, 0.0
      %v5451 = vmax.f32 %v5387, 0.0
      %v5452 = vmax.f32 %v5388, 0.0
      %v5453 = vmax.f32 %v5389, 0.0
      %v5454 = vmax.f32 %v5390, 0.0
      %v5455 = vpack.c.bf16 %v5392, %v5391
      %v5456 = vpack.c.bf16 %v5394, %v5393
      %v5457 = vpack.c.bf16 %v5396, %v5395
      %v5458 = vpack.c.bf16 %v5398, %v5397
      %v5459 = vpack.c.bf16 %v5400, %v5399
      %v5460 = vpack.c.bf16 %v5402, %v5401
      %v5461 = vpack.c.bf16 %v5404, %v5403
      %v5462 = vpack.c.bf16 %v5406, %v5405
      %v5463 = vpack.c.bf16 %v5408, %v5407
      %v5464 = vpack.c.bf16 %v5410, %v5409
      %v5465 = vpack.c.bf16 %v5412, %v5411
      %v5466 = vpack.c.bf16 %v5414, %v5413
      %v5467 = vpack.c.bf16 %v5416, %v5415
      %v5468 = vpack.c.bf16 %v5418, %v5417
      %v5469 = vpack.c.bf16 %v5420, %v5419
      %v5470 = vpack.c.bf16 %v5422, %v5421
      %v5471 = vpack.c.bf16 %v5424, %v5423
      %v5472 = vpack.c.bf16 %v5426, %v5425
      %v5473 = vpack.c.bf16 %v5428, %v5427
      %v5474 = vpack.c.bf16 %v5430, %v5429
      %v5475 = vpack.c.bf16 %v5432, %v5431
      %v5476 = vpack.c.bf16 %v5434, %v5433
      %v5477 = vpack.c.bf16 %v5436, %v5435
      %v5478 = vpack.c.bf16 %v5438, %v5437
      %v5479 = vpack.c.bf16 %v5440, %v5439
      %v5480 = vpack.c.bf16 %v5442, %v5441
      %v5481 = vpack.c.bf16 %v5444, %v5443
      %v5482 = vpack.c.bf16 %v5446, %v5445
      %v5483 = vpack.c.bf16 %v5448, %v5447
      %v5484 = vpack.c.bf16 %v5450, %v5449
      %v5485 = vpack.c.bf16 %v5452, %v5451
      %v5486 = vpack.c.bf16 %v5454, %v5453
      %v5487 = vld [vmem:[%s8] sm:$0xf]
      %v5488 = vld [vmem:[%s8 + $0x4] sm:$0xf]
      %v5489 = vld [vmem:[%s8 + $0x8] sm:$0xf]
      %v5490 = vld [vmem:[%s8 + $0xc] sm:$0xf]
      %v5491 = vld [vmem:[%s8 + $0x10] sm:$0xf]
      %v5492 = vld [vmem:[%s8 + $0x14] sm:$0xf]
      %v5493 = vld [vmem:[%s8 + $0x18] sm:$0xf]
      %v5494 = vld [vmem:[%s8 + $0x1c] sm:$0xf]
      %v5495 = vld [vmem:[%s9] sm:$0x1]
      %v5497 = vlaneseq
      %v5498 = vshrl.u32 %v5497, 7
      %v5499 = vsub.s32 0, %v5498
      %v5500 = vrot.slane %v5495, %v5499
      %v5510 = vunpack.c.l.b16 %v5487
      %v5511 = vunpack.c.l.b16 %v5488
      %v5512 = vunpack.c.l.b16 %v5489
      %v5513 = vunpack.c.l.b16 %v5490
      %v5514 = vunpack.c.l.b16 %v5491
      %v5515 = vunpack.c.l.b16 %v5492
      %v5516 = vunpack.c.l.b16 %v5493
      %v5517 = vunpack.c.l.b16 %v5494
      %v5518 = vpack.c.b16 %v5511, %v5510
      %v5519 = vpack.c.b16 %v5513, %v5512
      %v5520 = vpack.c.b16 %v5515, %v5514
      %v5521 = vpack.c.b16 %v5517, %v5516
      %vm5526 = vcmask 523264
      %v5528 = vsel %vm5526, %v5455, 0
      %v5531 = vsel %vm5526, %v5456, 0
      %v5534 = vsel %vm5526, %v5457, 0
      %v5537 = vsel %vm5526, %v5458, 0
      %v5540 = vsel %vm5526, %v5459, 0
      %v5543 = vsel %vm5526, %v5460, 0
      %v5546 = vsel %vm5526, %v5461, 0
      %v5549 = vsel %vm5526, %v5462, 0
      %v5552 = vsel %vm5526, %v5463, 0
      %v5555 = vsel %vm5526, %v5464, 0
      %v5558 = vsel %vm5526, %v5465, 0
      %v5561 = vsel %vm5526, %v5466, 0
      %v5564 = vsel %vm5526, %v5467, 0
      %v5567 = vsel %vm5526, %v5468, 0
      %v5570 = vsel %vm5526, %v5469, 0
      %v5573 = vsel %vm5526, %v5470, 0
      %v5576 = vsel %vm5526, %v5471, 0
      %v5579 = vsel %vm5526, %v5472, 0
      %v5582 = vsel %vm5526, %v5473, 0
      %v5585 = vsel %vm5526, %v5474, 0
      %v5588 = vsel %vm5526, %v5475, 0
      %v5591 = vsel %vm5526, %v5476, 0
      %v5594 = vsel %vm5526, %v5477, 0
      %v5597 = vsel %vm5526, %v5478, 0
      %v5600 = vsel %vm5526, %v5479, 0
      %v5603 = vsel %vm5526, %v5480, 0
      %v5606 = vsel %vm5526, %v5481, 0
      %v5609 = vsel %vm5526, %v5482, 0
      %v5612 = vsel %vm5526, %v5483, 0
      %v5615 = vsel %vm5526, %v5484, 0
      %v5618 = vsel %vm5526, %v5485, 0
      %v5621 = vsel %vm5526, %v5486, 0
      %5623 = vmatprep.subr.bf16.mxu0 0
      %5624 = vmatpush1.bf16.msra.mxu0 %v5518
      %5625 = vmatprep.subr.bf16.mxu0 0
      %5626 = vmatpush1.bf16.msra.mxu0 %v5519
      %5627 = vmatprep.subr.bf16.mxu0 0
      %5628 = vmatpush1.bf16.msra.mxu0 %v5520
      %5629 = vmatprep.subr.bf16.mxu0 0
      %5630 = vmatpush1.bf16.msra.mxu0 %v5521
      %5631 = vmatprep.subr.bf16.mxu0 0
      %5632 = vmatpush1.bf16.msra.mxu0 0
      %5633 = vmatprep.subr.bf16.mxu0 0
      %5634 = vmatpush1.bf16.msra.mxu0 0
      %5635 = vmatprep.subr.bf16.mxu0 0
      %5636 = vmatpush1.bf16.msra.mxu0 0
      %5637 = vmatprep.subr.bf16.mxu0 0
      %5638 = vmatpush1.bf16.msra.mxu0 0
      %5639 = vmatprep.subr.bf16.mxu0 0
      %5640 = vmatpush1.bf16.msra.mxu0 0
      %5641 = vmatprep.subr.bf16.mxu0 0
      %5642 = vmatpush1.bf16.msra.mxu0 0
      %5643 = vmatprep.subr.bf16.mxu0 0
      %5644 = vmatpush1.bf16.msra.mxu0 0
      %5645 = vmatprep.subr.bf16.mxu0 0
      %5646 = vmatpush1.bf16.msra.mxu0 0
      %5647 = vmatprep.subr.bf16.mxu0 0
      %5648 = vmatpush1.bf16.msra.mxu0 0
      %5649 = vmatprep.subr.bf16.mxu0 0
      %5650 = vmatpush1.bf16.msra.mxu0 0
      %5651 = vmatprep.subr.bf16.mxu0 0
      %5652 = vmatpush1.bf16.msra.mxu0 0
      %5653 = vmatprep.subr.bf16.mxu0 0
      %5654 = vmatpush1.bf16.msra.mxu0 0
      %5655 = vmatprep.mubr.bf16.mxu0 0
      %5656 = vmatmul.mubr.bf16.gmra.mrb[0].mxu0 %v5528
      %v5657 = vpop.f32.mrb[0].mxu0
      %v5658 = vadd.f32 %v5500, %v5657
      %v5659 = vpop.f32.mrb[0].mxu0
      %v5660 = vpop.f32.mrb[0].mxu0
      %v5661 = vadd.f32 %v5500, %v5660
      %v5662 = vpop.f32.mrb[0].mxu0
      %5663 = vmatprep.mubr.bf16.mxu0 0
      %5664 = vmatmul.mubr.bf16.gmra.mrb[0].mxu0 %v5531
      %v5665 = vpop.f32.mrb[0].mxu0
      %v5666 = vadd.f32 %v5500, %v5665
      %v5667 = vpop.f32.mrb[0].mxu0
      %v5668 = vpop.f32.mrb[0].mxu0
      %v5669 = vadd.f32 %v5500, %v5668
      %v5670 = vpop.f32.mrb[0].mxu0
      %5671 = vmatprep.mubr.bf16.mxu0 0
      %5672 = vmatmul.mubr.bf16.gmra.mrb[0].mxu0 %v5534
      %v5673 = vpop.f32.mrb[0].mxu0
      %v5674 = vadd.f32 %v5500, %v5673
      %v5675 = vpop.f32.mrb[0].mxu0
      %v5676 = vpop.f32.mrb[0].mxu0
      %v5677 = vadd.f32 %v5500, %v5676
      %v5678 = vpop.f32.mrb[0].mxu0
      %5679 = vmatprep.mubr.bf16.mxu0 0
      %5680 = vmatmul.mubr.bf16.gmra.mrb[0].mxu0 %v5537
      %v5681 = vpop.f32.mrb[0].mxu0
      %v5682 = vadd.f32 %v5500, %v5681
      %v5683 = vpop.f32.mrb[0].mxu0
      %v5684 = vpop.f32.mrb[0].mxu0
      %v5685 = vadd.f32 %v5500, %v5684
      %v5686 = vpop.f32.mrb[0].mxu0
      %5687 = vmatprep.mubr.bf16.mxu0 0
      %5688 = vmatmul.mubr.bf16.gmra.mrb[0].mxu0 %v5540
      %v5689 = vpop.f32.mrb[0].mxu0
      %v5690 = vadd.f32 %v5500, %v5689
      %v5691 = vpop.f32.mrb[0].mxu0
      %v5692 = vpop.f32.mrb[0].mxu0
      %v5693 = vadd.f32 %v5500, %v5692
      %v5694 = vpop.f32.mrb[0].mxu0
      %5695 = vmatprep.mubr.bf16.mxu0 0
      %5696 = vmatmul.mubr.bf16.gmra.mrb[0].mxu0 %v5543
      %v5697 = vpop.f32.mrb[0].mxu0
      %v5698 = vadd.f32 %v5500, %v5697
      %v5699 = vpop.f32.mrb[0].mxu0
      %v5700 = vpop.f32.mrb[0].mxu0
      %v5701 = vadd.f32 %v5500, %v5700
      %v5702 = vpop.f32.mrb[0].mxu0
      %5703 = vmatprep.mubr.bf16.mxu0 0
      %5704 = vmatmul.mubr.bf16.gmra.mrb[0].mxu0 %v5546
      %v5705 = vpop.f32.mrb[0].mxu0
      %v5706 = vadd.f32 %v5500, %v5705
      %v5707 = vpop.f32.mrb[0].mxu0
      %v5708 = vpop.f32.mrb[0].mxu0
      %v5709 = vadd.f32 %v5500, %v5708
      %v5710 = vpop.f32.mrb[0].mxu0
      %5711 = vmatprep.mubr.bf16.mxu0 0
      %5712 = vmatmul.mubr.bf16.gmra.mrb[0].mxu0 %v5549
      %v5713 = vpop.f32.mrb[0].mxu0
      %v5714 = vadd.f32 %v5500, %v5713
      %v5715 = vpop.f32.mrb[0].mxu0
      %v5716 = vpop.f32.mrb[0].mxu0
      %v5717 = vadd.f32 %v5500, %v5716
      %v5718 = vpop.f32.mrb[0].mxu0
      %5719 = vmatprep.mubr.bf16.mxu0 0
      %5720 = vmatmul.mubr.bf16.gmra.mrb[0].mxu0 %v5552
      %v5721 = vpop.f32.mrb[0].mxu0
      %v5722 = vadd.f32 %v5500, %v5721
      %v5723 = vpop.f32.mrb[0].mxu0
      %v5724 = vpop.f32.mrb[0].mxu0
      %v5725 = vadd.f32 %v5500, %v5724
      %v5726 = vpop.f32.mrb[0].mxu0
      %5727 = vmatprep.mubr.bf16.mxu0 0
      %5728 = vmatmul.mubr.bf16.gmra.mrb[0].mxu0 %v5555
      %v5729 = vpop.f32.mrb[0].mxu0
      %v5730 = vadd.f32 %v5500, %v5729
      %v5731 = vpop.f32.mrb[0].mxu0
      %v5732 = vpop.f32.mrb[0].mxu0
      %v5733 = vadd.f32 %v5500, %v5732
      %v5734 = vpop.f32.mrb[0].mxu0
      %5735 = vmatprep.mubr.bf16.mxu0 0
      %5736 = vmatmul.mubr.bf16.gmra.mrb[0].mxu0 %v5558
      %v5737 = vpop.f32.mrb[0].mxu0
      %v5738 = vadd.f32 %v5500, %v5737
      %v5739 = vpop.f32.mrb[0].mxu0
      %v5740 = vpop.f32.mrb[0].mxu0
      %v5741 = vadd.f32 %v5500, %v5740
      %v5742 = vpop.f32.mrb[0].mxu0
      %5743 = vmatprep.mubr.bf16.mxu0 0
      %5744 = vmatmul.mubr.bf16.gmra.mrb[0].mxu0 %v5561
      %v5745 = vpop.f32.mrb[0].mxu0
      %v5746 = vadd.f32 %v5500, %v5745
      %v5747 = vpop.f32.mrb[0].mxu0
      %v5748 = vpop.f32.mrb[0].mxu0
      %v5749 = vadd.f32 %v5500, %v5748
      %v5750 = vpop.f32.mrb[0].mxu0
      %5751 = vmatprep.mubr.bf16.mxu0 0
      %5752 = vmatmul.mubr.bf16.gmra.mrb[0].mxu0 %v5564
      %v5753 = vpop.f32.mrb[0].mxu0
      %v5754 = vadd.f32 %v5500, %v5753
      %v5755 = vpop.f32.mrb[0].mxu0
      %v5756 = vpop.f32.mrb[0].mxu0
      %v5757 = vadd.f32 %v5500, %v5756
      %v5758 = vpop.f32.mrb[0].mxu0
      %5759 = vmatprep.mubr.bf16.mxu0 0
      %5760 = vmatmul.mubr.bf16.gmra.mrb[0].mxu0 %v5567
      %v5761 = vpop.f32.mrb[0].mxu0
      %v5762 = vadd.f32 %v5500, %v5761
      %v5763 = vpop.f32.mrb[0].mxu0
      %v5764 = vpop.f32.mrb[0].mxu0
      %v5765 = vadd.f32 %v5500, %v5764
      %v5766 = vpop.f32.mrb[0].mxu0
      %5767 = vmatprep.mubr.bf16.mxu0 0
      %5768 = vmatmul.mubr.bf16.gmra.mrb[0].mxu0 %v5570
      %v5769 = vpop.f32.mrb[0].mxu0
      %v5770 = vadd.f32 %v5500, %v5769
      %v5771 = vpop.f32.mrb[0].mxu0
      %v5772 = vpop.f32.mrb[0].mxu0
      %v5773 = vadd.f32 %v5500, %v5772
      %v5774 = vpop.f32.mrb[0].mxu0
      %5775 = vmatprep.mubr.bf16.mxu0 0
      %5776 = vmatmul.mubr.bf16.gmra.mrb[0].mxu0 %v5573
      %v5777 = vpop.f32.mrb[0].mxu0
      %v5778 = vadd.f32 %v5500, %v5777
      %v5779 = vpop.f32.mrb[0].mxu0
      %v5780 = vpop.f32.mrb[0].mxu0
      %v5781 = vadd.f32 %v5500, %v5780
      %v5782 = vpop.f32.mrb[0].mxu0
      %5783 = vmatprep.mubr.bf16.mxu0 0
      %5784 = vmatmul.mubr.bf16.gmra.mrb[0].mxu0 %v5576
      %v5785 = vpop.f32.mrb[0].mxu0
      %v5786 = vadd.f32 %v5500, %v5785
      %v5787 = vpop.f32.mrb[0].mxu0
      %v5788 = vpop.f32.mrb[0].mxu0
      %v5789 = vadd.f32 %v5500, %v5788
      %v5790 = vpop.f32.mrb[0].mxu0
      %5791 = vmatprep.mubr.bf16.mxu0 0
      %5792 = vmatmul.mubr.bf16.gmra.mrb[0].mxu0 %v5579
      %v5793 = vpop.f32.mrb[0].mxu0
      %v5794 = vadd.f32 %v5500, %v5793
      %v5795 = vpop.f32.mrb[0].mxu0
      %v5796 = vpop.f32.mrb[0].mxu0
      %v5797 = vadd.f32 %v5500, %v5796
      %v5798 = vpop.f32.mrb[0].mxu0
      %5799 = vmatprep.mubr.bf16.mxu0 0
      %5800 = vmatmul.mubr.bf16.gmra.mrb[0].mxu0 %v5582
      %v5801 = vpop.f32.mrb[0].mxu0
      %v5802 = vadd.f32 %v5500, %v5801
      %v5803 = vpop.f32.mrb[0].mxu0
      %v5804 = vpop.f32.mrb[0].mxu0
      %v5805 = vadd.f32 %v5500, %v5804
      %v5806 = vpop.f32.mrb[0].mxu0
      %5807 = vmatprep.mubr.bf16.mxu0 0
      %5808 = vmatmul.mubr.bf16.gmra.mrb[0].mxu0 %v5585
      %v5809 = vpop.f32.mrb[0].mxu0
      %v5810 = vadd.f32 %v5500, %v5809
      %v5811 = vpop.f32.mrb[0].mxu0
      %v5812 = vpop.f32.mrb[0].mxu0
      %v5813 = vadd.f32 %v5500, %v5812
      %v5814 = vpop.f32.mrb[0].mxu0
      %5815 = vmatprep.mubr.bf16.mxu0 0
      %5816 = vmatmul.mubr.bf16.gmra.mrb[0].mxu0 %v5588
      %v5817 = vpop.f32.mrb[0].mxu0
      %v5818 = vadd.f32 %v5500, %v5817
      %v5819 = vpop.f32.mrb[0].mxu0
      %v5820 = vpop.f32.mrb[0].mxu0
      %v5821 = vadd.f32 %v5500, %v5820
      %v5822 = vpop.f32.mrb[0].mxu0
      %5823 = vmatprep.mubr.bf16.mxu0 0
      %5824 = vmatmul.mubr.bf16.gmra.mrb[0].mxu0 %v5591
      %v5825 = vpop.f32.mrb[0].mxu0
      %v5826 = vadd.f32 %v5500, %v5825
      %v5827 = vpop.f32.mrb[0].mxu0
      %v5828 = vpop.f32.mrb[0].mxu0
      %v5829 = vadd.f32 %v5500, %v5828
      %v5830 = vpop.f32.mrb[0].mxu0
      %5831 = vmatprep.mubr.bf16.mxu0 0
      %5832 = vmatmul.mubr.bf16.gmra.mrb[0].mxu0 %v5594
      %v5833 = vpop.f32.mrb[0].mxu0
      %v5834 = vadd.f32 %v5500, %v5833
      %v5835 = vpop.f32.mrb[0].mxu0
      %v5836 = vpop.f32.mrb[0].mxu0
      %v5837 = vadd.f32 %v5500, %v5836
      %v5838 = vpop.f32.mrb[0].mxu0
      %5839 = vmatprep.mubr.bf16.mxu0 0
      %5840 = vmatmul.mubr.bf16.gmra.mrb[0].mxu0 %v5597
      %v5841 = vpop.f32.mrb[0].mxu0
      %v5842 = vadd.f32 %v5500, %v5841
      %v5843 = vpop.f32.mrb[0].mxu0
      %v5844 = vpop.f32.mrb[0].mxu0
      %v5845 = vadd.f32 %v5500, %v5844
      %v5846 = vpop.f32.mrb[0].mxu0
      %5847 = vmatprep.mubr.bf16.mxu0 0
      %5848 = vmatmul.mubr.bf16.gmra.mrb[0].mxu0 %v5600
      %v5849 = vpop.f32.mrb[0].mxu0
      %v5850 = vadd.f32 %v5500, %v5849
      %v5851 = vpop.f32.mrb[0].mxu0
      %v5852 = vpop.f32.mrb[0].mxu0
      %v5853 = vadd.f32 %v5500, %v5852
      %v5854 = vpop.f32.mrb[0].mxu0
      %5855 = vmatprep.mubr.bf16.mxu0 0
      %5856 = vmatmul.mubr.bf16.gmra.mrb[0].mxu0 %v5603
      %v5857 = vpop.f32.mrb[0].mxu0
      %v5858 = vadd.f32 %v5500, %v5857
      %v5859 = vpop.f32.mrb[0].mxu0
      %v5860 = vpop.f32.mrb[0].mxu0
      %v5861 = vadd.f32 %v5500, %v5860
      %v5862 = vpop.f32.mrb[0].mxu0
      %5863 = vmatprep.mubr.bf16.mxu0 0
      %5864 = vmatmul.mubr.bf16.gmra.mrb[0].mxu0 %v5606
      %v5865 = vpop.f32.mrb[0].mxu0
      %v5866 = vadd.f32 %v5500, %v5865
      %v5867 = vpop.f32.mrb[0].mxu0
      %v5868 = vpop.f32.mrb[0].mxu0
      %v5869 = vadd.f32 %v5500, %v5868
      %v5870 = vpop.f32.mrb[0].mxu0
      %5871 = vmatprep.mubr.bf16.mxu0 0
      %5872 = vmatmul.mubr.bf16.gmra.mrb[0].mxu0 %v5609
      %v5873 = vpop.f32.mrb[0].mxu0
      %v5874 = vadd.f32 %v5500, %v5873
      %v5875 = vpop.f32.mrb[0].mxu0
      %v5876 = vpop.f32.mrb[0].mxu0
      %v5877 = vadd.f32 %v5500, %v5876
      %v5878 = vpop.f32.mrb[0].mxu0
      %5879 = vmatprep.mubr.bf16.mxu0 0
      %5880 = vmatmul.mubr.bf16.gmra.mrb[0].mxu0 %v5612
      %v5881 = vpop.f32.mrb[0].mxu0
      %v5882 = vadd.f32 %v5500, %v5881
      %v5883 = vpop.f32.mrb[0].mxu0
      %v5884 = vpop.f32.mrb[0].mxu0
      %v5885 = vadd.f32 %v5500, %v5884
      %v5886 = vpop.f32.mrb[0].mxu0
      %5887 = vmatprep.mubr.bf16.mxu0 0
      %5888 = vmatmul.mubr.bf16.gmra.mrb[0].mxu0 %v5615
      %v5889 = vpop.f32.mrb[0].mxu0
      %v5890 = vadd.f32 %v5500, %v5889
      %v5891 = vpop.f32.mrb[0].mxu0
      %v5892 = vpop.f32.mrb[0].mxu0
      %v5893 = vadd.f32 %v5500, %v5892
      %v5894 = vpop.f32.mrb[0].mxu0
      %5895 = vmatprep.mubr.bf16.mxu0 0
      %5896 = vmatmul.mubr.bf16.gmra.mrb[0].mxu0 %v5618
      %v5897 = vpop.f32.mrb[0].mxu0
      %v5898 = vadd.f32 %v5500, %v5897
      %v5899 = vpop.f32.mrb[0].mxu0
      %v5900 = vpop.f32.mrb[0].mxu0
      %v5901 = vadd.f32 %v5500, %v5900
      %v5902 = vpop.f32.mrb[0].mxu0
      %5903 = vmatprep.mubr.bf16.mxu0 0
      %5904 = vmatmul.mubr.bf16.gmra.mrb[0].mxu0 %v5621
      %v5905 = vpop.f32.mrb[0].mxu0
      %v5906 = vadd.f32 %v5500, %v5905
      %v5907 = vpop.f32.mrb[0].mxu0
      %v5908 = vpop.f32.mrb[0].mxu0
      %v5909 = vadd.f32 %v5500, %v5908
      %v5910 = vpop.f32.mrb[0].mxu0
      %5911 = vdwg.mxu0
      %v5912 = vxor.u32 %v5658, 2147483648
      %v5913 = vxor.u32 %v5661, 2147483648
      %v5914 = vxor.u32 %v5666, 2147483648
      %v5915 = vxor.u32 %v5669, 2147483648
      %v5916 = vxor.u32 %v5674, 2147483648
      %v5917 = vxor.u32 %v5677, 2147483648
      %v5918 = vxor.u32 %v5682, 2147483648
      %v5919 = vxor.u32 %v5685, 2147483648
      %v5920 = vxor.u32 %v5690, 2147483648
      %v5921 = vxor.u32 %v5693, 2147483648
      %v5922 = vxor.u32 %v5698, 2147483648
      %v5923 = vxor.u32 %v5701, 2147483648
      %v5924 = vxor.u32 %v5706, 2147483648
      %v5925 = vxor.u32 %v5709, 2147483648
      %v5926 = vxor.u32 %v5714, 2147483648
      %v5927 = vxor.u32 %v5717, 2147483648
      %v5928 = vxor.u32 %v5722, 2147483648
      %v5929 = vxor.u32 %v5725, 2147483648
      %v5930 = vxor.u32 %v5730, 2147483648
      %v5931 = vxor.u32 %v5733, 2147483648
      %v5932 = vxor.u32 %v5738, 2147483648
      %v5933 = vxor.u32 %v5741, 2147483648
      %v5934 = vxor.u32 %v5746, 2147483648
      %v5935 = vxor.u32 %v5749, 2147483648
      %v5936 = vxor.u32 %v5754, 2147483648
      %v5937 = vxor.u32 %v5757, 2147483648
      %v5938 = vxor.u32 %v5762, 2147483648
      %v5939 = vxor.u32 %v5765, 2147483648
      %v5940 = vxor.u32 %v5770, 2147483648
      %v5941 = vxor.u32 %v5773, 2147483648
      %v5942 = vxor.u32 %v5778, 2147483648
      %v5943 = vxor.u32 %v5781, 2147483648
      %v5944 = vxor.u32 %v5786, 2147483648
      %v5945 = vxor.u32 %v5789, 2147483648
      %v5946 = vxor.u32 %v5794, 2147483648
      %v5947 = vxor.u32 %v5797, 2147483648
      %v5948 = vxor.u32 %v5802, 2147483648
      %v5949 = vxor.u32 %v5805, 2147483648
      %v5950 = vxor.u32 %v5810, 2147483648
      %v5951 = vxor.u32 %v5813, 2147483648
      %v5952 = vxor.u32 %v5818, 2147483648
      %v5953 = vxor.u32 %v5821, 2147483648
      %v5954 = vxor.u32 %v5826, 2147483648
      %v5955 = vxor.u32 %v5829, 2147483648
      %v5956 = vxor.u32 %v5834, 2147483648
      %v5957 = vxor.u32 %v5837, 2147483648
      %v5958 = vxor.u32 %v5842, 2147483648
      %v5959 = vxor.u32 %v5845, 2147483648
      %v5960 = vxor.u32 %v5850, 2147483648
      %v5961 = vxor.u32 %v5853, 2147483648
      %v5962 = vxor.u32 %v5858, 2147483648
      %v5963 = vxor.u32 %v5861, 2147483648
      %v5964 = vxor.u32 %v5866, 2147483648
      %v5965 = vxor.u32 %v5869, 2147483648
      %v5966 = vxor.u32 %v5874, 2147483648
      %v5967 = vxor.u32 %v5877, 2147483648
      %v5968 = vxor.u32 %v5882, 2147483648
      %v5969 = vxor.u32 %v5885, 2147483648
      %v5970 = vxor.u32 %v5890, 2147483648
      %v5971 = vxor.u32 %v5893, 2147483648
      %v5972 = vxor.u32 %v5898, 2147483648
      %v5973 = vxor.u32 %v5901, 2147483648
      %v5974 = vxor.u32 %v5906, 2147483648
      %v5975 = vxor.u32 %v5909, 2147483648
      %v5976 = vmul.f32 %v5912, 1.442695
      %v5977 = vpow.pop %v5976
      %v5978 = vmul.f32 %v5913, 1.442695
      %v5979 = vpow.pop %v5978
      %v5980 = vmul.f32 %v5914, 1.442695
      %v5981 = vpow.pop %v5980
      %v5982 = vmul.f32 %v5915, 1.442695
      %v5983 = vpow.pop %v5982
      %v5984 = vmul.f32 %v5916, 1.442695
      %v5985 = vpow.pop %v5984
      %v5986 = vmul.f32 %v5917, 1.442695
      %v5987 = vpow.pop %v5986
      %v5988 = vmul.f32 %v5918, 1.442695
      %v5989 = vpow.pop %v5988
      %v5990 = vmul.f32 %v5919, 1.442695
      %v5991 = vpow.pop %v5990
      %v5992 = vmul.f32 %v5920, 1.442695
      %v5993 = vpow.pop %v5992
      %v5994 = vmul.f32 %v5921, 1.442695
      %v5995 = vpow.pop %v5994
      %v5996 = vmul.f32 %v5922, 1.442695
      %v5997 = vpow.pop %v5996
      %v5998 = vmul.f32 %v5923, 1.442695
      %v5999 = vpow.pop %v5998
      %v6000 = vmul.f32 %v5924, 1.442695
      %v6001 = vpow.pop %v6000
      %v6002 = vmul.f32 %v5925, 1.442695
      %v6003 = vpow.pop %v6002
      %v6004 = vmul.f32 %v5926, 1.442695
      %v6005 = vpow.pop %v6004
      %v6006 = vmul.f32 %v5927, 1.442695
      %v6007 = vpow.pop %v6006
      %v6008 = vmul.f32 %v5928, 1.442695
      %v6009 = vpow.pop %v6008
      %v6010 = vmul.f32 %v5929, 1.442695
      %v6011 = vpow.pop %v6010
      %v6012 = vmul.f32 %v5930, 1.442695
      %v6013 = vpow.pop %v6012
      %v6014 = vmul.f32 %v5931, 1.442695
      %v6015 = vpow.pop %v6014
      %v6016 = vmul.f32 %v5932, 1.442695
      %v6017 = vpow.pop %v6016
      %v6018 = vmul.f32 %v5933, 1.442695
      %v6019 = vpow.pop %v6018
      %v6020 = vmul.f32 %v5934, 1.442695
      %v6021 = vpow.pop %v6020
      %v6022 = vmul.f32 %v5935, 1.442695
      %v6023 = vpow.pop %v6022
      %v6024 = vmul.f32 %v5936, 1.442695
      %v6025 = vpow.pop %v6024
      %v6026 = vmul.f32 %v5937, 1.442695
      %v6027 = vpow.pop %v6026
      %v6028 = vmul.f32 %v5938, 1.442695
      %v6029 = vpow.pop %v6028
      %v6030 = vmul.f32 %v5939, 1.442695
      %v6031 = vpow.pop %v6030
      %v6032 = vmul.f32 %v5940, 1.442695
      %v6033 = vpow.pop %v6032
      %v6034 = vmul.f32 %v5941, 1.442695
      %v6035 = vpow.pop %v6034
      %v6036 = vmul.f32 %v5942, 1.442695
      %v6037 = vpow.pop %v6036
      %v6038 = vmul.f32 %v5943, 1.442695
      %v6039 = vpow.pop %v6038
      %v6040 = vmul.f32 %v5944, 1.442695
      %v6041 = vpow.pop %v6040
      %v6042 = vmul.f32 %v5945, 1.442695
      %v6043 = vpow.pop %v6042
      %v6044 = vmul.f32 %v5946, 1.442695
      %v6045 = vpow.pop %v6044
      %v6046 = vmul.f32 %v5947, 1.442695
      %v6047 = vpow.pop %v6046
      %v6048 = vmul.f32 %v5948, 1.442695
      %v6049 = vpow.pop %v6048
      %v6050 = vmul.f32 %v5949, 1.442695
      %v6051 = vpow.pop %v6050
      %v6052 = vmul.f32 %v5950, 1.442695
      %v6053 = vpow.pop %v6052
      %v6054 = vmul.f32 %v5951, 1.442695
      %v6055 = vpow.pop %v6054
      %v6056 = vmul.f32 %v5952, 1.442695
      %v6057 = vpow.pop %v6056
      %v6058 = vmul.f32 %v5953, 1.442695
      %v6059 = vpow.pop %v6058
      %v6060 = vmul.f32 %v5954, 1.442695
      %v6061 = vpow.pop %v6060
      %v6062 = vmul.f32 %v5955, 1.442695
      %v6063 = vpow.pop %v6062
      %v6064 = vmul.f32 %v5956, 1.442695
      %v6065 = vpow.pop %v6064
      %v6066 = vmul.f32 %v5957, 1.442695
      %v6067 = vpow.pop %v6066
      %v6068 = vmul.f32 %v5958, 1.442695
      %v6069 = vpow.pop %v6068
      %v6070 = vmul.f32 %v5959, 1.442695
      %v6071 = vpow.pop %v6070
      %v6072 = vmul.f32 %v5960, 1.442695
      %v6073 = vpow.pop %v6072
      %v6074 = vmul.f32 %v5961, 1.442695
      %v6075 = vpow.pop %v6074
      %v6076 = vmul.f32 %v5962, 1.442695
      %v6077 = vpow.pop %v6076
      %v6078 = vmul.f32 %v5963, 1.442695
      %v6079 = vpow.pop %v6078
      %v6080 = vmul.f32 %v5964, 1.442695
      %v6081 = vpow.pop %v6080
      %v6082 = vmul.f32 %v5965, 1.442695
      %v6083 = vpow.pop %v6082
      %v6084 = vmul.f32 %v5966, 1.442695
      %v6085 = vpow.pop %v6084
      %v6086 = vmul.f32 %v5967, 1.442695
      %v6087 = vpow.pop %v6086
      %v6088 = vmul.f32 %v5968, 1.442695
      %v6089 = vpow.pop %v6088
      %v6090 = vmul.f32 %v5969, 1.442695
      %v6091 = vpow.pop %v6090
      %v6092 = vmul.f32 %v5970, 1.442695
      %v6093 = vpow.pop %v6092
      %v6094 = vmul.f32 %v5971, 1.442695
      %v6095 = vpow.pop %v6094
      %v6096 = vmul.f32 %v5972, 1.442695
      %v6097 = vpow.pop %v6096
      %v6098 = vmul.f32 %v5973, 1.442695
      %v6099 = vpow.pop %v6098
      %v6100 = vmul.f32 %v5974, 1.442695
      %v6101 = vpow.pop %v6100
      %v6102 = vmul.f32 %v5975, 1.442695
      %v6103 = vpow.pop %v6102
      %v6104 = vadd.f32 %v5977, 1.0
      %v6105 = vadd.f32 %v5979, 1.0
      %v6106 = vadd.f32 %v5981, 1.0
      %v6107 = vadd.f32 %v5983, 1.0
      %v6108 = vadd.f32 %v5985, 1.0
      %v6109 = vadd.f32 %v5987, 1.0
      %v6110 = vadd.f32 %v5989, 1.0
      %v6111 = vadd.f32 %v5991, 1.0
      %v6112 = vadd.f32 %v5993, 1.0
      %v6113 = vadd.f32 %v5995, 1.0
      %v6114 = vadd.f32 %v5997, 1.0
      %v6115 = vadd.f32 %v5999, 1.0
      %v6116 = vadd.f32 %v6001, 1.0
      %v6117 = vadd.f32 %v6003, 1.0
      %v6118 = vadd.f32 %v6005, 1.0
      %v6119 = vadd.f32 %v6007, 1.0
      %v6120 = vadd.f32 %v6009, 1.0
      %v6121 = vadd.f32 %v6011, 1.0
      %v6122 = vadd.f32 %v6013, 1.0
      %v6123 = vadd.f32 %v6015, 1.0
      %v6124 = vadd.f32 %v6017, 1.0
      %v6125 = vadd.f32 %v6019, 1.0
      %v6126 = vadd.f32 %v6021, 1.0
      %v6127 = vadd.f32 %v6023, 1.0
      %v6128 = vadd.f32 %v6025, 1.0
      %v6129 = vadd.f32 %v6027, 1.0
      %v6130 = vadd.f32 %v6029, 1.0
      %v6131 = vadd.f32 %v6031, 1.0
      %v6132 = vadd.f32 %v6033, 1.0
      %v6133 = vadd.f32 %v6035, 1.0
      %v6134 = vadd.f32 %v6037, 1.0
      %v6135 = vadd.f32 %v6039, 1.0
      %v6136 = vadd.f32 %v6041, 1.0
      %v6137 = vadd.f32 %v6043, 1.0
      %v6138 = vadd.f32 %v6045, 1.0
      %v6139 = vadd.f32 %v6047, 1.0
      %v6140 = vadd.f32 %v6049, 1.0
      %v6141 = vadd.f32 %v6051, 1.0
      %v6142 = vadd.f32 %v6053, 1.0
      %v6143 = vadd.f32 %v6055, 1.0
      %v6144 = vadd.f32 %v6057, 1.0
      %v6145 = vadd.f32 %v6059, 1.0
      %v6146 = vadd.f32 %v6061, 1.0
      %v6147 = vadd.f32 %v6063, 1.0
      %v6148 = vadd.f32 %v6065, 1.0
      %v6149 = vadd.f32 %v6067, 1.0
      %v6150 = vadd.f32 %v6069, 1.0
      %v6151 = vadd.f32 %v6071, 1.0
      %v6152 = vadd.f32 %v6073, 1.0
      %v6153 = vadd.f32 %v6075, 1.0
      %v6154 = vadd.f32 %v6077, 1.0
      %v6155 = vadd.f32 %v6079, 1.0
      %v6156 = vadd.f32 %v6081, 1.0
      %v6157 = vadd.f32 %v6083, 1.0
      %v6158 = vadd.f32 %v6085, 1.0
      %v6159 = vadd.f32 %v6087, 1.0
      %v6160 = vadd.f32 %v6089, 1.0
      %v6161 = vadd.f32 %v6091, 1.0
      %v6162 = vadd.f32 %v6093, 1.0
      %v6163 = vadd.f32 %v6095, 1.0
      %v6164 = vadd.f32 %v6097, 1.0
      %v6165 = vadd.f32 %v6099, 1.0
      %v6166 = vadd.f32 %v6101, 1.0
      %v6167 = vadd.f32 %v6103, 1.0
      %v6168 = vrcp.pop %v6104
      %v6169 = vmul.f32 1.0, %v6168
      %v6170 = vrcp.pop %v6105
      %v6171 = vmul.f32 1.0, %v6170
      %v6172 = vrcp.pop %v6106
      %v6173 = vmul.f32 1.0, %v6172
      %v6174 = vrcp.pop %v6107
      %v6175 = vmul.f32 1.0, %v6174
      %v6176 = vrcp.pop %v6108
      %v6177 = vmul.f32 1.0, %v6176
      %v6178 = vrcp.pop %v6109
      %v6179 = vmul.f32 1.0, %v6178
      %v6180 = vrcp.pop %v6110
      %v6181 = vmul.f32 1.0, %v6180
      %v6182 = vrcp.pop %v6111
      %v6183 = vmul.f32 1.0, %v6182
      %v6184 = vrcp.pop %v6112
      %v6185 = vmul.f32 1.0, %v6184
      %v6186 = vrcp.pop %v6113
      %v6187 = vmul.f32 1.0, %v6186
      %v6188 = vrcp.pop %v6114
      %v6189 = vmul.f32 1.0, %v6188
      %v6190 = vrcp.pop %v6115
      %v6191 = vmul.f32 1.0, %v6190
      %v6192 = vrcp.pop %v6116
      %v6193 = vmul.f32 1.0, %v6192
      %v6194 = vrcp.pop %v6117
      %v6195 = vmul.f32 1.0, %v6194
      %v6196 = vrcp.pop %v6118
      %v6197 = vmul.f32 1.0, %v6196
      %v6198 = vrcp.pop %v6119
      %v6199 = vmul.f32 1.0, %v6198
      %v6200 = vrcp.pop %v6120
      %v6201 = vmul.f32 1.0, %v6200
      %v6202 = vrcp.pop %v6121
      %v6203 = vmul.f32 1.0, %v6202
      %v6204 = vrcp.pop %v6122
      %v6205 = vmul.f32 1.0, %v6204
      %v6206 = vrcp.pop %v6123
      %v6207 = vmul.f32 1.0, %v6206
      %v6208 = vrcp.pop %v6124
      %v6209 = vmul.f32 1.0, %v6208
      %v6210 = vrcp.pop %v6125
      %v6211 = vmul.f32 1.0, %v6210
      %v6212 = vrcp.pop %v6126
      %v6213 = vmul.f32 1.0, %v6212
      %v6214 = vrcp.pop %v6127
      %v6215 = vmul.f32 1.0, %v6214
      %v6216 = vrcp.pop %v6128
      %v6217 = vmul.f32 1.0, %v6216
      %v6218 = vrcp.pop %v6129
      %v6219 = vmul.f32 1.0, %v6218
      %v6220 = vrcp.pop %v6130
      %v6221 = vmul.f32 1.0, %v6220
      %v6222 = vrcp.pop %v6131
      %v6223 = vmul.f32 1.0, %v6222
      %v6224 = vrcp.pop %v6132
      %v6225 = vmul.f32 1.0, %v6224
      %v6226 = vrcp.pop %v6133
      %v6227 = vmul.f32 1.0, %v6226
      %v6228 = vrcp.pop %v6134
      %v6229 = vmul.f32 1.0, %v6228
      %v6230 = vrcp.pop %v6135
      %v6231 = vmul.f32 1.0, %v6230
      %v6232 = vrcp.pop %v6136
      %v6233 = vmul.f32 1.0, %v6232
      %v6234 = vrcp.pop %v6137
      %v6235 = vmul.f32 1.0, %v6234
      %v6236 = vrcp.pop %v6138
      %v6237 = vmul.f32 1.0, %v6236
      %v6238 = vrcp.pop %v6139
      %v6239 = vmul.f32 1.0, %v6238
      %v6240 = vrcp.pop %v6140
      %v6241 = vmul.f32 1.0, %v6240
      %v6242 = vrcp.pop %v6141
      %v6243 = vmul.f32 1.0, %v6242
      %v6244 = vrcp.pop %v6142
      %v6245 = vmul.f32 1.0, %v6244
      %v6246 = vrcp.pop %v6143
      %v6247 = vmul.f32 1.0, %v6246
      %v6248 = vrcp.pop %v6144
      %v6249 = vmul.f32 1.0, %v6248
      %v6250 = vrcp.pop %v6145
      %v6251 = vmul.f32 1.0, %v6250
      %v6252 = vrcp.pop %v6146
      %v6253 = vmul.f32 1.0, %v6252
      %v6254 = vrcp.pop %v6147
      %v6255 = vmul.f32 1.0, %v6254
      %v6256 = vrcp.pop %v6148
      %v6257 = vmul.f32 1.0, %v6256
      %v6258 = vrcp.pop %v6149
      %v6259 = vmul.f32 1.0, %v6258
      %v6260 = vrcp.pop %v6150
      %v6261 = vmul.f32 1.0, %v6260
      %v6262 = vrcp.pop %v6151
      %v6263 = vmul.f32 1.0, %v6262
      %v6264 = vrcp.pop %v6152
      %v6265 = vmul.f32 1.0, %v6264
      %v6266 = vrcp.pop %v6153
      %v6267 = vmul.f32 1.0, %v6266
      %v6268 = vrcp.pop %v6154
      %v6269 = vmul.f32 1.0, %v6268
      %v6270 = vrcp.pop %v6155
      %v6271 = vmul.f32 1.0, %v6270
      %v6272 = vrcp.pop %v6156
      %v6273 = vmul.f32 1.0, %v6272
      %v6274 = vrcp.pop %v6157
      %v6275 = vmul.f32 1.0, %v6274
      %v6276 = vrcp.pop %v6158
      %v6277 = vmul.f32 1.0, %v6276
      %v6278 = vrcp.pop %v6159
      %v6279 = vmul.f32 1.0, %v6278
      %v6280 = vrcp.pop %v6160
      %v6281 = vmul.f32 1.0, %v6280
      %v6282 = vrcp.pop %v6161
      %v6283 = vmul.f32 1.0, %v6282
      %v6284 = vrcp.pop %v6162
      %v6285 = vmul.f32 1.0, %v6284
      %v6286 = vrcp.pop %v6163
      %v6287 = vmul.f32 1.0, %v6286
      %v6288 = vrcp.pop %v6164
      %v6289 = vmul.f32 1.0, %v6288
      %v6290 = vrcp.pop %v6165
      %v6291 = vmul.f32 1.0, %v6290
      %v6292 = vrcp.pop %v6166
      %v6293 = vmul.f32 1.0, %v6292
      %v6294 = vrcp.pop %v6167
      %v6295 = vmul.f32 1.0, %v6294
      %6360 = vrot.lane.b32.xlu0 %v4903, 3
      %v6361 = vpop.permute.xlu0 %6360
      %6362 = vrot.lane.b32.xlu0 %v4904, 3
      %v6363 = vpop.permute.xlu0 %6362
      %6364 = vrot.lane.b32.xlu0 %v4905, 3
      %v6365 = vpop.permute.xlu0 %6364
      %6366 = vrot.lane.b32.xlu0 %v4906, 3
      %v6367 = vpop.permute.xlu0 %6366
      %6368 = vrot.lane.b32.xlu0 %v4907, 3
      %v6369 = vpop.permute.xlu0 %6368
      %6370 = vrot.lane.b32.xlu0 %v4908, 3
      %v6371 = vpop.permute.xlu0 %6370
      %6372 = vrot.lane.b32.xlu0 %v4909, 3
      %v6373 = vpop.permute.xlu0 %6372
      %6374 = vrot.lane.b32.xlu0 %v4910, 3
      %v6375 = vpop.permute.xlu0 %6374
      %6376 = vrot.lane.b32.xlu0 %v4911, 3
      %v6377 = vpop.permute.xlu0 %6376
      %6378 = vrot.lane.b32.xlu0 %v4912, 3
      %v6379 = vpop.permute.xlu0 %6378
      %6380 = vrot.lane.b32.xlu0 %v4913, 3
      %v6381 = vpop.permute.xlu0 %6380
      %6382 = vrot.lane.b32.xlu0 %v4914, 3
      %v6383 = vpop.permute.xlu0 %6382
      %6384 = vrot.lane.b32.xlu0 %v4915, 3
      %v6385 = vpop.permute.xlu0 %6384
      %6386 = vrot.lane.b32.xlu0 %v4916, 3
      %v6387 = vpop.permute.xlu0 %6386
      %6388 = vrot.lane.b32.xlu0 %v4917, 3
      %v6389 = vpop.permute.xlu0 %6388
      %6390 = vrot.lane.b32.xlu0 %v4918, 3
      %v6391 = vpop.permute.xlu0 %6390
      %6392 = vrot.lane.b32.xlu0 %v4919, 3
      %v6393 = vpop.permute.xlu0 %6392
      %6394 = vrot.lane.b32.xlu0 %v4920, 3
      %v6395 = vpop.permute.xlu0 %6394
      %6396 = vrot.lane.b32.xlu0 %v4921, 3
      %v6397 = vpop.permute.xlu0 %6396
      %6398 = vrot.lane.b32.xlu0 %v4922, 3
      %v6399 = vpop.permute.xlu0 %6398
      %6400 = vrot.lane.b32.xlu0 %v4923, 3
      %v6401 = vpop.permute.xlu0 %6400
      %6402 = vrot.lane.b32.xlu0 %v4924, 3
      %v6403 = vpop.permute.xlu0 %6402
      %6404 = vrot.lane.b32.xlu0 %v4925, 3
      %v6405 = vpop.permute.xlu0 %6404
      %6406 = vrot.lane.b32.xlu0 %v4926, 3
      %v6407 = vpop.permute.xlu0 %6406
      %6408 = vrot.lane.b32.xlu0 %v4927, 3
      %v6409 = vpop.permute.xlu0 %6408
      %6410 = vrot.lane.b32.xlu0 %v4928, 3
      %v6411 = vpop.permute.xlu0 %6410
      %6412 = vrot.lane.b32.xlu0 %v4929, 3
      %v6413 = vpop.permute.xlu0 %6412
      %6414 = vrot.lane.b32.xlu0 %v4930, 3
      %v6415 = vpop.permute.xlu0 %6414
      %6416 = vrot.lane.b32.xlu0 %v4931, 3
      %v6417 = vpop.permute.xlu0 %6416
      %6418 = vrot.lane.b32.xlu0 %v4932, 3
      %v6419 = vpop.permute.xlu0 %6418
      %6420 = vrot.lane.b32.xlu0 %v4933, 3
      %v6421 = vpop.permute.xlu0 %6420
      %6422 = vrot.lane.b32.xlu0 %v4934, 3
      %v6423 = vpop.permute.xlu0 %6422
      %6424 = vrot.lane.b32.xlu0 %v4935, 3
      %v6425 = vpop.permute.xlu0 %6424
      %6426 = vrot.lane.b32.xlu0 %v4936, 3
      %v6427 = vpop.permute.xlu0 %6426
      %6428 = vrot.lane.b32.xlu0 %v4937, 3
      %v6429 = vpop.permute.xlu0 %6428
      %6430 = vrot.lane.b32.xlu0 %v4938, 3
      %v6431 = vpop.permute.xlu0 %6430
      %6432 = vrot.lane.b32.xlu0 %v4939, 3
      %v6433 = vpop.permute.xlu0 %6432
      %6434 = vrot.lane.b32.xlu0 %v4940, 3
      %v6435 = vpop.permute.xlu0 %6434
      %6436 = vrot.lane.b32.xlu0 %v4941, 3
      %v6437 = vpop.permute.xlu0 %6436
      %6438 = vrot.lane.b32.xlu0 %v4942, 3
      %v6439 = vpop.permute.xlu0 %6438
      %6440 = vrot.lane.b32.xlu0 %v4943, 3
      %v6441 = vpop.permute.xlu0 %6440
      %6442 = vrot.lane.b32.xlu0 %v4944, 3
      %v6443 = vpop.permute.xlu0 %6442
      %6444 = vrot.lane.b32.xlu0 %v4945, 3
      %v6445 = vpop.permute.xlu0 %6444
      %6446 = vrot.lane.b32.xlu0 %v4946, 3
      %v6447 = vpop.permute.xlu0 %6446
      %6448 = vrot.lane.b32.xlu0 %v4947, 3
      %v6449 = vpop.permute.xlu0 %6448
      %6450 = vrot.lane.b32.xlu0 %v4948, 3
      %v6451 = vpop.permute.xlu0 %6450
      %6452 = vrot.lane.b32.xlu0 %v4949, 3
      %v6453 = vpop.permute.xlu0 %6452
      %6454 = vrot.lane.b32.xlu0 %v4950, 3
      %v6455 = vpop.permute.xlu0 %6454
      %6456 = vrot.lane.b32.xlu0 %v4951, 3
      %v6457 = vpop.permute.xlu0 %6456
      %6458 = vrot.lane.b32.xlu0 %v4952, 3
      %v6459 = vpop.permute.xlu0 %6458
      %6460 = vrot.lane.b32.xlu0 %v4953, 3
      %v6461 = vpop.permute.xlu0 %6460
      %6462 = vrot.lane.b32.xlu0 %v4954, 3
      %v6463 = vpop.permute.xlu0 %6462
      %6464 = vrot.lane.b32.xlu0 %v4955, 3
      %v6465 = vpop.permute.xlu0 %6464
      %6466 = vrot.lane.b32.xlu0 %v4956, 3
      %v6467 = vpop.permute.xlu0 %6466
      %6468 = vrot.lane.b32.xlu0 %v4957, 3
      %v6469 = vpop.permute.xlu0 %6468
      %6470 = vrot.lane.b32.xlu0 %v4958, 3
      %v6471 = vpop.permute.xlu0 %6470
      %6472 = vrot.lane.b32.xlu0 %v4959, 3
      %v6473 = vpop.permute.xlu0 %6472
      %6474 = vrot.lane.b32.xlu0 %v4960, 3
      %v6475 = vpop.permute.xlu0 %6474
      %6476 = vrot.lane.b32.xlu0 %v4961, 3
      %v6477 = vpop.permute.xlu0 %6476
      %6478 = vrot.lane.b32.xlu0 %v4962, 3
      %v6479 = vpop.permute.xlu0 %6478
      %6480 = vrot.lane.b32.xlu0 %v4963, 3
      %v6481 = vpop.permute.xlu0 %6480
      %6482 = vrot.lane.b32.xlu0 %v4964, 3
      %v6483 = vpop.permute.xlu0 %6482
      %6484 = vrot.lane.b32.xlu0 %v4965, 3
      %v6485 = vpop.permute.xlu0 %6484
      %6486 = vrot.lane.b32.xlu0 %v4966, 3
      %v6487 = vpop.permute.xlu0 %6486
      %vm6552 = vcmask 23552
      %v6553 = vsel %vm6552, %v6169, %v6361
      %v6554 = vsel %vm6552, %v6171, %v6363
      %v6555 = vsel %vm6552, %v6173, %v6365
      %v6556 = vsel %vm6552, %v6175, %v6367
      %v6557 = vsel %vm6552, %v6177, %v6369
      %v6558 = vsel %vm6552, %v6179, %v6371
      %v6559 = vsel %vm6552, %v6181, %v6373
      %v6560 = vsel %vm6552, %v6183, %v6375
      %v6561 = vsel %vm6552, %v6185, %v6377
      %v6562 = vsel %vm6552, %v6187, %v6379
      %v6563 = vsel %vm6552, %v6189, %v6381
      %v6564 = vsel %vm6552, %v6191, %v6383
      %v6565 = vsel %vm6552, %v6193, %v6385
      %v6566 = vsel %vm6552, %v6195, %v6387
      %v6567 = vsel %vm6552, %v6197, %v6389
      %v6568 = vsel %vm6552, %v6199, %v6391
      %v6569 = vsel %vm6552, %v6201, %v6393
      %v6570 = vsel %vm6552, %v6203, %v6395
      %v6571 = vsel %vm6552, %v6205, %v6397
      %v6572 = vsel %vm6552, %v6207, %v6399
      %v6573 = vsel %vm6552, %v6209, %v6401
      %v6574 = vsel %vm6552, %v6211, %v6403
      %v6575 = vsel %vm6552, %v6213, %v6405
      %v6576 = vsel %vm6552, %v6215, %v6407
      %v6577 = vsel %vm6552, %v6217, %v6409
      %v6578 = vsel %vm6552, %v6219, %v6411
      %v6579 = vsel %vm6552, %v6221, %v6413
      %v6580 = vsel %vm6552, %v6223, %v6415
      %v6581 = vsel %vm6552, %v6225, %v6417
      %v6582 = vsel %vm6552, %v6227, %v6419
      %v6583 = vsel %vm6552, %v6229, %v6421
      %v6584 = vsel %vm6552, %v6231, %v6423
      %v6585 = vsel %vm6552, %v6233, %v6425
      %v6586 = vsel %vm6552, %v6235, %v6427
      %v6587 = vsel %vm6552, %v6237, %v6429
      %v6588 = vsel %vm6552, %v6239, %v6431
      %v6589 = vsel %vm6552, %v6241, %v6433
      %v6590 = vsel %vm6552, %v6243, %v6435
      %v6591 = vsel %vm6552, %v6245, %v6437
      %v6592 = vsel %vm6552, %v6247, %v6439
      %v6593 = vsel %vm6552, %v6249, %v6441
      %v6594 = vsel %vm6552, %v6251, %v6443
      %v6595 = vsel %vm6552, %v6253, %v6445
      %v6596 = vsel %vm6552, %v6255, %v6447
      %v6597 = vsel %vm6552, %v6257, %v6449
      %v6598 = vsel %vm6552, %v6259, %v6451
      %v6599 = vsel %vm6552, %v6261, %v6453
      %v6600 = vsel %vm6552, %v6263, %v6455
      %v6601 = vsel %vm6552, %v6265, %v6457
      %v6602 = vsel %vm6552, %v6267, %v6459
      %v6603 = vsel %vm6552, %v6269, %v6461
      %v6604 = vsel %vm6552, %v6271, %v6463
      %v6605 = vsel %vm6552, %v6273, %v6465
      %v6606 = vsel %vm6552, %v6275, %v6467
      %v6607 = vsel %vm6552, %v6277, %v6469
      %v6608 = vsel %vm6552, %v6279, %v6471
      %v6609 = vsel %vm6552, %v6281, %v6473
      %v6610 = vsel %vm6552, %v6283, %v6475
      %v6611 = vsel %vm6552, %v6285, %v6477
      %v6612 = vsel %vm6552, %v6287, %v6479
      %v6613 = vsel %vm6552, %v6289, %v6481
      %v6614 = vsel %vm6552, %v6291, %v6483
      %v6615 = vsel %vm6552, %v6293, %v6485
      %v6616 = vsel %vm6552, %v6295, %v6487
      %vm6617 = vcmask 31744
      %6618 = vst.msk [vmem:[%s361] sm:$0xff] %vm6617, %v6553
      %6619 = vst.msk [vmem:[%s361 + $0x8] sm:$0xff] %vm6617, %v6554
      %6620 = vst.msk [vmem:[%s361 + $0x10] sm:$0xff] %vm6617, %v6555
      %6621 = vst.msk [vmem:[%s361 + $0x18] sm:$0xff] %vm6617, %v6556
      %6622 = vst.msk [vmem:[%s361 + $0x20] sm:$0xff] %vm6617, %v6557
      %6623 = vst.msk [vmem:[%s361 + $0x28] sm:$0xff] %vm6617, %v6558
      %6624 = vst.msk [vmem:[%s361 + $0x30] sm:$0xff] %vm6617, %v6559
      %6625 = vst.msk [vmem:[%s361 + $0x38] sm:$0xff] %vm6617, %v6560
      %6626 = vst.msk [vmem:[%s361 + $0x40] sm:$0xff] %vm6617, %v6561
      %6627 = vst.msk [vmem:[%s361 + $0x48] sm:$0xff] %vm6617, %v6562
      %6628 = vst.msk [vmem:[%s361 + $0x50] sm:$0xff] %vm6617, %v6563
      %6629 = vst.msk [vmem:[%s361 + $0x58] sm:$0xff] %vm6617, %v6564
      %6630 = vst.msk [vmem:[%s361 + $0x60] sm:$0xff] %vm6617, %v6565
      %6631 = vst.msk [vmem:[%s361 + $0x68] sm:$0xff] %vm6617, %v6566
      %6632 = vst.msk [vmem:[%s361 + $0x70] sm:$0xff] %vm6617, %v6567
      %6633 = vst.msk [vmem:[%s361 + $0x78] sm:$0xff] %vm6617, %v6568
      %6634 = vst.msk [vmem:[%s361 + $0x80] sm:$0xff] %vm6617, %v6569
      %6635 = vst.msk [vmem:[%s361 + $0x88] sm:$0xff] %vm6617, %v6570
      %6636 = vst.msk [vmem:[%s361 + $0x90] sm:$0xff] %vm6617, %v6571
      %6637 = vst.msk [vmem:[%s361 + $0x98] sm:$0xff] %vm6617, %v6572
      %6638 = vst.msk [vmem:[%s361 + $0xa0] sm:$0xff] %vm6617, %v6573
      %6639 = vst.msk [vmem:[%s361 + $0xa8] sm:$0xff] %vm6617, %v6574
      %6640 = vst.msk [vmem:[%s361 + $0xb0] sm:$0xff] %vm6617, %v6575
      %6641 = vst.msk [vmem:[%s361 + $0xb8] sm:$0xff] %vm6617, %v6576
      %6642 = vst.msk [vmem:[%s361 + $0xc0] sm:$0xff] %vm6617, %v6577
      %6643 = vst.msk [vmem:[%s361 + $0xc8] sm:$0xff] %vm6617, %v6578
      %6644 = vst.msk [vmem:[%s361 + $0xd0] sm:$0xff] %vm6617, %v6579
      %6645 = vst.msk [vmem:[%s361 + $0xd8] sm:$0xff] %vm6617, %v6580
      %6646 = vst.msk [vmem:[%s361 + $0xe0] sm:$0xff] %vm6617, %v6581
      %6647 = vst.msk [vmem:[%s361 + $0xe8] sm:$0xff] %vm6617, %v6582
      %6648 = vst.msk [vmem:[%s361 + $0xf0] sm:$0xff] %vm6617, %v6583
      %6649 = vst.msk [vmem:[%s361 + $0xf8] sm:$0xff] %vm6617, %v6584
      %6650 = vst.msk [vmem:[%s361 + $0x100] sm:$0xff] %vm6617, %v6585
      %6651 = vst.msk [vmem:[%s361 + $0x108] sm:$0xff] %vm6617, %v6586
      %6652 = vst.msk [vmem:[%s361 + $0x110] sm:$0xff] %vm6617, %v6587
      %6653 = vst.msk [vmem:[%s361 + $0x118] sm:$0xff] %vm6617, %v6588
      %6654 = vst.msk [vmem:[%s361 + $0x120] sm:$0xff] %vm6617, %v6589
      %6655 = vst.msk [vmem:[%s361 + $0x128] sm:$0xff] %vm6617, %v6590
      %6656 = vst.msk [vmem:[%s361 + $0x130] sm:$0xff] %vm6617, %v6591
      %6657 = vst.msk [vmem:[%s361 + $0x138] sm:$0xff] %vm6617, %v6592
      %6658 = vst.msk [vmem:[%s361 + $0x140] sm:$0xff] %vm6617, %v6593
      %6659 = vst.msk [vmem:[%s361 + $0x148] sm:$0xff] %vm6617, %v6594
      %6660 = vst.msk [vmem:[%s361 + $0x150] sm:$0xff] %vm6617, %v6595
      %6661 = vst.msk [vmem:[%s361 + $0x158] sm:$0xff] %vm6617, %v6596
      %6662 = vst.msk [vmem:[%s361 + $0x160] sm:$0xff] %vm6617, %v6597
      %6663 = vst.msk [vmem:[%s361 + $0x168] sm:$0xff] %vm6617, %v6598
      %6664 = vst.msk [vmem:[%s361 + $0x170] sm:$0xff] %vm6617, %v6599
      %6665 = vst.msk [vmem:[%s361 + $0x178] sm:$0xff] %vm6617, %v6600
      %6666 = vst.msk [vmem:[%s361 + $0x180] sm:$0xff] %vm6617, %v6601
      %6667 = vst.msk [vmem:[%s361 + $0x188] sm:$0xff] %vm6617, %v6602
      %6668 = vst.msk [vmem:[%s361 + $0x190] sm:$0xff] %vm6617, %v6603
      %6669 = vst.msk [vmem:[%s361 + $0x198] sm:$0xff] %vm6617, %v6604
      %6670 = vst.msk [vmem:[%s361 + $0x1a0] sm:$0xff] %vm6617, %v6605
      %6671 = vst.msk [vmem:[%s361 + $0x1a8] sm:$0xff] %vm6617, %v6606
      %6672 = vst.msk [vmem:[%s361 + $0x1b0] sm:$0xff] %vm6617, %v6607
      %6673 = vst.msk [vmem:[%s361 + $0x1b8] sm:$0xff] %vm6617, %v6608
      %6674 = vst.msk [vmem:[%s361 + $0x1c0] sm:$0xff] %vm6617, %v6609
      %6675 = vst.msk [vmem:[%s361 + $0x1c8] sm:$0xff] %vm6617, %v6610
      %6676 = vst.msk [vmem:[%s361 + $0x1d0] sm:$0xff] %vm6617, %v6611
      %6677 = vst.msk [vmem:[%s361 + $0x1d8] sm:$0xff] %vm6617, %v6612
      %6678 = vst.msk [vmem:[%s361 + $0x1e0] sm:$0xff] %vm6617, %v6613
      %6679 = vst.msk [vmem:[%s361 + $0x1e8] sm:$0xff] %vm6617, %v6614
      %6680 = vst.msk [vmem:[%s361 + $0x1f0] sm:$0xff] %vm6617, %v6615
      %6681 = vst.msk [vmem:[%s361 + $0x1f8] sm:$0xff] %vm6617, %v6616
      %s6682 = smul.u32 64, %s21
      %p6683 = scmp.lt.s32.totalorder %s6682, 127
      %s6684 = scalar_select %p6683, %s6682, 127
      %s6685 = smul.addr %s6684, 8
      %s6686 = scalar_lea.vmem %s10, %s6685
      // Predicated region
      $region61: #{nerf_forward.1} parent=59 // pred_check
        %p6687 = pneg %p254
      $region62: #{nerf_forward.1} parent=59 // pred_check_branch
        %6689 = sbr.rel (%p6687) target = $region64
      $region63: #{nerf_forward.1} parent=59 // pred_region
        %s6690 = smul.u32 64, %s21
      $region64: #{nerf_forward.1} parent=59 // pred_fallthru
        _
    $region60: #{nerf_forward.1} parent=5 // pred_fallthru
      _
    %p6691 = scmp.le.s32.totalorder 2, %s16
    // Predicated region
    $region65: #{nerf_forward.1} parent=5 // pred_check
      %p6692 = pneg %p6691
    $region66: #{nerf_forward.1} parent=5 // pred_check_branch
      %6694 = sbr.rel (%p6692) target = $region68
    $region67: #{nerf_forward.1} parent=5 // pred_region
      %s6695 = ssub.s32 %s16, 2
      // Predicated region
      $region69: #{nerf_forward.1} parent=67 // pred_check
        %p6696 = pneg %p260
      $region70: #{nerf_forward.1} parent=67 // pred_check_branch
        %6698 = sbr.rel (%p6696) target = $region72
      $region71: #{nerf_forward.1} parent=67 // pred_region
        %s6699 = smul.u32 64, %s22
        %p6700 = scmp.lt.s32.totalorder %s6699, 127
        %s6701 = scalar_select %p6700, %s6699, 127
        %s6702 = smul.addr %s6701, 8
        %s6703 = scalar_lea.vmem %s10, %s6702
      $region72: #{nerf_forward.1} parent=67 // pred_fallthru
        _
    $region68: #{nerf_forward.1} parent=5 // pred_fallthru
      _
  $region6: #{nerf_forward.1} parent=0 // loop_footer
    %s20 = sadd.s32 1, %s16
  $region7: #{nerf_forward.1} parent=0 // loop_footer_branch
    %15 = sbr.rel target = $region3
  $region8: #{nerf_forward.1} parent=0 // loop_exit
    _

</llo_original>
